<compile_context>
chip_gen: v7x
topology: tpu7x:2x2x1
jax: 0.10.0
libtpu: 0.0.40
codegen_flags: <defaults>
</compile_context>

<pallas_src>
import jax
import jax.numpy as jnp
from jax.experimental import pallas as pl
from jax.experimental.pallas import tpu as pltpu

LANES = 128
VMEM_LIMIT = 32 * 1024 * 1024  # safe on v5e/v6e (128 MiB) and v7x (64 MiB)


# ----------------------------- Pallas kernels ------------------------------

def _conv3x3_s2_relu_kernel(p00_ref, p01_ref, p10_ref, p11_ref,
                            w_ref, b_ref, o_ref):
    """Fused im2col 3x3 stride-2 conv + bias + ReLU for one image.

    Inputs are the 4 stride-2 phases of the zero-padded NHWC image, each
    (Ho+1, Wo+1, C) bf16; weights are (9, C, N) bf16 (tap-major, matching the
    (di, dj) loop below); bias (1, N) f32.  Output (Ho*Wo, N) bf16.
    """
    hp, wp, c = p00_ref.shape
    ho, wo = hp - 1, wp - 1
    m, n = o_ref.shape

    phases = ((p00_ref, p01_ref), (p10_ref, p11_ref))
    acc = jnp.zeros((m, n), jnp.float32)
    for di in range(3):
        for dj in range(3):
            ph = phases[di % 2][dj % 2]
            # padded-input row 2*oh+di lives in phase (di%2) at row oh + di//2
            tap = ph[pl.ds(di // 2, ho), pl.ds(dj // 2, wo), :]      # (Ho, Wo, C)
            acc = acc + jnp.dot(tap.reshape(m, c), w_ref[di * 3 + dj],
                                preferred_element_type=jnp.float32)
    acc = acc + b_ref[...]                       # (1, N) bias, hoisted broadcast
    o_ref[...] = jnp.maximum(acc, 0.0).astype(o_ref.dtype)


def _pool_embed_kernel(x_ref, pool_ref, w_ref, b_ref, o_ref):
    """Fused AdaptiveAvgPool2d((1,1)) + flatten + Linear.

    x:    (TB*S, C) bf16  -- TB images' flattened spatial features
    pool: (TB, TB*S) bf16 -- block-diagonal (1/S) pooling matrix (MXU reduction)
    w:    (C, E_pad) bf16, b: (1, E_pad) f32 -> out (TB, E_pad) f32
    """
    pooled = jnp.dot(pool_ref[...], x_ref[...],
                     preferred_element_type=jnp.float32)            # (TB, C)
    out = jnp.dot(pooled.astype(jnp.bfloat16), w_ref[...],
                  preferred_element_type=jnp.float32)               # (TB, E_pad)
    o_ref[...] = (out + b_ref[...]).astype(o_ref.dtype)


# ------------------------------ JAX wrappers --------------------------------

def conv3x3_s2_relu(x_nhwc, w, b):
    """3x3 / stride 2 / pad 1 conv + ReLU.  x: (B, H, W, C) bf16 -> (B, Ho*Wo, N) bf16."""
    bsz, h, wd, c = x_nhwc.shape
    assert h % 2 == 0 and wd % 2 == 0
    ho, wo = h // 2, wd // 2
    n = w.shape[-1]
    m = ho * wo

    # Spatial zero-pad, then split into the 4 stride-2 phases.  Total bytes ==
    # padded input (no 9x im2col expansion); the 9 shifted taps are read from
    # VMEM inside the kernel.
    xp = jnp.pad(x_nhwc, ((0, 0), (1, 1), (1, 1), (0, 0)))
    p00 = xp[:, 0::2, 0::2, :]
    p01 = xp[:, 0::2, 1::2, :]
    p10 = xp[:, 1::2, 0::2, :]
    p11 = xp[:, 1::2, 1::2, :]
    hp2, wp2 = ho + 1, wo + 1

    phase_spec = pl.BlockSpec((None, hp2, wp2, c), lambda bi: (bi, 0, 0, 0))
    cost = pl.CostEstimate(
        flops=2 * bsz * m * (9 * c) * n,
        transcendentals=0,
        bytes_accessed=(4 * bsz * hp2 * wp2 * c * 2      # bf16 phases
                        + 9 * c * n * 2                  # bf16 weights
                        + n * 4                          # f32 bias
                        + bsz * m * n * 2))              # bf16 output

    return pl.pallas_call(
        _conv3x3_s2_relu_kernel,
        out_shape=jax.ShapeDtypeStruct((bsz, m, n), jnp.bfloat16),
        grid=(bsz,),
        in_specs=[phase_spec, phase_spec, phase_spec, phase_spec,
                  pl.BlockSpec((9, c, n), lambda bi: (0, 0, 0)),
                  pl.BlockSpec((1, n), lambda bi: (0, 0))],
        out_specs=pl.BlockSpec((None, m, n), lambda bi: (bi, 0, 0)),
        compiler_params=pltpu.CompilerParams(
            dimension_semantics=("parallel",),           # both v7x TCs
            vmem_limit_bytes=VMEM_LIMIT),
        cost_estimate=cost,
    )(p00, p01, p10, p11, w, b)


def pool_and_embed(feat_bsc, w_e, b_e):
    """Global avg-pool over spatial + Linear embed.  feat: (B, S, C) bf16 -> (B, E_pad) f32."""
    bsz, s, c = feat_bsc.shape
    e_pad = w_e.shape[-1]
    tb = bsz if bsz <= 8 else 8          # batch tile (sublane-aligned for big B)
    assert bsz % tb == 0

    x2d = feat_bsc.reshape(bsz * s, c)
    # Block-diagonal mean-pool matrix for one batch tile; identical per tile.
    pool_mat = (jnp.repeat(jnp.eye(tb, dtype=jnp.float32), s, axis=1) / s
                ).astype(jnp.bfloat16)                    # (TB, TB*S)

    cost = pl.CostEstimate(
        flops=2 * bsz * s * c + 2 * bsz * c * e_pad,
        transcendentals=0,
        bytes_accessed=bsz * s * c * 2 + c * e_pad * 2 + e_pad * 4 + bsz * e_pad * 4)

    return pl.pallas_call(
        _pool_embed_kernel,
        out_shape=jax.ShapeDtypeStruct((bsz, e_pad), jnp.float32),
        grid=(bsz // tb,),
        in_specs=[pl.BlockSpec((tb * s, c), lambda t: (t, 0)),
                  pl.BlockSpec((tb, tb * s), lambda t: (0, 0)),
                  pl.BlockSpec((c, e_pad), lambda t: (0, 0)),
                  pl.BlockSpec((1, e_pad), lambda t: (0, 0))],
        out_specs=pl.BlockSpec((tb, e_pad), lambda t: (t, 0)),
        compiler_params=pltpu.CompilerParams(
            dimension_semantics=("parallel",),
            vmem_limit_bytes=VMEM_LIMIT),
        cost_estimate=cost,
    )(x2d, pool_mat, w_e, b_e)


class EncoderCNNPallas:
    """Stand-in EncoderCNN: conv stack -> global avg pool -> Linear embed.

    Internal channel width is 128 so every conv/embed matmul is lane-dense
    (N and K are multiples of 128); the embed output is a (B, 128) slab sliced
    to embed_size in the wrapper.
    """

    def __init__(self, embed_size, c_in=3, width=LANES, seed=0):
        assert c_in <= width and width % LANES == 0
        key = jax.random.PRNGKey(seed)
        k1, k2, k3, k4, k5, k6 = jax.random.split(key, 6)
        e_pad = ((embed_size + LANES - 1) // LANES) * LANES

        # conv1: 3x3/2, (padded) width -> width.  Only the first c_in input
        # channels ever see non-zero data (rest are zero-padded channels).
        self.w1 = (jax.random.normal(k1, (9, width, width), jnp.float32) * 0.05
                   ).astype(jnp.bfloat16)
        self.b1 = jax.random.normal(k2, (1, width), jnp.float32) * 0.01
        # conv2: 3x3/2, width -> width
        self.w2 = (jax.random.normal(k3, (9, width, width), jnp.float32) * 0.05
                   ).astype(jnp.bfloat16)
        self.b2 = jax.random.normal(k4, (1, width), jnp.float32) * 0.01
        # embed: Linear(width -> embed_size), stored lane-padded as (width, e_pad)
        self.we = (jax.random.normal(k5, (width, e_pad), jnp.float32) * 0.05
                   ).astype(jnp.bfloat16)
        self.be = jax.random.normal(k6, (1, e_pad), jnp.float32) * 0.01

        self.c_in = c_in
        self.width = width
        self.embed_size = embed_size

    def __call__(self, images_nchw):
        bsz, cin, h, w = images_nchw.shape
        assert cin == self.c_in and h % 4 == 0 and w % 4 == 0

        # NCHW -> NHWC, bf16, lane-pad channels to 128 (zeros contribute nothing)
        x = jnp.transpose(images_nchw, (0, 2, 3, 1)).astype(jnp.bfloat16)
        x = jnp.pad(x, ((0, 0), (0, 0), (0, 0), (0, self.width - cin)))

        # "resnet" backbone stand-in: two 3x3/2 conv+ReLU layers (Pallas kernels)
        y1 = conv3x3_s2_relu(x, self.w1, self.b1)                 # (B, H/2*W/2, 128)
        y1 = y1.reshape(bsz, h // 2, w // 2, self.width)
        y2 = conv3x3_s2_relu(y1, self.w2, self.b2)                # (B, H/4*W/4, 128)

        # AdaptiveAvgPool2d((1,1)) + view(B,-1) + self.embed, fused in one kernel
        emb = pool_and_embed(y2, self.we, self.be)                # (B, 128) f32
        return emb[:, :self.embed_size]


if __name__ == "__main__":
    B, C, H, W = 2, 3, 32, 32       # RGB images, small spatial size
    embed_size = 8

    key = jax.random.PRNGKey(0)
    images = jax.random.normal(key, (B, C, H, W), jnp.float32)    # NCHW input

    model = EncoderCNNPallas(embed_size=embed_size, c_in=C)
    fwd = jax.jit(lambda imgs: model(imgs))
    out = fwd(images)
    out = jax.block_until_ready(out)

    assert out.shape == (B, embed_size), out.shape
    assert out.dtype == jnp.float32
    assert bool(jnp.all(jnp.isfinite(out)))
    print("KERNEL_OK")
</pallas_src>

<mosaic_0001>
module attributes {stable_mosaic.version = 11 : i64} {
  func.func @_conv3x3_s2_relu_kernel(%arg0: i32, %arg1: memref<1x17x17x128xbf16, #tpu.memory_space<vmem>>, %arg2: memref<1x17x17x128xbf16, #tpu.memory_space<vmem>>, %arg3: memref<1x17x17x128xbf16, #tpu.memory_space<vmem>>, %arg4: memref<1x17x17x128xbf16, #tpu.memory_space<vmem>>, %arg5: memref<9x128x128xbf16, #tpu.memory_space<vmem>>, %arg6: memref<1x128xf32, #tpu.memory_space<vmem>>, %arg7: memref<1x256x128xbf16, #tpu.memory_space<vmem>>) attributes {dimension_semantics = [#tpu.dimension_semantics<parallel>], iteration_bounds = array<i64: 2>, scalar_prefetch = 0 : i64, scratch_operands = 0 : i64, tpu.core_type = #tpu.core_type<tc>, window_params = [{transform_indices = @transform_0, window_bounds = array<i64: 1, 17, 17, 128>}, {transform_indices = @transform_1, window_bounds = array<i64: 1, 17, 17, 128>}, {transform_indices = @transform_2, window_bounds = array<i64: 1, 17, 17, 128>}, {transform_indices = @transform_3, window_bounds = array<i64: 1, 17, 17, 128>}, {pipeline_mode = #tpu.pipeline_mode<synchronous>, transform_indices = @transform_4, window_bounds = array<i64: 9, 128, 128>}, {pipeline_mode = #tpu.pipeline_mode<synchronous>, transform_indices = @transform_5, window_bounds = array<i64: 1, 128>}, {transform_indices = @transform_6, window_bounds = array<i64: 1, 256, 128>}]} {
    %cst = arith.constant 0.000000e+00 : f32
    %0 = vector.broadcast %cst : f32 to vector<256x128xf32>
    %c0 = arith.constant 0 : index
    %c0_0 = arith.constant 0 : index
    %c0_1 = arith.constant 0 : index
    %c0_2 = arith.constant 0 : index
    %1 = vector.load %arg1[%c0, %c0_0, %c0_1, %c0_2] : memref<1x17x17x128xbf16, #tpu.memory_space<vmem>>, vector<1x16x16x128xbf16>
    %2 = vector.shape_cast %1 : vector<1x16x16x128xbf16> to vector<16x16x128xbf16>
    %3 = vector.shape_cast %2 : vector<16x16x128xbf16> to vector<256x128xbf16>
    %c0_3 = arith.constant 0 : index
    %c0_4 = arith.constant 0 : index
    %c0_5 = arith.constant 0 : index
    %4 = vector.load %arg5[%c0_3, %c0_4, %c0_5] : memref<9x128x128xbf16, #tpu.memory_space<vmem>>, vector<1x128x128xbf16>
    %5 = vector.shape_cast %4 : vector<1x128x128xbf16> to vector<128x128xbf16>
    %cst_6 = arith.constant dense<0.000000e+00> : vector<256x128xf32>
    %6 = tpu.matmul %3, %5, %cst_6 {dimension_numbers = #tpu.dot_dimension_numbers<[1], [0], [0], [1], [0, 0, 1, 1], [], []>} : vector<256x128xbf16>, vector<128x128xbf16>, vector<256x128xf32> -> vector<256x128xf32>
    %7 = arith.addf %0, %6 : vector<256x128xf32>
    %c0_7 = arith.constant 0 : index
    %c0_8 = arith.constant 0 : index
    %c0_9 = arith.constant 0 : index
    %c0_10 = arith.constant 0 : index
    %8 = vector.load %arg2[%c0_7, %c0_8, %c0_9, %c0_10] : memref<1x17x17x128xbf16, #tpu.memory_space<vmem>>, vector<1x16x16x128xbf16>
    %9 = vector.shape_cast %8 : vector<1x16x16x128xbf16> to vector<16x16x128xbf16>
    %10 = vector.shape_cast %9 : vector<16x16x128xbf16> to vector<256x128xbf16>
    %c1 = arith.constant 1 : index
    %c0_11 = arith.constant 0 : index
    %c0_12 = arith.constant 0 : index
    %11 = vector.load %arg5[%c1, %c0_11, %c0_12] : memref<9x128x128xbf16, #tpu.memory_space<vmem>>, vector<1x128x128xbf16>
    %12 = vector.shape_cast %11 : vector<1x128x128xbf16> to vector<128x128xbf16>
    %cst_13 = arith.constant dense<0.000000e+00> : vector<256x128xf32>
    %13 = tpu.matmul %10, %12, %cst_13 {dimension_numbers = #tpu.dot_dimension_numbers<[1], [0], [0], [1], [0, 0, 1, 1], [], []>} : vector<256x128xbf16>, vector<128x128xbf16>, vector<256x128xf32> -> vector<256x128xf32>
    %14 = arith.addf %7, %13 : vector<256x128xf32>
    %c0_14 = arith.constant 0 : index
    %c0_15 = arith.constant 0 : index
    %c1_16 = arith.constant 1 : index
    %c0_17 = arith.constant 0 : index
    %15 = vector.load %arg1[%c0_14, %c0_15, %c1_16, %c0_17] : memref<1x17x17x128xbf16, #tpu.memory_space<vmem>>, vector<1x16x16x128xbf16>
    %16 = vector.shape_cast %15 : vector<1x16x16x128xbf16> to vector<16x16x128xbf16>
    %17 = vector.shape_cast %16 : vector<16x16x128xbf16> to vector<256x128xbf16>
    %c2 = arith.constant 2 : index
    %c0_18 = arith.constant 0 : index
    %c0_19 = arith.constant 0 : index
    %18 = vector.load %arg5[%c2, %c0_18, %c0_19] : memref<9x128x128xbf16, #tpu.memory_space<vmem>>, vector<1x128x128xbf16>
    %19 = vector.shape_cast %18 : vector<1x128x128xbf16> to vector<128x128xbf16>
    %cst_20 = arith.constant dense<0.000000e+00> : vector<256x128xf32>
    %20 = tpu.matmul %17, %19, %cst_20 {dimension_numbers = #tpu.dot_dimension_numbers<[1], [0], [0], [1], [0, 0, 1, 1], [], []>} : vector<256x128xbf16>, vector<128x128xbf16>, vector<256x128xf32> -> vector<256x128xf32>
    %21 = arith.addf %14, %20 : vector<256x128xf32>
    %c0_21 = arith.constant 0 : index
    %c0_22 = arith.constant 0 : index
    %c0_23 = arith.constant 0 : index
    %c0_24 = arith.constant 0 : index
    %22 = vector.load %arg3[%c0_21, %c0_22, %c0_23, %c0_24] : memref<1x17x17x128xbf16, #tpu.memory_space<vmem>>, vector<1x16x16x128xbf16>
    %23 = vector.shape_cast %22 : vector<1x16x16x128xbf16> to vector<16x16x128xbf16>
    %24 = vector.shape_cast %23 : vector<16x16x128xbf16> to vector<256x128xbf16>
    %c3 = arith.constant 3 : index
    %c0_25 = arith.constant 0 : index
    %c0_26 = arith.constant 0 : index
    %25 = vector.load %arg5[%c3, %c0_25, %c0_26] : memref<9x128x128xbf16, #tpu.memory_space<vmem>>, vector<1x128x128xbf16>
    %26 = vector.shape_cast %25 : vector<1x128x128xbf16> to vector<128x128xbf16>
    %cst_27 = arith.constant dense<0.000000e+00> : vector<256x128xf32>
    %27 = tpu.matmul %24, %26, %cst_27 {dimension_numbers = #tpu.dot_dimension_numbers<[1], [0], [0], [1], [0, 0, 1, 1], [], []>} : vector<256x128xbf16>, vector<128x128xbf16>, vector<256x128xf32> -> vector<256x128xf32>
    %28 = arith.addf %21, %27 : vector<256x128xf32>
    %c0_28 = arith.constant 0 : index
    %c0_29 = arith.constant 0 : index
    %c0_30 = arith.constant 0 : index
    %c0_31 = arith.constant 0 : index
    %29 = vector.load %arg4[%c0_28, %c0_29, %c0_30, %c0_31] : memref<1x17x17x128xbf16, #tpu.memory_space<vmem>>, vector<1x16x16x128xbf16>
    %30 = vector.shape_cast %29 : vector<1x16x16x128xbf16> to vector<16x16x128xbf16>
    %31 = vector.shape_cast %30 : vector<16x16x128xbf16> to vector<256x128xbf16>
    %c4 = arith.constant 4 : index
    %c0_32 = arith.constant 0 : index
    %c0_33 = arith.constant 0 : index
    %32 = vector.load %arg5[%c4, %c0_32, %c0_33] : memref<9x128x128xbf16, #tpu.memory_space<vmem>>, vector<1x128x128xbf16>
    %33 = vector.shape_cast %32 : vector<1x128x128xbf16> to vector<128x128xbf16>
    %cst_34 = arith.constant dense<0.000000e+00> : vector<256x128xf32>
    %34 = tpu.matmul %31, %33, %cst_34 {dimension_numbers = #tpu.dot_dimension_numbers<[1], [0], [0], [1], [0, 0, 1, 1], [], []>} : vector<256x128xbf16>, vector<128x128xbf16>, vector<256x128xf32> -> vector<256x128xf32>
    %35 = arith.addf %28, %34 : vector<256x128xf32>
    %c0_35 = arith.constant 0 : index
    %c0_36 = arith.constant 0 : index
    %c1_37 = arith.constant 1 : index
    %c0_38 = arith.constant 0 : index
    %36 = vector.load %arg3[%c0_35, %c0_36, %c1_37, %c0_38] : memref<1x17x17x128xbf16, #tpu.memory_space<vmem>>, vector<1x16x16x128xbf16>
    %37 = vector.shape_cast %36 : vector<1x16x16x128xbf16> to vector<16x16x128xbf16>
    %38 = vector.shape_cast %37 : vector<16x16x128xbf16> to vector<256x128xbf16>
    %c5 = arith.constant 5 : index
    %c0_39 = arith.constant 0 : index
    %c0_40 = arith.constant 0 : index
    %39 = vector.load %arg5[%c5, %c0_39, %c0_40] : memref<9x128x128xbf16, #tpu.memory_space<vmem>>, vector<1x128x128xbf16>
    %40 = vector.shape_cast %39 : vector<1x128x128xbf16> to vector<128x128xbf16>
    %cst_41 = arith.constant dense<0.000000e+00> : vector<256x128xf32>
    %41 = tpu.matmul %38, %40, %cst_41 {dimension_numbers = #tpu.dot_dimension_numbers<[1], [0], [0], [1], [0, 0, 1, 1], [], []>} : vector<256x128xbf16>, vector<128x128xbf16>, vector<256x128xf32> -> vector<256x128xf32>
    %42 = arith.addf %35, %41 : vector<256x128xf32>
    %c0_42 = arith.constant 0 : index
    %c1_43 = arith.constant 1 : index
    %c0_44 = arith.constant 0 : index
    %c0_45 = arith.constant 0 : index
    %43 = vector.load %arg1[%c0_42, %c1_43, %c0_44, %c0_45] : memref<1x17x17x128xbf16, #tpu.memory_space<vmem>>, vector<1x16x16x128xbf16>
    %44 = vector.shape_cast %43 : vector<1x16x16x128xbf16> to vector<16x16x128xbf16>
    %45 = vector.shape_cast %44 : vector<16x16x128xbf16> to vector<256x128xbf16>
    %c6 = arith.constant 6 : index
    %c0_46 = arith.constant 0 : index
    %c0_47 = arith.constant 0 : index
    %46 = vector.load %arg5[%c6, %c0_46, %c0_47] : memref<9x128x128xbf16, #tpu.memory_space<vmem>>, vector<1x128x128xbf16>
    %47 = vector.shape_cast %46 : vector<1x128x128xbf16> to vector<128x128xbf16>
    %cst_48 = arith.constant dense<0.000000e+00> : vector<256x128xf32>
    %48 = tpu.matmul %45, %47, %cst_48 {dimension_numbers = #tpu.dot_dimension_numbers<[1], [0], [0], [1], [0, 0, 1, 1], [], []>} : vector<256x128xbf16>, vector<128x128xbf16>, vector<256x128xf32> -> vector<256x128xf32>
    %49 = arith.addf %42, %48 : vector<256x128xf32>
    %c0_49 = arith.constant 0 : index
    %c1_50 = arith.constant 1 : index
    %c0_51 = arith.constant 0 : index
    %c0_52 = arith.constant 0 : index
    %50 = vector.load %arg2[%c0_49, %c1_50, %c0_51, %c0_52] : memref<1x17x17x128xbf16, #tpu.memory_space<vmem>>, vector<1x16x16x128xbf16>
    %51 = vector.shape_cast %50 : vector<1x16x16x128xbf16> to vector<16x16x128xbf16>
    %52 = vector.shape_cast %51 : vector<16x16x128xbf16> to vector<256x128xbf16>
    %c7 = arith.constant 7 : index
    %c0_53 = arith.constant 0 : index
    %c0_54 = arith.constant 0 : index
    %53 = vector.load %arg5[%c7, %c0_53, %c0_54] : memref<9x128x128xbf16, #tpu.memory_space<vmem>>, vector<1x128x128xbf16>
    %54 = vector.shape_cast %53 : vector<1x128x128xbf16> to vector<128x128xbf16>
    %cst_55 = arith.constant dense<0.000000e+00> : vector<256x128xf32>
    %55 = tpu.matmul %52, %54, %cst_55 {dimension_numbers = #tpu.dot_dimension_numbers<[1], [0], [0], [1], [0, 0, 1, 1], [], []>} : vector<256x128xbf16>, vector<128x128xbf16>, vector<256x128xf32> -> vector<256x128xf32>
    %56 = arith.addf %49, %55 : vector<256x128xf32>
    %c0_56 = arith.constant 0 : index
    %c1_57 = arith.constant 1 : index
    %c1_58 = arith.constant 1 : index
    %c0_59 = arith.constant 0 : index
    %57 = vector.load %arg1[%c0_56, %c1_57, %c1_58, %c0_59] : memref<1x17x17x128xbf16, #tpu.memory_space<vmem>>, vector<1x16x16x128xbf16>
    %58 = vector.shape_cast %57 : vector<1x16x16x128xbf16> to vector<16x16x128xbf16>
    %59 = vector.shape_cast %58 : vector<16x16x128xbf16> to vector<256x128xbf16>
    %c8 = arith.constant 8 : index
    %c0_60 = arith.constant 0 : index
    %c0_61 = arith.constant 0 : index
    %60 = vector.load %arg5[%c8, %c0_60, %c0_61] : memref<9x128x128xbf16, #tpu.memory_space<vmem>>, vector<1x128x128xbf16>
    %61 = vector.shape_cast %60 : vector<1x128x128xbf16> to vector<128x128xbf16>
    %cst_62 = arith.constant dense<0.000000e+00> : vector<256x128xf32>
    %62 = tpu.matmul %59, %61, %cst_62 {dimension_numbers = #tpu.dot_dimension_numbers<[1], [0], [0], [1], [0, 0, 1, 1], [], []>} : vector<256x128xbf16>, vector<128x128xbf16>, vector<256x128xf32> -> vector<256x128xf32>
    %63 = arith.addf %56, %62 : vector<256x128xf32>
    %c0_63 = arith.constant 0 : index
    %c0_64 = arith.constant 0 : index
    %64 = vector.load %arg6[%c0_63, %c0_64] : memref<1x128xf32, #tpu.memory_space<vmem>>, vector<1x128xf32>
    %65 = vector.broadcast %64 : vector<1x128xf32> to vector<256x128xf32>
    %66 = arith.addf %63, %65 : vector<256x128xf32>
    %cst_65 = arith.constant 0.000000e+00 : f32
    %67 = vector.broadcast %cst_65 : f32 to vector<256x128xf32>
    %68 = arith.maximumf %66, %67 : vector<256x128xf32>
    %69 = arith.truncf %68 : vector<256x128xf32> to vector<256x128xbf16>
    %c0_66 = arith.constant 0 : index
    %c0_67 = arith.constant 0 : index
    %c0_68 = arith.constant 0 : index
    %70 = vector.load %arg7[%c0_66, %c0_67, %c0_68] : memref<1x256x128xbf16, #tpu.memory_space<vmem>>, vector<1x256x128xbf16>
    %71 = vector.shape_cast %70 : vector<1x256x128xbf16> to vector<256x128xbf16>
    %72 = vector.shape_cast %69 : vector<256x128xbf16> to vector<1x256x128xbf16>
    tpu.vector_store %arg7[%c0_66, %c0_67, %c0_68], %72 {strides = array<i32>} : memref<1x256x128xbf16, #tpu.memory_space<vmem>>, vector<1x256x128xbf16>,
    return
  }
  func.func @transform_0(%arg0: i32) -> (i32, i32, i32, i32) {
    %c0_i32 = arith.constant 0 : i32
    %c0_i32_0 = arith.constant 0 : i32
    %c0_i32_1 = arith.constant 0 : i32
    %c0_i32_2 = arith.constant 0 : i32
    return %arg0, %c0_i32, %c0_i32_0, %c0_i32_1 : i32, i32, i32, i32
  }
  func.func @transform_1(%arg0: i32) -> (i32, i32, i32, i32) {
    %c0_i32 = arith.constant 0 : i32
    %c0_i32_0 = arith.constant 0 : i32
    %c0_i32_1 = arith.constant 0 : i32
    %c0_i32_2 = arith.constant 0 : i32
    return %arg0, %c0_i32, %c0_i32_0, %c0_i32_1 : i32, i32, i32, i32
  }
  func.func @transform_2(%arg0: i32) -> (i32, i32, i32, i32) {
    %c0_i32 = arith.constant 0 : i32
    %c0_i32_0 = arith.constant 0 : i32
    %c0_i32_1 = arith.constant 0 : i32
    %c0_i32_2 = arith.constant 0 : i32
    return %arg0, %c0_i32, %c0_i32_0, %c0_i32_1 : i32, i32, i32, i32
  }
  func.func @transform_3(%arg0: i32) -> (i32, i32, i32, i32) {
    %c0_i32 = arith.constant 0 : i32
    %c0_i32_0 = arith.constant 0 : i32
    %c0_i32_1 = arith.constant 0 : i32
    %c0_i32_2 = arith.constant 0 : i32
    return %arg0, %c0_i32, %c0_i32_0, %c0_i32_1 : i32, i32, i32, i32
  }
  func.func @transform_4(%arg0: i32) -> (i32, i32, i32) {
    %c0_i32 = arith.constant 0 : i32
    %c0_i32_0 = arith.constant 0 : i32
    %c0_i32_1 = arith.constant 0 : i32
    %c0_i32_2 = arith.constant 0 : i32
    return %c0_i32, %c0_i32_0, %c0_i32_1 : i32, i32, i32
  }
  func.func @transform_5(%arg0: i32) -> (i32, i32) {
    %c0_i32 = arith.constant 0 : i32
    %c0_i32_0 = arith.constant 0 : i32
    %c0_i32_1 = arith.constant 0 : i32
    return %c0_i32, %c0_i32_0 : i32, i32
  }
  func.func @transform_6(%arg0: i32) -> (i32, i32, i32) {
    %c0_i32 = arith.constant 0 : i32
    %c0_i32_0 = arith.constant 0 : i32
    %c0_i32_1 = arith.constant 0 : i32
    return %arg0, %c0_i32, %c0_i32_0 : i32, i32, i32
  }
}

module attributes {stable_mosaic.version = 11 : i64} {
  func.func @_pool_embed_kernel(%arg0: i32, %arg1: memref<128x128xbf16, #tpu.memory_space<vmem>>, %arg2: memref<2x128xbf16, #tpu.memory_space<vmem>>, %arg3: memref<128x128xbf16, #tpu.memory_space<vmem>>, %arg4: memref<1x128xf32, #tpu.memory_space<vmem>>, %arg5: memref<2x128xf32, #tpu.memory_space<vmem>>) attributes {dimension_semantics = [#tpu.dimension_semantics<parallel>], iteration_bounds = array<i64: 1>, scalar_prefetch = 0 : i64, scratch_operands = 0 : i64, tpu.core_type = #tpu.core_type<tc>, window_params = [{transform_indices = @transform_0, window_bounds = array<i64: 128, 128>}, {pipeline_mode = #tpu.pipeline_mode<synchronous>, transform_indices = @transform_1, window_bounds = array<i64: 2, 128>}, {pipeline_mode = #tpu.pipeline_mode<synchronous>, transform_indices = @transform_2, window_bounds = array<i64: 128, 128>}, {pipeline_mode = #tpu.pipeline_mode<synchronous>, transform_indices = @transform_3, window_bounds = array<i64: 1, 128>}, {transform_indices = @transform_4, window_bounds = array<i64: 2, 128>}]} {
    %c0 = arith.constant 0 : index
    %c0_0 = arith.constant 0 : index
    %0 = vector.load %arg2[%c0, %c0_0] : memref<2x128xbf16, #tpu.memory_space<vmem>>, vector<2x128xbf16>
    %c0_1 = arith.constant 0 : index
    %c0_2 = arith.constant 0 : index
    %1 = vector.load %arg1[%c0_1, %c0_2] : memref<128x128xbf16, #tpu.memory_space<vmem>>, vector<128x128xbf16>
    %cst = arith.constant dense<0.000000e+00> : vector<2x128xf32>
    %2 = tpu.matmul %0, %1, %cst {dimension_numbers = #tpu.dot_dimension_numbers<[1], [0], [0], [1], [0, 0, 1, 1], [], []>} : vector<2x128xbf16>, vector<128x128xbf16>, vector<2x128xf32> -> vector<2x128xf32>
    %3 = arith.truncf %2 : vector<2x128xf32> to vector<2x128xbf16>
    %c0_3 = arith.constant 0 : index
    %c0_4 = arith.constant 0 : index
    %4 = vector.load %arg3[%c0_3, %c0_4] : memref<128x128xbf16, #tpu.memory_space<vmem>>, vector<128x128xbf16>
    %cst_5 = arith.constant dense<0.000000e+00> : vector<2x128xf32>
    %5 = tpu.matmul %3, %4, %cst_5 {dimension_numbers = #tpu.dot_dimension_numbers<[1], [0], [0], [1], [0, 0, 1, 1], [], []>} : vector<2x128xbf16>, vector<128x128xbf16>, vector<2x128xf32> -> vector<2x128xf32>
    %c0_6 = arith.constant 0 : index
    %c0_7 = arith.constant 0 : index
    %6 = vector.load %arg4[%c0_6, %c0_7] : memref<1x128xf32, #tpu.memory_space<vmem>>, vector<1x128xf32>
    %7 = vector.broadcast %6 : vector<1x128xf32> to vector<2x128xf32>
    %8 = arith.addf %5, %7 : vector<2x128xf32>
    %c0_8 = arith.constant 0 : index
    %c0_9 = arith.constant 0 : index
    %9 = vector.load %arg5[%c0_8, %c0_9] : memref<2x128xf32, #tpu.memory_space<vmem>>, vector<2x128xf32>
    tpu.vector_store %arg5[%c0_8, %c0_9], %8 {strides = array<i32>} : memref<2x128xf32, #tpu.memory_space<vmem>>, vector<2x128xf32>,
    return
  }
  func.func @transform_0(%arg0: i32) -> (i32, i32) {
    %c0_i32 = arith.constant 0 : i32
    %c0_i32_0 = arith.constant 0 : i32
    return %arg0, %c0_i32 : i32, i32
  }
  func.func @transform_1(%arg0: i32) -> (i32, i32) {
    %c0_i32 = arith.constant 0 : i32
    %c0_i32_0 = arith.constant 0 : i32
    %c0_i32_1 = arith.constant 0 : i32
    return %c0_i32, %c0_i32_0 : i32, i32
  }
  func.func @transform_2(%arg0: i32) -> (i32, i32) {
    %c0_i32 = arith.constant 0 : i32
    %c0_i32_0 = arith.constant 0 : i32
    %c0_i32_1 = arith.constant 0 : i32
    return %c0_i32, %c0_i32_0 : i32, i32
  }
  func.func @transform_3(%arg0: i32) -> (i32, i32) {
    %c0_i32 = arith.constant 0 : i32
    %c0_i32_0 = arith.constant 0 : i32
    %c0_i32_1 = arith.constant 0 : i32
    return %c0_i32, %c0_i32_0 : i32, i32
  }
  func.func @transform_4(%arg0: i32) -> (i32, i32) {
    %c0_i32 = arith.constant 0 : i32
    %c0_i32_0 = arith.constant 0 : i32
    return %arg0, %c0_i32 : i32, i32
  }
}

module attributes {stable_mosaic.version = 11 : i64} {
  func.func @_conv3x3_s2_relu_kernel(%arg0: i32, %arg1: memref<1x9x9x128xbf16, #tpu.memory_space<vmem>>, %arg2: memref<1x9x9x128xbf16, #tpu.memory_space<vmem>>, %arg3: memref<1x9x9x128xbf16, #tpu.memory_space<vmem>>, %arg4: memref<1x9x9x128xbf16, #tpu.memory_space<vmem>>, %arg5: memref<9x128x128xbf16, #tpu.memory_space<vmem>>, %arg6: memref<1x128xf32, #tpu.memory_space<vmem>>, %arg7: memref<1x64x128xbf16, #tpu.memory_space<vmem>>) attributes {dimension_semantics = [#tpu.dimension_semantics<parallel>], iteration_bounds = array<i64: 2>, scalar_prefetch = 0 : i64, scratch_operands = 0 : i64, tpu.core_type = #tpu.core_type<tc>, window_params = [{transform_indices = @transform_0, window_bounds = array<i64: 1, 9, 9, 128>}, {transform_indices = @transform_1, window_bounds = array<i64: 1, 9, 9, 128>}, {transform_indices = @transform_2, window_bounds = array<i64: 1, 9, 9, 128>}, {transform_indices = @transform_3, window_bounds = array<i64: 1, 9, 9, 128>}, {pipeline_mode = #tpu.pipeline_mode<synchronous>, transform_indices = @transform_4, window_bounds = array<i64: 9, 128, 128>}, {pipeline_mode = #tpu.pipeline_mode<synchronous>, transform_indices = @transform_5, window_bounds = array<i64: 1, 128>}, {transform_indices = @transform_6, window_bounds = array<i64: 1, 64, 128>}]} {
    %cst = arith.constant 0.000000e+00 : f32
    %0 = vector.broadcast %cst : f32 to vector<64x128xf32>
    %c0 = arith.constant 0 : index
    %c0_0 = arith.constant 0 : index
    %c0_1 = arith.constant 0 : index
    %c0_2 = arith.constant 0 : index
    %1 = vector.load %arg1[%c0, %c0_0, %c0_1, %c0_2] : memref<1x9x9x128xbf16, #tpu.memory_space<vmem>>, vector<1x8x8x128xbf16>
    %2 = vector.shape_cast %1 : vector<1x8x8x128xbf16> to vector<8x8x128xbf16>
    %3 = vector.shape_cast %2 : vector<8x8x128xbf16> to vector<64x128xbf16>
    %c0_3 = arith.constant 0 : index
    %c0_4 = arith.constant 0 : index
    %c0_5 = arith.constant 0 : index
    %4 = vector.load %arg5[%c0_3, %c0_4, %c0_5] : memref<9x128x128xbf16, #tpu.memory_space<vmem>>, vector<1x128x128xbf16>
    %5 = vector.shape_cast %4 : vector<1x128x128xbf16> to vector<128x128xbf16>
    %cst_6 = arith.constant dense<0.000000e+00> : vector<64x128xf32>
    %6 = tpu.matmul %3, %5, %cst_6 {dimension_numbers = #tpu.dot_dimension_numbers<[1], [0], [0], [1], [0, 0, 1, 1], [], []>} : vector<64x128xbf16>, vector<128x128xbf16>, vector<64x128xf32> -> vector<64x128xf32>
    %7 = arith.addf %0, %6 : vector<64x128xf32>
    %c0_7 = arith.constant 0 : index
    %c0_8 = arith.constant 0 : index
    %c0_9 = arith.constant 0 : index
    %c0_10 = arith.constant 0 : index
    %8 = vector.load %arg2[%c0_7, %c0_8, %c0_9, %c0_10] : memref<1x9x9x128xbf16, #tpu.memory_space<vmem>>, vector<1x8x8x128xbf16>
    %9 = vector.shape_cast %8 : vector<1x8x8x128xbf16> to vector<8x8x128xbf16>
    %10 = vector.shape_cast %9 : vector<8x8x128xbf16> to vector<64x128xbf16>
    %c1 = arith.constant 1 : index
    %c0_11 = arith.constant 0 : index
    %c0_12 = arith.constant 0 : index
    %11 = vector.load %arg5[%c1, %c0_11, %c0_12] : memref<9x128x128xbf16, #tpu.memory_space<vmem>>, vector<1x128x128xbf16>
    %12 = vector.shape_cast %11 : vector<1x128x128xbf16> to vector<128x128xbf16>
    %cst_13 = arith.constant dense<0.000000e+00> : vector<64x128xf32>
    %13 = tpu.matmul %10, %12, %cst_13 {dimension_numbers = #tpu.dot_dimension_numbers<[1], [0], [0], [1], [0, 0, 1, 1], [], []>} : vector<64x128xbf16>, vector<128x128xbf16>, vector<64x128xf32> -> vector<64x128xf32>
    %14 = arith.addf %7, %13 : vector<64x128xf32>
    %c0_14 = arith.constant 0 : index
    %c0_15 = arith.constant 0 : index
    %c1_16 = arith.constant 1 : index
    %c0_17 = arith.constant 0 : index
    %15 = vector.load %arg1[%c0_14, %c0_15, %c1_16, %c0_17] : memref<1x9x9x128xbf16, #tpu.memory_space<vmem>>, vector<1x8x8x128xbf16>
    %16 = vector.shape_cast %15 : vector<1x8x8x128xbf16> to vector<8x8x128xbf16>
    %17 = vector.shape_cast %16 : vector<8x8x128xbf16> to vector<64x128xbf16>
    %c2 = arith.constant 2 : index
    %c0_18 = arith.constant 0 : index
    %c0_19 = arith.constant 0 : index
    %18 = vector.load %arg5[%c2, %c0_18, %c0_19] : memref<9x128x128xbf16, #tpu.memory_space<vmem>>, vector<1x128x128xbf16>
    %19 = vector.shape_cast %18 : vector<1x128x128xbf16> to vector<128x128xbf16>
    %cst_20 = arith.constant dense<0.000000e+00> : vector<64x128xf32>
    %20 = tpu.matmul %17, %19, %cst_20 {dimension_numbers = #tpu.dot_dimension_numbers<[1], [0], [0], [1], [0, 0, 1, 1], [], []>} : vector<64x128xbf16>, vector<128x128xbf16>, vector<64x128xf32> -> vector<64x128xf32>
    %21 = arith.addf %14, %20 : vector<64x128xf32>
    %c0_21 = arith.constant 0 : index
    %c0_22 = arith.constant 0 : index
    %c0_23 = arith.constant 0 : index
    %c0_24 = arith.constant 0 : index
    %22 = vector.load %arg3[%c0_21, %c0_22, %c0_23, %c0_24] : memref<1x9x9x128xbf16, #tpu.memory_space<vmem>>, vector<1x8x8x128xbf16>
    %23 = vector.shape_cast %22 : vector<1x8x8x128xbf16> to vector<8x8x128xbf16>
    %24 = vector.shape_cast %23 : vector<8x8x128xbf16> to vector<64x128xbf16>
    %c3 = arith.constant 3 : index
    %c0_25 = arith.constant 0 : index
    %c0_26 = arith.constant 0 : index
    %25 = vector.load %arg5[%c3, %c0_25, %c0_26] : memref<9x128x128xbf16, #tpu.memory_space<vmem>>, vector<1x128x128xbf16>
    %26 = vector.shape_cast %25 : vector<1x128x128xbf16> to vector<128x128xbf16>
    %cst_27 = arith.constant dense<0.000000e+00> : vector<64x128xf32>
    %27 = tpu.matmul %24, %26, %cst_27 {dimension_numbers = #tpu.dot_dimension_numbers<[1], [0], [0], [1], [0, 0, 1, 1], [], []>} : vector<64x128xbf16>, vector<128x128xbf16>, vector<64x128xf32> -> vector<64x128xf32>
    %28 = arith.addf %21, %27 : vector<64x128xf32>
    %c0_28 = arith.constant 0 : index
    %c0_29 = arith.constant 0 : index
    %c0_30 = arith.constant 0 : index
    %c0_31 = arith.constant 0 : index
    %29 = vector.load %arg4[%c0_28, %c0_29, %c0_30, %c0_31] : memref<1x9x9x128xbf16, #tpu.memory_space<vmem>>, vector<1x8x8x128xbf16>
    %30 = vector.shape_cast %29 : vector<1x8x8x128xbf16> to vector<8x8x128xbf16>
    %31 = vector.shape_cast %30 : vector<8x8x128xbf16> to vector<64x128xbf16>
    %c4 = arith.constant 4 : index
    %c0_32 = arith.constant 0 : index
    %c0_33 = arith.constant 0 : index
    %32 = vector.load %arg5[%c4, %c0_32, %c0_33] : memref<9x128x128xbf16, #tpu.memory_space<vmem>>, vector<1x128x128xbf16>
    %33 = vector.shape_cast %32 : vector<1x128x128xbf16> to vector<128x128xbf16>
    %cst_34 = arith.constant dense<0.000000e+00> : vector<64x128xf32>
    %34 = tpu.matmul %31, %33, %cst_34 {dimension_numbers = #tpu.dot_dimension_numbers<[1], [0], [0], [1], [0, 0, 1, 1], [], []>} : vector<64x128xbf16>, vector<128x128xbf16>, vector<64x128xf32> -> vector<64x128xf32>
    %35 = arith.addf %28, %34 : vector<64x128xf32>
    %c0_35 = arith.constant 0 : index
    %c0_36 = arith.constant 0 : index
    %c1_37 = arith.constant 1 : index
    %c0_38 = arith.constant 0 : index
    %36 = vector.load %arg3[%c0_35, %c0_36, %c1_37, %c0_38] : memref<1x9x9x128xbf16, #tpu.memory_space<vmem>>, vector<1x8x8x128xbf16>
    %37 = vector.shape_cast %36 : vector<1x8x8x128xbf16> to vector<8x8x128xbf16>
    %38 = vector.shape_cast %37 : vector<8x8x128xbf16> to vector<64x128xbf16>
    %c5 = arith.constant 5 : index
    %c0_39 = arith.constant 0 : index
    %c0_40 = arith.constant 0 : index
    %39 = vector.load %arg5[%c5, %c0_39, %c0_40] : memref<9x128x128xbf16, #tpu.memory_space<vmem>>, vector<1x128x128xbf16>
    %40 = vector.shape_cast %39 : vector<1x128x128xbf16> to vector<128x128xbf16>
    %cst_41 = arith.constant dense<0.000000e+00> : vector<64x128xf32>
    %41 = tpu.matmul %38, %40, %cst_41 {dimension_numbers = #tpu.dot_dimension_numbers<[1], [0], [0], [1], [0, 0, 1, 1], [], []>} : vector<64x128xbf16>, vector<128x128xbf16>, vector<64x128xf32> -> vector<64x128xf32>
    %42 = arith.addf %35, %41 : vector<64x128xf32>
    %c0_42 = arith.constant 0 : index
    %c1_43 = arith.constant 1 : index
    %c0_44 = arith.constant 0 : index
    %c0_45 = arith.constant 0 : index
    %43 = vector.load %arg1[%c0_42, %c1_43, %c0_44, %c0_45] : memref<1x9x9x128xbf16, #tpu.memory_space<vmem>>, vector<1x8x8x128xbf16>
    %44 = vector.shape_cast %43 : vector<1x8x8x128xbf16> to vector<8x8x128xbf16>
    %45 = vector.shape_cast %44 : vector<8x8x128xbf16> to vector<64x128xbf16>
    %c6 = arith.constant 6 : index
    %c0_46 = arith.constant 0 : index
    %c0_47 = arith.constant 0 : index
    %46 = vector.load %arg5[%c6, %c0_46, %c0_47] : memref<9x128x128xbf16, #tpu.memory_space<vmem>>, vector<1x128x128xbf16>
    %47 = vector.shape_cast %46 : vector<1x128x128xbf16> to vector<128x128xbf16>
    %cst_48 = arith.constant dense<0.000000e+00> : vector<64x128xf32>
    %48 = tpu.matmul %45, %47, %cst_48 {dimension_numbers = #tpu.dot_dimension_numbers<[1], [0], [0], [1], [0, 0, 1, 1], [], []>} : vector<64x128xbf16>, vector<128x128xbf16>, vector<64x128xf32> -> vector<64x128xf32>
    %49 = arith.addf %42, %48 : vector<64x128xf32>
    %c0_49 = arith.constant 0 : index
    %c1_50 = arith.constant 1 : index
    %c0_51 = arith.constant 0 : index
    %c0_52 = arith.constant 0 : index
    %50 = vector.load %arg2[%c0_49, %c1_50, %c0_51, %c0_52] : memref<1x9x9x128xbf16, #tpu.memory_space<vmem>>, vector<1x8x8x128xbf16>
    %51 = vector.shape_cast %50 : vector<1x8x8x128xbf16> to vector<8x8x128xbf16>
    %52 = vector.shape_cast %51 : vector<8x8x128xbf16> to vector<64x128xbf16>
    %c7 = arith.constant 7 : index
    %c0_53 = arith.constant 0 : index
    %c0_54 = arith.constant 0 : index
    %53 = vector.load %arg5[%c7, %c0_53, %c0_54] : memref<9x128x128xbf16, #tpu.memory_space<vmem>>, vector<1x128x128xbf16>
    %54 = vector.shape_cast %53 : vector<1x128x128xbf16> to vector<128x128xbf16>
    %cst_55 = arith.constant dense<0.000000e+00> : vector<64x128xf32>
    %55 = tpu.matmul %52, %54, %cst_55 {dimension_numbers = #tpu.dot_dimension_numbers<[1], [0], [0], [1], [0, 0, 1, 1], [], []>} : vector<64x128xbf16>, vector<128x128xbf16>, vector<64x128xf32> -> vector<64x128xf32>
    %56 = arith.addf %49, %55 : vector<64x128xf32>
    %c0_56 = arith.constant 0 : index
    %c1_57 = arith.constant 1 : index
    %c1_58 = arith.constant 1 : index
    %c0_59 = arith.constant 0 : index
    %57 = vector.load %arg1[%c0_56, %c1_57, %c1_58, %c0_59] : memref<1x9x9x128xbf16, #tpu.memory_space<vmem>>, vector<1x8x8x128xbf16>
    %58 = vector.shape_cast %57 : vector<1x8x8x128xbf16> to vector<8x8x128xbf16>
    %59 = vector.shape_cast %58 : vector<8x8x128xbf16> to vector<64x128xbf16>
    %c8 = arith.constant 8 : index
    %c0_60 = arith.constant 0 : index
    %c0_61 = arith.constant 0 : index
    %60 = vector.load %arg5[%c8, %c0_60, %c0_61] : memref<9x128x128xbf16, #tpu.memory_space<vmem>>, vector<1x128x128xbf16>
    %61 = vector.shape_cast %60 : vector<1x128x128xbf16> to vector<128x128xbf16>
    %cst_62 = arith.constant dense<0.000000e+00> : vector<64x128xf32>
    %62 = tpu.matmul %59, %61, %cst_62 {dimension_numbers = #tpu.dot_dimension_numbers<[1], [0], [0], [1], [0, 0, 1, 1], [], []>} : vector<64x128xbf16>, vector<128x128xbf16>, vector<64x128xf32> -> vector<64x128xf32>
    %63 = arith.addf %56, %62 : vector<64x128xf32>
    %c0_63 = arith.constant 0 : index
    %c0_64 = arith.constant 0 : index
    %64 = vector.load %arg6[%c0_63, %c0_64] : memref<1x128xf32, #tpu.memory_space<vmem>>, vector<1x128xf32>
    %65 = vector.broadcast %64 : vector<1x128xf32> to vector<64x128xf32>
    %66 = arith.addf %63, %65 : vector<64x128xf32>
    %cst_65 = arith.constant 0.000000e+00 : f32
    %67 = vector.broadcast %cst_65 : f32 to vector<64x128xf32>
    %68 = arith.maximumf %66, %67 : vector<64x128xf32>
    %69 = arith.truncf %68 : vector<64x128xf32> to vector<64x128xbf16>
    %c0_66 = arith.constant 0 : index
    %c0_67 = arith.constant 0 : index
    %c0_68 = arith.constant 0 : index
    %70 = vector.load %arg7[%c0_66, %c0_67, %c0_68] : memref<1x64x128xbf16, #tpu.memory_space<vmem>>, vector<1x64x128xbf16>
    %71 = vector.shape_cast %70 : vector<1x64x128xbf16> to vector<64x128xbf16>
    %72 = vector.shape_cast %69 : vector<64x128xbf16> to vector<1x64x128xbf16>
    tpu.vector_store %arg7[%c0_66, %c0_67, %c0_68], %72 {strides = array<i32>} : memref<1x64x128xbf16, #tpu.memory_space<vmem>>, vector<1x64x128xbf16>,
    return
  }
  func.func @transform_0(%arg0: i32) -> (i32, i32, i32, i32) {
    %c0_i32 = arith.constant 0 : i32
    %c0_i32_0 = arith.constant 0 : i32
    %c0_i32_1 = arith.constant 0 : i32
    %c0_i32_2 = arith.constant 0 : i32
    return %arg0, %c0_i32, %c0_i32_0, %c0_i32_1 : i32, i32, i32, i32
  }
  func.func @transform_1(%arg0: i32) -> (i32, i32, i32, i32) {
    %c0_i32 = arith.constant 0 : i32
    %c0_i32_0 = arith.constant 0 : i32
    %c0_i32_1 = arith.constant 0 : i32
    %c0_i32_2 = arith.constant 0 : i32
    return %arg0, %c0_i32, %c0_i32_0, %c0_i32_1 : i32, i32, i32, i32
  }
  func.func @transform_2(%arg0: i32) -> (i32, i32, i32, i32) {
    %c0_i32 = arith.constant 0 : i32
    %c0_i32_0 = arith.constant 0 : i32
    %c0_i32_1 = arith.constant 0 : i32
    %c0_i32_2 = arith.constant 0 : i32
    return %arg0, %c0_i32, %c0_i32_0, %c0_i32_1 : i32, i32, i32, i32
  }
  func.func @transform_3(%arg0: i32) -> (i32, i32, i32, i32) {
    %c0_i32 = arith.constant 0 : i32
    %c0_i32_0 = arith.constant 0 : i32
    %c0_i32_1 = arith.constant 0 : i32
    %c0_i32_2 = arith.constant 0 : i32
    return %arg0, %c0_i32, %c0_i32_0, %c0_i32_1 : i32, i32, i32, i32
  }
  func.func @transform_4(%arg0: i32) -> (i32, i32, i32) {
    %c0_i32 = arith.constant 0 : i32
    %c0_i32_0 = arith.constant 0 : i32
    %c0_i32_1 = arith.constant 0 : i32
    %c0_i32_2 = arith.constant 0 : i32
    return %c0_i32, %c0_i32_0, %c0_i32_1 : i32, i32, i32
  }
  func.func @transform_5(%arg0: i32) -> (i32, i32) {
    %c0_i32 = arith.constant 0 : i32
    %c0_i32_0 = arith.constant 0 : i32
    %c0_i32_1 = arith.constant 0 : i32
    return %c0_i32, %c0_i32_0 : i32, i32
  }
  func.func @transform_6(%arg0: i32) -> (i32, i32, i32) {
    %c0_i32 = arith.constant 0 : i32
    %c0_i32_0 = arith.constant 0 : i32
    %c0_i32_1 = arith.constant 0 : i32
    return %arg0, %c0_i32, %c0_i32_0 : i32, i32, i32
  }
}

</mosaic_0001>

<llo_original>
// kernel: _lambda_.5
$region0: #{_lambda_.5}
  #allocation0 [shape = 'u32[]', space=smem, size = 0x4, offset = 0x4, fixed_abs, tag = 'smem constant byte address 0x4 - core index']
  #allocation1 [shape = 'u32[144,128]{1,0:T(1,128)}', space=vmem, size = 0x12000, scoped, tag = 'internal scratch']
  %s0 = inlined_call_operand.vmem [shape: bf16[128,128], index: 0, kind: input, shape index: {}]
  %s1 = inlined_call_operand.vmem [shape: bf16[2,128], index: 1, kind: input, shape index: {}]
  %s2 = inlined_call_operand.vmem [shape: bf16[128,128], index: 2, kind: input, shape index: {}]
  %s3 = inlined_call_operand.vmem [shape: f32[1,128], index: 3, kind: input, shape index: {}]
  %s4 = inlined_call_operand.hbm [shape: f32[2,128], index: 4, kind: output, shape index: {}]
  %s5 = sld [smem:[#allocation0]]
  $region26: #{_lambda_.5} parent=0
    _
  %s7 = ssub.s32 1, %s5
  %s8 = scalar_select 0, %s7, %s5
  $region1: #{_lambda_.5} parent=0
    #allocation2 [shape = 'u8[1024]{0}', space=vmem, size = 0x400, scoped, tag = 'output window, operand 0, single buffered']
    #allocation3 [shape = 's32[1]{0}', space=sflag, size = 0x4, scoped, tag = 'scoped memory for _lambda_.5']
    %9 = vsyncpa [#allocation3], 0
    // Predicated region
    $region2: #{_lambda_.5} parent=1 // pred_check
      _
    $region3: #{_lambda_.5} parent=1 // pred_check_branch
      %11 = sbr.rel (0) target = $region5
    $region4: #{_lambda_.5} parent=1 // pred_region
      _
    $region5: #{_lambda_.5} parent=1 // pred_fallthru
      _
    // Predicated region
    $region6: #{_lambda_.5} parent=1 // pred_check
      _
    $region7: #{_lambda_.5} parent=1 // pred_check_branch
      %13 = sbr.rel (0) target = $region9
    $region8: #{_lambda_.5} parent=1 // pred_region
      _
    $region9: #{_lambda_.5} parent=1 // pred_fallthru
      _
    // Predicated region
    $region10: #{_lambda_.5} parent=1 // pred_check
      _
    $region11: #{_lambda_.5} parent=1 // pred_check_branch
      %15 = sbr.rel (0) target = $region13
    $region12: #{_lambda_.5} parent=1 // pred_region
      _
    $region13: #{_lambda_.5} parent=1 // pred_fallthru
      _
    // Predicated region
    $region14: #{_lambda_.5} parent=1 // pred_check
      _
    $region15: #{_lambda_.5} parent=1 // pred_check_branch
      %17 = sbr.rel (0) target = $region17
    $region16: #{_lambda_.5} parent=1 // pred_region
      _
    $region17: #{_lambda_.5} parent=1 // pred_fallthru
      _
    %v19 = vld [vmem:[%s1] sm:$0x1]
    %v20 = vld [vmem:[%s0] sm:$0xf]
    %v21 = vld [vmem:[%s0 + $0x4] sm:$0xf]
    %v22 = vld [vmem:[%s0 + $0x8] sm:$0xf]
    %v23 = vld [vmem:[%s0 + $0xc] sm:$0xf]
    %v24 = vld [vmem:[%s0 + $0x10] sm:$0xf]
    %v25 = vld [vmem:[%s0 + $0x14] sm:$0xf]
    %v26 = vld [vmem:[%s0 + $0x18] sm:$0xf]
    %v27 = vld [vmem:[%s0 + $0x1c] sm:$0xf]
    %v28 = vld [vmem:[%s0 + $0x20] sm:$0xf]
    %v29 = vld [vmem:[%s0 + $0x24] sm:$0xf]
    %v30 = vld [vmem:[%s0 + $0x28] sm:$0xf]
    %v31 = vld [vmem:[%s0 + $0x2c] sm:$0xf]
    %v32 = vld [vmem:[%s0 + $0x30] sm:$0xf]
    %v33 = vld [vmem:[%s0 + $0x34] sm:$0xf]
    %v34 = vld [vmem:[%s0 + $0x38] sm:$0xf]
    %v35 = vld [vmem:[%s0 + $0x3c] sm:$0xf]
    %v52 = vunpack.c.l.b16 %v20
    %v53 = vunpack.c.l.b16 %v21
    %v54 = vunpack.c.l.b16 %v22
    %v55 = vunpack.c.l.b16 %v23
    %v56 = vunpack.c.l.b16 %v24
    %v57 = vunpack.c.l.b16 %v25
    %v58 = vunpack.c.l.b16 %v26
    %v59 = vunpack.c.l.b16 %v27
    %v60 = vunpack.c.l.b16 %v28
    %v61 = vunpack.c.l.b16 %v29
    %v62 = vunpack.c.l.b16 %v30
    %v63 = vunpack.c.l.b16 %v31
    %v64 = vunpack.c.l.b16 %v32
    %v65 = vunpack.c.l.b16 %v33
    %v66 = vunpack.c.l.b16 %v34
    %v67 = vunpack.c.l.b16 %v35
    %v68 = vpack.c.b16 %v53, %v52
    %v69 = vpack.c.b16 %v55, %v54
    %v70 = vpack.c.b16 %v57, %v56
    %v71 = vpack.c.b16 %v59, %v58
    %v72 = vpack.c.b16 %v61, %v60
    %v73 = vpack.c.b16 %v63, %v62
    %v74 = vpack.c.b16 %v65, %v64
    %v75 = vpack.c.b16 %v67, %v66
    %84 = vmatprep.subr.bf16.mxu0 0
    %85 = vmatpush1.bf16.msra.mxu0 %v68
    %86 = vmatprep.subr.bf16.mxu0 0
    %87 = vmatpush1.bf16.msra.mxu0 %v69
    %88 = vmatprep.subr.bf16.mxu0 0
    %89 = vmatpush1.bf16.msra.mxu0 %v70
    %90 = vmatprep.subr.bf16.mxu0 0
    %91 = vmatpush1.bf16.msra.mxu0 %v71
    %92 = vmatprep.subr.bf16.mxu0 0
    %93 = vmatpush1.bf16.msra.mxu0 %v72
    %94 = vmatprep.subr.bf16.mxu0 0
    %95 = vmatpush1.bf16.msra.mxu0 %v73
    %96 = vmatprep.subr.bf16.mxu0 0
    %97 = vmatpush1.bf16.msra.mxu0 %v74
    %98 = vmatprep.subr.bf16.mxu0 0
    %99 = vmatpush1.bf16.msra.mxu0 %v75
    %100 = vmatprep.subr.bf16.mxu0 0
    %101 = vmatpush1.bf16.msra.mxu0 0
    %102 = vmatprep.subr.bf16.mxu0 0
    %103 = vmatpush1.bf16.msra.mxu0 0
    %104 = vmatprep.subr.bf16.mxu0 0
    %105 = vmatpush1.bf16.msra.mxu0 0
    %106 = vmatprep.subr.bf16.mxu0 0
    %107 = vmatpush1.bf16.msra.mxu0 0
    %108 = vmatprep.subr.bf16.mxu0 0
    %109 = vmatpush1.bf16.msra.mxu0 0
    %110 = vmatprep.subr.bf16.mxu0 0
    %111 = vmatpush1.bf16.msra.mxu0 0
    %112 = vmatprep.subr.bf16.mxu0 0
    %113 = vmatpush1.bf16.msra.mxu0 0
    %114 = vmatprep.subr.bf16.mxu0 0
    %115 = vmatpush1.bf16.msra.mxu0 0
    %116 = vmatprep.mubr.bf16.mxu0 0
    %117 = vmatmul.mubr.bf16.gmra.mrb[0].mxu0 %v19
    %v118 = vpop.f32.mrb[0].mxu0
    %v119 = vadd.f32 0.0, %v118
    %v120 = vpop.f32.mrb[0].mxu0
    %v121 = vpop.f32.mrb[0].mxu0
    %v122 = vpop.f32.mrb[0].mxu0
    %123 = vdwg.mxu0
    %v124 = vpack.c.bf16 %v119, %v119
    %v125 = vld [vmem:[%s2] sm:$0xf]
    %v126 = vld [vmem:[%s2 + $0x4] sm:$0xf]
    %v127 = vld [vmem:[%s2 + $0x8] sm:$0xf]
    %v128 = vld [vmem:[%s2 + $0xc] sm:$0xf]
    %v129 = vld [vmem:[%s2 + $0x10] sm:$0xf]
    %v130 = vld [vmem:[%s2 + $0x14] sm:$0xf]
    %v131 = vld [vmem:[%s2 + $0x18] sm:$0xf]
    %v132 = vld [vmem:[%s2 + $0x1c] sm:$0xf]
    %v133 = vld [vmem:[%s2 + $0x20] sm:$0xf]
    %v134 = vld [vmem:[%s2 + $0x24] sm:$0xf]
    %v135 = vld [vmem:[%s2 + $0x28] sm:$0xf]
    %v136 = vld [vmem:[%s2 + $0x2c] sm:$0xf]
    %v137 = vld [vmem:[%s2 + $0x30] sm:$0xf]
    %v138 = vld [vmem:[%s2 + $0x34] sm:$0xf]
    %v139 = vld [vmem:[%s2 + $0x38] sm:$0xf]
    %v140 = vld [vmem:[%s2 + $0x3c] sm:$0xf]
    %v141 = vld [vmem:[%s3] sm:$0x1]
    %v143 = vlaneseq
    %v144 = vshrl.u32 %v143, 7
    %v145 = vsub.s32 0, %v144
    %v146 = vrot.slane %v141, %v145
    %v164 = vunpack.c.l.b16 %v125
    %v165 = vunpack.c.l.b16 %v126
    %v166 = vunpack.c.l.b16 %v127
    %v167 = vunpack.c.l.b16 %v128
    %v168 = vunpack.c.l.b16 %v129
    %v169 = vunpack.c.l.b16 %v130
    %v170 = vunpack.c.l.b16 %v131
    %v171 = vunpack.c.l.b16 %v132
    %v172 = vunpack.c.l.b16 %v133
    %v173 = vunpack.c.l.b16 %v134
    %v174 = vunpack.c.l.b16 %v135
    %v175 = vunpack.c.l.b16 %v136
    %v176 = vunpack.c.l.b16 %v137
    %v177 = vunpack.c.l.b16 %v138
    %v178 = vunpack.c.l.b16 %v139
    %v179 = vunpack.c.l.b16 %v140
    %v180 = vpack.c.b16 %v165, %v164
    %v181 = vpack.c.b16 %v167, %v166
    %v182 = vpack.c.b16 %v169, %v168
    %v183 = vpack.c.b16 %v171, %v170
    %v184 = vpack.c.b16 %v173, %v172
    %v185 = vpack.c.b16 %v175, %v174
    %v186 = vpack.c.b16 %v177, %v176
    %v187 = vpack.c.b16 %v179, %v178
    %196 = vmatprep.subr.bf16.mxu0 0
    %197 = vmatpush1.bf16.msra.mxu0 %v180
    %198 = vmatprep.subr.bf16.mxu0 0
    %199 = vmatpush1.bf16.msra.mxu0 %v181
    %200 = vmatprep.subr.bf16.mxu0 0
    %201 = vmatpush1.bf16.msra.mxu0 %v182
    %202 = vmatprep.subr.bf16.mxu0 0
    %203 = vmatpush1.bf16.msra.mxu0 %v183
    %204 = vmatprep.subr.bf16.mxu0 0
    %205 = vmatpush1.bf16.msra.mxu0 %v184
    %206 = vmatprep.subr.bf16.mxu0 0
    %207 = vmatpush1.bf16.msra.mxu0 %v185
    %208 = vmatprep.subr.bf16.mxu0 0
    %209 = vmatpush1.bf16.msra.mxu0 %v186
    %210 = vmatprep.subr.bf16.mxu0 0
    %211 = vmatpush1.bf16.msra.mxu0 %v187
    %212 = vmatprep.subr.bf16.mxu0 0
    %213 = vmatpush1.bf16.msra.mxu0 0
    %214 = vmatprep.subr.bf16.mxu0 0
    %215 = vmatpush1.bf16.msra.mxu0 0
    %216 = vmatprep.subr.bf16.mxu0 0
    %217 = vmatpush1.bf16.msra.mxu0 0
    %218 = vmatprep.subr.bf16.mxu0 0
    %219 = vmatpush1.bf16.msra.mxu0 0
    %220 = vmatprep.subr.bf16.mxu0 0
    %221 = vmatpush1.bf16.msra.mxu0 0
    %222 = vmatprep.subr.bf16.mxu0 0
    %223 = vmatpush1.bf16.msra.mxu0 0
    %224 = vmatprep.subr.bf16.mxu0 0
    %225 = vmatpush1.bf16.msra.mxu0 0
    %226 = vmatprep.subr.bf16.mxu0 0
    %227 = vmatpush1.bf16.msra.mxu0 0
    %228 = vmatprep.mubr.bf16.mxu0 0
    %229 = vmatmul.mubr.bf16.gmra.mrb[0].mxu0 %v124
    %v230 = vpop.f32.mrb[0].mxu0
    %v231 = vadd.f32 %v146, %v230
    %v232 = vpop.f32.mrb[0].mxu0
    %v233 = vpop.f32.mrb[0].mxu0
    %v234 = vpop.f32.mrb[0].mxu0
    %235 = vdwg.mxu0
    %236 = vst [vmem:[#allocation2] sm:$0x3] %v231
    // Predicated region
    $region18: #{_lambda_.5} parent=1 // pred_check
      _
    $region19: #{_lambda_.5} parent=1 // pred_check_branch
      %238 = sbr.rel (0) target = $region21
    $region20: #{_lambda_.5} parent=1 // pred_region
      %s240 = ssub.s32 32, 32
      %241 = vsyncadd [#allocation3], %s240
      %s243 = sshll.u32 [#allocation2], 4
      %s244 = int_to_ptr.vmem [resolvable:$true] %s243
      %246 = dma.vmem_to_hbm [thread:$0]  %s244, 32, %s4, [#allocation3]
    $region21: #{_lambda_.5} parent=1 // pred_fallthru
      _
    // Predicated region
    $region22: #{_lambda_.5} parent=1 // pred_check
      _
    $region23: #{_lambda_.5} parent=1 // pred_check_branch
      %248 = sbr.rel (0) target = $region25
    $region24: #{_lambda_.5} parent=1 // pred_region
      %249 = dma.done [#allocation3], 32
    $region25: #{_lambda_.5} parent=1 // pred_fallthru
      _
    %250 = vsyncpa [#allocation3], 1

// kernel: _lambda_.4
$region0: #{_lambda_.4}
  #allocation0 [shape = 'u32[]', space=smem, size = 0x4, offset = 0x4, fixed_abs, tag = 'smem constant byte address 0x4 - core index']
  #allocation1 [shape = 'u32[144,128]{1,0:T(1,128)}', space=vmem, size = 0x12000, scoped, tag = 'internal scratch']
  %s0 = inlined_call_operand.vmem [shape: bf16[2,9,9,128], index: 0, kind: input, shape index: {}]
  %s1 = inlined_call_operand.vmem [shape: bf16[2,9,9,128], index: 1, kind: input, shape index: {}]
  %s2 = inlined_call_operand.vmem [shape: bf16[2,9,9,128], index: 2, kind: input, shape index: {}]
  %s3 = inlined_call_operand.vmem [shape: bf16[2,9,9,128], index: 3, kind: input, shape index: {}]
  %s4 = inlined_call_operand.vmem [shape: bf16[9,128,128], index: 4, kind: input, shape index: {}]
  %s5 = inlined_call_operand.vmem [shape: f32[1,128], index: 5, kind: input, shape index: {}]
  %s6 = inlined_call_operand.vmem [shape: bf16[2,64,128], index: 6, kind: output, shape index: {}]
  %s7 = sld [smem:[#allocation0]]
  $region57: #{_lambda_.4} parent=0
    _
  %s9 = ssub.s32 1, %s7
  %s10 = scalar_select 0, %s9, %s7
  loop: start=0, step=1, limit=4
  $region2: #{_lambda_.4} parent=0 // loop_pre_header
    _
  $region3: #{_lambda_.4} parent=0 // loop_header
    %s12 = sphi 0, %s16
    %p13 = scmp.ge.s32.totalorder %s12, 4
    %s22 = sphi 0, %s24
    %s25 = sphi 0, %s22
    %s26 = sphi 0, %s25
    %s42 = sphi 0, %s26
    %s48 = sphi 0, %s50
    %s51 = sphi 0, %s48
    %s52 = sphi 0, %s51
    %s68 = sphi 0, %s52
    %s74 = sphi 0, %s76
    %s77 = sphi 0, %s74
    %s78 = sphi 0, %s77
    %s94 = sphi 0, %s78
    %s100 = sphi 0, %s102
    %s103 = sphi 0, %s100
    %s104 = sphi 0, %s103
    %s120 = sphi 0, %s104
    %s124 = sphi 0, %s124
    %s126 = sphi 0, %s124
    %s127 = sphi 0, %s126
    %s141 = sphi 0, %s127
    %s145 = sphi 0, %s145
    %s147 = sphi 0, %s145
    %s148 = sphi 0, %s147
    %s162 = sphi 0, %s148
    %s168 = sphi 0, %s170
    %s171 = sphi 0, %s168
    %s172 = sphi 0, %s171
    %s188 = sphi 0, %s172
  $region4: #{_lambda_.4} parent=0 // loop_header_branch
    %15 = sbr.rel (%p13) target = $region8
  $region5: #{_lambda_.4} parent=0 // loop_body
    %s17 = ssub.s32 %s12, 1
    %s18 = ssub.s32 %s12, 2
    %s19 = sadd.s32 %s12, 1
    %s20 = ssub.s32 %s12, %s19
    %p21 = scmp.eq.s32.totalorder %s20, 0
    %s23 = sadd.s32 %s22, 1
    %s24 = scalar_select %p21, %s22, %s23
    %p27 = pneg %p21
    %p28 = scmp.eq.s32.totalorder %s12, 1
    %p29 = por %p27, %p28
    %p30 = scmp.ne.s32.totalorder %s22, %s25
    %p31 = scmp.eq.s32.totalorder %s12, 0
    %p32 = por %p30, %p31
    %p33 = scmp.ne.s32.totalorder %s22, %s25
    %p34 = scmp.eq.s32.totalorder %s17, 1
    %p35 = por %p33, %p34
    %p36 = scmp.ne.s32.totalorder %s25, %s26
    %p37 = scmp.eq.s32.totalorder %s17, 0
    %p38 = por %p36, %p37
    %p39 = scmp.ne.s32.totalorder %s25, %s26
    %p40 = scmp.eq.s32.totalorder %s18, 1
    %p41 = por %p39, %p40
    %p43 = scmp.ne.s32.totalorder %s26, %s42
    %p44 = scmp.eq.s32.totalorder %s18, 0
    %p45 = por %p43, %p44
    %s46 = ssub.s32 %s12, %s19
    %p47 = scmp.eq.s32.totalorder %s46, 0
    %s49 = sadd.s32 %s48, 1
    %s50 = scalar_select %p47, %s48, %s49
    %p53 = pneg %p47
    %p54 = scmp.eq.s32.totalorder %s12, 1
    %p55 = por %p53, %p54
    %p56 = scmp.ne.s32.totalorder %s48, %s51
    %p57 = scmp.eq.s32.totalorder %s12, 0
    %p58 = por %p56, %p57
    %p59 = scmp.ne.s32.totalorder %s48, %s51
    %p60 = scmp.eq.s32.totalorder %s17, 1
    %p61 = por %p59, %p60
    %p62 = scmp.ne.s32.totalorder %s51, %s52
    %p63 = scmp.eq.s32.totalorder %s17, 0
    %p64 = por %p62, %p63
    %p65 = scmp.ne.s32.totalorder %s51, %s52
    %p66 = scmp.eq.s32.totalorder %s18, 1
    %p67 = por %p65, %p66
    %p69 = scmp.ne.s32.totalorder %s52, %s68
    %p70 = scmp.eq.s32.totalorder %s18, 0
    %p71 = por %p69, %p70
    %s72 = ssub.s32 %s12, %s19
    %p73 = scmp.eq.s32.totalorder %s72, 0
    %s75 = sadd.s32 %s74, 1
    %s76 = scalar_select %p73, %s74, %s75
    %p79 = pneg %p73
    %p80 = scmp.eq.s32.totalorder %s12, 1
    %p81 = por %p79, %p80
    %p82 = scmp.ne.s32.totalorder %s74, %s77
    %p83 = scmp.eq.s32.totalorder %s12, 0
    %p84 = por %p82, %p83
    %p85 = scmp.ne.s32.totalorder %s74, %s77
    %p86 = scmp.eq.s32.totalorder %s17, 1
    %p87 = por %p85, %p86
    %p88 = scmp.ne.s32.totalorder %s77, %s78
    %p89 = scmp.eq.s32.totalorder %s17, 0
    %p90 = por %p88, %p89
    %p91 = scmp.ne.s32.totalorder %s77, %s78
    %p92 = scmp.eq.s32.totalorder %s18, 1
    %p93 = por %p91, %p92
    %p95 = scmp.ne.s32.totalorder %s78, %s94
    %p96 = scmp.eq.s32.totalorder %s18, 0
    %p97 = por %p95, %p96
    %s98 = ssub.s32 %s12, %s19
    %p99 = scmp.eq.s32.totalorder %s98, 0
    %s101 = sadd.s32 %s100, 1
    %s102 = scalar_select %p99, %s100, %s101
    %p105 = pneg %p99
    %p106 = scmp.eq.s32.totalorder %s12, 1
    %p107 = por %p105, %p106
    %p108 = scmp.ne.s32.totalorder %s100, %s103
    %p109 = scmp.eq.s32.totalorder %s12, 0
    %p110 = por %p108, %p109
    %p111 = scmp.ne.s32.totalorder %s100, %s103
    %p112 = scmp.eq.s32.totalorder %s17, 1
    %p113 = por %p111, %p112
    %p114 = scmp.ne.s32.totalorder %s103, %s104
    %p115 = scmp.eq.s32.totalorder %s17, 0
    %p116 = por %p114, %p115
    %p117 = scmp.ne.s32.totalorder %s103, %s104
    %p118 = scmp.eq.s32.totalorder %s18, 1
    %p119 = por %p117, %p118
    %p121 = scmp.ne.s32.totalorder %s104, %s120
    %p122 = scmp.eq.s32.totalorder %s18, 0
    %p123 = por %p121, %p122
    %s125 = sadd.s32 %s124, 1
    %p128 = scmp.eq.s32.totalorder %s12, 1
    %p129 = scmp.ne.s32.totalorder %s124, %s126
    %p130 = scmp.eq.s32.totalorder %s12, 0
    %p131 = por %p129, %p130
    %p132 = scmp.ne.s32.totalorder %s124, %s126
    %p133 = scmp.eq.s32.totalorder %s17, 1
    %p134 = por %p132, %p133
    %p135 = scmp.ne.s32.totalorder %s126, %s127
    %p136 = scmp.eq.s32.totalorder %s17, 0
    %p137 = por %p135, %p136
    %p138 = scmp.ne.s32.totalorder %s126, %s127
    %p139 = scmp.eq.s32.totalorder %s18, 1
    %p140 = por %p138, %p139
    %p142 = scmp.ne.s32.totalorder %s127, %s141
    %p143 = scmp.eq.s32.totalorder %s18, 0
    %p144 = por %p142, %p143
    %s146 = sadd.s32 %s145, 1
    %p149 = scmp.eq.s32.totalorder %s12, 1
    %p150 = scmp.ne.s32.totalorder %s145, %s147
    %p151 = scmp.eq.s32.totalorder %s12, 0
    %p152 = por %p150, %p151
    %p153 = scmp.ne.s32.totalorder %s145, %s147
    %p154 = scmp.eq.s32.totalorder %s17, 1
    %p155 = por %p153, %p154
    %p156 = scmp.ne.s32.totalorder %s147, %s148
    %p157 = scmp.eq.s32.totalorder %s17, 0
    %p158 = por %p156, %p157
    %p159 = scmp.ne.s32.totalorder %s147, %s148
    %p160 = scmp.eq.s32.totalorder %s18, 1
    %p161 = por %p159, %p160
    %p163 = scmp.ne.s32.totalorder %s148, %s162
    %p164 = scmp.eq.s32.totalorder %s18, 0
    %p165 = por %p163, %p164
    %s166 = ssub.s32 %s12, %s19
    %p167 = scmp.eq.s32.totalorder %s166, 0
    %s169 = sadd.s32 %s168, 1
    %s170 = scalar_select %p167, %s168, %s169
    %p173 = pneg %p167
    %p174 = scmp.eq.s32.totalorder %s12, 1
    %p175 = por %p173, %p174
    %p176 = scmp.ne.s32.totalorder %s168, %s171
    %p177 = scmp.eq.s32.totalorder %s12, 0
    %p178 = por %p176, %p177
    %p179 = scmp.ne.s32.totalorder %s168, %s171
    %p180 = scmp.eq.s32.totalorder %s17, 1
    %p181 = por %p179, %p180
    %p182 = scmp.ne.s32.totalorder %s171, %s172
    %p183 = scmp.eq.s32.totalorder %s17, 0
    %p184 = por %p182, %p183
    %p185 = scmp.ne.s32.totalorder %s171, %s172
    %p186 = scmp.eq.s32.totalorder %s18, 1
    %p187 = por %p185, %p186
    %p189 = scmp.ne.s32.totalorder %s172, %s188
    %p190 = scmp.eq.s32.totalorder %s18, 0
    %p191 = por %p189, %p190
    %p192 = scmp.le.s32.totalorder 1, %s12
    %p193 = scmp.lt.s32.totalorder %s12, 3
    %p194 = pnand %p192, %p193
    %p195 = pneg %p194
    // Predicated region
    $region9: #{_lambda_.4} parent=5 // pred_check
      _
    $region10: #{_lambda_.4} parent=5 // pred_check_branch
      %197 = sbr.rel (%p194) target = $region12
    $region11: #{_lambda_.4} parent=5 // pred_region
      %s198 = ssub.s32 %s12, 1
      // Predicated region
      $region13: #{_lambda_.4} parent=11 // pred_check
        %p199 = pneg %p137
      $region14: #{_lambda_.4} parent=11 // pred_check_branch
        %201 = sbr.rel (%p199) target = $region16
      $region15: #{_lambda_.4} parent=11 // pred_region
        _
      $region16: #{_lambda_.4} parent=11 // pred_fallthru
        _
      // Predicated region
      $region17: #{_lambda_.4} parent=11 // pred_check
        %p202 = pneg %p158
      $region18: #{_lambda_.4} parent=11 // pred_check_branch
        %204 = sbr.rel (%p202) target = $region20
      $region19: #{_lambda_.4} parent=11 // pred_region
        _
      $region20: #{_lambda_.4} parent=11 // pred_fallthru
        _
    $region12: #{_lambda_.4} parent=5 // pred_fallthru
      _
    %p205 = scmp.lt.s32.totalorder %s12, 2
    // Predicated region
    $region21: #{_lambda_.4} parent=5 // pred_check
      %p206 = pneg %p205
    $region22: #{_lambda_.4} parent=5 // pred_check_branch
      %208 = sbr.rel (%p206) target = $region24
    $region23: #{_lambda_.4} parent=5 // pred_region
      // Predicated region
      $region25: #{_lambda_.4} parent=23 // pred_check
        %p209 = pneg %p32
      $region26: #{_lambda_.4} parent=23 // pred_check_branch
        %211 = sbr.rel (%p209) target = $region28
      $region27: #{_lambda_.4} parent=23 // pred_region
        %p212 = scmp.lt.s32.totalorder %s12, 1
        %s213 = scalar_select %p212, %s12, 1
        %s214 = smul.addr %s213, 18
        %s215 = smul.addr %s214, 4
        %s216 = scalar_lea.vmem %s0, %s215
      $region28: #{_lambda_.4} parent=23 // pred_fallthru
        _
      // Predicated region
      $region29: #{_lambda_.4} parent=23 // pred_check
        %p217 = pneg %p58
      $region30: #{_lambda_.4} parent=23 // pred_check_branch
        %219 = sbr.rel (%p217) target = $region32
      $region31: #{_lambda_.4} parent=23 // pred_region
        %p220 = scmp.lt.s32.totalorder %s12, 1
        %s221 = scalar_select %p220, %s12, 1
        %s222 = smul.addr %s221, 18
        %s223 = smul.addr %s222, 4
        %s224 = scalar_lea.vmem %s1, %s223
      $region32: #{_lambda_.4} parent=23 // pred_fallthru
        _
      // Predicated region
      $region33: #{_lambda_.4} parent=23 // pred_check
        %p225 = pneg %p84
      $region34: #{_lambda_.4} parent=23 // pred_check_branch
        %227 = sbr.rel (%p225) target = $region36
      $region35: #{_lambda_.4} parent=23 // pred_region
        %p228 = scmp.lt.s32.totalorder %s12, 1
        %s229 = scalar_select %p228, %s12, 1
        %s230 = smul.addr %s229, 18
        %s231 = smul.addr %s230, 4
        %s232 = scalar_lea.vmem %s2, %s231
      $region36: #{_lambda_.4} parent=23 // pred_fallthru
        _
      // Predicated region
      $region37: #{_lambda_.4} parent=23 // pred_check
        %p233 = pneg %p110
      $region38: #{_lambda_.4} parent=23 // pred_check_branch
        %235 = sbr.rel (%p233) target = $region40
      $region39: #{_lambda_.4} parent=23 // pred_region
        %p236 = scmp.lt.s32.totalorder %s12, 1
        %s237 = scalar_select %p236, %s12, 1
        %s238 = smul.addr %s237, 18
        %s239 = smul.addr %s238, 4
        %s240 = scalar_lea.vmem %s3, %s239
      $region40: #{_lambda_.4} parent=23 // pred_fallthru
        _
    $region24: #{_lambda_.4} parent=5 // pred_fallthru
      _
    %p241 = scmp.le.s32.totalorder 1, %s12
    %p242 = scmp.lt.s32.totalorder %s12, 3
    %p243 = pnand %p241, %p242
    %p244 = pneg %p243
    // Predicated region
    $region41: #{_lambda_.4} parent=5 // pred_check
      _
    $region42: #{_lambda_.4} parent=5 // pred_check_branch
      %246 = sbr.rel (%p243) target = $region44
    $region43: #{_lambda_.4} parent=5 // pred_region
      %s247 = ssub.s32 %s12, 1
      %p248 = scmp.lt.s32.totalorder %s17, 1
      %s249 = scalar_select %p248, %s17, 1
      %s250 = smul.addr %s249, 18
      %s251 = smul.addr %s250, 4
      %s252 = scalar_lea.vmem %s0, %s251
      %p253 = pneg %p38
      %p254 = pneg %p35
      %p255 = scmp.lt.s32.totalorder %s17, 1
      %s256 = scalar_select %p255, %s17, 1
      %s257 = smul.addr %s256, 18
      %s258 = smul.addr %s257, 4
      %s259 = scalar_lea.vmem %s1, %s258
      %p260 = pneg %p64
      %p261 = pneg %p61
      %p262 = scmp.lt.s32.totalorder %s17, 1
      %s263 = scalar_select %p262, %s17, 1
      %s264 = smul.addr %s263, 18
      %s265 = smul.addr %s264, 4
      %s266 = scalar_lea.vmem %s2, %s265
      %p267 = pneg %p90
      %p268 = pneg %p87
      %p269 = scmp.lt.s32.totalorder %s17, 1
      %s270 = scalar_select %p269, %s17, 1
      %s271 = smul.addr %s270, 18
      %s272 = smul.addr %s271, 4
      %s273 = scalar_lea.vmem %s3, %s272
      %p274 = pneg %p116
      %p275 = pneg %p113
      %p276 = pneg %p137
      %p277 = pneg %p134
      %p278 = pneg %p158
      %p279 = pneg %p155
      %p280 = pneg %p184
      %p281 = pneg %p181
      %p282 = scmp.lt.s32.totalorder %s17, 1
      %s283 = scalar_select %p282, %s17, 1
      %s284 = smul.addr %s283, 8
      %s285 = smul.addr %s284, 4
      %s286 = scalar_lea.vmem %s6, %s285
      %p287 = scmp.lt.s32.totalorder %s17, 1
      %s288 = scalar_select %p287, %s17, 1
      %s289 = smul.addr %s288, 18
      %s290 = smul.addr %s289, 4
      %s291 = scalar_lea.vmem %s0, %s290
      %p292 = scmp.lt.s32.totalorder %s17, 1
      %s293 = scalar_select %p292, %s17, 1
      %s294 = smul.addr %s293, 18
      %s295 = smul.addr %s294, 4
      %s296 = scalar_lea.vmem %s1, %s295
      %p297 = scmp.lt.s32.totalorder %s17, 1
      %s298 = scalar_select %p297, %s17, 1
      %s299 = smul.addr %s298, 18
      %s300 = smul.addr %s299, 4
      %s301 = scalar_lea.vmem %s2, %s300
      %p302 = scmp.lt.s32.totalorder %s17, 1
      %s303 = scalar_select %p302, %s17, 1
      %s304 = smul.addr %s303, 18
      %s305 = smul.addr %s304, 4
      %s306 = scalar_lea.vmem %s3, %s305
      %p307 = scmp.lt.s32.totalorder %s17, 1
      %s308 = scalar_select %p307, %s17, 1
      %s309 = smul.addr %s308, 8
      %s310 = smul.addr %s309, 4
      %s311 = scalar_lea.vmem %s6, %s310
      %v313 = vld [vmem:[%s291] sm:$0xf]
      %v314 = vld [vmem:[%s291 + $0x8] sm:$0xf]
      %v315 = vld [vmem:[%s291 + $0x10] sm:$0xf]
      %v316 = vld [vmem:[%s291 + $0x18] sm:$0xf]
      %v317 = vld [vmem:[%s291 + $0x20] sm:$0xf]
      %v318 = vld [vmem:[%s291 + $0x28] sm:$0xf]
      %v319 = vld [vmem:[%s291 + $0x30] sm:$0xf]
      %v320 = vld [vmem:[%s291 + $0x38] sm:$0xf]
      %v321 = vld [vmem:[%s4] sm:$0xf]
      %v322 = vld [vmem:[%s4 + $0x4] sm:$0xf]
      %v323 = vld [vmem:[%s4 + $0x8] sm:$0xf]
      %v324 = vld [vmem:[%s4 + $0xc] sm:$0xf]
      %v325 = vld [vmem:[%s4 + $0x10] sm:$0xf]
      %v326 = vld [vmem:[%s4 + $0x14] sm:$0xf]
      %v327 = vld [vmem:[%s4 + $0x18] sm:$0xf]
      %v328 = vld [vmem:[%s4 + $0x1c] sm:$0xf]
      %v329 = vld [vmem:[%s4 + $0x20] sm:$0xf]
      %v330 = vld [vmem:[%s4 + $0x24] sm:$0xf]
      %v331 = vld [vmem:[%s4 + $0x28] sm:$0xf]
      %v332 = vld [vmem:[%s4 + $0x2c] sm:$0xf]
      %v333 = vld [vmem:[%s4 + $0x30] sm:$0xf]
      %v334 = vld [vmem:[%s4 + $0x34] sm:$0xf]
      %v335 = vld [vmem:[%s4 + $0x38] sm:$0xf]
      %v336 = vld [vmem:[%s4 + $0x3c] sm:$0xf]
      %v337 = vld [vmem:[%s296] sm:$0xf]
      %v338 = vld [vmem:[%s296 + $0x8] sm:$0xf]
      %v339 = vld [vmem:[%s296 + $0x10] sm:$0xf]
      %v340 = vld [vmem:[%s296 + $0x18] sm:$0xf]
      %v341 = vld [vmem:[%s296 + $0x20] sm:$0xf]
      %v342 = vld [vmem:[%s296 + $0x28] sm:$0xf]
      %v343 = vld [vmem:[%s296 + $0x30] sm:$0xf]
      %v344 = vld [vmem:[%s296 + $0x38] sm:$0xf]
      %s345 = scalar_lea.vmem %s4, 64
      %v346 = vld [vmem:[%s345] sm:$0xf]
      %v347 = vld [vmem:[%s345 + $0x4] sm:$0xf]
      %v348 = vld [vmem:[%s345 + $0x8] sm:$0xf]
      %v349 = vld [vmem:[%s345 + $0xc] sm:$0xf]
      %v350 = vld [vmem:[%s345 + $0x10] sm:$0xf]
      %v351 = vld [vmem:[%s345 + $0x14] sm:$0xf]
      %v352 = vld [vmem:[%s345 + $0x18] sm:$0xf]
      %v353 = vld [vmem:[%s345 + $0x1c] sm:$0xf]
      %v354 = vld [vmem:[%s345 + $0x20] sm:$0xf]
      %v355 = vld [vmem:[%s345 + $0x24] sm:$0xf]
      %v356 = vld [vmem:[%s345 + $0x28] sm:$0xf]
      %v357 = vld [vmem:[%s345 + $0x2c] sm:$0xf]
      %v358 = vld [vmem:[%s345 + $0x30] sm:$0xf]
      %v359 = vld [vmem:[%s345 + $0x34] sm:$0xf]
      %v360 = vld [vmem:[%s345 + $0x38] sm:$0xf]
      %v361 = vld [vmem:[%s345 + $0x3c] sm:$0xf]
      %v370 = vunpack.c.l.b16 %v337
      %v371 = vunpack.c.l.b16 %v338
      %v372 = vunpack.c.l.b16 %v339
      %v373 = vunpack.c.l.b16 %v340
      %v374 = vunpack.c.l.b16 %v341
      %v375 = vunpack.c.l.b16 %v342
      %v376 = vunpack.c.l.b16 %v343
      %v377 = vunpack.c.l.b16 %v344
      %v378 = vpack.c.b16 %v371, %v370
      %v379 = vpack.c.b16 %v373, %v372
      %v380 = vpack.c.b16 %v375, %v374
      %v381 = vpack.c.b16 %v377, %v376
      %v402 = vunpack.c.l.b16 %v346
      %v403 = vunpack.c.l.b16 %v347
      %v404 = vunpack.c.l.b16 %v348
      %v405 = vunpack.c.l.b16 %v349
      %v406 = vunpack.c.l.b16 %v350
      %v407 = vunpack.c.l.b16 %v351
      %v408 = vunpack.c.l.b16 %v352
      %v409 = vunpack.c.l.b16 %v353
      %v410 = vunpack.c.l.b16 %v354
      %v411 = vunpack.c.l.b16 %v355
      %v412 = vunpack.c.l.b16 %v356
      %v413 = vunpack.c.l.b16 %v357
      %v414 = vunpack.c.l.b16 %v358
      %v415 = vunpack.c.l.b16 %v359
      %v416 = vunpack.c.l.b16 %v360
      %v417 = vunpack.c.l.b16 %v361
      %v418 = vpack.c.b16 %v403, %v402
      %v419 = vpack.c.b16 %v405, %v404
      %v420 = vpack.c.b16 %v407, %v406
      %v421 = vpack.c.b16 %v409, %v408
      %v422 = vpack.c.b16 %v411, %v410
      %v423 = vpack.c.b16 %v413, %v412
      %v424 = vpack.c.b16 %v415, %v414
      %v425 = vpack.c.b16 %v417, %v416
      %434 = vmatprep.subr.bf16.mxu0 0
      %435 = vmatpush1.bf16.msra.mxu0 %v418
      %436 = vmatprep.subr.bf16.mxu0 0
      %437 = vmatpush1.bf16.msra.mxu0 %v419
      %438 = vmatprep.subr.bf16.mxu0 0
      %439 = vmatpush1.bf16.msra.mxu0 %v420
      %440 = vmatprep.subr.bf16.mxu0 0
      %441 = vmatpush1.bf16.msra.mxu0 %v421
      %442 = vmatprep.subr.bf16.mxu0 0
      %443 = vmatpush1.bf16.msra.mxu0 %v422
      %444 = vmatprep.subr.bf16.mxu0 0
      %445 = vmatpush1.bf16.msra.mxu0 %v423
      %446 = vmatprep.subr.bf16.mxu0 0
      %447 = vmatpush1.bf16.msra.mxu0 %v424
      %448 = vmatprep.subr.bf16.mxu0 0
      %449 = vmatpush1.bf16.msra.mxu0 %v425
      %450 = vmatprep.subr.bf16.mxu0 0
      %451 = vmatpush1.bf16.msra.mxu0 0
      %452 = vmatprep.subr.bf16.mxu0 0
      %453 = vmatpush1.bf16.msra.mxu0 0
      %454 = vmatprep.subr.bf16.mxu0 0
      %455 = vmatpush1.bf16.msra.mxu0 0
      %456 = vmatprep.subr.bf16.mxu0 0
      %457 = vmatpush1.bf16.msra.mxu0 0
      %458 = vmatprep.subr.bf16.mxu0 0
      %459 = vmatpush1.bf16.msra.mxu0 0
      %460 = vmatprep.subr.bf16.mxu0 0
      %461 = vmatpush1.bf16.msra.mxu0 0
      %462 = vmatprep.subr.bf16.mxu0 0
      %463 = vmatpush1.bf16.msra.mxu0 0
      %464 = vmatprep.subr.bf16.mxu0 0
      %465 = vmatpush1.bf16.msra.mxu0 0
      %466 = vmatprep.mubr.bf16.mxu0 0
      %467 = vmatmul.mubr.bf16.gmra.mrb[0].mxu0 %v378
      %v468 = vpop.f32.mrb[0].mxu0
      %v469 = vadd.f32 0.0, %v468
      %v470 = vpop.f32.mrb[0].mxu0
      %v471 = vpop.f32.mrb[0].mxu0
      %v472 = vadd.f32 0.0, %v471
      %v473 = vpop.f32.mrb[0].mxu0
      %474 = vmatprep.mubr.bf16.mxu0 0
      %475 = vmatmul.mubr.bf16.gmra.mrb[0].mxu0 %v379
      %v476 = vpop.f32.mrb[0].mxu0
      %v477 = vadd.f32 0.0, %v476
      %v478 = vpop.f32.mrb[0].mxu0
      %v479 = vpop.f32.mrb[0].mxu0
      %v480 = vadd.f32 0.0, %v479
      %v481 = vpop.f32.mrb[0].mxu0
      %482 = vmatprep.mubr.bf16.mxu0 0
      %483 = vmatmul.mubr.bf16.gmra.mrb[0].mxu0 %v380
      %v484 = vpop.f32.mrb[0].mxu0
      %v485 = vadd.f32 0.0, %v484
      %v486 = vpop.f32.mrb[0].mxu0
      %v487 = vpop.f32.mrb[0].mxu0
      %v488 = vadd.f32 0.0, %v487
      %v489 = vpop.f32.mrb[0].mxu0
      %490 = vmatprep.mubr.bf16.mxu0 0
      %491 = vmatmul.mubr.bf16.gmra.mrb[0].mxu0 %v381
      %v492 = vpop.f32.mrb[0].mxu0
      %v493 = vadd.f32 0.0, %v492
      %v494 = vpop.f32.mrb[0].mxu0
      %v495 = vpop.f32.mrb[0].mxu0
      %v496 = vadd.f32 0.0, %v495
      %v497 = vpop.f32.mrb[0].mxu0
      %498 = vdwg.mxu0
      %v507 = vunpack.c.l.b16 %v313
      %v508 = vunpack.c.l.b16 %v314
      %v509 = vunpack.c.l.b16 %v315
      %v510 = vunpack.c.l.b16 %v316
      %v511 = vunpack.c.l.b16 %v317
      %v512 = vunpack.c.l.b16 %v318
      %v513 = vunpack.c.l.b16 %v319
      %v514 = vunpack.c.l.b16 %v320
      %v515 = vpack.c.b16 %v508, %v507
      %v516 = vpack.c.b16 %v510, %v509
      %v517 = vpack.c.b16 %v512, %v511
      %v518 = vpack.c.b16 %v514, %v513
      %v539 = vunpack.c.l.b16 %v321
      %v540 = vunpack.c.l.b16 %v322
      %v541 = vunpack.c.l.b16 %v323
      %v542 = vunpack.c.l.b16 %v324
      %v543 = vunpack.c.l.b16 %v325
      %v544 = vunpack.c.l.b16 %v326
      %v545 = vunpack.c.l.b16 %v327
      %v546 = vunpack.c.l.b16 %v328
      %v547 = vunpack.c.l.b16 %v329
      %v548 = vunpack.c.l.b16 %v330
      %v549 = vunpack.c.l.b16 %v331
      %v550 = vunpack.c.l.b16 %v332
      %v551 = vunpack.c.l.b16 %v333
      %v552 = vunpack.c.l.b16 %v334
      %v553 = vunpack.c.l.b16 %v335
      %v554 = vunpack.c.l.b16 %v336
      %v555 = vpack.c.b16 %v540, %v539
      %v556 = vpack.c.b16 %v542, %v541
      %v557 = vpack.c.b16 %v544, %v543
      %v558 = vpack.c.b16 %v546, %v545
      %v559 = vpack.c.b16 %v548, %v547
      %v560 = vpack.c.b16 %v550, %v549
      %v561 = vpack.c.b16 %v552, %v551
      %v562 = vpack.c.b16 %v554, %v553
      %571 = vmatprep.subr.bf16.mxu0 0
      %572 = vmatpush1.bf16.msra.mxu0 %v555
      %573 = vmatprep.subr.bf16.mxu0 0
      %574 = vmatpush1.bf16.msra.mxu0 %v556
      %575 = vmatprep.subr.bf16.mxu0 0
      %576 = vmatpush1.bf16.msra.mxu0 %v557
      %577 = vmatprep.subr.bf16.mxu0 0
      %578 = vmatpush1.bf16.msra.mxu0 %v558
      %579 = vmatprep.subr.bf16.mxu0 0
      %580 = vmatpush1.bf16.msra.mxu0 %v559
      %581 = vmatprep.subr.bf16.mxu0 0
      %582 = vmatpush1.bf16.msra.mxu0 %v560
      %583 = vmatprep.subr.bf16.mxu0 0
      %584 = vmatpush1.bf16.msra.mxu0 %v561
      %585 = vmatprep.subr.bf16.mxu0 0
      %586 = vmatpush1.bf16.msra.mxu0 %v562
      %587 = vmatprep.subr.bf16.mxu0 0
      %588 = vmatpush1.bf16.msra.mxu0 0
      %589 = vmatprep.subr.bf16.mxu0 0
      %590 = vmatpush1.bf16.msra.mxu0 0
      %591 = vmatprep.subr.bf16.mxu0 0
      %592 = vmatpush1.bf16.msra.mxu0 0
      %593 = vmatprep.subr.bf16.mxu0 0
      %594 = vmatpush1.bf16.msra.mxu0 0
      %595 = vmatprep.subr.bf16.mxu0 0
      %596 = vmatpush1.bf16.msra.mxu0 0
      %597 = vmatprep.subr.bf16.mxu0 0
      %598 = vmatpush1.bf16.msra.mxu0 0
      %599 = vmatprep.subr.bf16.mxu0 0
      %600 = vmatpush1.bf16.msra.mxu0 0
      %601 = vmatprep.subr.bf16.mxu0 0
      %602 = vmatpush1.bf16.msra.mxu0 0
      %603 = vmatprep.mubr.bf16.mxu0 0
      %604 = vmatmul.mubr.bf16.gmra.mrb[0].mxu0 %v515
      %v605 = vpop.f32.mrb[0].mxu0
      %v606 = vadd.f32 %v469, %v605
      %v607 = vpop.f32.mrb[0].mxu0
      %v608 = vpop.f32.mrb[0].mxu0
      %v609 = vadd.f32 %v472, %v608
      %v610 = vpop.f32.mrb[0].mxu0
      %611 = vmatprep.mubr.bf16.mxu0 0
      %612 = vmatmul.mubr.bf16.gmra.mrb[0].mxu0 %v516
      %v613 = vpop.f32.mrb[0].mxu0
      %v614 = vadd.f32 %v477, %v613
      %v615 = vpop.f32.mrb[0].mxu0
      %v616 = vpop.f32.mrb[0].mxu0
      %v617 = vadd.f32 %v480, %v616
      %v618 = vpop.f32.mrb[0].mxu0
      %619 = vmatprep.mubr.bf16.mxu0 0
      %620 = vmatmul.mubr.bf16.gmra.mrb[0].mxu0 %v517
      %v621 = vpop.f32.mrb[0].mxu0
      %v622 = vadd.f32 %v485, %v621
      %v623 = vpop.f32.mrb[0].mxu0
      %v624 = vpop.f32.mrb[0].mxu0
      %v625 = vadd.f32 %v488, %v624
      %v626 = vpop.f32.mrb[0].mxu0
      %627 = vmatprep.mubr.bf16.mxu0 0
      %628 = vmatmul.mubr.bf16.gmra.mrb[0].mxu0 %v518
      %v629 = vpop.f32.mrb[0].mxu0
      %v630 = vadd.f32 %v493, %v629
      %v631 = vpop.f32.mrb[0].mxu0
      %v632 = vpop.f32.mrb[0].mxu0
      %v633 = vadd.f32 %v496, %v632
      %v634 = vpop.f32.mrb[0].mxu0
      %635 = vdwg.mxu0
      %v636 = vld [vmem:[%s291] sm:$0xf]
      %v637 = vld [vmem:[%s291 + $0x4] sm:$0x1]
      %v638 = vld [vmem:[%s291 + $0x8] sm:$0xf]
      %v639 = vld [vmem:[%s291 + $0xc] sm:$0x1]
      %v640 = vld [vmem:[%s291 + $0x10] sm:$0xf]
      %v641 = vld [vmem:[%s291 + $0x14] sm:$0x1]
      %v642 = vld [vmem:[%s291 + $0x18] sm:$0xf]
      %v643 = vld [vmem:[%s291 + $0x1c] sm:$0x1]
      %v644 = vld [vmem:[%s291 + $0x20] sm:$0xf]
      %v645 = vld [vmem:[%s291 + $0x24] sm:$0x1]
      %v646 = vld [vmem:[%s291 + $0x28] sm:$0xf]
      %v647 = vld [vmem:[%s291 + $0x2c] sm:$0x1]
      %v648 = vld [vmem:[%s291 + $0x30] sm:$0xf]
      %v649 = vld [vmem:[%s291 + $0x34] sm:$0x1]
      %v650 = vld [vmem:[%s291 + $0x38] sm:$0xf]
      %v651 = vld [vmem:[%s291 + $0x3c] sm:$0x1]
      %vm652 = vsmask.f32 3328
      %vm653 = vsmask.f32 7440
      %vm654 = vmor %vm652, %vm653
      %v656 = vshrl.u32 %v636, 16
      %v658 = vrot.slane %v656, 4
      %v659 = vshll.u32 %v636, 16
      %v661 = vrot.slane %v659, 5
      %v662 = vor.u32 %v658, %v661
      %v663 = vrot.slane %v662, 4
      %v665 = vshll.u32 %v637, 16
      %v667 = vrot.slane %v665, 5
      %v668 = vsel %vm654, %v663, %v667
      %v670 = vshrl.u32 %v638, 16
      %v672 = vrot.slane %v670, 4
      %v673 = vshll.u32 %v638, 16
      %v675 = vrot.slane %v673, 5
      %v676 = vor.u32 %v672, %v675
      %v677 = vrot.slane %v676, 4
      %v679 = vshll.u32 %v639, 16
      %v681 = vrot.slane %v679, 5
      %v682 = vsel %vm654, %v677, %v681
      %v684 = vshrl.u32 %v640, 16
      %v686 = vrot.slane %v684, 4
      %v687 = vshll.u32 %v640, 16
      %v689 = vrot.slane %v687, 5
      %v690 = vor.u32 %v686, %v689
      %v691 = vrot.slane %v690, 4
      %v693 = vshll.u32 %v641, 16
      %v695 = vrot.slane %v693, 5
      %v696 = vsel %vm654, %v691, %v695
      %v698 = vshrl.u32 %v642, 16
      %v700 = vrot.slane %v698, 4
      %v701 = vshll.u32 %v642, 16
      %v703 = vrot.slane %v701, 5
      %v704 = vor.u32 %v700, %v703
      %v705 = vrot.slane %v704, 4
      %v707 = vshll.u32 %v643, 16
      %v709 = vrot.slane %v707, 5
      %v710 = vsel %vm654, %v705, %v709
      %v712 = vshrl.u32 %v644, 16
      %v714 = vrot.slane %v712, 4
      %v715 = vshll.u32 %v644, 16
      %v717 = vrot.slane %v715, 5
      %v718 = vor.u32 %v714, %v717
      %v719 = vrot.slane %v718, 4
      %v721 = vshll.u32 %v645, 16
      %v723 = vrot.slane %v721, 5
      %v724 = vsel %vm654, %v719, %v723
      %v726 = vshrl.u32 %v646, 16
      %v728 = vrot.slane %v726, 4
      %v729 = vshll.u32 %v646, 16
      %v731 = vrot.slane %v729, 5
      %v732 = vor.u32 %v728, %v731
      %v733 = vrot.slane %v732, 4
      %v735 = vshll.u32 %v647, 16
      %v737 = vrot.slane %v735, 5
      %v738 = vsel %vm654, %v733, %v737
      %v740 = vshrl.u32 %v648, 16
      %v742 = vrot.slane %v740, 4
      %v743 = vshll.u32 %v648, 16
      %v745 = vrot.slane %v743, 5
      %v746 = vor.u32 %v742, %v745
      %v747 = vrot.slane %v746, 4
      %v749 = vshll.u32 %v649, 16
      %v751 = vrot.slane %v749, 5
      %v752 = vsel %vm654, %v747, %v751
      %v754 = vshrl.u32 %v650, 16
      %v756 = vrot.slane %v754, 4
      %v757 = vshll.u32 %v650, 16
      %v759 = vrot.slane %v757, 5
      %v760 = vor.u32 %v756, %v759
      %v761 = vrot.slane %v760, 4
      %v763 = vshll.u32 %v651, 16
      %v765 = vrot.slane %v763, 5
      %v766 = vsel %vm654, %v761, %v765
      %s767 = scalar_lea.vmem %s4, 128
      %v768 = vld [vmem:[%s767] sm:$0xf]
      %v769 = vld [vmem:[%s767 + $0x4] sm:$0xf]
      %v770 = vld [vmem:[%s767 + $0x8] sm:$0xf]
      %v771 = vld [vmem:[%s767 + $0xc] sm:$0xf]
      %v772 = vld [vmem:[%s767 + $0x10] sm:$0xf]
      %v773 = vld [vmem:[%s767 + $0x14] sm:$0xf]
      %v774 = vld [vmem:[%s767 + $0x18] sm:$0xf]
      %v775 = vld [vmem:[%s767 + $0x1c] sm:$0xf]
      %v776 = vld [vmem:[%s767 + $0x20] sm:$0xf]
      %v777 = vld [vmem:[%s767 + $0x24] sm:$0xf]
      %v778 = vld [vmem:[%s767 + $0x28] sm:$0xf]
      %v779 = vld [vmem:[%s767 + $0x2c] sm:$0xf]
      %v780 = vld [vmem:[%s767 + $0x30] sm:$0xf]
      %v781 = vld [vmem:[%s767 + $0x34] sm:$0xf]
      %v782 = vld [vmem:[%s767 + $0x38] sm:$0xf]
      %v783 = vld [vmem:[%s767 + $0x3c] sm:$0xf]
      %v784 = vunpack.c.l.b16 %v668
      %v785 = vunpack.c.l.b16 %v682
      %v786 = vunpack.c.l.b16 %v696
      %v787 = vunpack.c.l.b16 %v710
      %v788 = vunpack.c.l.b16 %v724
      %v789 = vunpack.c.l.b16 %v738
      %v790 = vunpack.c.l.b16 %v752
      %v791 = vunpack.c.l.b16 %v766
      %v792 = vpack.c.b16 %v785, %v784
      %v793 = vpack.c.b16 %v787, %v786
      %v794 = vpack.c.b16 %v789, %v788
      %v795 = vpack.c.b16 %v791, %v790
      %v816 = vunpack.c.l.b16 %v768
      %v817 = vunpack.c.l.b16 %v769
      %v818 = vunpack.c.l.b16 %v770
      %v819 = vunpack.c.l.b16 %v771
      %v820 = vunpack.c.l.b16 %v772
      %v821 = vunpack.c.l.b16 %v773
      %v822 = vunpack.c.l.b16 %v774
      %v823 = vunpack.c.l.b16 %v775
      %v824 = vunpack.c.l.b16 %v776
      %v825 = vunpack.c.l.b16 %v777
      %v826 = vunpack.c.l.b16 %v778
      %v827 = vunpack.c.l.b16 %v779
      %v828 = vunpack.c.l.b16 %v780
      %v829 = vunpack.c.l.b16 %v781
      %v830 = vunpack.c.l.b16 %v782
      %v831 = vunpack.c.l.b16 %v783
      %v832 = vpack.c.b16 %v817, %v816
      %v833 = vpack.c.b16 %v819, %v818
      %v834 = vpack.c.b16 %v821, %v820
      %v835 = vpack.c.b16 %v823, %v822
      %v836 = vpack.c.b16 %v825, %v824
      %v837 = vpack.c.b16 %v827, %v826
      %v838 = vpack.c.b16 %v829, %v828
      %v839 = vpack.c.b16 %v831, %v830
      %848 = vmatprep.subr.bf16.mxu0 0
      %849 = vmatpush1.bf16.msra.mxu0 %v832
      %850 = vmatprep.subr.bf16.mxu0 0
      %851 = vmatpush1.bf16.msra.mxu0 %v833
      %852 = vmatprep.subr.bf16.mxu0 0
      %853 = vmatpush1.bf16.msra.mxu0 %v834
      %854 = vmatprep.subr.bf16.mxu0 0
      %855 = vmatpush1.bf16.msra.mxu0 %v835
      %856 = vmatprep.subr.bf16.mxu0 0
      %857 = vmatpush1.bf16.msra.mxu0 %v836
      %858 = vmatprep.subr.bf16.mxu0 0
      %859 = vmatpush1.bf16.msra.mxu0 %v837
      %860 = vmatprep.subr.bf16.mxu0 0
      %861 = vmatpush1.bf16.msra.mxu0 %v838
      %862 = vmatprep.subr.bf16.mxu0 0
      %863 = vmatpush1.bf16.msra.mxu0 %v839
      %864 = vmatprep.subr.bf16.mxu0 0
      %865 = vmatpush1.bf16.msra.mxu0 0
      %866 = vmatprep.subr.bf16.mxu0 0
      %867 = vmatpush1.bf16.msra.mxu0 0
      %868 = vmatprep.subr.bf16.mxu0 0
      %869 = vmatpush1.bf16.msra.mxu0 0
      %870 = vmatprep.subr.bf16.mxu0 0
      %871 = vmatpush1.bf16.msra.mxu0 0
      %872 = vmatprep.subr.bf16.mxu0 0
      %873 = vmatpush1.bf16.msra.mxu0 0
      %874 = vmatprep.subr.bf16.mxu0 0
      %875 = vmatpush1.bf16.msra.mxu0 0
      %876 = vmatprep.subr.bf16.mxu0 0
      %877 = vmatpush1.bf16.msra.mxu0 0
      %878 = vmatprep.subr.bf16.mxu0 0
      %879 = vmatpush1.bf16.msra.mxu0 0
      %880 = vmatprep.mubr.bf16.mxu0 0
      %881 = vmatmul.mubr.bf16.gmra.mrb[0].mxu0 %v792
      %v882 = vpop.f32.mrb[0].mxu0
      %v883 = vadd.f32 0.0, %v882
      %v884 = vpop.f32.mrb[0].mxu0
      %v885 = vpop.f32.mrb[0].mxu0
      %v886 = vadd.f32 0.0, %v885
      %v887 = vpop.f32.mrb[0].mxu0
      %888 = vmatprep.mubr.bf16.mxu0 0
      %889 = vmatmul.mubr.bf16.gmra.mrb[0].mxu0 %v793
      %v890 = vpop.f32.mrb[0].mxu0
      %v891 = vadd.f32 0.0, %v890
      %v892 = vpop.f32.mrb[0].mxu0
      %v893 = vpop.f32.mrb[0].mxu0
      %v894 = vadd.f32 0.0, %v893
      %v895 = vpop.f32.mrb[0].mxu0
      %896 = vmatprep.mubr.bf16.mxu0 0
      %897 = vmatmul.mubr.bf16.gmra.mrb[0].mxu0 %v794
      %v898 = vpop.f32.mrb[0].mxu0
      %v899 = vadd.f32 0.0, %v898
      %v900 = vpop.f32.mrb[0].mxu0
      %v901 = vpop.f32.mrb[0].mxu0
      %v902 = vadd.f32 0.0, %v901
      %v903 = vpop.f32.mrb[0].mxu0
      %904 = vmatprep.mubr.bf16.mxu0 0
      %905 = vmatmul.mubr.bf16.gmra.mrb[0].mxu0 %v795
      %v906 = vpop.f32.mrb[0].mxu0
      %v907 = vadd.f32 0.0, %v906
      %v908 = vpop.f32.mrb[0].mxu0
      %v909 = vpop.f32.mrb[0].mxu0
      %v910 = vadd.f32 0.0, %v909
      %v911 = vpop.f32.mrb[0].mxu0
      %912 = vdwg.mxu0
      %v913 = vadd.f32 %v606, %v883
      %v914 = vadd.f32 %v609, %v886
      %v915 = vadd.f32 %v614, %v891
      %v916 = vadd.f32 %v617, %v894
      %v917 = vadd.f32 %v622, %v899
      %v918 = vadd.f32 %v625, %v902
      %v919 = vadd.f32 %v630, %v907
      %v920 = vadd.f32 %v633, %v910
      %v921 = vld [vmem:[%s301] sm:$0xf]
      %v922 = vld [vmem:[%s301 + $0x8] sm:$0xf]
      %v923 = vld [vmem:[%s301 + $0x10] sm:$0xf]
      %v924 = vld [vmem:[%s301 + $0x18] sm:$0xf]
      %v925 = vld [vmem:[%s301 + $0x20] sm:$0xf]
      %v926 = vld [vmem:[%s301 + $0x28] sm:$0xf]
      %v927 = vld [vmem:[%s301 + $0x30] sm:$0xf]
      %v928 = vld [vmem:[%s301 + $0x38] sm:$0xf]
      %s929 = scalar_lea.vmem %s4, 192
      %v930 = vld [vmem:[%s929] sm:$0xf]
      %v931 = vld [vmem:[%s929 + $0x4] sm:$0xf]
      %v932 = vld [vmem:[%s929 + $0x8] sm:$0xf]
      %v933 = vld [vmem:[%s929 + $0xc] sm:$0xf]
      %v934 = vld [vmem:[%s929 + $0x10] sm:$0xf]
      %v935 = vld [vmem:[%s929 + $0x14] sm:$0xf]
      %v936 = vld [vmem:[%s929 + $0x18] sm:$0xf]
      %v937 = vld [vmem:[%s929 + $0x1c] sm:$0xf]
      %v938 = vld [vmem:[%s929 + $0x20] sm:$0xf]
      %v939 = vld [vmem:[%s929 + $0x24] sm:$0xf]
      %v940 = vld [vmem:[%s929 + $0x28] sm:$0xf]
      %v941 = vld [vmem:[%s929 + $0x2c] sm:$0xf]
      %v942 = vld [vmem:[%s929 + $0x30] sm:$0xf]
      %v943 = vld [vmem:[%s929 + $0x34] sm:$0xf]
      %v944 = vld [vmem:[%s929 + $0x38] sm:$0xf]
      %v945 = vld [vmem:[%s929 + $0x3c] sm:$0xf]
      %v954 = vunpack.c.l.b16 %v921
      %v955 = vunpack.c.l.b16 %v922
      %v956 = vunpack.c.l.b16 %v923
      %v957 = vunpack.c.l.b16 %v924
      %v958 = vunpack.c.l.b16 %v925
      %v959 = vunpack.c.l.b16 %v926
      %v960 = vunpack.c.l.b16 %v927
      %v961 = vunpack.c.l.b16 %v928
      %v962 = vpack.c.b16 %v955, %v954
      %v963 = vpack.c.b16 %v957, %v956
      %v964 = vpack.c.b16 %v959, %v958
      %v965 = vpack.c.b16 %v961, %v960
      %v986 = vunpack.c.l.b16 %v930
      %v987 = vunpack.c.l.b16 %v931
      %v988 = vunpack.c.l.b16 %v932
      %v989 = vunpack.c.l.b16 %v933
      %v990 = vunpack.c.l.b16 %v934
      %v991 = vunpack.c.l.b16 %v935
      %v992 = vunpack.c.l.b16 %v936
      %v993 = vunpack.c.l.b16 %v937
      %v994 = vunpack.c.l.b16 %v938
      %v995 = vunpack.c.l.b16 %v939
      %v996 = vunpack.c.l.b16 %v940
      %v997 = vunpack.c.l.b16 %v941
      %v998 = vunpack.c.l.b16 %v942
      %v999 = vunpack.c.l.b16 %v943
      %v1000 = vunpack.c.l.b16 %v944
      %v1001 = vunpack.c.l.b16 %v945
      %v1002 = vpack.c.b16 %v987, %v986
      %v1003 = vpack.c.b16 %v989, %v988
      %v1004 = vpack.c.b16 %v991, %v990
      %v1005 = vpack.c.b16 %v993, %v992
      %v1006 = vpack.c.b16 %v995, %v994
      %v1007 = vpack.c.b16 %v997, %v996
      %v1008 = vpack.c.b16 %v999, %v998
      %v1009 = vpack.c.b16 %v1001, %v1000
      %1018 = vmatprep.subr.bf16.mxu0 0
      %1019 = vmatpush1.bf16.msra.mxu0 %v1002
      %1020 = vmatprep.subr.bf16.mxu0 0
      %1021 = vmatpush1.bf16.msra.mxu0 %v1003
      %1022 = vmatprep.subr.bf16.mxu0 0
      %1023 = vmatpush1.bf16.msra.mxu0 %v1004
      %1024 = vmatprep.subr.bf16.mxu0 0
      %1025 = vmatpush1.bf16.msra.mxu0 %v1005
      %1026 = vmatprep.subr.bf16.mxu0 0
      %1027 = vmatpush1.bf16.msra.mxu0 %v1006
      %1028 = vmatprep.subr.bf16.mxu0 0
      %1029 = vmatpush1.bf16.msra.mxu0 %v1007
      %1030 = vmatprep.subr.bf16.mxu0 0
      %1031 = vmatpush1.bf16.msra.mxu0 %v1008
      %1032 = vmatprep.subr.bf16.mxu0 0
      %1033 = vmatpush1.bf16.msra.mxu0 %v1009
      %1034 = vmatprep.subr.bf16.mxu0 0
      %1035 = vmatpush1.bf16.msra.mxu0 0
      %1036 = vmatprep.subr.bf16.mxu0 0
      %1037 = vmatpush1.bf16.msra.mxu0 0
      %1038 = vmatprep.subr.bf16.mxu0 0
      %1039 = vmatpush1.bf16.msra.mxu0 0
      %1040 = vmatprep.subr.bf16.mxu0 0
      %1041 = vmatpush1.bf16.msra.mxu0 0
      %1042 = vmatprep.subr.bf16.mxu0 0
      %1043 = vmatpush1.bf16.msra.mxu0 0
      %1044 = vmatprep.subr.bf16.mxu0 0
      %1045 = vmatpush1.bf16.msra.mxu0 0
      %1046 = vmatprep.subr.bf16.mxu0 0
      %1047 = vmatpush1.bf16.msra.mxu0 0
      %1048 = vmatprep.subr.bf16.mxu0 0
      %1049 = vmatpush1.bf16.msra.mxu0 0
      %1050 = vmatprep.mubr.bf16.mxu0 0
      %1051 = vmatmul.mubr.bf16.gmra.mrb[0].mxu0 %v962
      %v1052 = vpop.f32.mrb[0].mxu0
      %v1053 = vadd.f32 0.0, %v1052
      %v1054 = vpop.f32.mrb[0].mxu0
      %v1055 = vpop.f32.mrb[0].mxu0
      %v1056 = vadd.f32 0.0, %v1055
      %v1057 = vpop.f32.mrb[0].mxu0
      %1058 = vmatprep.mubr.bf16.mxu0 0
      %1059 = vmatmul.mubr.bf16.gmra.mrb[0].mxu0 %v963
      %v1060 = vpop.f32.mrb[0].mxu0
      %v1061 = vadd.f32 0.0, %v1060
      %v1062 = vpop.f32.mrb[0].mxu0
      %v1063 = vpop.f32.mrb[0].mxu0
      %v1064 = vadd.f32 0.0, %v1063
      %v1065 = vpop.f32.mrb[0].mxu0
      %1066 = vmatprep.mubr.bf16.mxu0 0
      %1067 = vmatmul.mubr.bf16.gmra.mrb[0].mxu0 %v964
      %v1068 = vpop.f32.mrb[0].mxu0
      %v1069 = vadd.f32 0.0, %v1068
      %v1070 = vpop.f32.mrb[0].mxu0
      %v1071 = vpop.f32.mrb[0].mxu0
      %v1072 = vadd.f32 0.0, %v1071
      %v1073 = vpop.f32.mrb[0].mxu0
      %1074 = vmatprep.mubr.bf16.mxu0 0
      %1075 = vmatmul.mubr.bf16.gmra.mrb[0].mxu0 %v965
      %v1076 = vpop.f32.mrb[0].mxu0
      %v1077 = vadd.f32 0.0, %v1076
      %v1078 = vpop.f32.mrb[0].mxu0
      %v1079 = vpop.f32.mrb[0].mxu0
      %v1080 = vadd.f32 0.0, %v1079
      %v1081 = vpop.f32.mrb[0].mxu0
      %1082 = vdwg.mxu0
      %v1083 = vadd.f32 %v913, %v1053
      %v1084 = vadd.f32 %v914, %v1056
      %v1085 = vadd.f32 %v915, %v1061
      %v1086 = vadd.f32 %v916, %v1064
      %v1087 = vadd.f32 %v917, %v1069
      %v1088 = vadd.f32 %v918, %v1072
      %v1089 = vadd.f32 %v919, %v1077
      %v1090 = vadd.f32 %v920, %v1080
      %v1091 = vld [vmem:[%s306] sm:$0xf]
      %v1092 = vld [vmem:[%s306 + $0x8] sm:$0xf]
      %v1093 = vld [vmem:[%s306 + $0x10] sm:$0xf]
      %v1094 = vld [vmem:[%s306 + $0x18] sm:$0xf]
      %v1095 = vld [vmem:[%s306 + $0x20] sm:$0xf]
      %v1096 = vld [vmem:[%s306 + $0x28] sm:$0xf]
      %v1097 = vld [vmem:[%s306 + $0x30] sm:$0xf]
      %v1098 = vld [vmem:[%s306 + $0x38] sm:$0xf]
      %s1099 = scalar_lea.vmem %s4, 256
      %v1100 = vld [vmem:[%s1099] sm:$0xf]
      %v1101 = vld [vmem:[%s1099 + $0x4] sm:$0xf]
      %v1102 = vld [vmem:[%s1099 + $0x8] sm:$0xf]
      %v1103 = vld [vmem:[%s1099 + $0xc] sm:$0xf]
      %v1104 = vld [vmem:[%s1099 + $0x10] sm:$0xf]
      %v1105 = vld [vmem:[%s1099 + $0x14] sm:$0xf]
      %v1106 = vld [vmem:[%s1099 + $0x18] sm:$0xf]
      %v1107 = vld [vmem:[%s1099 + $0x1c] sm:$0xf]
      %v1108 = vld [vmem:[%s1099 + $0x20] sm:$0xf]
      %v1109 = vld [vmem:[%s1099 + $0x24] sm:$0xf]
      %v1110 = vld [vmem:[%s1099 + $0x28] sm:$0xf]
      %v1111 = vld [vmem:[%s1099 + $0x2c] sm:$0xf]
      %v1112 = vld [vmem:[%s1099 + $0x30] sm:$0xf]
      %v1113 = vld [vmem:[%s1099 + $0x34] sm:$0xf]
      %v1114 = vld [vmem:[%s1099 + $0x38] sm:$0xf]
      %v1115 = vld [vmem:[%s1099 + $0x3c] sm:$0xf]
      %v1124 = vunpack.c.l.b16 %v1091
      %v1125 = vunpack.c.l.b16 %v1092
      %v1126 = vunpack.c.l.b16 %v1093
      %v1127 = vunpack.c.l.b16 %v1094
      %v1128 = vunpack.c.l.b16 %v1095
      %v1129 = vunpack.c.l.b16 %v1096
      %v1130 = vunpack.c.l.b16 %v1097
      %v1131 = vunpack.c.l.b16 %v1098
      %v1132 = vpack.c.b16 %v1125, %v1124
      %v1133 = vpack.c.b16 %v1127, %v1126
      %v1134 = vpack.c.b16 %v1129, %v1128
      %v1135 = vpack.c.b16 %v1131, %v1130
      %v1156 = vunpack.c.l.b16 %v1100
      %v1157 = vunpack.c.l.b16 %v1101
      %v1158 = vunpack.c.l.b16 %v1102
      %v1159 = vunpack.c.l.b16 %v1103
      %v1160 = vunpack.c.l.b16 %v1104
      %v1161 = vunpack.c.l.b16 %v1105
      %v1162 = vunpack.c.l.b16 %v1106
      %v1163 = vunpack.c.l.b16 %v1107
      %v1164 = vunpack.c.l.b16 %v1108
      %v1165 = vunpack.c.l.b16 %v1109
      %v1166 = vunpack.c.l.b16 %v1110
      %v1167 = vunpack.c.l.b16 %v1111
      %v1168 = vunpack.c.l.b16 %v1112
      %v1169 = vunpack.c.l.b16 %v1113
      %v1170 = vunpack.c.l.b16 %v1114
      %v1171 = vunpack.c.l.b16 %v1115
      %v1172 = vpack.c.b16 %v1157, %v1156
      %v1173 = vpack.c.b16 %v1159, %v1158
      %v1174 = vpack.c.b16 %v1161, %v1160
      %v1175 = vpack.c.b16 %v1163, %v1162
      %v1176 = vpack.c.b16 %v1165, %v1164
      %v1177 = vpack.c.b16 %v1167, %v1166
      %v1178 = vpack.c.b16 %v1169, %v1168
      %v1179 = vpack.c.b16 %v1171, %v1170
      %1188 = vmatprep.subr.bf16.mxu0 0
      %1189 = vmatpush1.bf16.msra.mxu0 %v1172
      %1190 = vmatprep.subr.bf16.mxu0 0
      %1191 = vmatpush1.bf16.msra.mxu0 %v1173
      %1192 = vmatprep.subr.bf16.mxu0 0
      %1193 = vmatpush1.bf16.msra.mxu0 %v1174
      %1194 = vmatprep.subr.bf16.mxu0 0
      %1195 = vmatpush1.bf16.msra.mxu0 %v1175
      %1196 = vmatprep.subr.bf16.mxu0 0
      %1197 = vmatpush1.bf16.msra.mxu0 %v1176
      %1198 = vmatprep.subr.bf16.mxu0 0
      %1199 = vmatpush1.bf16.msra.mxu0 %v1177
      %1200 = vmatprep.subr.bf16.mxu0 0
      %1201 = vmatpush1.bf16.msra.mxu0 %v1178
      %1202 = vmatprep.subr.bf16.mxu0 0
      %1203 = vmatpush1.bf16.msra.mxu0 %v1179
      %1204 = vmatprep.subr.bf16.mxu0 0
      %1205 = vmatpush1.bf16.msra.mxu0 0
      %1206 = vmatprep.subr.bf16.mxu0 0
      %1207 = vmatpush1.bf16.msra.mxu0 0
      %1208 = vmatprep.subr.bf16.mxu0 0
      %1209 = vmatpush1.bf16.msra.mxu0 0
      %1210 = vmatprep.subr.bf16.mxu0 0
      %1211 = vmatpush1.bf16.msra.mxu0 0
      %1212 = vmatprep.subr.bf16.mxu0 0
      %1213 = vmatpush1.bf16.msra.mxu0 0
      %1214 = vmatprep.subr.bf16.mxu0 0
      %1215 = vmatpush1.bf16.msra.mxu0 0
      %1216 = vmatprep.subr.bf16.mxu0 0
      %1217 = vmatpush1.bf16.msra.mxu0 0
      %1218 = vmatprep.subr.bf16.mxu0 0
      %1219 = vmatpush1.bf16.msra.mxu0 0
      %1220 = vmatprep.mubr.bf16.mxu0 0
      %1221 = vmatmul.mubr.bf16.gmra.mrb[0].mxu0 %v1132
      %v1222 = vpop.f32.mrb[0].mxu0
      %v1223 = vadd.f32 0.0, %v1222
      %v1224 = vpop.f32.mrb[0].mxu0
      %v1225 = vpop.f32.mrb[0].mxu0
      %v1226 = vadd.f32 0.0, %v1225
      %v1227 = vpop.f32.mrb[0].mxu0
      %1228 = vmatprep.mubr.bf16.mxu0 0
      %1229 = vmatmul.mubr.bf16.gmra.mrb[0].mxu0 %v1133
      %v1230 = vpop.f32.mrb[0].mxu0
      %v1231 = vadd.f32 0.0, %v1230
      %v1232 = vpop.f32.mrb[0].mxu0
      %v1233 = vpop.f32.mrb[0].mxu0
      %v1234 = vadd.f32 0.0, %v1233
      %v1235 = vpop.f32.mrb[0].mxu0
      %1236 = vmatprep.mubr.bf16.mxu0 0
      %1237 = vmatmul.mubr.bf16.gmra.mrb[0].mxu0 %v1134
      %v1238 = vpop.f32.mrb[0].mxu0
      %v1239 = vadd.f32 0.0, %v1238
      %v1240 = vpop.f32.mrb[0].mxu0
      %v1241 = vpop.f32.mrb[0].mxu0
      %v1242 = vadd.f32 0.0, %v1241
      %v1243 = vpop.f32.mrb[0].mxu0
      %1244 = vmatprep.mubr.bf16.mxu0 0
      %1245 = vmatmul.mubr.bf16.gmra.mrb[0].mxu0 %v1135
      %v1246 = vpop.f32.mrb[0].mxu0
      %v1247 = vadd.f32 0.0, %v1246
      %v1248 = vpop.f32.mrb[0].mxu0
      %v1249 = vpop.f32.mrb[0].mxu0
      %v1250 = vadd.f32 0.0, %v1249
      %v1251 = vpop.f32.mrb[0].mxu0
      %1252 = vdwg.mxu0
      %v1253 = vadd.f32 %v1083, %v1223
      %v1254 = vadd.f32 %v1084, %v1226
      %v1255 = vadd.f32 %v1085, %v1231
      %v1256 = vadd.f32 %v1086, %v1234
      %v1257 = vadd.f32 %v1087, %v1239
      %v1258 = vadd.f32 %v1088, %v1242
      %v1259 = vadd.f32 %v1089, %v1247
      %v1260 = vadd.f32 %v1090, %v1250
      %v1261 = vld [vmem:[%s301] sm:$0xf]
      %v1262 = vld [vmem:[%s301 + $0x4] sm:$0x1]
      %v1263 = vld [vmem:[%s301 + $0x8] sm:$0xf]
      %v1264 = vld [vmem:[%s301 + $0xc] sm:$0x1]
      %v1265 = vld [vmem:[%s301 + $0x10] sm:$0xf]
      %v1266 = vld [vmem:[%s301 + $0x14] sm:$0x1]
      %v1267 = vld [vmem:[%s301 + $0x18] sm:$0xf]
      %v1268 = vld [vmem:[%s301 + $0x1c] sm:$0x1]
      %v1269 = vld [vmem:[%s301 + $0x20] sm:$0xf]
      %v1270 = vld [vmem:[%s301 + $0x24] sm:$0x1]
      %v1271 = vld [vmem:[%s301 + $0x28] sm:$0xf]
      %v1272 = vld [vmem:[%s301 + $0x2c] sm:$0x1]
      %v1273 = vld [vmem:[%s301 + $0x30] sm:$0xf]
      %v1274 = vld [vmem:[%s301 + $0x34] sm:$0x1]
      %v1275 = vld [vmem:[%s301 + $0x38] sm:$0xf]
      %v1276 = vld [vmem:[%s301 + $0x3c] sm:$0x1]
      %v1278 = vshrl.u32 %v1261, 16
      %v1280 = vrot.slane %v1278, 4
      %v1281 = vshll.u32 %v1261, 16
      %v1283 = vrot.slane %v1281, 5
      %v1284 = vor.u32 %v1280, %v1283
      %v1285 = vrot.slane %v1284, 4
      %v1287 = vshll.u32 %v1262, 16
      %v1289 = vrot.slane %v1287, 5
      %v1290 = vsel %vm654, %v1285, %v1289
      %v1292 = vshrl.u32 %v1263, 16
      %v1294 = vrot.slane %v1292, 4
      %v1295 = vshll.u32 %v1263, 16
      %v1297 = vrot.slane %v1295, 5
      %v1298 = vor.u32 %v1294, %v1297
      %v1299 = vrot.slane %v1298, 4
      %v1301 = vshll.u32 %v1264, 16
      %v1303 = vrot.slane %v1301, 5
      %v1304 = vsel %vm654, %v1299, %v1303
      %v1306 = vshrl.u32 %v1265, 16
      %v1308 = vrot.slane %v1306, 4
      %v1309 = vshll.u32 %v1265, 16
      %v1311 = vrot.slane %v1309, 5
      %v1312 = vor.u32 %v1308, %v1311
      %v1313 = vrot.slane %v1312, 4
      %v1315 = vshll.u32 %v1266, 16
      %v1317 = vrot.slane %v1315, 5
      %v1318 = vsel %vm654, %v1313, %v1317
      %v1320 = vshrl.u32 %v1267, 16
      %v1322 = vrot.slane %v1320, 4
      %v1323 = vshll.u32 %v1267, 16
      %v1325 = vrot.slane %v1323, 5
      %v1326 = vor.u32 %v1322, %v1325
      %v1327 = vrot.slane %v1326, 4
      %v1329 = vshll.u32 %v1268, 16
      %v1331 = vrot.slane %v1329, 5
      %v1332 = vsel %vm654, %v1327, %v1331
      %v1334 = vshrl.u32 %v1269, 16
      %v1336 = vrot.slane %v1334, 4
      %v1337 = vshll.u32 %v1269, 16
      %v1339 = vrot.slane %v1337, 5
      %v1340 = vor.u32 %v1336, %v1339
      %v1341 = vrot.slane %v1340, 4
      %v1343 = vshll.u32 %v1270, 16
      %v1345 = vrot.slane %v1343, 5
      %v1346 = vsel %vm654, %v1341, %v1345
      %v1348 = vshrl.u32 %v1271, 16
      %v1350 = vrot.slane %v1348, 4
      %v1351 = vshll.u32 %v1271, 16
      %v1353 = vrot.slane %v1351, 5
      %v1354 = vor.u32 %v1350, %v1353
      %v1355 = vrot.slane %v1354, 4
      %v1357 = vshll.u32 %v1272, 16
      %v1359 = vrot.slane %v1357, 5
      %v1360 = vsel %vm654, %v1355, %v1359
      %v1362 = vshrl.u32 %v1273, 16
      %v1364 = vrot.slane %v1362, 4
      %v1365 = vshll.u32 %v1273, 16
      %v1367 = vrot.slane %v1365, 5
      %v1368 = vor.u32 %v1364, %v1367
      %v1369 = vrot.slane %v1368, 4
      %v1371 = vshll.u32 %v1274, 16
      %v1373 = vrot.slane %v1371, 5
      %v1374 = vsel %vm654, %v1369, %v1373
      %v1376 = vshrl.u32 %v1275, 16
      %v1378 = vrot.slane %v1376, 4
      %v1379 = vshll.u32 %v1275, 16
      %v1381 = vrot.slane %v1379, 5
      %v1382 = vor.u32 %v1378, %v1381
      %v1383 = vrot.slane %v1382, 4
      %v1385 = vshll.u32 %v1276, 16
      %v1387 = vrot.slane %v1385, 5
      %v1388 = vsel %vm654, %v1383, %v1387
      %s1389 = scalar_lea.vmem %s4, 320
      %v1390 = vld [vmem:[%s1389] sm:$0xf]
      %v1391 = vld [vmem:[%s1389 + $0x4] sm:$0xf]
      %v1392 = vld [vmem:[%s1389 + $0x8] sm:$0xf]
      %v1393 = vld [vmem:[%s1389 + $0xc] sm:$0xf]
      %v1394 = vld [vmem:[%s1389 + $0x10] sm:$0xf]
      %v1395 = vld [vmem:[%s1389 + $0x14] sm:$0xf]
      %v1396 = vld [vmem:[%s1389 + $0x18] sm:$0xf]
      %v1397 = vld [vmem:[%s1389 + $0x1c] sm:$0xf]
      %v1398 = vld [vmem:[%s1389 + $0x20] sm:$0xf]
      %v1399 = vld [vmem:[%s1389 + $0x24] sm:$0xf]
      %v1400 = vld [vmem:[%s1389 + $0x28] sm:$0xf]
      %v1401 = vld [vmem:[%s1389 + $0x2c] sm:$0xf]
      %v1402 = vld [vmem:[%s1389 + $0x30] sm:$0xf]
      %v1403 = vld [vmem:[%s1389 + $0x34] sm:$0xf]
      %v1404 = vld [vmem:[%s1389 + $0x38] sm:$0xf]
      %v1405 = vld [vmem:[%s1389 + $0x3c] sm:$0xf]
      %v1406 = vunpack.c.l.b16 %v1290
      %v1407 = vunpack.c.l.b16 %v1304
      %v1408 = vunpack.c.l.b16 %v1318
      %v1409 = vunpack.c.l.b16 %v1332
      %v1410 = vunpack.c.l.b16 %v1346
      %v1411 = vunpack.c.l.b16 %v1360
      %v1412 = vunpack.c.l.b16 %v1374
      %v1413 = vunpack.c.l.b16 %v1388
      %v1414 = vpack.c.b16 %v1407, %v1406
      %v1415 = vpack.c.b16 %v1409, %v1408
      %v1416 = vpack.c.b16 %v1411, %v1410
      %v1417 = vpack.c.b16 %v1413, %v1412
      %v1438 = vunpack.c.l.b16 %v1390
      %v1439 = vunpack.c.l.b16 %v1391
      %v1440 = vunpack.c.l.b16 %v1392
      %v1441 = vunpack.c.l.b16 %v1393
      %v1442 = vunpack.c.l.b16 %v1394
      %v1443 = vunpack.c.l.b16 %v1395
      %v1444 = vunpack.c.l.b16 %v1396
      %v1445 = vunpack.c.l.b16 %v1397
      %v1446 = vunpack.c.l.b16 %v1398
      %v1447 = vunpack.c.l.b16 %v1399
      %v1448 = vunpack.c.l.b16 %v1400
      %v1449 = vunpack.c.l.b16 %v1401
      %v1450 = vunpack.c.l.b16 %v1402
      %v1451 = vunpack.c.l.b16 %v1403
      %v1452 = vunpack.c.l.b16 %v1404
      %v1453 = vunpack.c.l.b16 %v1405
      %v1454 = vpack.c.b16 %v1439, %v1438
      %v1455 = vpack.c.b16 %v1441, %v1440
      %v1456 = vpack.c.b16 %v1443, %v1442
      %v1457 = vpack.c.b16 %v1445, %v1444
      %v1458 = vpack.c.b16 %v1447, %v1446
      %v1459 = vpack.c.b16 %v1449, %v1448
      %v1460 = vpack.c.b16 %v1451, %v1450
      %v1461 = vpack.c.b16 %v1453, %v1452
      %1470 = vmatprep.subr.bf16.mxu0 0
      %1471 = vmatpush1.bf16.msra.mxu0 %v1454
      %1472 = vmatprep.subr.bf16.mxu0 0
      %1473 = vmatpush1.bf16.msra.mxu0 %v1455
      %1474 = vmatprep.subr.bf16.mxu0 0
      %1475 = vmatpush1.bf16.msra.mxu0 %v1456
      %1476 = vmatprep.subr.bf16.mxu0 0
      %1477 = vmatpush1.bf16.msra.mxu0 %v1457
      %1478 = vmatprep.subr.bf16.mxu0 0
      %1479 = vmatpush1.bf16.msra.mxu0 %v1458
      %1480 = vmatprep.subr.bf16.mxu0 0
      %1481 = vmatpush1.bf16.msra.mxu0 %v1459
      %1482 = vmatprep.subr.bf16.mxu0 0
      %1483 = vmatpush1.bf16.msra.mxu0 %v1460
      %1484 = vmatprep.subr.bf16.mxu0 0
      %1485 = vmatpush1.bf16.msra.mxu0 %v1461
      %1486 = vmatprep.subr.bf16.mxu0 0
      %1487 = vmatpush1.bf16.msra.mxu0 0
      %1488 = vmatprep.subr.bf16.mxu0 0
      %1489 = vmatpush1.bf16.msra.mxu0 0
      %1490 = vmatprep.subr.bf16.mxu0 0
      %1491 = vmatpush1.bf16.msra.mxu0 0
      %1492 = vmatprep.subr.bf16.mxu0 0
      %1493 = vmatpush1.bf16.msra.mxu0 0
      %1494 = vmatprep.subr.bf16.mxu0 0
      %1495 = vmatpush1.bf16.msra.mxu0 0
      %1496 = vmatprep.subr.bf16.mxu0 0
      %1497 = vmatpush1.bf16.msra.mxu0 0
      %1498 = vmatprep.subr.bf16.mxu0 0
      %1499 = vmatpush1.bf16.msra.mxu0 0
      %1500 = vmatprep.subr.bf16.mxu0 0
      %1501 = vmatpush1.bf16.msra.mxu0 0
      %1502 = vmatprep.mubr.bf16.mxu0 0
      %1503 = vmatmul.mubr.bf16.gmra.mrb[0].mxu0 %v1414
      %v1504 = vpop.f32.mrb[0].mxu0
      %v1505 = vadd.f32 0.0, %v1504
      %v1506 = vpop.f32.mrb[0].mxu0
      %v1507 = vpop.f32.mrb[0].mxu0
      %v1508 = vadd.f32 0.0, %v1507
      %v1509 = vpop.f32.mrb[0].mxu0
      %1510 = vmatprep.mubr.bf16.mxu0 0
      %1511 = vmatmul.mubr.bf16.gmra.mrb[0].mxu0 %v1415
      %v1512 = vpop.f32.mrb[0].mxu0
      %v1513 = vadd.f32 0.0, %v1512
      %v1514 = vpop.f32.mrb[0].mxu0
      %v1515 = vpop.f32.mrb[0].mxu0
      %v1516 = vadd.f32 0.0, %v1515
      %v1517 = vpop.f32.mrb[0].mxu0
      %1518 = vmatprep.mubr.bf16.mxu0 0
      %1519 = vmatmul.mubr.bf16.gmra.mrb[0].mxu0 %v1416
      %v1520 = vpop.f32.mrb[0].mxu0
      %v1521 = vadd.f32 0.0, %v1520
      %v1522 = vpop.f32.mrb[0].mxu0
      %v1523 = vpop.f32.mrb[0].mxu0
      %v1524 = vadd.f32 0.0, %v1523
      %v1525 = vpop.f32.mrb[0].mxu0
      %1526 = vmatprep.mubr.bf16.mxu0 0
      %1527 = vmatmul.mubr.bf16.gmra.mrb[0].mxu0 %v1417
      %v1528 = vpop.f32.mrb[0].mxu0
      %v1529 = vadd.f32 0.0, %v1528
      %v1530 = vpop.f32.mrb[0].mxu0
      %v1531 = vpop.f32.mrb[0].mxu0
      %v1532 = vadd.f32 0.0, %v1531
      %v1533 = vpop.f32.mrb[0].mxu0
      %1534 = vdwg.mxu0
      %v1535 = vadd.f32 %v1253, %v1505
      %v1536 = vadd.f32 %v1254, %v1508
      %v1537 = vadd.f32 %v1255, %v1513
      %v1538 = vadd.f32 %v1256, %v1516
      %v1539 = vadd.f32 %v1257, %v1521
      %v1540 = vadd.f32 %v1258, %v1524
      %v1541 = vadd.f32 %v1259, %v1529
      %v1542 = vadd.f32 %v1260, %v1532
      %s1543 = scalar_lea.vmem %s291, 8
      %v1544 = vld [vmem:[%s1543] sm:$0xf]
      %v1545 = vld [vmem:[%s1543 + $0x8] sm:$0xf]
      %v1546 = vld [vmem:[%s1543 + $0x10] sm:$0xf]
      %v1547 = vld [vmem:[%s1543 + $0x18] sm:$0xf]
      %v1548 = vld [vmem:[%s1543 + $0x20] sm:$0xf]
      %v1549 = vld [vmem:[%s1543 + $0x28] sm:$0xf]
      %v1550 = vld [vmem:[%s1543 + $0x30] sm:$0xf]
      %v1551 = vld [vmem:[%s1543 + $0x38] sm:$0xf]
      %s1552 = scalar_lea.vmem %s4, 384
      %v1553 = vld [vmem:[%s1552] sm:$0xf]
      %v1554 = vld [vmem:[%s1552 + $0x4] sm:$0xf]
      %v1555 = vld [vmem:[%s1552 + $0x8] sm:$0xf]
      %v1556 = vld [vmem:[%s1552 + $0xc] sm:$0xf]
      %v1557 = vld [vmem:[%s1552 + $0x10] sm:$0xf]
      %v1558 = vld [vmem:[%s1552 + $0x14] sm:$0xf]
      %v1559 = vld [vmem:[%s1552 + $0x18] sm:$0xf]
      %v1560 = vld [vmem:[%s1552 + $0x1c] sm:$0xf]
      %v1561 = vld [vmem:[%s1552 + $0x20] sm:$0xf]
      %v1562 = vld [vmem:[%s1552 + $0x24] sm:$0xf]
      %v1563 = vld [vmem:[%s1552 + $0x28] sm:$0xf]
      %v1564 = vld [vmem:[%s1552 + $0x2c] sm:$0xf]
      %v1565 = vld [vmem:[%s1552 + $0x30] sm:$0xf]
      %v1566 = vld [vmem:[%s1552 + $0x34] sm:$0xf]
      %v1567 = vld [vmem:[%s1552 + $0x38] sm:$0xf]
      %v1568 = vld [vmem:[%s1552 + $0x3c] sm:$0xf]
      %v1577 = vunpack.c.l.b16 %v1544
      %v1578 = vunpack.c.l.b16 %v1545
      %v1579 = vunpack.c.l.b16 %v1546
      %v1580 = vunpack.c.l.b16 %v1547
      %v1581 = vunpack.c.l.b16 %v1548
      %v1582 = vunpack.c.l.b16 %v1549
      %v1583 = vunpack.c.l.b16 %v1550
      %v1584 = vunpack.c.l.b16 %v1551
      %v1585 = vpack.c.b16 %v1578, %v1577
      %v1586 = vpack.c.b16 %v1580, %v1579
      %v1587 = vpack.c.b16 %v1582, %v1581
      %v1588 = vpack.c.b16 %v1584, %v1583
      %v1609 = vunpack.c.l.b16 %v1553
      %v1610 = vunpack.c.l.b16 %v1554
      %v1611 = vunpack.c.l.b16 %v1555
      %v1612 = vunpack.c.l.b16 %v1556
      %v1613 = vunpack.c.l.b16 %v1557
      %v1614 = vunpack.c.l.b16 %v1558
      %v1615 = vunpack.c.l.b16 %v1559
      %v1616 = vunpack.c.l.b16 %v1560
      %v1617 = vunpack.c.l.b16 %v1561
      %v1618 = vunpack.c.l.b16 %v1562
      %v1619 = vunpack.c.l.b16 %v1563
      %v1620 = vunpack.c.l.b16 %v1564
      %v1621 = vunpack.c.l.b16 %v1565
      %v1622 = vunpack.c.l.b16 %v1566
      %v1623 = vunpack.c.l.b16 %v1567
      %v1624 = vunpack.c.l.b16 %v1568
      %v1625 = vpack.c.b16 %v1610, %v1609
      %v1626 = vpack.c.b16 %v1612, %v1611
      %v1627 = vpack.c.b16 %v1614, %v1613
      %v1628 = vpack.c.b16 %v1616, %v1615
      %v1629 = vpack.c.b16 %v1618, %v1617
      %v1630 = vpack.c.b16 %v1620, %v1619
      %v1631 = vpack.c.b16 %v1622, %v1621
      %v1632 = vpack.c.b16 %v1624, %v1623
      %1641 = vmatprep.subr.bf16.mxu0 0
      %1642 = vmatpush1.bf16.msra.mxu0 %v1625
      %1643 = vmatprep.subr.bf16.mxu0 0
      %1644 = vmatpush1.bf16.msra.mxu0 %v1626
      %1645 = vmatprep.subr.bf16.mxu0 0
      %1646 = vmatpush1.bf16.msra.mxu0 %v1627
      %1647 = vmatprep.subr.bf16.mxu0 0
      %1648 = vmatpush1.bf16.msra.mxu0 %v1628
      %1649 = vmatprep.subr.bf16.mxu0 0
      %1650 = vmatpush1.bf16.msra.mxu0 %v1629
      %1651 = vmatprep.subr.bf16.mxu0 0
      %1652 = vmatpush1.bf16.msra.mxu0 %v1630
      %1653 = vmatprep.subr.bf16.mxu0 0
      %1654 = vmatpush1.bf16.msra.mxu0 %v1631
      %1655 = vmatprep.subr.bf16.mxu0 0
      %1656 = vmatpush1.bf16.msra.mxu0 %v1632
      %1657 = vmatprep.subr.bf16.mxu0 0
      %1658 = vmatpush1.bf16.msra.mxu0 0
      %1659 = vmatprep.subr.bf16.mxu0 0
      %1660 = vmatpush1.bf16.msra.mxu0 0
      %1661 = vmatprep.subr.bf16.mxu0 0
      %1662 = vmatpush1.bf16.msra.mxu0 0
      %1663 = vmatprep.subr.bf16.mxu0 0
      %1664 = vmatpush1.bf16.msra.mxu0 0
      %1665 = vmatprep.subr.bf16.mxu0 0
      %1666 = vmatpush1.bf16.msra.mxu0 0
      %1667 = vmatprep.subr.bf16.mxu0 0
      %1668 = vmatpush1.bf16.msra.mxu0 0
      %1669 = vmatprep.subr.bf16.mxu0 0
      %1670 = vmatpush1.bf16.msra.mxu0 0
      %1671 = vmatprep.subr.bf16.mxu0 0
      %1672 = vmatpush1.bf16.msra.mxu0 0
      %1673 = vmatprep.mubr.bf16.mxu0 0
      %1674 = vmatmul.mubr.bf16.gmra.mrb[0].mxu0 %v1585
      %v1675 = vpop.f32.mrb[0].mxu0
      %v1676 = vadd.f32 0.0, %v1675
      %v1677 = vpop.f32.mrb[0].mxu0
      %v1678 = vpop.f32.mrb[0].mxu0
      %v1679 = vadd.f32 0.0, %v1678
      %v1680 = vpop.f32.mrb[0].mxu0
      %1681 = vmatprep.mubr.bf16.mxu0 0
      %1682 = vmatmul.mubr.bf16.gmra.mrb[0].mxu0 %v1586
      %v1683 = vpop.f32.mrb[0].mxu0
      %v1684 = vadd.f32 0.0, %v1683
      %v1685 = vpop.f32.mrb[0].mxu0
      %v1686 = vpop.f32.mrb[0].mxu0
      %v1687 = vadd.f32 0.0, %v1686
      %v1688 = vpop.f32.mrb[0].mxu0
      %1689 = vmatprep.mubr.bf16.mxu0 0
      %1690 = vmatmul.mubr.bf16.gmra.mrb[0].mxu0 %v1587
      %v1691 = vpop.f32.mrb[0].mxu0
      %v1692 = vadd.f32 0.0, %v1691
      %v1693 = vpop.f32.mrb[0].mxu0
      %v1694 = vpop.f32.mrb[0].mxu0
      %v1695 = vadd.f32 0.0, %v1694
      %v1696 = vpop.f32.mrb[0].mxu0
      %1697 = vmatprep.mubr.bf16.mxu0 0
      %1698 = vmatmul.mubr.bf16.gmra.mrb[0].mxu0 %v1588
      %v1699 = vpop.f32.mrb[0].mxu0
      %v1700 = vadd.f32 0.0, %v1699
      %v1701 = vpop.f32.mrb[0].mxu0
      %v1702 = vpop.f32.mrb[0].mxu0
      %v1703 = vadd.f32 0.0, %v1702
      %v1704 = vpop.f32.mrb[0].mxu0
      %1705 = vdwg.mxu0
      %v1706 = vadd.f32 %v1535, %v1676
      %v1707 = vadd.f32 %v1536, %v1679
      %v1708 = vadd.f32 %v1537, %v1684
      %v1709 = vadd.f32 %v1538, %v1687
      %v1710 = vadd.f32 %v1539, %v1692
      %v1711 = vadd.f32 %v1540, %v1695
      %v1712 = vadd.f32 %v1541, %v1700
      %v1713 = vadd.f32 %v1542, %v1703
      %s1714 = scalar_lea.vmem %s296, 8
      %v1715 = vld [vmem:[%s1714] sm:$0xf]
      %v1716 = vld [vmem:[%s1714 + $0x8] sm:$0xf]
      %v1717 = vld [vmem:[%s1714 + $0x10] sm:$0xf]
      %v1718 = vld [vmem:[%s1714 + $0x18] sm:$0xf]
      %v1719 = vld [vmem:[%s1714 + $0x20] sm:$0xf]
      %v1720 = vld [vmem:[%s1714 + $0x28] sm:$0xf]
      %v1721 = vld [vmem:[%s1714 + $0x30] sm:$0xf]
      %v1722 = vld [vmem:[%s1714 + $0x38] sm:$0xf]
      %s1723 = scalar_lea.vmem %s4, 448
      %v1724 = vld [vmem:[%s1723] sm:$0xf]
      %v1725 = vld [vmem:[%s1723 + $0x4] sm:$0xf]
      %v1726 = vld [vmem:[%s1723 + $0x8] sm:$0xf]
      %v1727 = vld [vmem:[%s1723 + $0xc] sm:$0xf]
      %v1728 = vld [vmem:[%s1723 + $0x10] sm:$0xf]
      %v1729 = vld [vmem:[%s1723 + $0x14] sm:$0xf]
      %v1730 = vld [vmem:[%s1723 + $0x18] sm:$0xf]
      %v1731 = vld [vmem:[%s1723 + $0x1c] sm:$0xf]
      %v1732 = vld [vmem:[%s1723 + $0x20] sm:$0xf]
      %v1733 = vld [vmem:[%s1723 + $0x24] sm:$0xf]
      %v1734 = vld [vmem:[%s1723 + $0x28] sm:$0xf]
      %v1735 = vld [vmem:[%s1723 + $0x2c] sm:$0xf]
      %v1736 = vld [vmem:[%s1723 + $0x30] sm:$0xf]
      %v1737 = vld [vmem:[%s1723 + $0x34] sm:$0xf]
      %v1738 = vld [vmem:[%s1723 + $0x38] sm:$0xf]
      %v1739 = vld [vmem:[%s1723 + $0x3c] sm:$0xf]
      %v1748 = vunpack.c.l.b16 %v1715
      %v1749 = vunpack.c.l.b16 %v1716
      %v1750 = vunpack.c.l.b16 %v1717
      %v1751 = vunpack.c.l.b16 %v1718
      %v1752 = vunpack.c.l.b16 %v1719
      %v1753 = vunpack.c.l.b16 %v1720
      %v1754 = vunpack.c.l.b16 %v1721
      %v1755 = vunpack.c.l.b16 %v1722
      %v1756 = vpack.c.b16 %v1749, %v1748
      %v1757 = vpack.c.b16 %v1751, %v1750
      %v1758 = vpack.c.b16 %v1753, %v1752
      %v1759 = vpack.c.b16 %v1755, %v1754
      %v1780 = vunpack.c.l.b16 %v1724
      %v1781 = vunpack.c.l.b16 %v1725
      %v1782 = vunpack.c.l.b16 %v1726
      %v1783 = vunpack.c.l.b16 %v1727
      %v1784 = vunpack.c.l.b16 %v1728
      %v1785 = vunpack.c.l.b16 %v1729
      %v1786 = vunpack.c.l.b16 %v1730
      %v1787 = vunpack.c.l.b16 %v1731
      %v1788 = vunpack.c.l.b16 %v1732
      %v1789 = vunpack.c.l.b16 %v1733
      %v1790 = vunpack.c.l.b16 %v1734
      %v1791 = vunpack.c.l.b16 %v1735
      %v1792 = vunpack.c.l.b16 %v1736
      %v1793 = vunpack.c.l.b16 %v1737
      %v1794 = vunpack.c.l.b16 %v1738
      %v1795 = vunpack.c.l.b16 %v1739
      %v1796 = vpack.c.b16 %v1781, %v1780
      %v1797 = vpack.c.b16 %v1783, %v1782
      %v1798 = vpack.c.b16 %v1785, %v1784
      %v1799 = vpack.c.b16 %v1787, %v1786
      %v1800 = vpack.c.b16 %v1789, %v1788
      %v1801 = vpack.c.b16 %v1791, %v1790
      %v1802 = vpack.c.b16 %v1793, %v1792
      %v1803 = vpack.c.b16 %v1795, %v1794
      %1812 = vmatprep.subr.bf16.mxu0 0
      %1813 = vmatpush1.bf16.msra.mxu0 %v1796
      %1814 = vmatprep.subr.bf16.mxu0 0
      %1815 = vmatpush1.bf16.msra.mxu0 %v1797
      %1816 = vmatprep.subr.bf16.mxu0 0
      %1817 = vmatpush1.bf16.msra.mxu0 %v1798
      %1818 = vmatprep.subr.bf16.mxu0 0
      %1819 = vmatpush1.bf16.msra.mxu0 %v1799
      %1820 = vmatprep.subr.bf16.mxu0 0
      %1821 = vmatpush1.bf16.msra.mxu0 %v1800
      %1822 = vmatprep.subr.bf16.mxu0 0
      %1823 = vmatpush1.bf16.msra.mxu0 %v1801
      %1824 = vmatprep.subr.bf16.mxu0 0
      %1825 = vmatpush1.bf16.msra.mxu0 %v1802
      %1826 = vmatprep.subr.bf16.mxu0 0
      %1827 = vmatpush1.bf16.msra.mxu0 %v1803
      %1828 = vmatprep.subr.bf16.mxu0 0
      %1829 = vmatpush1.bf16.msra.mxu0 0
      %1830 = vmatprep.subr.bf16.mxu0 0
      %1831 = vmatpush1.bf16.msra.mxu0 0
      %1832 = vmatprep.subr.bf16.mxu0 0
      %1833 = vmatpush1.bf16.msra.mxu0 0
      %1834 = vmatprep.subr.bf16.mxu0 0
      %1835 = vmatpush1.bf16.msra.mxu0 0
      %1836 = vmatprep.subr.bf16.mxu0 0
      %1837 = vmatpush1.bf16.msra.mxu0 0
      %1838 = vmatprep.subr.bf16.mxu0 0
      %1839 = vmatpush1.bf16.msra.mxu0 0
      %1840 = vmatprep.subr.bf16.mxu0 0
      %1841 = vmatpush1.bf16.msra.mxu0 0
      %1842 = vmatprep.subr.bf16.mxu0 0
      %1843 = vmatpush1.bf16.msra.mxu0 0
      %1844 = vmatprep.mubr.bf16.mxu0 0
      %1845 = vmatmul.mubr.bf16.gmra.mrb[0].mxu0 %v1756
      %v1846 = vpop.f32.mrb[0].mxu0
      %v1847 = vadd.f32 0.0, %v1846
      %v1848 = vpop.f32.mrb[0].mxu0
      %v1849 = vpop.f32.mrb[0].mxu0
      %v1850 = vadd.f32 0.0, %v1849
      %v1851 = vpop.f32.mrb[0].mxu0
      %1852 = vmatprep.mubr.bf16.mxu0 0
      %1853 = vmatmul.mubr.bf16.gmra.mrb[0].mxu0 %v1757
      %v1854 = vpop.f32.mrb[0].mxu0
      %v1855 = vadd.f32 0.0, %v1854
      %v1856 = vpop.f32.mrb[0].mxu0
      %v1857 = vpop.f32.mrb[0].mxu0
      %v1858 = vadd.f32 0.0, %v1857
      %v1859 = vpop.f32.mrb[0].mxu0
      %1860 = vmatprep.mubr.bf16.mxu0 0
      %1861 = vmatmul.mubr.bf16.gmra.mrb[0].mxu0 %v1758
      %v1862 = vpop.f32.mrb[0].mxu0
      %v1863 = vadd.f32 0.0, %v1862
      %v1864 = vpop.f32.mrb[0].mxu0
      %v1865 = vpop.f32.mrb[0].mxu0
      %v1866 = vadd.f32 0.0, %v1865
      %v1867 = vpop.f32.mrb[0].mxu0
      %1868 = vmatprep.mubr.bf16.mxu0 0
      %1869 = vmatmul.mubr.bf16.gmra.mrb[0].mxu0 %v1759
      %v1870 = vpop.f32.mrb[0].mxu0
      %v1871 = vadd.f32 0.0, %v1870
      %v1872 = vpop.f32.mrb[0].mxu0
      %v1873 = vpop.f32.mrb[0].mxu0
      %v1874 = vadd.f32 0.0, %v1873
      %v1875 = vpop.f32.mrb[0].mxu0
      %1876 = vdwg.mxu0
      %v1877 = vadd.f32 %v1706, %v1847
      %v1878 = vadd.f32 %v1707, %v1850
      %v1879 = vadd.f32 %v1708, %v1855
      %v1880 = vadd.f32 %v1709, %v1858
      %v1881 = vadd.f32 %v1710, %v1863
      %v1882 = vadd.f32 %v1711, %v1866
      %v1883 = vadd.f32 %v1712, %v1871
      %v1884 = vadd.f32 %v1713, %v1874
      %v1885 = vld [vmem:[%s1543] sm:$0xf]
      %v1886 = vld [vmem:[%s1543 + $0x4] sm:$0x1]
      %v1887 = vld [vmem:[%s1543 + $0x8] sm:$0xf]
      %v1888 = vld [vmem:[%s1543 + $0xc] sm:$0x1]
      %v1889 = vld [vmem:[%s1543 + $0x10] sm:$0xf]
      %v1890 = vld [vmem:[%s1543 + $0x14] sm:$0x1]
      %v1891 = vld [vmem:[%s1543 + $0x18] sm:$0xf]
      %v1892 = vld [vmem:[%s1543 + $0x1c] sm:$0x1]
      %v1893 = vld [vmem:[%s1543 + $0x20] sm:$0xf]
      %v1894 = vld [vmem:[%s1543 + $0x24] sm:$0x1]
      %v1895 = vld [vmem:[%s1543 + $0x28] sm:$0xf]
      %v1896 = vld [vmem:[%s1543 + $0x2c] sm:$0x1]
      %v1897 = vld [vmem:[%s1543 + $0x30] sm:$0xf]
      %v1898 = vld [vmem:[%s1543 + $0x34] sm:$0x1]
      %v1899 = vld [vmem:[%s1543 + $0x38] sm:$0xf]
      %v1900 = vld [vmem:[%s1543 + $0x3c] sm:$0x1]
      %v1902 = vshrl.u32 %v1885, 16
      %v1904 = vrot.slane %v1902, 4
      %v1905 = vshll.u32 %v1885, 16
      %v1907 = vrot.slane %v1905, 5
      %v1908 = vor.u32 %v1904, %v1907
      %v1909 = vrot.slane %v1908, 4
      %v1911 = vshll.u32 %v1886, 16
      %v1913 = vrot.slane %v1911, 5
      %v1914 = vsel %vm654, %v1909, %v1913
      %v1916 = vshrl.u32 %v1887, 16
      %v1918 = vrot.slane %v1916, 4
      %v1919 = vshll.u32 %v1887, 16
      %v1921 = vrot.slane %v1919, 5
      %v1922 = vor.u32 %v1918, %v1921
      %v1923 = vrot.slane %v1922, 4
      %v1925 = vshll.u32 %v1888, 16
      %v1927 = vrot.slane %v1925, 5
      %v1928 = vsel %vm654, %v1923, %v1927
      %v1930 = vshrl.u32 %v1889, 16
      %v1932 = vrot.slane %v1930, 4
      %v1933 = vshll.u32 %v1889, 16
      %v1935 = vrot.slane %v1933, 5
      %v1936 = vor.u32 %v1932, %v1935
      %v1937 = vrot.slane %v1936, 4
      %v1939 = vshll.u32 %v1890, 16
      %v1941 = vrot.slane %v1939, 5
      %v1942 = vsel %vm654, %v1937, %v1941
      %v1944 = vshrl.u32 %v1891, 16
      %v1946 = vrot.slane %v1944, 4
      %v1947 = vshll.u32 %v1891, 16
      %v1949 = vrot.slane %v1947, 5
      %v1950 = vor.u32 %v1946, %v1949
      %v1951 = vrot.slane %v1950, 4
      %v1953 = vshll.u32 %v1892, 16
      %v1955 = vrot.slane %v1953, 5
      %v1956 = vsel %vm654, %v1951, %v1955
      %v1958 = vshrl.u32 %v1893, 16
      %v1960 = vrot.slane %v1958, 4
      %v1961 = vshll.u32 %v1893, 16
      %v1963 = vrot.slane %v1961, 5
      %v1964 = vor.u32 %v1960, %v1963
      %v1965 = vrot.slane %v1964, 4
      %v1967 = vshll.u32 %v1894, 16
      %v1969 = vrot.slane %v1967, 5
      %v1970 = vsel %vm654, %v1965, %v1969
      %v1972 = vshrl.u32 %v1895, 16
      %v1974 = vrot.slane %v1972, 4
      %v1975 = vshll.u32 %v1895, 16
      %v1977 = vrot.slane %v1975, 5
      %v1978 = vor.u32 %v1974, %v1977
      %v1979 = vrot.slane %v1978, 4
      %v1981 = vshll.u32 %v1896, 16
      %v1983 = vrot.slane %v1981, 5
      %v1984 = vsel %vm654, %v1979, %v1983
      %v1986 = vshrl.u32 %v1897, 16
      %v1988 = vrot.slane %v1986, 4
      %v1989 = vshll.u32 %v1897, 16
      %v1991 = vrot.slane %v1989, 5
      %v1992 = vor.u32 %v1988, %v1991
      %v1993 = vrot.slane %v1992, 4
      %v1995 = vshll.u32 %v1898, 16
      %v1997 = vrot.slane %v1995, 5
      %v1998 = vsel %vm654, %v1993, %v1997
      %v2000 = vshrl.u32 %v1899, 16
      %v2002 = vrot.slane %v2000, 4
      %v2003 = vshll.u32 %v1899, 16
      %v2005 = vrot.slane %v2003, 5
      %v2006 = vor.u32 %v2002, %v2005
      %v2007 = vrot.slane %v2006, 4
      %v2009 = vshll.u32 %v1900, 16
      %v2011 = vrot.slane %v2009, 5
      %v2012 = vsel %vm654, %v2007, %v2011
      %s2013 = scalar_lea.vmem %s4, 512
      %v2014 = vld [vmem:[%s2013] sm:$0xf]
      %v2015 = vld [vmem:[%s2013 + $0x4] sm:$0xf]
      %v2016 = vld [vmem:[%s2013 + $0x8] sm:$0xf]
      %v2017 = vld [vmem:[%s2013 + $0xc] sm:$0xf]
      %v2018 = vld [vmem:[%s2013 + $0x10] sm:$0xf]
      %v2019 = vld [vmem:[%s2013 + $0x14] sm:$0xf]
      %v2020 = vld [vmem:[%s2013 + $0x18] sm:$0xf]
      %v2021 = vld [vmem:[%s2013 + $0x1c] sm:$0xf]
      %v2022 = vld [vmem:[%s2013 + $0x20] sm:$0xf]
      %v2023 = vld [vmem:[%s2013 + $0x24] sm:$0xf]
      %v2024 = vld [vmem:[%s2013 + $0x28] sm:$0xf]
      %v2025 = vld [vmem:[%s2013 + $0x2c] sm:$0xf]
      %v2026 = vld [vmem:[%s2013 + $0x30] sm:$0xf]
      %v2027 = vld [vmem:[%s2013 + $0x34] sm:$0xf]
      %v2028 = vld [vmem:[%s2013 + $0x38] sm:$0xf]
      %v2029 = vld [vmem:[%s2013 + $0x3c] sm:$0xf]
      %v2030 = vunpack.c.l.b16 %v1914
      %v2031 = vunpack.c.l.b16 %v1928
      %v2032 = vunpack.c.l.b16 %v1942
      %v2033 = vunpack.c.l.b16 %v1956
      %v2034 = vunpack.c.l.b16 %v1970
      %v2035 = vunpack.c.l.b16 %v1984
      %v2036 = vunpack.c.l.b16 %v1998
      %v2037 = vunpack.c.l.b16 %v2012
      %v2038 = vpack.c.b16 %v2031, %v2030
      %v2039 = vpack.c.b16 %v2033, %v2032
      %v2040 = vpack.c.b16 %v2035, %v2034
      %v2041 = vpack.c.b16 %v2037, %v2036
      %v2062 = vunpack.c.l.b16 %v2014
      %v2063 = vunpack.c.l.b16 %v2015
      %v2064 = vunpack.c.l.b16 %v2016
      %v2065 = vunpack.c.l.b16 %v2017
      %v2066 = vunpack.c.l.b16 %v2018
      %v2067 = vunpack.c.l.b16 %v2019
      %v2068 = vunpack.c.l.b16 %v2020
      %v2069 = vunpack.c.l.b16 %v2021
      %v2070 = vunpack.c.l.b16 %v2022
      %v2071 = vunpack.c.l.b16 %v2023
      %v2072 = vunpack.c.l.b16 %v2024
      %v2073 = vunpack.c.l.b16 %v2025
      %v2074 = vunpack.c.l.b16 %v2026
      %v2075 = vunpack.c.l.b16 %v2027
      %v2076 = vunpack.c.l.b16 %v2028
      %v2077 = vunpack.c.l.b16 %v2029
      %v2078 = vpack.c.b16 %v2063, %v2062
      %v2079 = vpack.c.b16 %v2065, %v2064
      %v2080 = vpack.c.b16 %v2067, %v2066
      %v2081 = vpack.c.b16 %v2069, %v2068
      %v2082 = vpack.c.b16 %v2071, %v2070
      %v2083 = vpack.c.b16 %v2073, %v2072
      %v2084 = vpack.c.b16 %v2075, %v2074
      %v2085 = vpack.c.b16 %v2077, %v2076
      %2094 = vmatprep.subr.bf16.mxu0 0
      %2095 = vmatpush1.bf16.msra.mxu0 %v2078
      %2096 = vmatprep.subr.bf16.mxu0 0
      %2097 = vmatpush1.bf16.msra.mxu0 %v2079
      %2098 = vmatprep.subr.bf16.mxu0 0
      %2099 = vmatpush1.bf16.msra.mxu0 %v2080
      %2100 = vmatprep.subr.bf16.mxu0 0
      %2101 = vmatpush1.bf16.msra.mxu0 %v2081
      %2102 = vmatprep.subr.bf16.mxu0 0
      %2103 = vmatpush1.bf16.msra.mxu0 %v2082
      %2104 = vmatprep.subr.bf16.mxu0 0
      %2105 = vmatpush1.bf16.msra.mxu0 %v2083
      %2106 = vmatprep.subr.bf16.mxu0 0
      %2107 = vmatpush1.bf16.msra.mxu0 %v2084
      %2108 = vmatprep.subr.bf16.mxu0 0
      %2109 = vmatpush1.bf16.msra.mxu0 %v2085
      %2110 = vmatprep.subr.bf16.mxu0 0
      %2111 = vmatpush1.bf16.msra.mxu0 0
      %2112 = vmatprep.subr.bf16.mxu0 0
      %2113 = vmatpush1.bf16.msra.mxu0 0
      %2114 = vmatprep.subr.bf16.mxu0 0
      %2115 = vmatpush1.bf16.msra.mxu0 0
      %2116 = vmatprep.subr.bf16.mxu0 0
      %2117 = vmatpush1.bf16.msra.mxu0 0
      %2118 = vmatprep.subr.bf16.mxu0 0
      %2119 = vmatpush1.bf16.msra.mxu0 0
      %2120 = vmatprep.subr.bf16.mxu0 0
      %2121 = vmatpush1.bf16.msra.mxu0 0
      %2122 = vmatprep.subr.bf16.mxu0 0
      %2123 = vmatpush1.bf16.msra.mxu0 0
      %2124 = vmatprep.subr.bf16.mxu0 0
      %2125 = vmatpush1.bf16.msra.mxu0 0
      %2126 = vmatprep.mubr.bf16.mxu0 0
      %2127 = vmatmul.mubr.bf16.gmra.mrb[0].mxu0 %v2038
      %v2128 = vpop.f32.mrb[0].mxu0
      %v2129 = vadd.f32 0.0, %v2128
      %v2130 = vpop.f32.mrb[0].mxu0
      %v2131 = vpop.f32.mrb[0].mxu0
      %v2132 = vadd.f32 0.0, %v2131
      %v2133 = vpop.f32.mrb[0].mxu0
      %2134 = vmatprep.mubr.bf16.mxu0 0
      %2135 = vmatmul.mubr.bf16.gmra.mrb[0].mxu0 %v2039
      %v2136 = vpop.f32.mrb[0].mxu0
      %v2137 = vadd.f32 0.0, %v2136
      %v2138 = vpop.f32.mrb[0].mxu0
      %v2139 = vpop.f32.mrb[0].mxu0
      %v2140 = vadd.f32 0.0, %v2139
      %v2141 = vpop.f32.mrb[0].mxu0
      %2142 = vmatprep.mubr.bf16.mxu0 0
      %2143 = vmatmul.mubr.bf16.gmra.mrb[0].mxu0 %v2040
      %v2144 = vpop.f32.mrb[0].mxu0
      %v2145 = vadd.f32 0.0, %v2144
      %v2146 = vpop.f32.mrb[0].mxu0
      %v2147 = vpop.f32.mrb[0].mxu0
      %v2148 = vadd.f32 0.0, %v2147
      %v2149 = vpop.f32.mrb[0].mxu0
      %2150 = vmatprep.mubr.bf16.mxu0 0
      %2151 = vmatmul.mubr.bf16.gmra.mrb[0].mxu0 %v2041
      %v2152 = vpop.f32.mrb[0].mxu0
      %v2153 = vadd.f32 0.0, %v2152
      %v2154 = vpop.f32.mrb[0].mxu0
      %v2155 = vpop.f32.mrb[0].mxu0
      %v2156 = vadd.f32 0.0, %v2155
      %v2157 = vpop.f32.mrb[0].mxu0
      %2158 = vdwg.mxu0
      %v2159 = vadd.f32 %v1877, %v2129
      %v2160 = vadd.f32 %v1878, %v2132
      %v2161 = vadd.f32 %v1879, %v2137
      %v2162 = vadd.f32 %v1880, %v2140
      %v2163 = vadd.f32 %v1881, %v2145
      %v2164 = vadd.f32 %v1882, %v2148
      %v2165 = vadd.f32 %v1883, %v2153
      %v2166 = vadd.f32 %v1884, %v2156
      %v2167 = vld [vmem:[%s5] sm:$0x1]
      %v2169 = vlaneseq
      %v2170 = vshrl.u32 %v2169, 7
      %v2171 = vsub.s32 0, %v2170
      %v2172 = vrot.slane %v2167, %v2171
      %v2174 = vadd.f32 %v2159, %v2172
      %v2175 = vadd.f32 %v2160, %v2172
      %v2176 = vadd.f32 %v2161, %v2172
      %v2177 = vadd.f32 %v2162, %v2172
      %v2178 = vadd.f32 %v2163, %v2172
      %v2179 = vadd.f32 %v2164, %v2172
      %v2180 = vadd.f32 %v2165, %v2172
      %v2181 = vadd.f32 %v2166, %v2172
      %v2182 = vmax.f32 %v2174, 0.0
      %v2183 = vmax.f32 %v2175, 0.0
      %v2184 = vmax.f32 %v2176, 0.0
      %v2185 = vmax.f32 %v2177, 0.0
      %v2186 = vmax.f32 %v2178, 0.0
      %v2187 = vmax.f32 %v2179, 0.0
      %v2188 = vmax.f32 %v2180, 0.0
      %v2189 = vmax.f32 %v2181, 0.0
      %v2190 = vpack.c.bf16 %v2183, %v2182
      %v2191 = vpack.c.bf16 %v2185, %v2184
      %v2192 = vpack.c.bf16 %v2187, %v2186
      %v2193 = vpack.c.bf16 %v2189, %v2188
      %v2198 = vunpack.c.l.b16 %v2190
      %v2199 = vunpack.c.h.b16 %v2190
      %v2200 = vunpack.c.l.b16 %v2191
      %v2201 = vunpack.c.h.b16 %v2191
      %v2202 = vunpack.c.l.b16 %v2192
      %v2203 = vunpack.c.h.b16 %v2192
      %v2204 = vunpack.c.l.b16 %v2193
      %v2205 = vunpack.c.h.b16 %v2193
      %v2206 = vpack.c.b16 %v2198, %v2198
      %v2207 = vpack.c.b16 %v2199, %v2199
      %v2208 = vpack.c.b16 %v2200, %v2200
      %v2209 = vpack.c.b16 %v2201, %v2201
      %v2210 = vpack.c.b16 %v2202, %v2202
      %v2211 = vpack.c.b16 %v2203, %v2203
      %v2212 = vpack.c.b16 %v2204, %v2204
      %v2213 = vpack.c.b16 %v2205, %v2205
      %2222 = vst [vmem:[%s311] sm:$0xf] %v2206
      %2223 = vst [vmem:[%s311 + $0x4] sm:$0xf] %v2207
      %2224 = vst [vmem:[%s311 + $0x8] sm:$0xf] %v2208
      %2225 = vst [vmem:[%s311 + $0xc] sm:$0xf] %v2209
      %2226 = vst [vmem:[%s311 + $0x10] sm:$0xf] %v2210
      %2227 = vst [vmem:[%s311 + $0x14] sm:$0xf] %v2211
      %2228 = vst [vmem:[%s311 + $0x18] sm:$0xf] %v2212
      %2229 = vst [vmem:[%s311 + $0x1c] sm:$0xf] %v2213
      %p2230 = scmp.lt.s32.totalorder %s17, 1
      %s2231 = scalar_select %p2230, %s17, 1
      %s2232 = smul.addr %s2231, 8
      %s2233 = smul.addr %s2232, 4
      %s2234 = scalar_lea.vmem %s6, %s2233
      // Predicated region
      $region45: #{_lambda_.4} parent=43 // pred_check
        %p2235 = pneg %p181
      $region46: #{_lambda_.4} parent=43 // pred_check_branch
        %2237 = sbr.rel (%p2235) target = $region48
      $region47: #{_lambda_.4} parent=43 // pred_region
        _
      $region48: #{_lambda_.4} parent=43 // pred_fallthru
        _
    $region44: #{_lambda_.4} parent=5 // pred_fallthru
      _
    %p2238 = scmp.le.s32.totalorder 2, %s12
    // Predicated region
    $region49: #{_lambda_.4} parent=5 // pred_check
      %p2239 = pneg %p2238
    $region50: #{_lambda_.4} parent=5 // pred_check_branch
      %2241 = sbr.rel (%p2239) target = $region52
    $region51: #{_lambda_.4} parent=5 // pred_region
      %s2242 = ssub.s32 %s12, 2
      // Predicated region
      $region53: #{_lambda_.4} parent=51 // pred_check
        %p2243 = pneg %p187
      $region54: #{_lambda_.4} parent=51 // pred_check_branch
        %2245 = sbr.rel (%p2243) target = $region56
      $region55: #{_lambda_.4} parent=51 // pred_region
        %p2246 = scmp.lt.s32.totalorder %s18, 1
        %s2247 = scalar_select %p2246, %s18, 1
        %s2248 = smul.addr %s2247, 8
        %s2249 = smul.addr %s2248, 4
        %s2250 = scalar_lea.vmem %s6, %s2249
      $region56: #{_lambda_.4} parent=51 // pred_fallthru
        _
    $region52: #{_lambda_.4} parent=5 // pred_fallthru
      _
  $region6: #{_lambda_.4} parent=0 // loop_footer
    %s16 = sadd.s32 1, %s12
  $region7: #{_lambda_.4} parent=0 // loop_footer_branch
    %11 = sbr.rel target = $region3
  $region8: #{_lambda_.4} parent=0 // loop_exit
    _

// kernel: _lambda_.3
$region0: #{_lambda_.3}
  #allocation0 [shape = 'u32[]', space=smem, size = 0x4, offset = 0x4, fixed_abs, tag = 'smem constant byte address 0x4 - core index']
  #allocation1 [shape = 'u32[144,128]{1,0:T(1,128)}', space=vmem, size = 0x12000, scoped, tag = 'internal scratch']
  %s0 = inlined_call_operand.vmem [shape: bf16[2,17,17,128], index: 0, kind: input, shape index: {}]
  %s1 = inlined_call_operand.vmem [shape: bf16[2,17,17,128], index: 1, kind: input, shape index: {}]
  %s2 = inlined_call_operand.vmem [shape: bf16[2,17,17,128], index: 2, kind: input, shape index: {}]
  %s3 = inlined_call_operand.vmem [shape: bf16[2,17,17,128], index: 3, kind: input, shape index: {}]
  %s4 = inlined_call_operand.vmem [shape: bf16[9,128,128], index: 4, kind: input, shape index: {}]
  %s5 = inlined_call_operand.vmem [shape: f32[1,128], index: 5, kind: input, shape index: {}]
  %s6 = inlined_call_operand.vmem [shape: bf16[2,256,128], index: 6, kind: output, shape index: {}]
  %s7 = sld [smem:[#allocation0]]
  $region57: #{_lambda_.3} parent=0
    _
  %s9 = ssub.s32 1, %s7
  %s10 = scalar_select 0, %s9, %s7
  loop: start=0, step=1, limit=4
  $region2: #{_lambda_.3} parent=0 // loop_pre_header
    _
  $region3: #{_lambda_.3} parent=0 // loop_header
    %s12 = sphi 0, %s16
    %p13 = scmp.ge.s32.totalorder %s12, 4
    %s22 = sphi 0, %s24
    %s25 = sphi 0, %s22
    %s26 = sphi 0, %s25
    %s42 = sphi 0, %s26
    %s48 = sphi 0, %s50
    %s51 = sphi 0, %s48
    %s52 = sphi 0, %s51
    %s68 = sphi 0, %s52
    %s74 = sphi 0, %s76
    %s77 = sphi 0, %s74
    %s78 = sphi 0, %s77
    %s94 = sphi 0, %s78
    %s100 = sphi 0, %s102
    %s103 = sphi 0, %s100
    %s104 = sphi 0, %s103
    %s120 = sphi 0, %s104
    %s124 = sphi 0, %s124
    %s126 = sphi 0, %s124
    %s127 = sphi 0, %s126
    %s141 = sphi 0, %s127
    %s145 = sphi 0, %s145
    %s147 = sphi 0, %s145
    %s148 = sphi 0, %s147
    %s162 = sphi 0, %s148
    %s168 = sphi 0, %s170
    %s171 = sphi 0, %s168
    %s172 = sphi 0, %s171
    %s188 = sphi 0, %s172
  $region4: #{_lambda_.3} parent=0 // loop_header_branch
    %15 = sbr.rel (%p13) target = $region8
  $region5: #{_lambda_.3} parent=0 // loop_body
    %s17 = ssub.s32 %s12, 1
    %s18 = ssub.s32 %s12, 2
    %s19 = sadd.s32 %s12, 1
    %s20 = ssub.s32 %s12, %s19
    %p21 = scmp.eq.s32.totalorder %s20, 0
    %s23 = sadd.s32 %s22, 1
    %s24 = scalar_select %p21, %s22, %s23
    %p27 = pneg %p21
    %p28 = scmp.eq.s32.totalorder %s12, 1
    %p29 = por %p27, %p28
    %p30 = scmp.ne.s32.totalorder %s22, %s25
    %p31 = scmp.eq.s32.totalorder %s12, 0
    %p32 = por %p30, %p31
    %p33 = scmp.ne.s32.totalorder %s22, %s25
    %p34 = scmp.eq.s32.totalorder %s17, 1
    %p35 = por %p33, %p34
    %p36 = scmp.ne.s32.totalorder %s25, %s26
    %p37 = scmp.eq.s32.totalorder %s17, 0
    %p38 = por %p36, %p37
    %p39 = scmp.ne.s32.totalorder %s25, %s26
    %p40 = scmp.eq.s32.totalorder %s18, 1
    %p41 = por %p39, %p40
    %p43 = scmp.ne.s32.totalorder %s26, %s42
    %p44 = scmp.eq.s32.totalorder %s18, 0
    %p45 = por %p43, %p44
    %s46 = ssub.s32 %s12, %s19
    %p47 = scmp.eq.s32.totalorder %s46, 0
    %s49 = sadd.s32 %s48, 1
    %s50 = scalar_select %p47, %s48, %s49
    %p53 = pneg %p47
    %p54 = scmp.eq.s32.totalorder %s12, 1
    %p55 = por %p53, %p54
    %p56 = scmp.ne.s32.totalorder %s48, %s51
    %p57 = scmp.eq.s32.totalorder %s12, 0
    %p58 = por %p56, %p57
    %p59 = scmp.ne.s32.totalorder %s48, %s51
    %p60 = scmp.eq.s32.totalorder %s17, 1
    %p61 = por %p59, %p60
    %p62 = scmp.ne.s32.totalorder %s51, %s52
    %p63 = scmp.eq.s32.totalorder %s17, 0
    %p64 = por %p62, %p63
    %p65 = scmp.ne.s32.totalorder %s51, %s52
    %p66 = scmp.eq.s32.totalorder %s18, 1
    %p67 = por %p65, %p66
    %p69 = scmp.ne.s32.totalorder %s52, %s68
    %p70 = scmp.eq.s32.totalorder %s18, 0
    %p71 = por %p69, %p70
    %s72 = ssub.s32 %s12, %s19
    %p73 = scmp.eq.s32.totalorder %s72, 0
    %s75 = sadd.s32 %s74, 1
    %s76 = scalar_select %p73, %s74, %s75
    %p79 = pneg %p73
    %p80 = scmp.eq.s32.totalorder %s12, 1
    %p81 = por %p79, %p80
    %p82 = scmp.ne.s32.totalorder %s74, %s77
    %p83 = scmp.eq.s32.totalorder %s12, 0
    %p84 = por %p82, %p83
    %p85 = scmp.ne.s32.totalorder %s74, %s77
    %p86 = scmp.eq.s32.totalorder %s17, 1
    %p87 = por %p85, %p86
    %p88 = scmp.ne.s32.totalorder %s77, %s78
    %p89 = scmp.eq.s32.totalorder %s17, 0
    %p90 = por %p88, %p89
    %p91 = scmp.ne.s32.totalorder %s77, %s78
    %p92 = scmp.eq.s32.totalorder %s18, 1
    %p93 = por %p91, %p92
    %p95 = scmp.ne.s32.totalorder %s78, %s94
    %p96 = scmp.eq.s32.totalorder %s18, 0
    %p97 = por %p95, %p96
    %s98 = ssub.s32 %s12, %s19
    %p99 = scmp.eq.s32.totalorder %s98, 0
    %s101 = sadd.s32 %s100, 1
    %s102 = scalar_select %p99, %s100, %s101
    %p105 = pneg %p99
    %p106 = scmp.eq.s32.totalorder %s12, 1
    %p107 = por %p105, %p106
    %p108 = scmp.ne.s32.totalorder %s100, %s103
    %p109 = scmp.eq.s32.totalorder %s12, 0
    %p110 = por %p108, %p109
    %p111 = scmp.ne.s32.totalorder %s100, %s103
    %p112 = scmp.eq.s32.totalorder %s17, 1
    %p113 = por %p111, %p112
    %p114 = scmp.ne.s32.totalorder %s103, %s104
    %p115 = scmp.eq.s32.totalorder %s17, 0
    %p116 = por %p114, %p115
    %p117 = scmp.ne.s32.totalorder %s103, %s104
    %p118 = scmp.eq.s32.totalorder %s18, 1
    %p119 = por %p117, %p118
    %p121 = scmp.ne.s32.totalorder %s104, %s120
    %p122 = scmp.eq.s32.totalorder %s18, 0
    %p123 = por %p121, %p122
    %s125 = sadd.s32 %s124, 1
    %p128 = scmp.eq.s32.totalorder %s12, 1
    %p129 = scmp.ne.s32.totalorder %s124, %s126
    %p130 = scmp.eq.s32.totalorder %s12, 0
    %p131 = por %p129, %p130
    %p132 = scmp.ne.s32.totalorder %s124, %s126
    %p133 = scmp.eq.s32.totalorder %s17, 1
    %p134 = por %p132, %p133
    %p135 = scmp.ne.s32.totalorder %s126, %s127
    %p136 = scmp.eq.s32.totalorder %s17, 0
    %p137 = por %p135, %p136
    %p138 = scmp.ne.s32.totalorder %s126, %s127
    %p139 = scmp.eq.s32.totalorder %s18, 1
    %p140 = por %p138, %p139
    %p142 = scmp.ne.s32.totalorder %s127, %s141
    %p143 = scmp.eq.s32.totalorder %s18, 0
    %p144 = por %p142, %p143
    %s146 = sadd.s32 %s145, 1
    %p149 = scmp.eq.s32.totalorder %s12, 1
    %p150 = scmp.ne.s32.totalorder %s145, %s147
    %p151 = scmp.eq.s32.totalorder %s12, 0
    %p152 = por %p150, %p151
    %p153 = scmp.ne.s32.totalorder %s145, %s147
    %p154 = scmp.eq.s32.totalorder %s17, 1
    %p155 = por %p153, %p154
    %p156 = scmp.ne.s32.totalorder %s147, %s148
    %p157 = scmp.eq.s32.totalorder %s17, 0
    %p158 = por %p156, %p157
    %p159 = scmp.ne.s32.totalorder %s147, %s148
    %p160 = scmp.eq.s32.totalorder %s18, 1
    %p161 = por %p159, %p160
    %p163 = scmp.ne.s32.totalorder %s148, %s162
    %p164 = scmp.eq.s32.totalorder %s18, 0
    %p165 = por %p163, %p164
    %s166 = ssub.s32 %s12, %s19
    %p167 = scmp.eq.s32.totalorder %s166, 0
    %s169 = sadd.s32 %s168, 1
    %s170 = scalar_select %p167, %s168, %s169
    %p173 = pneg %p167
    %p174 = scmp.eq.s32.totalorder %s12, 1
    %p175 = por %p173, %p174
    %p176 = scmp.ne.s32.totalorder %s168, %s171
    %p177 = scmp.eq.s32.totalorder %s12, 0
    %p178 = por %p176, %p177
    %p179 = scmp.ne.s32.totalorder %s168, %s171
    %p180 = scmp.eq.s32.totalorder %s17, 1
    %p181 = por %p179, %p180
    %p182 = scmp.ne.s32.totalorder %s171, %s172
    %p183 = scmp.eq.s32.totalorder %s17, 0
    %p184 = por %p182, %p183
    %p185 = scmp.ne.s32.totalorder %s171, %s172
    %p186 = scmp.eq.s32.totalorder %s18, 1
    %p187 = por %p185, %p186
    %p189 = scmp.ne.s32.totalorder %s172, %s188
    %p190 = scmp.eq.s32.totalorder %s18, 0
    %p191 = por %p189, %p190
    %p192 = scmp.le.s32.totalorder 1, %s12
    %p193 = scmp.lt.s32.totalorder %s12, 3
    %p194 = pnand %p192, %p193
    %p195 = pneg %p194
    // Predicated region
    $region9: #{_lambda_.3} parent=5 // pred_check
      _
    $region10: #{_lambda_.3} parent=5 // pred_check_branch
      %197 = sbr.rel (%p194) target = $region12
    $region11: #{_lambda_.3} parent=5 // pred_region
      %s198 = ssub.s32 %s12, 1
      // Predicated region
      $region13: #{_lambda_.3} parent=11 // pred_check
        %p199 = pneg %p137
      $region14: #{_lambda_.3} parent=11 // pred_check_branch
        %201 = sbr.rel (%p199) target = $region16
      $region15: #{_lambda_.3} parent=11 // pred_region
        _
      $region16: #{_lambda_.3} parent=11 // pred_fallthru
        _
      // Predicated region
      $region17: #{_lambda_.3} parent=11 // pred_check
        %p202 = pneg %p158
      $region18: #{_lambda_.3} parent=11 // pred_check_branch
        %204 = sbr.rel (%p202) target = $region20
      $region19: #{_lambda_.3} parent=11 // pred_region
        _
      $region20: #{_lambda_.3} parent=11 // pred_fallthru
        _
    $region12: #{_lambda_.3} parent=5 // pred_fallthru
      _
    %p205 = scmp.lt.s32.totalorder %s12, 2
    // Predicated region
    $region21: #{_lambda_.3} parent=5 // pred_check
      %p206 = pneg %p205
    $region22: #{_lambda_.3} parent=5 // pred_check_branch
      %208 = sbr.rel (%p206) target = $region24
    $region23: #{_lambda_.3} parent=5 // pred_region
      // Predicated region
      $region25: #{_lambda_.3} parent=23 // pred_check
        %p209 = pneg %p32
      $region26: #{_lambda_.3} parent=23 // pred_check_branch
        %211 = sbr.rel (%p209) target = $region28
      $region27: #{_lambda_.3} parent=23 // pred_region
        %p212 = scmp.lt.s32.totalorder %s12, 1
        %s213 = scalar_select %p212, %s12, 1
        %s214 = smul.addr %s213, 51
        %s215 = smul.addr %s214, 4
        %s216 = scalar_lea.vmem %s0, %s215
      $region28: #{_lambda_.3} parent=23 // pred_fallthru
        _
      // Predicated region
      $region29: #{_lambda_.3} parent=23 // pred_check
        %p217 = pneg %p58
      $region30: #{_lambda_.3} parent=23 // pred_check_branch
        %219 = sbr.rel (%p217) target = $region32
      $region31: #{_lambda_.3} parent=23 // pred_region
        %p220 = scmp.lt.s32.totalorder %s12, 1
        %s221 = scalar_select %p220, %s12, 1
        %s222 = smul.addr %s221, 51
        %s223 = smul.addr %s222, 4
        %s224 = scalar_lea.vmem %s1, %s223
      $region32: #{_lambda_.3} parent=23 // pred_fallthru
        _
      // Predicated region
      $region33: #{_lambda_.3} parent=23 // pred_check
        %p225 = pneg %p84
      $region34: #{_lambda_.3} parent=23 // pred_check_branch
        %227 = sbr.rel (%p225) target = $region36
      $region35: #{_lambda_.3} parent=23 // pred_region
        %p228 = scmp.lt.s32.totalorder %s12, 1
        %s229 = scalar_select %p228, %s12, 1
        %s230 = smul.addr %s229, 51
        %s231 = smul.addr %s230, 4
        %s232 = scalar_lea.vmem %s2, %s231
      $region36: #{_lambda_.3} parent=23 // pred_fallthru
        _
      // Predicated region
      $region37: #{_lambda_.3} parent=23 // pred_check
        %p233 = pneg %p110
      $region38: #{_lambda_.3} parent=23 // pred_check_branch
        %235 = sbr.rel (%p233) target = $region40
      $region39: #{_lambda_.3} parent=23 // pred_region
        %p236 = scmp.lt.s32.totalorder %s12, 1
        %s237 = scalar_select %p236, %s12, 1
        %s238 = smul.addr %s237, 51
        %s239 = smul.addr %s238, 4
        %s240 = scalar_lea.vmem %s3, %s239
      $region40: #{_lambda_.3} parent=23 // pred_fallthru
        _
    $region24: #{_lambda_.3} parent=5 // pred_fallthru
      _
    %p241 = scmp.le.s32.totalorder 1, %s12
    %p242 = scmp.lt.s32.totalorder %s12, 3
    %p243 = pnand %p241, %p242
    %p244 = pneg %p243
    // Predicated region
    $region41: #{_lambda_.3} parent=5 // pred_check
      _
    $region42: #{_lambda_.3} parent=5 // pred_check_branch
      %246 = sbr.rel (%p243) target = $region44
    $region43: #{_lambda_.3} parent=5 // pred_region
      %s247 = ssub.s32 %s12, 1
      %p248 = scmp.lt.s32.totalorder %s17, 1
      %s249 = scalar_select %p248, %s17, 1
      %s250 = smul.addr %s249, 51
      %s251 = smul.addr %s250, 4
      %s252 = scalar_lea.vmem %s0, %s251
      %p253 = pneg %p38
      %p254 = pneg %p35
      %p255 = scmp.lt.s32.totalorder %s17, 1
      %s256 = scalar_select %p255, %s17, 1
      %s257 = smul.addr %s256, 51
      %s258 = smul.addr %s257, 4
      %s259 = scalar_lea.vmem %s1, %s258
      %p260 = pneg %p64
      %p261 = pneg %p61
      %p262 = scmp.lt.s32.totalorder %s17, 1
      %s263 = scalar_select %p262, %s17, 1
      %s264 = smul.addr %s263, 51
      %s265 = smul.addr %s264, 4
      %s266 = scalar_lea.vmem %s2, %s265
      %p267 = pneg %p90
      %p268 = pneg %p87
      %p269 = scmp.lt.s32.totalorder %s17, 1
      %s270 = scalar_select %p269, %s17, 1
      %s271 = smul.addr %s270, 51
      %s272 = smul.addr %s271, 4
      %s273 = scalar_lea.vmem %s3, %s272
      %p274 = pneg %p116
      %p275 = pneg %p113
      %p276 = pneg %p137
      %p277 = pneg %p134
      %p278 = pneg %p158
      %p279 = pneg %p155
      %p280 = pneg %p184
      %p281 = pneg %p181
      %p282 = scmp.lt.s32.totalorder %s17, 1
      %s283 = scalar_select %p282, %s17, 1
      %s284 = smul.addr %s283, 32
      %s285 = smul.addr %s284, 4
      %s286 = scalar_lea.vmem %s6, %s285
      %p287 = scmp.lt.s32.totalorder %s17, 1
      %s288 = scalar_select %p287, %s17, 1
      %s289 = smul.addr %s288, 51
      %s290 = smul.addr %s289, 4
      %s291 = scalar_lea.vmem %s0, %s290
      %p292 = scmp.lt.s32.totalorder %s17, 1
      %s293 = scalar_select %p292, %s17, 1
      %s294 = smul.addr %s293, 51
      %s295 = smul.addr %s294, 4
      %s296 = scalar_lea.vmem %s1, %s295
      %p297 = scmp.lt.s32.totalorder %s17, 1
      %s298 = scalar_select %p297, %s17, 1
      %s299 = smul.addr %s298, 51
      %s300 = smul.addr %s299, 4
      %s301 = scalar_lea.vmem %s2, %s300
      %p302 = scmp.lt.s32.totalorder %s17, 1
      %s303 = scalar_select %p302, %s17, 1
      %s304 = smul.addr %s303, 51
      %s305 = smul.addr %s304, 4
      %s306 = scalar_lea.vmem %s3, %s305
      %p307 = scmp.lt.s32.totalorder %s17, 1
      %s308 = scalar_select %p307, %s17, 1
      %s309 = smul.addr %s308, 32
      %s310 = smul.addr %s309, 4
      %s311 = scalar_lea.vmem %s6, %s310
      %v313 = vld [vmem:[%s291] sm:$0xf]
      %v314 = vld [vmem:[%s291 + $0x4] sm:$0xf]
      %v315 = vld [vmem:[%s291 + $0xc] sm:$0xf]
      %v316 = vld [vmem:[%s291 + $0x10] sm:$0xf]
      %v317 = vld [vmem:[%s291 + $0x18] sm:$0xf]
      %v318 = vld [vmem:[%s291 + $0x1c] sm:$0xf]
      %v319 = vld [vmem:[%s291 + $0x24] sm:$0xf]
      %v320 = vld [vmem:[%s291 + $0x28] sm:$0xf]
      %v321 = vld [vmem:[%s291 + $0x30] sm:$0xf]
      %v322 = vld [vmem:[%s291 + $0x34] sm:$0xf]
      %v323 = vld [vmem:[%s291 + $0x3c] sm:$0xf]
      %v324 = vld [vmem:[%s291 + $0x40] sm:$0xf]
      %v325 = vld [vmem:[%s291 + $0x48] sm:$0xf]
      %v326 = vld [vmem:[%s291 + $0x4c] sm:$0xf]
      %v327 = vld [vmem:[%s291 + $0x54] sm:$0xf]
      %v328 = vld [vmem:[%s291 + $0x58] sm:$0xf]
      %v329 = vld [vmem:[%s291 + $0x60] sm:$0xf]
      %v330 = vld [vmem:[%s291 + $0x64] sm:$0xf]
      %v331 = vld [vmem:[%s291 + $0x6c] sm:$0xf]
      %v332 = vld [vmem:[%s291 + $0x70] sm:$0xf]
      %v333 = vld [vmem:[%s291 + $0x78] sm:$0xf]
      %v334 = vld [vmem:[%s291 + $0x7c] sm:$0xf]
      %v335 = vld [vmem:[%s291 + $0x84] sm:$0xf]
      %v336 = vld [vmem:[%s291 + $0x88] sm:$0xf]
      %v337 = vld [vmem:[%s291 + $0x90] sm:$0xf]
      %v338 = vld [vmem:[%s291 + $0x94] sm:$0xf]
      %v339 = vld [vmem:[%s291 + $0x9c] sm:$0xf]
      %v340 = vld [vmem:[%s291 + $0xa0] sm:$0xf]
      %v341 = vld [vmem:[%s291 + $0xa8] sm:$0xf]
      %v342 = vld [vmem:[%s291 + $0xac] sm:$0xf]
      %v343 = vld [vmem:[%s291 + $0xb4] sm:$0xf]
      %v344 = vld [vmem:[%s291 + $0xb8] sm:$0xf]
      %v345 = vld [vmem:[%s4] sm:$0xf]
      %v346 = vld [vmem:[%s4 + $0x4] sm:$0xf]
      %v347 = vld [vmem:[%s4 + $0x8] sm:$0xf]
      %v348 = vld [vmem:[%s4 + $0xc] sm:$0xf]
      %v349 = vld [vmem:[%s4 + $0x10] sm:$0xf]
      %v350 = vld [vmem:[%s4 + $0x14] sm:$0xf]
      %v351 = vld [vmem:[%s4 + $0x18] sm:$0xf]
      %v352 = vld [vmem:[%s4 + $0x1c] sm:$0xf]
      %v353 = vld [vmem:[%s4 + $0x20] sm:$0xf]
      %v354 = vld [vmem:[%s4 + $0x24] sm:$0xf]
      %v355 = vld [vmem:[%s4 + $0x28] sm:$0xf]
      %v356 = vld [vmem:[%s4 + $0x2c] sm:$0xf]
      %v357 = vld [vmem:[%s4 + $0x30] sm:$0xf]
      %v358 = vld [vmem:[%s4 + $0x34] sm:$0xf]
      %v359 = vld [vmem:[%s4 + $0x38] sm:$0xf]
      %v360 = vld [vmem:[%s4 + $0x3c] sm:$0xf]
      %v361 = vld [vmem:[%s296] sm:$0xf]
      %v362 = vld [vmem:[%s296 + $0x4] sm:$0xf]
      %v363 = vld [vmem:[%s296 + $0xc] sm:$0xf]
      %v364 = vld [vmem:[%s296 + $0x10] sm:$0xf]
      %v365 = vld [vmem:[%s296 + $0x18] sm:$0xf]
      %v366 = vld [vmem:[%s296 + $0x1c] sm:$0xf]
      %v367 = vld [vmem:[%s296 + $0x24] sm:$0xf]
      %v368 = vld [vmem:[%s296 + $0x28] sm:$0xf]
      %v369 = vld [vmem:[%s296 + $0x30] sm:$0xf]
      %v370 = vld [vmem:[%s296 + $0x34] sm:$0xf]
      %v371 = vld [vmem:[%s296 + $0x3c] sm:$0xf]
      %v372 = vld [vmem:[%s296 + $0x40] sm:$0xf]
      %v373 = vld [vmem:[%s296 + $0x48] sm:$0xf]
      %v374 = vld [vmem:[%s296 + $0x4c] sm:$0xf]
      %v375 = vld [vmem:[%s296 + $0x54] sm:$0xf]
      %v376 = vld [vmem:[%s296 + $0x58] sm:$0xf]
      %v377 = vld [vmem:[%s296 + $0x60] sm:$0xf]
      %v378 = vld [vmem:[%s296 + $0x64] sm:$0xf]
      %v379 = vld [vmem:[%s296 + $0x6c] sm:$0xf]
      %v380 = vld [vmem:[%s296 + $0x70] sm:$0xf]
      %v381 = vld [vmem:[%s296 + $0x78] sm:$0xf]
      %v382 = vld [vmem:[%s296 + $0x7c] sm:$0xf]
      %v383 = vld [vmem:[%s296 + $0x84] sm:$0xf]
      %v384 = vld [vmem:[%s296 + $0x88] sm:$0xf]
      %v385 = vld [vmem:[%s296 + $0x90] sm:$0xf]
      %v386 = vld [vmem:[%s296 + $0x94] sm:$0xf]
      %v387 = vld [vmem:[%s296 + $0x9c] sm:$0xf]
      %v388 = vld [vmem:[%s296 + $0xa0] sm:$0xf]
      %v389 = vld [vmem:[%s296 + $0xa8] sm:$0xf]
      %v390 = vld [vmem:[%s296 + $0xac] sm:$0xf]
      %v391 = vld [vmem:[%s296 + $0xb4] sm:$0xf]
      %v392 = vld [vmem:[%s296 + $0xb8] sm:$0xf]
      %s393 = scalar_lea.vmem %s4, 64
      %v394 = vld [vmem:[%s393] sm:$0xf]
      %v395 = vld [vmem:[%s393 + $0x4] sm:$0xf]
      %v396 = vld [vmem:[%s393 + $0x8] sm:$0xf]
      %v397 = vld [vmem:[%s393 + $0xc] sm:$0xf]
      %v398 = vld [vmem:[%s393 + $0x10] sm:$0xf]
      %v399 = vld [vmem:[%s393 + $0x14] sm:$0xf]
      %v400 = vld [vmem:[%s393 + $0x18] sm:$0xf]
      %v401 = vld [vmem:[%s393 + $0x1c] sm:$0xf]
      %v402 = vld [vmem:[%s393 + $0x20] sm:$0xf]
      %v403 = vld [vmem:[%s393 + $0x24] sm:$0xf]
      %v404 = vld [vmem:[%s393 + $0x28] sm:$0xf]
      %v405 = vld [vmem:[%s393 + $0x2c] sm:$0xf]
      %v406 = vld [vmem:[%s393 + $0x30] sm:$0xf]
      %v407 = vld [vmem:[%s393 + $0x34] sm:$0xf]
      %v408 = vld [vmem:[%s393 + $0x38] sm:$0xf]
      %v409 = vld [vmem:[%s393 + $0x3c] sm:$0xf]
      %v442 = vunpack.c.l.b16 %v361
      %v443 = vunpack.c.l.b16 %v362
      %v444 = vunpack.c.l.b16 %v363
      %v445 = vunpack.c.l.b16 %v364
      %v446 = vunpack.c.l.b16 %v365
      %v447 = vunpack.c.l.b16 %v366
      %v448 = vunpack.c.l.b16 %v367
      %v449 = vunpack.c.l.b16 %v368
      %v450 = vunpack.c.l.b16 %v369
      %v451 = vunpack.c.l.b16 %v370
      %v452 = vunpack.c.l.b16 %v371
      %v453 = vunpack.c.l.b16 %v372
      %v454 = vunpack.c.l.b16 %v373
      %v455 = vunpack.c.l.b16 %v374
      %v456 = vunpack.c.l.b16 %v375
      %v457 = vunpack.c.l.b16 %v376
      %v458 = vunpack.c.l.b16 %v377
      %v459 = vunpack.c.l.b16 %v378
      %v460 = vunpack.c.l.b16 %v379
      %v461 = vunpack.c.l.b16 %v380
      %v462 = vunpack.c.l.b16 %v381
      %v463 = vunpack.c.l.b16 %v382
      %v464 = vunpack.c.l.b16 %v383
      %v465 = vunpack.c.l.b16 %v384
      %v466 = vunpack.c.l.b16 %v385
      %v467 = vunpack.c.l.b16 %v386
      %v468 = vunpack.c.l.b16 %v387
      %v469 = vunpack.c.l.b16 %v388
      %v470 = vunpack.c.l.b16 %v389
      %v471 = vunpack.c.l.b16 %v390
      %v472 = vunpack.c.l.b16 %v391
      %v473 = vunpack.c.l.b16 %v392
      %v474 = vpack.c.b16 %v443, %v442
      %v475 = vpack.c.b16 %v445, %v444
      %v476 = vpack.c.b16 %v447, %v446
      %v477 = vpack.c.b16 %v449, %v448
      %v478 = vpack.c.b16 %v451, %v450
      %v479 = vpack.c.b16 %v453, %v452
      %v480 = vpack.c.b16 %v455, %v454
      %v481 = vpack.c.b16 %v457, %v456
      %v482 = vpack.c.b16 %v459, %v458
      %v483 = vpack.c.b16 %v461, %v460
      %v484 = vpack.c.b16 %v463, %v462
      %v485 = vpack.c.b16 %v465, %v464
      %v486 = vpack.c.b16 %v467, %v466
      %v487 = vpack.c.b16 %v469, %v468
      %v488 = vpack.c.b16 %v471, %v470
      %v489 = vpack.c.b16 %v473, %v472
      %v522 = vunpack.c.l.b16 %v394
      %v523 = vunpack.c.l.b16 %v395
      %v524 = vunpack.c.l.b16 %v396
      %v525 = vunpack.c.l.b16 %v397
      %v526 = vunpack.c.l.b16 %v398
      %v527 = vunpack.c.l.b16 %v399
      %v528 = vunpack.c.l.b16 %v400
      %v529 = vunpack.c.l.b16 %v401
      %v530 = vunpack.c.l.b16 %v402
      %v531 = vunpack.c.l.b16 %v403
      %v532 = vunpack.c.l.b16 %v404
      %v533 = vunpack.c.l.b16 %v405
      %v534 = vunpack.c.l.b16 %v406
      %v535 = vunpack.c.l.b16 %v407
      %v536 = vunpack.c.l.b16 %v408
      %v537 = vunpack.c.l.b16 %v409
      %v538 = vpack.c.b16 %v523, %v522
      %v539 = vpack.c.b16 %v525, %v524
      %v540 = vpack.c.b16 %v527, %v526
      %v541 = vpack.c.b16 %v529, %v528
      %v542 = vpack.c.b16 %v531, %v530
      %v543 = vpack.c.b16 %v533, %v532
      %v544 = vpack.c.b16 %v535, %v534
      %v545 = vpack.c.b16 %v537, %v536
      %554 = vmatprep.subr.bf16.mxu0 0
      %555 = vmatpush1.bf16.msra.mxu0 %v538
      %556 = vmatprep.subr.bf16.mxu0 0
      %557 = vmatpush1.bf16.msra.mxu0 %v539
      %558 = vmatprep.subr.bf16.mxu0 0
      %559 = vmatpush1.bf16.msra.mxu0 %v540
      %560 = vmatprep.subr.bf16.mxu0 0
      %561 = vmatpush1.bf16.msra.mxu0 %v541
      %562 = vmatprep.subr.bf16.mxu0 0
      %563 = vmatpush1.bf16.msra.mxu0 %v542
      %564 = vmatprep.subr.bf16.mxu0 0
      %565 = vmatpush1.bf16.msra.mxu0 %v543
      %566 = vmatprep.subr.bf16.mxu0 0
      %567 = vmatpush1.bf16.msra.mxu0 %v544
      %568 = vmatprep.subr.bf16.mxu0 0
      %569 = vmatpush1.bf16.msra.mxu0 %v545
      %570 = vmatprep.subr.bf16.mxu0 0
      %571 = vmatpush1.bf16.msra.mxu0 0
      %572 = vmatprep.subr.bf16.mxu0 0
      %573 = vmatpush1.bf16.msra.mxu0 0
      %574 = vmatprep.subr.bf16.mxu0 0
      %575 = vmatpush1.bf16.msra.mxu0 0
      %576 = vmatprep.subr.bf16.mxu0 0
      %577 = vmatpush1.bf16.msra.mxu0 0
      %578 = vmatprep.subr.bf16.mxu0 0
      %579 = vmatpush1.bf16.msra.mxu0 0
      %580 = vmatprep.subr.bf16.mxu0 0
      %581 = vmatpush1.bf16.msra.mxu0 0
      %582 = vmatprep.subr.bf16.mxu0 0
      %583 = vmatpush1.bf16.msra.mxu0 0
      %584 = vmatprep.subr.bf16.mxu0 0
      %585 = vmatpush1.bf16.msra.mxu0 0
      %586 = vmatprep.mubr.bf16.mxu0 0
      %587 = vmatmul.mubr.bf16.gmra.mrb[0].mxu0 %v474
      %v588 = vpop.f32.mrb[0].mxu0
      %v589 = vadd.f32 0.0, %v588
      %v590 = vpop.f32.mrb[0].mxu0
      %v591 = vpop.f32.mrb[0].mxu0
      %v592 = vadd.f32 0.0, %v591
      %v593 = vpop.f32.mrb[0].mxu0
      %594 = vmatprep.mubr.bf16.mxu0 0
      %595 = vmatmul.mubr.bf16.gmra.mrb[0].mxu0 %v475
      %v596 = vpop.f32.mrb[0].mxu0
      %v597 = vadd.f32 0.0, %v596
      %v598 = vpop.f32.mrb[0].mxu0
      %v599 = vpop.f32.mrb[0].mxu0
      %v600 = vadd.f32 0.0, %v599
      %v601 = vpop.f32.mrb[0].mxu0
      %602 = vmatprep.mubr.bf16.mxu0 0
      %603 = vmatmul.mubr.bf16.gmra.mrb[0].mxu0 %v476
      %v604 = vpop.f32.mrb[0].mxu0
      %v605 = vadd.f32 0.0, %v604
      %v606 = vpop.f32.mrb[0].mxu0
      %v607 = vpop.f32.mrb[0].mxu0
      %v608 = vadd.f32 0.0, %v607
      %v609 = vpop.f32.mrb[0].mxu0
      %610 = vmatprep.mubr.bf16.mxu0 0
      %611 = vmatmul.mubr.bf16.gmra.mrb[0].mxu0 %v477
      %v612 = vpop.f32.mrb[0].mxu0
      %v613 = vadd.f32 0.0, %v612
      %v614 = vpop.f32.mrb[0].mxu0
      %v615 = vpop.f32.mrb[0].mxu0
      %v616 = vadd.f32 0.0, %v615
      %v617 = vpop.f32.mrb[0].mxu0
      %618 = vmatprep.mubr.bf16.mxu0 0
      %619 = vmatmul.mubr.bf16.gmra.mrb[0].mxu0 %v478
      %v620 = vpop.f32.mrb[0].mxu0
      %v621 = vadd.f32 0.0, %v620
      %v622 = vpop.f32.mrb[0].mxu0
      %v623 = vpop.f32.mrb[0].mxu0
      %v624 = vadd.f32 0.0, %v623
      %v625 = vpop.f32.mrb[0].mxu0
      %626 = vmatprep.mubr.bf16.mxu0 0
      %627 = vmatmul.mubr.bf16.gmra.mrb[0].mxu0 %v479
      %v628 = vpop.f32.mrb[0].mxu0
      %v629 = vadd.f32 0.0, %v628
      %v630 = vpop.f32.mrb[0].mxu0
      %v631 = vpop.f32.mrb[0].mxu0
      %v632 = vadd.f32 0.0, %v631
      %v633 = vpop.f32.mrb[0].mxu0
      %634 = vmatprep.mubr.bf16.mxu0 0
      %635 = vmatmul.mubr.bf16.gmra.mrb[0].mxu0 %v480
      %v636 = vpop.f32.mrb[0].mxu0
      %v637 = vadd.f32 0.0, %v636
      %v638 = vpop.f32.mrb[0].mxu0
      %v639 = vpop.f32.mrb[0].mxu0
      %v640 = vadd.f32 0.0, %v639
      %v641 = vpop.f32.mrb[0].mxu0
      %642 = vmatprep.mubr.bf16.mxu0 0
      %643 = vmatmul.mubr.bf16.gmra.mrb[0].mxu0 %v481
      %v644 = vpop.f32.mrb[0].mxu0
      %v645 = vadd.f32 0.0, %v644
      %v646 = vpop.f32.mrb[0].mxu0
      %v647 = vpop.f32.mrb[0].mxu0
      %v648 = vadd.f32 0.0, %v647
      %v649 = vpop.f32.mrb[0].mxu0
      %650 = vmatprep.mubr.bf16.mxu0 0
      %651 = vmatmul.mubr.bf16.gmra.mrb[0].mxu0 %v482
      %v652 = vpop.f32.mrb[0].mxu0
      %v653 = vadd.f32 0.0, %v652
      %v654 = vpop.f32.mrb[0].mxu0
      %v655 = vpop.f32.mrb[0].mxu0
      %v656 = vadd.f32 0.0, %v655
      %v657 = vpop.f32.mrb[0].mxu0
      %658 = vmatprep.mubr.bf16.mxu0 0
      %659 = vmatmul.mubr.bf16.gmra.mrb[0].mxu0 %v483
      %v660 = vpop.f32.mrb[0].mxu0
      %v661 = vadd.f32 0.0, %v660
      %v662 = vpop.f32.mrb[0].mxu0
      %v663 = vpop.f32.mrb[0].mxu0
      %v664 = vadd.f32 0.0, %v663
      %v665 = vpop.f32.mrb[0].mxu0
      %666 = vmatprep.mubr.bf16.mxu0 0
      %667 = vmatmul.mubr.bf16.gmra.mrb[0].mxu0 %v484
      %v668 = vpop.f32.mrb[0].mxu0
      %v669 = vadd.f32 0.0, %v668
      %v670 = vpop.f32.mrb[0].mxu0
      %v671 = vpop.f32.mrb[0].mxu0
      %v672 = vadd.f32 0.0, %v671
      %v673 = vpop.f32.mrb[0].mxu0
      %674 = vmatprep.mubr.bf16.mxu0 0
      %675 = vmatmul.mubr.bf16.gmra.mrb[0].mxu0 %v485
      %v676 = vpop.f32.mrb[0].mxu0
      %v677 = vadd.f32 0.0, %v676
      %v678 = vpop.f32.mrb[0].mxu0
      %v679 = vpop.f32.mrb[0].mxu0
      %v680 = vadd.f32 0.0, %v679
      %v681 = vpop.f32.mrb[0].mxu0
      %682 = vmatprep.mubr.bf16.mxu0 0
      %683 = vmatmul.mubr.bf16.gmra.mrb[0].mxu0 %v486
      %v684 = vpop.f32.mrb[0].mxu0
      %v685 = vadd.f32 0.0, %v684
      %v686 = vpop.f32.mrb[0].mxu0
      %v687 = vpop.f32.mrb[0].mxu0
      %v688 = vadd.f32 0.0, %v687
      %v689 = vpop.f32.mrb[0].mxu0
      %690 = vmatprep.mubr.bf16.mxu0 0
      %691 = vmatmul.mubr.bf16.gmra.mrb[0].mxu0 %v487
      %v692 = vpop.f32.mrb[0].mxu0
      %v693 = vadd.f32 0.0, %v692
      %v694 = vpop.f32.mrb[0].mxu0
      %v695 = vpop.f32.mrb[0].mxu0
      %v696 = vadd.f32 0.0, %v695
      %v697 = vpop.f32.mrb[0].mxu0
      %698 = vmatprep.mubr.bf16.mxu0 0
      %699 = vmatmul.mubr.bf16.gmra.mrb[0].mxu0 %v488
      %v700 = vpop.f32.mrb[0].mxu0
      %v701 = vadd.f32 0.0, %v700
      %v702 = vpop.f32.mrb[0].mxu0
      %v703 = vpop.f32.mrb[0].mxu0
      %v704 = vadd.f32 0.0, %v703
      %v705 = vpop.f32.mrb[0].mxu0
      %706 = vmatprep.mubr.bf16.mxu0 0
      %707 = vmatmul.mubr.bf16.gmra.mrb[0].mxu0 %v489
      %v708 = vpop.f32.mrb[0].mxu0
      %v709 = vadd.f32 0.0, %v708
      %v710 = vpop.f32.mrb[0].mxu0
      %v711 = vpop.f32.mrb[0].mxu0
      %v712 = vadd.f32 0.0, %v711
      %v713 = vpop.f32.mrb[0].mxu0
      %714 = vdwg.mxu0
      %v747 = vunpack.c.l.b16 %v313
      %v748 = vunpack.c.l.b16 %v314
      %v749 = vunpack.c.l.b16 %v315
      %v750 = vunpack.c.l.b16 %v316
      %v751 = vunpack.c.l.b16 %v317
      %v752 = vunpack.c.l.b16 %v318
      %v753 = vunpack.c.l.b16 %v319
      %v754 = vunpack.c.l.b16 %v320
      %v755 = vunpack.c.l.b16 %v321
      %v756 = vunpack.c.l.b16 %v322
      %v757 = vunpack.c.l.b16 %v323
      %v758 = vunpack.c.l.b16 %v324
      %v759 = vunpack.c.l.b16 %v325
      %v760 = vunpack.c.l.b16 %v326
      %v761 = vunpack.c.l.b16 %v327
      %v762 = vunpack.c.l.b16 %v328
      %v763 = vunpack.c.l.b16 %v329
      %v764 = vunpack.c.l.b16 %v330
      %v765 = vunpack.c.l.b16 %v331
      %v766 = vunpack.c.l.b16 %v332
      %v767 = vunpack.c.l.b16 %v333
      %v768 = vunpack.c.l.b16 %v334
      %v769 = vunpack.c.l.b16 %v335
      %v770 = vunpack.c.l.b16 %v336
      %v771 = vunpack.c.l.b16 %v337
      %v772 = vunpack.c.l.b16 %v338
      %v773 = vunpack.c.l.b16 %v339
      %v774 = vunpack.c.l.b16 %v340
      %v775 = vunpack.c.l.b16 %v341
      %v776 = vunpack.c.l.b16 %v342
      %v777 = vunpack.c.l.b16 %v343
      %v778 = vunpack.c.l.b16 %v344
      %v779 = vpack.c.b16 %v748, %v747
      %v780 = vpack.c.b16 %v750, %v749
      %v781 = vpack.c.b16 %v752, %v751
      %v782 = vpack.c.b16 %v754, %v753
      %v783 = vpack.c.b16 %v756, %v755
      %v784 = vpack.c.b16 %v758, %v757
      %v785 = vpack.c.b16 %v760, %v759
      %v786 = vpack.c.b16 %v762, %v761
      %v787 = vpack.c.b16 %v764, %v763
      %v788 = vpack.c.b16 %v766, %v765
      %v789 = vpack.c.b16 %v768, %v767
      %v790 = vpack.c.b16 %v770, %v769
      %v791 = vpack.c.b16 %v772, %v771
      %v792 = vpack.c.b16 %v774, %v773
      %v793 = vpack.c.b16 %v776, %v775
      %v794 = vpack.c.b16 %v778, %v777
      %v827 = vunpack.c.l.b16 %v345
      %v828 = vunpack.c.l.b16 %v346
      %v829 = vunpack.c.l.b16 %v347
      %v830 = vunpack.c.l.b16 %v348
      %v831 = vunpack.c.l.b16 %v349
      %v832 = vunpack.c.l.b16 %v350
      %v833 = vunpack.c.l.b16 %v351
      %v834 = vunpack.c.l.b16 %v352
      %v835 = vunpack.c.l.b16 %v353
      %v836 = vunpack.c.l.b16 %v354
      %v837 = vunpack.c.l.b16 %v355
      %v838 = vunpack.c.l.b16 %v356
      %v839 = vunpack.c.l.b16 %v357
      %v840 = vunpack.c.l.b16 %v358
      %v841 = vunpack.c.l.b16 %v359
      %v842 = vunpack.c.l.b16 %v360
      %v843 = vpack.c.b16 %v828, %v827
      %v844 = vpack.c.b16 %v830, %v829
      %v845 = vpack.c.b16 %v832, %v831
      %v846 = vpack.c.b16 %v834, %v833
      %v847 = vpack.c.b16 %v836, %v835
      %v848 = vpack.c.b16 %v838, %v837
      %v849 = vpack.c.b16 %v840, %v839
      %v850 = vpack.c.b16 %v842, %v841
      %859 = vmatprep.subr.bf16.mxu0 0
      %860 = vmatpush1.bf16.msra.mxu0 %v843
      %861 = vmatprep.subr.bf16.mxu0 0
      %862 = vmatpush1.bf16.msra.mxu0 %v844
      %863 = vmatprep.subr.bf16.mxu0 0
      %864 = vmatpush1.bf16.msra.mxu0 %v845
      %865 = vmatprep.subr.bf16.mxu0 0
      %866 = vmatpush1.bf16.msra.mxu0 %v846
      %867 = vmatprep.subr.bf16.mxu0 0
      %868 = vmatpush1.bf16.msra.mxu0 %v847
      %869 = vmatprep.subr.bf16.mxu0 0
      %870 = vmatpush1.bf16.msra.mxu0 %v848
      %871 = vmatprep.subr.bf16.mxu0 0
      %872 = vmatpush1.bf16.msra.mxu0 %v849
      %873 = vmatprep.subr.bf16.mxu0 0
      %874 = vmatpush1.bf16.msra.mxu0 %v850
      %875 = vmatprep.subr.bf16.mxu0 0
      %876 = vmatpush1.bf16.msra.mxu0 0
      %877 = vmatprep.subr.bf16.mxu0 0
      %878 = vmatpush1.bf16.msra.mxu0 0
      %879 = vmatprep.subr.bf16.mxu0 0
      %880 = vmatpush1.bf16.msra.mxu0 0
      %881 = vmatprep.subr.bf16.mxu0 0
      %882 = vmatpush1.bf16.msra.mxu0 0
      %883 = vmatprep.subr.bf16.mxu0 0
      %884 = vmatpush1.bf16.msra.mxu0 0
      %885 = vmatprep.subr.bf16.mxu0 0
      %886 = vmatpush1.bf16.msra.mxu0 0
      %887 = vmatprep.subr.bf16.mxu0 0
      %888 = vmatpush1.bf16.msra.mxu0 0
      %889 = vmatprep.subr.bf16.mxu0 0
      %890 = vmatpush1.bf16.msra.mxu0 0
      %891 = vmatprep.mubr.bf16.mxu0 0
      %892 = vmatmul.mubr.bf16.gmra.mrb[0].mxu0 %v779
      %v893 = vpop.f32.mrb[0].mxu0
      %v894 = vadd.f32 %v589, %v893
      %v895 = vpop.f32.mrb[0].mxu0
      %v896 = vpop.f32.mrb[0].mxu0
      %v897 = vadd.f32 %v592, %v896
      %v898 = vpop.f32.mrb[0].mxu0
      %899 = vmatprep.mubr.bf16.mxu0 0
      %900 = vmatmul.mubr.bf16.gmra.mrb[0].mxu0 %v780
      %v901 = vpop.f32.mrb[0].mxu0
      %v902 = vadd.f32 %v597, %v901
      %v903 = vpop.f32.mrb[0].mxu0
      %v904 = vpop.f32.mrb[0].mxu0
      %v905 = vadd.f32 %v600, %v904
      %v906 = vpop.f32.mrb[0].mxu0
      %907 = vmatprep.mubr.bf16.mxu0 0
      %908 = vmatmul.mubr.bf16.gmra.mrb[0].mxu0 %v781
      %v909 = vpop.f32.mrb[0].mxu0
      %v910 = vadd.f32 %v605, %v909
      %v911 = vpop.f32.mrb[0].mxu0
      %v912 = vpop.f32.mrb[0].mxu0
      %v913 = vadd.f32 %v608, %v912
      %v914 = vpop.f32.mrb[0].mxu0
      %915 = vmatprep.mubr.bf16.mxu0 0
      %916 = vmatmul.mubr.bf16.gmra.mrb[0].mxu0 %v782
      %v917 = vpop.f32.mrb[0].mxu0
      %v918 = vadd.f32 %v613, %v917
      %v919 = vpop.f32.mrb[0].mxu0
      %v920 = vpop.f32.mrb[0].mxu0
      %v921 = vadd.f32 %v616, %v920
      %v922 = vpop.f32.mrb[0].mxu0
      %923 = vmatprep.mubr.bf16.mxu0 0
      %924 = vmatmul.mubr.bf16.gmra.mrb[0].mxu0 %v783
      %v925 = vpop.f32.mrb[0].mxu0
      %v926 = vadd.f32 %v621, %v925
      %v927 = vpop.f32.mrb[0].mxu0
      %v928 = vpop.f32.mrb[0].mxu0
      %v929 = vadd.f32 %v624, %v928
      %v930 = vpop.f32.mrb[0].mxu0
      %931 = vmatprep.mubr.bf16.mxu0 0
      %932 = vmatmul.mubr.bf16.gmra.mrb[0].mxu0 %v784
      %v933 = vpop.f32.mrb[0].mxu0
      %v934 = vadd.f32 %v629, %v933
      %v935 = vpop.f32.mrb[0].mxu0
      %v936 = vpop.f32.mrb[0].mxu0
      %v937 = vadd.f32 %v632, %v936
      %v938 = vpop.f32.mrb[0].mxu0
      %939 = vmatprep.mubr.bf16.mxu0 0
      %940 = vmatmul.mubr.bf16.gmra.mrb[0].mxu0 %v785
      %v941 = vpop.f32.mrb[0].mxu0
      %v942 = vadd.f32 %v637, %v941
      %v943 = vpop.f32.mrb[0].mxu0
      %v944 = vpop.f32.mrb[0].mxu0
      %v945 = vadd.f32 %v640, %v944
      %v946 = vpop.f32.mrb[0].mxu0
      %947 = vmatprep.mubr.bf16.mxu0 0
      %948 = vmatmul.mubr.bf16.gmra.mrb[0].mxu0 %v786
      %v949 = vpop.f32.mrb[0].mxu0
      %v950 = vadd.f32 %v645, %v949
      %v951 = vpop.f32.mrb[0].mxu0
      %v952 = vpop.f32.mrb[0].mxu0
      %v953 = vadd.f32 %v648, %v952
      %v954 = vpop.f32.mrb[0].mxu0
      %955 = vmatprep.mubr.bf16.mxu0 0
      %956 = vmatmul.mubr.bf16.gmra.mrb[0].mxu0 %v787
      %v957 = vpop.f32.mrb[0].mxu0
      %v958 = vadd.f32 %v653, %v957
      %v959 = vpop.f32.mrb[0].mxu0
      %v960 = vpop.f32.mrb[0].mxu0
      %v961 = vadd.f32 %v656, %v960
      %v962 = vpop.f32.mrb[0].mxu0
      %963 = vmatprep.mubr.bf16.mxu0 0
      %964 = vmatmul.mubr.bf16.gmra.mrb[0].mxu0 %v788
      %v965 = vpop.f32.mrb[0].mxu0
      %v966 = vadd.f32 %v661, %v965
      %v967 = vpop.f32.mrb[0].mxu0
      %v968 = vpop.f32.mrb[0].mxu0
      %v969 = vadd.f32 %v664, %v968
      %v970 = vpop.f32.mrb[0].mxu0
      %971 = vmatprep.mubr.bf16.mxu0 0
      %972 = vmatmul.mubr.bf16.gmra.mrb[0].mxu0 %v789
      %v973 = vpop.f32.mrb[0].mxu0
      %v974 = vadd.f32 %v669, %v973
      %v975 = vpop.f32.mrb[0].mxu0
      %v976 = vpop.f32.mrb[0].mxu0
      %v977 = vadd.f32 %v672, %v976
      %v978 = vpop.f32.mrb[0].mxu0
      %979 = vmatprep.mubr.bf16.mxu0 0
      %980 = vmatmul.mubr.bf16.gmra.mrb[0].mxu0 %v790
      %v981 = vpop.f32.mrb[0].mxu0
      %v982 = vadd.f32 %v677, %v981
      %v983 = vpop.f32.mrb[0].mxu0
      %v984 = vpop.f32.mrb[0].mxu0
      %v985 = vadd.f32 %v680, %v984
      %v986 = vpop.f32.mrb[0].mxu0
      %987 = vmatprep.mubr.bf16.mxu0 0
      %988 = vmatmul.mubr.bf16.gmra.mrb[0].mxu0 %v791
      %v989 = vpop.f32.mrb[0].mxu0
      %v990 = vadd.f32 %v685, %v989
      %v991 = vpop.f32.mrb[0].mxu0
      %v992 = vpop.f32.mrb[0].mxu0
      %v993 = vadd.f32 %v688, %v992
      %v994 = vpop.f32.mrb[0].mxu0
      %995 = vmatprep.mubr.bf16.mxu0 0
      %996 = vmatmul.mubr.bf16.gmra.mrb[0].mxu0 %v792
      %v997 = vpop.f32.mrb[0].mxu0
      %v998 = vadd.f32 %v693, %v997
      %v999 = vpop.f32.mrb[0].mxu0
      %v1000 = vpop.f32.mrb[0].mxu0
      %v1001 = vadd.f32 %v696, %v1000
      %v1002 = vpop.f32.mrb[0].mxu0
      %1003 = vmatprep.mubr.bf16.mxu0 0
      %1004 = vmatmul.mubr.bf16.gmra.mrb[0].mxu0 %v793
      %v1005 = vpop.f32.mrb[0].mxu0
      %v1006 = vadd.f32 %v701, %v1005
      %v1007 = vpop.f32.mrb[0].mxu0
      %v1008 = vpop.f32.mrb[0].mxu0
      %v1009 = vadd.f32 %v704, %v1008
      %v1010 = vpop.f32.mrb[0].mxu0
      %1011 = vmatprep.mubr.bf16.mxu0 0
      %1012 = vmatmul.mubr.bf16.gmra.mrb[0].mxu0 %v794
      %v1013 = vpop.f32.mrb[0].mxu0
      %v1014 = vadd.f32 %v709, %v1013
      %v1015 = vpop.f32.mrb[0].mxu0
      %v1016 = vpop.f32.mrb[0].mxu0
      %v1017 = vadd.f32 %v712, %v1016
      %v1018 = vpop.f32.mrb[0].mxu0
      %1019 = vdwg.mxu0
      %v1020 = vld [vmem:[%s291] sm:$0xf]
      %v1021 = vld [vmem:[%s291 + $0x4] sm:$0xf]
      %v1022 = vld [vmem:[%s291 + $0x8] sm:$0x1]
      %v1023 = vld [vmem:[%s291 + $0xc] sm:$0xf]
      %v1024 = vld [vmem:[%s291 + $0x10] sm:$0xf]
      %v1025 = vld [vmem:[%s291 + $0x14] sm:$0x1]
      %v1026 = vld [vmem:[%s291 + $0x18] sm:$0xf]
      %v1027 = vld [vmem:[%s291 + $0x1c] sm:$0xf]
      %v1028 = vld [vmem:[%s291 + $0x20] sm:$0x1]
      %v1029 = vld [vmem:[%s291 + $0x24] sm:$0xf]
      %v1030 = vld [vmem:[%s291 + $0x28] sm:$0xf]
      %v1031 = vld [vmem:[%s291 + $0x2c] sm:$0x1]
      %v1032 = vld [vmem:[%s291 + $0x30] sm:$0xf]
      %v1033 = vld [vmem:[%s291 + $0x34] sm:$0xf]
      %v1034 = vld [vmem:[%s291 + $0x38] sm:$0x1]
      %v1035 = vld [vmem:[%s291 + $0x3c] sm:$0xf]
      %v1036 = vld [vmem:[%s291 + $0x40] sm:$0xf]
      %v1037 = vld [vmem:[%s291 + $0x44] sm:$0x1]
      %v1038 = vld [vmem:[%s291 + $0x48] sm:$0xf]
      %v1039 = vld [vmem:[%s291 + $0x4c] sm:$0xf]
      %v1040 = vld [vmem:[%s291 + $0x50] sm:$0x1]
      %v1041 = vld [vmem:[%s291 + $0x54] sm:$0xf]
      %v1042 = vld [vmem:[%s291 + $0x58] sm:$0xf]
      %v1043 = vld [vmem:[%s291 + $0x5c] sm:$0x1]
      %v1044 = vld [vmem:[%s291 + $0x60] sm:$0xf]
      %v1045 = vld [vmem:[%s291 + $0x64] sm:$0xf]
      %v1046 = vld [vmem:[%s291 + $0x68] sm:$0x1]
      %v1047 = vld [vmem:[%s291 + $0x6c] sm:$0xf]
      %v1048 = vld [vmem:[%s291 + $0x70] sm:$0xf]
      %v1049 = vld [vmem:[%s291 + $0x74] sm:$0x1]
      %v1050 = vld [vmem:[%s291 + $0x78] sm:$0xf]
      %v1051 = vld [vmem:[%s291 + $0x7c] sm:$0xf]
      %v1052 = vld [vmem:[%s291 + $0x80] sm:$0x1]
      %v1053 = vld [vmem:[%s291 + $0x84] sm:$0xf]
      %v1054 = vld [vmem:[%s291 + $0x88] sm:$0xf]
      %v1055 = vld [vmem:[%s291 + $0x8c] sm:$0x1]
      %v1056 = vld [vmem:[%s291 + $0x90] sm:$0xf]
      %v1057 = vld [vmem:[%s291 + $0x94] sm:$0xf]
      %v1058 = vld [vmem:[%s291 + $0x98] sm:$0x1]
      %v1059 = vld [vmem:[%s291 + $0x9c] sm:$0xf]
      %v1060 = vld [vmem:[%s291 + $0xa0] sm:$0xf]
      %v1061 = vld [vmem:[%s291 + $0xa4] sm:$0x1]
      %v1062 = vld [vmem:[%s291 + $0xa8] sm:$0xf]
      %v1063 = vld [vmem:[%s291 + $0xac] sm:$0xf]
      %v1064 = vld [vmem:[%s291 + $0xb0] sm:$0x1]
      %v1065 = vld [vmem:[%s291 + $0xb4] sm:$0xf]
      %v1066 = vld [vmem:[%s291 + $0xb8] sm:$0xf]
      %v1067 = vld [vmem:[%s291 + $0xbc] sm:$0x1]
      %vm1068 = vsmask.f32 3328
      %vm1069 = vsmask.f32 7440
      %vm1070 = vmor %vm1068, %vm1069
      %v1072 = vshrl.u32 %v1020, 16
      %v1074 = vrot.slane %v1072, 4
      %v1075 = vshll.u32 %v1020, 16
      %v1077 = vrot.slane %v1075, 5
      %v1078 = vor.u32 %v1074, %v1077
      %v1079 = vrot.slane %v1078, 4
      %v1081 = vshll.u32 %v1021, 16
      %v1083 = vrot.slane %v1081, 5
      %v1084 = vsel %vm1070, %v1079, %v1083
      %v1085 = vshrl.u32 %v1021, 16
      %v1087 = vrot.slane %v1085, 4
      %v1088 = vor.u32 %v1087, %v1083
      %v1089 = vrot.slane %v1088, 4
      %v1091 = vshll.u32 %v1022, 16
      %v1093 = vrot.slane %v1091, 5
      %v1094 = vsel %vm1070, %v1089, %v1093
      %v1096 = vshrl.u32 %v1023, 16
      %v1098 = vrot.slane %v1096, 4
      %v1099 = vshll.u32 %v1023, 16
      %v1101 = vrot.slane %v1099, 5
      %v1102 = vor.u32 %v1098, %v1101
      %v1103 = vrot.slane %v1102, 4
      %v1105 = vshll.u32 %v1024, 16
      %v1107 = vrot.slane %v1105, 5
      %v1108 = vsel %vm1070, %v1103, %v1107
      %v1109 = vshrl.u32 %v1024, 16
      %v1111 = vrot.slane %v1109, 4
      %v1112 = vor.u32 %v1111, %v1107
      %v1113 = vrot.slane %v1112, 4
      %v1115 = vshll.u32 %v1025, 16
      %v1117 = vrot.slane %v1115, 5
      %v1118 = vsel %vm1070, %v1113, %v1117
      %v1120 = vshrl.u32 %v1026, 16
      %v1122 = vrot.slane %v1120, 4
      %v1123 = vshll.u32 %v1026, 16
      %v1125 = vrot.slane %v1123, 5
      %v1126 = vor.u32 %v1122, %v1125
      %v1127 = vrot.slane %v1126, 4
      %v1129 = vshll.u32 %v1027, 16
      %v1131 = vrot.slane %v1129, 5
      %v1132 = vsel %vm1070, %v1127, %v1131
      %v1133 = vshrl.u32 %v1027, 16
      %v1135 = vrot.slane %v1133, 4
      %v1136 = vor.u32 %v1135, %v1131
      %v1137 = vrot.slane %v1136, 4
      %v1139 = vshll.u32 %v1028, 16
      %v1141 = vrot.slane %v1139, 5
      %v1142 = vsel %vm1070, %v1137, %v1141
      %v1144 = vshrl.u32 %v1029, 16
      %v1146 = vrot.slane %v1144, 4
      %v1147 = vshll.u32 %v1029, 16
      %v1149 = vrot.slane %v1147, 5
      %v1150 = vor.u32 %v1146, %v1149
      %v1151 = vrot.slane %v1150, 4
      %v1153 = vshll.u32 %v1030, 16
      %v1155 = vrot.slane %v1153, 5
      %v1156 = vsel %vm1070, %v1151, %v1155
      %v1157 = vshrl.u32 %v1030, 16
      %v1159 = vrot.slane %v1157, 4
      %v1160 = vor.u32 %v1159, %v1155
      %v1161 = vrot.slane %v1160, 4
      %v1163 = vshll.u32 %v1031, 16
      %v1165 = vrot.slane %v1163, 5
      %v1166 = vsel %vm1070, %v1161, %v1165
      %v1168 = vshrl.u32 %v1032, 16
      %v1170 = vrot.slane %v1168, 4
      %v1171 = vshll.u32 %v1032, 16
      %v1173 = vrot.slane %v1171, 5
      %v1174 = vor.u32 %v1170, %v1173
      %v1175 = vrot.slane %v1174, 4
      %v1177 = vshll.u32 %v1033, 16
      %v1179 = vrot.slane %v1177, 5
      %v1180 = vsel %vm1070, %v1175, %v1179
      %v1181 = vshrl.u32 %v1033, 16
      %v1183 = vrot.slane %v1181, 4
      %v1184 = vor.u32 %v1183, %v1179
      %v1185 = vrot.slane %v1184, 4
      %v1187 = vshll.u32 %v1034, 16
      %v1189 = vrot.slane %v1187, 5
      %v1190 = vsel %vm1070, %v1185, %v1189
      %v1192 = vshrl.u32 %v1035, 16
      %v1194 = vrot.slane %v1192, 4
      %v1195 = vshll.u32 %v1035, 16
      %v1197 = vrot.slane %v1195, 5
      %v1198 = vor.u32 %v1194, %v1197
      %v1199 = vrot.slane %v1198, 4
      %v1201 = vshll.u32 %v1036, 16
      %v1203 = vrot.slane %v1201, 5
      %v1204 = vsel %vm1070, %v1199, %v1203
      %v1205 = vshrl.u32 %v1036, 16
      %v1207 = vrot.slane %v1205, 4
      %v1208 = vor.u32 %v1207, %v1203
      %v1209 = vrot.slane %v1208, 4
      %v1211 = vshll.u32 %v1037, 16
      %v1213 = vrot.slane %v1211, 5
      %v1214 = vsel %vm1070, %v1209, %v1213
      %v1216 = vshrl.u32 %v1038, 16
      %v1218 = vrot.slane %v1216, 4
      %v1219 = vshll.u32 %v1038, 16
      %v1221 = vrot.slane %v1219, 5
      %v1222 = vor.u32 %v1218, %v1221
      %v1223 = vrot.slane %v1222, 4
      %v1225 = vshll.u32 %v1039, 16
      %v1227 = vrot.slane %v1225, 5
      %v1228 = vsel %vm1070, %v1223, %v1227
      %v1229 = vshrl.u32 %v1039, 16
      %v1231 = vrot.slane %v1229, 4
      %v1232 = vor.u32 %v1231, %v1227
      %v1233 = vrot.slane %v1232, 4
      %v1235 = vshll.u32 %v1040, 16
      %v1237 = vrot.slane %v1235, 5
      %v1238 = vsel %vm1070, %v1233, %v1237
      %v1240 = vshrl.u32 %v1041, 16
      %v1242 = vrot.slane %v1240, 4
      %v1243 = vshll.u32 %v1041, 16
      %v1245 = vrot.slane %v1243, 5
      %v1246 = vor.u32 %v1242, %v1245
      %v1247 = vrot.slane %v1246, 4
      %v1249 = vshll.u32 %v1042, 16
      %v1251 = vrot.slane %v1249, 5
      %v1252 = vsel %vm1070, %v1247, %v1251
      %v1253 = vshrl.u32 %v1042, 16
      %v1255 = vrot.slane %v1253, 4
      %v1256 = vor.u32 %v1255, %v1251
      %v1257 = vrot.slane %v1256, 4
      %v1259 = vshll.u32 %v1043, 16
      %v1261 = vrot.slane %v1259, 5
      %v1262 = vsel %vm1070, %v1257, %v1261
      %v1264 = vshrl.u32 %v1044, 16
      %v1266 = vrot.slane %v1264, 4
      %v1267 = vshll.u32 %v1044, 16
      %v1269 = vrot.slane %v1267, 5
      %v1270 = vor.u32 %v1266, %v1269
      %v1271 = vrot.slane %v1270, 4
      %v1273 = vshll.u32 %v1045, 16
      %v1275 = vrot.slane %v1273, 5
      %v1276 = vsel %vm1070, %v1271, %v1275
      %v1277 = vshrl.u32 %v1045, 16
      %v1279 = vrot.slane %v1277, 4
      %v1280 = vor.u32 %v1279, %v1275
      %v1281 = vrot.slane %v1280, 4
      %v1283 = vshll.u32 %v1046, 16
      %v1285 = vrot.slane %v1283, 5
      %v1286 = vsel %vm1070, %v1281, %v1285
      %v1288 = vshrl.u32 %v1047, 16
      %v1290 = vrot.slane %v1288, 4
      %v1291 = vshll.u32 %v1047, 16
      %v1293 = vrot.slane %v1291, 5
      %v1294 = vor.u32 %v1290, %v1293
      %v1295 = vrot.slane %v1294, 4
      %v1297 = vshll.u32 %v1048, 16
      %v1299 = vrot.slane %v1297, 5
      %v1300 = vsel %vm1070, %v1295, %v1299
      %v1301 = vshrl.u32 %v1048, 16
      %v1303 = vrot.slane %v1301, 4
      %v1304 = vor.u32 %v1303, %v1299
      %v1305 = vrot.slane %v1304, 4
      %v1307 = vshll.u32 %v1049, 16
      %v1309 = vrot.slane %v1307, 5
      %v1310 = vsel %vm1070, %v1305, %v1309
      %v1312 = vshrl.u32 %v1050, 16
      %v1314 = vrot.slane %v1312, 4
      %v1315 = vshll.u32 %v1050, 16
      %v1317 = vrot.slane %v1315, 5
      %v1318 = vor.u32 %v1314, %v1317
      %v1319 = vrot.slane %v1318, 4
      %v1321 = vshll.u32 %v1051, 16
      %v1323 = vrot.slane %v1321, 5
      %v1324 = vsel %vm1070, %v1319, %v1323
      %v1325 = vshrl.u32 %v1051, 16
      %v1327 = vrot.slane %v1325, 4
      %v1328 = vor.u32 %v1327, %v1323
      %v1329 = vrot.slane %v1328, 4
      %v1331 = vshll.u32 %v1052, 16
      %v1333 = vrot.slane %v1331, 5
      %v1334 = vsel %vm1070, %v1329, %v1333
      %v1336 = vshrl.u32 %v1053, 16
      %v1338 = vrot.slane %v1336, 4
      %v1339 = vshll.u32 %v1053, 16
      %v1341 = vrot.slane %v1339, 5
      %v1342 = vor.u32 %v1338, %v1341
      %v1343 = vrot.slane %v1342, 4
      %v1345 = vshll.u32 %v1054, 16
      %v1347 = vrot.slane %v1345, 5
      %v1348 = vsel %vm1070, %v1343, %v1347
      %v1349 = vshrl.u32 %v1054, 16
      %v1351 = vrot.slane %v1349, 4
      %v1352 = vor.u32 %v1351, %v1347
      %v1353 = vrot.slane %v1352, 4
      %v1355 = vshll.u32 %v1055, 16
      %v1357 = vrot.slane %v1355, 5
      %v1358 = vsel %vm1070, %v1353, %v1357
      %v1360 = vshrl.u32 %v1056, 16
      %v1362 = vrot.slane %v1360, 4
      %v1363 = vshll.u32 %v1056, 16
      %v1365 = vrot.slane %v1363, 5
      %v1366 = vor.u32 %v1362, %v1365
      %v1367 = vrot.slane %v1366, 4
      %v1369 = vshll.u32 %v1057, 16
      %v1371 = vrot.slane %v1369, 5
      %v1372 = vsel %vm1070, %v1367, %v1371
      %v1373 = vshrl.u32 %v1057, 16
      %v1375 = vrot.slane %v1373, 4
      %v1376 = vor.u32 %v1375, %v1371
      %v1377 = vrot.slane %v1376, 4
      %v1379 = vshll.u32 %v1058, 16
      %v1381 = vrot.slane %v1379, 5
      %v1382 = vsel %vm1070, %v1377, %v1381
      %v1384 = vshrl.u32 %v1059, 16
      %v1386 = vrot.slane %v1384, 4
      %v1387 = vshll.u32 %v1059, 16
      %v1389 = vrot.slane %v1387, 5
      %v1390 = vor.u32 %v1386, %v1389
      %v1391 = vrot.slane %v1390, 4
      %v1393 = vshll.u32 %v1060, 16
      %v1395 = vrot.slane %v1393, 5
      %v1396 = vsel %vm1070, %v1391, %v1395
      %v1397 = vshrl.u32 %v1060, 16
      %v1399 = vrot.slane %v1397, 4
      %v1400 = vor.u32 %v1399, %v1395
      %v1401 = vrot.slane %v1400, 4
      %v1403 = vshll.u32 %v1061, 16
      %v1405 = vrot.slane %v1403, 5
      %v1406 = vsel %vm1070, %v1401, %v1405
      %v1408 = vshrl.u32 %v1062, 16
      %v1410 = vrot.slane %v1408, 4
      %v1411 = vshll.u32 %v1062, 16
      %v1413 = vrot.slane %v1411, 5
      %v1414 = vor.u32 %v1410, %v1413
      %v1415 = vrot.slane %v1414, 4
      %v1417 = vshll.u32 %v1063, 16
      %v1419 = vrot.slane %v1417, 5
      %v1420 = vsel %vm1070, %v1415, %v1419
      %v1421 = vshrl.u32 %v1063, 16
      %v1423 = vrot.slane %v1421, 4
      %v1424 = vor.u32 %v1423, %v1419
      %v1425 = vrot.slane %v1424, 4
      %v1427 = vshll.u32 %v1064, 16
      %v1429 = vrot.slane %v1427, 5
      %v1430 = vsel %vm1070, %v1425, %v1429
      %v1432 = vshrl.u32 %v1065, 16
      %v1434 = vrot.slane %v1432, 4
      %v1435 = vshll.u32 %v1065, 16
      %v1437 = vrot.slane %v1435, 5
      %v1438 = vor.u32 %v1434, %v1437
      %v1439 = vrot.slane %v1438, 4
      %v1441 = vshll.u32 %v1066, 16
      %v1443 = vrot.slane %v1441, 5
      %v1444 = vsel %vm1070, %v1439, %v1443
      %v1445 = vshrl.u32 %v1066, 16
      %v1447 = vrot.slane %v1445, 4
      %v1448 = vor.u32 %v1447, %v1443
      %v1449 = vrot.slane %v1448, 4
      %v1451 = vshll.u32 %v1067, 16
      %v1453 = vrot.slane %v1451, 5
      %v1454 = vsel %vm1070, %v1449, %v1453
      %s1455 = scalar_lea.vmem %s4, 128
      %v1456 = vld [vmem:[%s1455] sm:$0xf]
      %v1457 = vld [vmem:[%s1455 + $0x4] sm:$0xf]
      %v1458 = vld [vmem:[%s1455 + $0x8] sm:$0xf]
      %v1459 = vld [vmem:[%s1455 + $0xc] sm:$0xf]
      %v1460 = vld [vmem:[%s1455 + $0x10] sm:$0xf]
      %v1461 = vld [vmem:[%s1455 + $0x14] sm:$0xf]
      %v1462 = vld [vmem:[%s1455 + $0x18] sm:$0xf]
      %v1463 = vld [vmem:[%s1455 + $0x1c] sm:$0xf]
      %v1464 = vld [vmem:[%s1455 + $0x20] sm:$0xf]
      %v1465 = vld [vmem:[%s1455 + $0x24] sm:$0xf]
      %v1466 = vld [vmem:[%s1455 + $0x28] sm:$0xf]
      %v1467 = vld [vmem:[%s1455 + $0x2c] sm:$0xf]
      %v1468 = vld [vmem:[%s1455 + $0x30] sm:$0xf]
      %v1469 = vld [vmem:[%s1455 + $0x34] sm:$0xf]
      %v1470 = vld [vmem:[%s1455 + $0x38] sm:$0xf]
      %v1471 = vld [vmem:[%s1455 + $0x3c] sm:$0xf]
      %v1472 = vunpack.c.l.b16 %v1084
      %v1473 = vunpack.c.l.b16 %v1094
      %v1474 = vunpack.c.l.b16 %v1108
      %v1475 = vunpack.c.l.b16 %v1118
      %v1476 = vunpack.c.l.b16 %v1132
      %v1477 = vunpack.c.l.b16 %v1142
      %v1478 = vunpack.c.l.b16 %v1156
      %v1479 = vunpack.c.l.b16 %v1166
      %v1480 = vunpack.c.l.b16 %v1180
      %v1481 = vunpack.c.l.b16 %v1190
      %v1482 = vunpack.c.l.b16 %v1204
      %v1483 = vunpack.c.l.b16 %v1214
      %v1484 = vunpack.c.l.b16 %v1228
      %v1485 = vunpack.c.l.b16 %v1238
      %v1486 = vunpack.c.l.b16 %v1252
      %v1487 = vunpack.c.l.b16 %v1262
      %v1488 = vunpack.c.l.b16 %v1276
      %v1489 = vunpack.c.l.b16 %v1286
      %v1490 = vunpack.c.l.b16 %v1300
      %v1491 = vunpack.c.l.b16 %v1310
      %v1492 = vunpack.c.l.b16 %v1324
      %v1493 = vunpack.c.l.b16 %v1334
      %v1494 = vunpack.c.l.b16 %v1348
      %v1495 = vunpack.c.l.b16 %v1358
      %v1496 = vunpack.c.l.b16 %v1372
      %v1497 = vunpack.c.l.b16 %v1382
      %v1498 = vunpack.c.l.b16 %v1396
      %v1499 = vunpack.c.l.b16 %v1406
      %v1500 = vunpack.c.l.b16 %v1420
      %v1501 = vunpack.c.l.b16 %v1430
      %v1502 = vunpack.c.l.b16 %v1444
      %v1503 = vunpack.c.l.b16 %v1454
      %v1504 = vpack.c.b16 %v1473, %v1472
      %v1505 = vpack.c.b16 %v1475, %v1474
      %v1506 = vpack.c.b16 %v1477, %v1476
      %v1507 = vpack.c.b16 %v1479, %v1478
      %v1508 = vpack.c.b16 %v1481, %v1480
      %v1509 = vpack.c.b16 %v1483, %v1482
      %v1510 = vpack.c.b16 %v1485, %v1484
      %v1511 = vpack.c.b16 %v1487, %v1486
      %v1512 = vpack.c.b16 %v1489, %v1488
      %v1513 = vpack.c.b16 %v1491, %v1490
      %v1514 = vpack.c.b16 %v1493, %v1492
      %v1515 = vpack.c.b16 %v1495, %v1494
      %v1516 = vpack.c.b16 %v1497, %v1496
      %v1517 = vpack.c.b16 %v1499, %v1498
      %v1518 = vpack.c.b16 %v1501, %v1500
      %v1519 = vpack.c.b16 %v1503, %v1502
      %v1552 = vunpack.c.l.b16 %v1456
      %v1553 = vunpack.c.l.b16 %v1457
      %v1554 = vunpack.c.l.b16 %v1458
      %v1555 = vunpack.c.l.b16 %v1459
      %v1556 = vunpack.c.l.b16 %v1460
      %v1557 = vunpack.c.l.b16 %v1461
      %v1558 = vunpack.c.l.b16 %v1462
      %v1559 = vunpack.c.l.b16 %v1463
      %v1560 = vunpack.c.l.b16 %v1464
      %v1561 = vunpack.c.l.b16 %v1465
      %v1562 = vunpack.c.l.b16 %v1466
      %v1563 = vunpack.c.l.b16 %v1467
      %v1564 = vunpack.c.l.b16 %v1468
      %v1565 = vunpack.c.l.b16 %v1469
      %v1566 = vunpack.c.l.b16 %v1470
      %v1567 = vunpack.c.l.b16 %v1471
      %v1568 = vpack.c.b16 %v1553, %v1552
      %v1569 = vpack.c.b16 %v1555, %v1554
      %v1570 = vpack.c.b16 %v1557, %v1556
      %v1571 = vpack.c.b16 %v1559, %v1558
      %v1572 = vpack.c.b16 %v1561, %v1560
      %v1573 = vpack.c.b16 %v1563, %v1562
      %v1574 = vpack.c.b16 %v1565, %v1564
      %v1575 = vpack.c.b16 %v1567, %v1566
      %1584 = vmatprep.subr.bf16.mxu0 0
      %1585 = vmatpush1.bf16.msra.mxu0 %v1568
      %1586 = vmatprep.subr.bf16.mxu0 0
      %1587 = vmatpush1.bf16.msra.mxu0 %v1569
      %1588 = vmatprep.subr.bf16.mxu0 0
      %1589 = vmatpush1.bf16.msra.mxu0 %v1570
      %1590 = vmatprep.subr.bf16.mxu0 0
      %1591 = vmatpush1.bf16.msra.mxu0 %v1571
      %1592 = vmatprep.subr.bf16.mxu0 0
      %1593 = vmatpush1.bf16.msra.mxu0 %v1572
      %1594 = vmatprep.subr.bf16.mxu0 0
      %1595 = vmatpush1.bf16.msra.mxu0 %v1573
      %1596 = vmatprep.subr.bf16.mxu0 0
      %1597 = vmatpush1.bf16.msra.mxu0 %v1574
      %1598 = vmatprep.subr.bf16.mxu0 0
      %1599 = vmatpush1.bf16.msra.mxu0 %v1575
      %1600 = vmatprep.subr.bf16.mxu0 0
      %1601 = vmatpush1.bf16.msra.mxu0 0
      %1602 = vmatprep.subr.bf16.mxu0 0
      %1603 = vmatpush1.bf16.msra.mxu0 0
      %1604 = vmatprep.subr.bf16.mxu0 0
      %1605 = vmatpush1.bf16.msra.mxu0 0
      %1606 = vmatprep.subr.bf16.mxu0 0
      %1607 = vmatpush1.bf16.msra.mxu0 0
      %1608 = vmatprep.subr.bf16.mxu0 0
      %1609 = vmatpush1.bf16.msra.mxu0 0
      %1610 = vmatprep.subr.bf16.mxu0 0
      %1611 = vmatpush1.bf16.msra.mxu0 0
      %1612 = vmatprep.subr.bf16.mxu0 0
      %1613 = vmatpush1.bf16.msra.mxu0 0
      %1614 = vmatprep.subr.bf16.mxu0 0
      %1615 = vmatpush1.bf16.msra.mxu0 0
      %1616 = vmatprep.mubr.bf16.mxu0 0
      %1617 = vmatmul.mubr.bf16.gmra.mrb[0].mxu0 %v1504
      %v1618 = vpop.f32.mrb[0].mxu0
      %v1619 = vadd.f32 0.0, %v1618
      %v1620 = vpop.f32.mrb[0].mxu0
      %v1621 = vpop.f32.mrb[0].mxu0
      %v1622 = vadd.f32 0.0, %v1621
      %v1623 = vpop.f32.mrb[0].mxu0
      %1624 = vmatprep.mubr.bf16.mxu0 0
      %1625 = vmatmul.mubr.bf16.gmra.mrb[0].mxu0 %v1505
      %v1626 = vpop.f32.mrb[0].mxu0
      %v1627 = vadd.f32 0.0, %v1626
      %v1628 = vpop.f32.mrb[0].mxu0
      %v1629 = vpop.f32.mrb[0].mxu0
      %v1630 = vadd.f32 0.0, %v1629
      %v1631 = vpop.f32.mrb[0].mxu0
      %1632 = vmatprep.mubr.bf16.mxu0 0
      %1633 = vmatmul.mubr.bf16.gmra.mrb[0].mxu0 %v1506
      %v1634 = vpop.f32.mrb[0].mxu0
      %v1635 = vadd.f32 0.0, %v1634
      %v1636 = vpop.f32.mrb[0].mxu0
      %v1637 = vpop.f32.mrb[0].mxu0
      %v1638 = vadd.f32 0.0, %v1637
      %v1639 = vpop.f32.mrb[0].mxu0
      %1640 = vmatprep.mubr.bf16.mxu0 0
      %1641 = vmatmul.mubr.bf16.gmra.mrb[0].mxu0 %v1507
      %v1642 = vpop.f32.mrb[0].mxu0
      %v1643 = vadd.f32 0.0, %v1642
      %v1644 = vpop.f32.mrb[0].mxu0
      %v1645 = vpop.f32.mrb[0].mxu0
      %v1646 = vadd.f32 0.0, %v1645
      %v1647 = vpop.f32.mrb[0].mxu0
      %1648 = vmatprep.mubr.bf16.mxu0 0
      %1649 = vmatmul.mubr.bf16.gmra.mrb[0].mxu0 %v1508
      %v1650 = vpop.f32.mrb[0].mxu0
      %v1651 = vadd.f32 0.0, %v1650
      %v1652 = vpop.f32.mrb[0].mxu0
      %v1653 = vpop.f32.mrb[0].mxu0
      %v1654 = vadd.f32 0.0, %v1653
      %v1655 = vpop.f32.mrb[0].mxu0
      %1656 = vmatprep.mubr.bf16.mxu0 0
      %1657 = vmatmul.mubr.bf16.gmra.mrb[0].mxu0 %v1509
      %v1658 = vpop.f32.mrb[0].mxu0
      %v1659 = vadd.f32 0.0, %v1658
      %v1660 = vpop.f32.mrb[0].mxu0
      %v1661 = vpop.f32.mrb[0].mxu0
      %v1662 = vadd.f32 0.0, %v1661
      %v1663 = vpop.f32.mrb[0].mxu0
      %1664 = vmatprep.mubr.bf16.mxu0 0
      %1665 = vmatmul.mubr.bf16.gmra.mrb[0].mxu0 %v1510
      %v1666 = vpop.f32.mrb[0].mxu0
      %v1667 = vadd.f32 0.0, %v1666
      %v1668 = vpop.f32.mrb[0].mxu0
      %v1669 = vpop.f32.mrb[0].mxu0
      %v1670 = vadd.f32 0.0, %v1669
      %v1671 = vpop.f32.mrb[0].mxu0
      %1672 = vmatprep.mubr.bf16.mxu0 0
      %1673 = vmatmul.mubr.bf16.gmra.mrb[0].mxu0 %v1511
      %v1674 = vpop.f32.mrb[0].mxu0
      %v1675 = vadd.f32 0.0, %v1674
      %v1676 = vpop.f32.mrb[0].mxu0
      %v1677 = vpop.f32.mrb[0].mxu0
      %v1678 = vadd.f32 0.0, %v1677
      %v1679 = vpop.f32.mrb[0].mxu0
      %1680 = vmatprep.mubr.bf16.mxu0 0
      %1681 = vmatmul.mubr.bf16.gmra.mrb[0].mxu0 %v1512
      %v1682 = vpop.f32.mrb[0].mxu0
      %v1683 = vadd.f32 0.0, %v1682
      %v1684 = vpop.f32.mrb[0].mxu0
      %v1685 = vpop.f32.mrb[0].mxu0
      %v1686 = vadd.f32 0.0, %v1685
      %v1687 = vpop.f32.mrb[0].mxu0
      %1688 = vmatprep.mubr.bf16.mxu0 0
      %1689 = vmatmul.mubr.bf16.gmra.mrb[0].mxu0 %v1513
      %v1690 = vpop.f32.mrb[0].mxu0
      %v1691 = vadd.f32 0.0, %v1690
      %v1692 = vpop.f32.mrb[0].mxu0
      %v1693 = vpop.f32.mrb[0].mxu0
      %v1694 = vadd.f32 0.0, %v1693
      %v1695 = vpop.f32.mrb[0].mxu0
      %1696 = vmatprep.mubr.bf16.mxu0 0
      %1697 = vmatmul.mubr.bf16.gmra.mrb[0].mxu0 %v1514
      %v1698 = vpop.f32.mrb[0].mxu0
      %v1699 = vadd.f32 0.0, %v1698
      %v1700 = vpop.f32.mrb[0].mxu0
      %v1701 = vpop.f32.mrb[0].mxu0
      %v1702 = vadd.f32 0.0, %v1701
      %v1703 = vpop.f32.mrb[0].mxu0
      %1704 = vmatprep.mubr.bf16.mxu0 0
      %1705 = vmatmul.mubr.bf16.gmra.mrb[0].mxu0 %v1515
      %v1706 = vpop.f32.mrb[0].mxu0
      %v1707 = vadd.f32 0.0, %v1706
      %v1708 = vpop.f32.mrb[0].mxu0
      %v1709 = vpop.f32.mrb[0].mxu0
      %v1710 = vadd.f32 0.0, %v1709
      %v1711 = vpop.f32.mrb[0].mxu0
      %1712 = vmatprep.mubr.bf16.mxu0 0
      %1713 = vmatmul.mubr.bf16.gmra.mrb[0].mxu0 %v1516
      %v1714 = vpop.f32.mrb[0].mxu0
      %v1715 = vadd.f32 0.0, %v1714
      %v1716 = vpop.f32.mrb[0].mxu0
      %v1717 = vpop.f32.mrb[0].mxu0
      %v1718 = vadd.f32 0.0, %v1717
      %v1719 = vpop.f32.mrb[0].mxu0
      %1720 = vmatprep.mubr.bf16.mxu0 0
      %1721 = vmatmul.mubr.bf16.gmra.mrb[0].mxu0 %v1517
      %v1722 = vpop.f32.mrb[0].mxu0
      %v1723 = vadd.f32 0.0, %v1722
      %v1724 = vpop.f32.mrb[0].mxu0
      %v1725 = vpop.f32.mrb[0].mxu0
      %v1726 = vadd.f32 0.0, %v1725
      %v1727 = vpop.f32.mrb[0].mxu0
      %1728 = vmatprep.mubr.bf16.mxu0 0
      %1729 = vmatmul.mubr.bf16.gmra.mrb[0].mxu0 %v1518
      %v1730 = vpop.f32.mrb[0].mxu0
      %v1731 = vadd.f32 0.0, %v1730
      %v1732 = vpop.f32.mrb[0].mxu0
      %v1733 = vpop.f32.mrb[0].mxu0
      %v1734 = vadd.f32 0.0, %v1733
      %v1735 = vpop.f32.mrb[0].mxu0
      %1736 = vmatprep.mubr.bf16.mxu0 0
      %1737 = vmatmul.mubr.bf16.gmra.mrb[0].mxu0 %v1519
      %v1738 = vpop.f32.mrb[0].mxu0
      %v1739 = vadd.f32 0.0, %v1738
      %v1740 = vpop.f32.mrb[0].mxu0
      %v1741 = vpop.f32.mrb[0].mxu0
      %v1742 = vadd.f32 0.0, %v1741
      %v1743 = vpop.f32.mrb[0].mxu0
      %1744 = vdwg.mxu0
      %v1745 = vadd.f32 %v894, %v1619
      %v1746 = vadd.f32 %v897, %v1622
      %v1747 = vadd.f32 %v902, %v1627
      %v1748 = vadd.f32 %v905, %v1630
      %v1749 = vadd.f32 %v910, %v1635
      %v1750 = vadd.f32 %v913, %v1638
      %v1751 = vadd.f32 %v918, %v1643
      %v1752 = vadd.f32 %v921, %v1646
      %v1753 = vadd.f32 %v926, %v1651
      %v1754 = vadd.f32 %v929, %v1654
      %v1755 = vadd.f32 %v934, %v1659
      %v1756 = vadd.f32 %v937, %v1662
      %v1757 = vadd.f32 %v942, %v1667
      %v1758 = vadd.f32 %v945, %v1670
      %v1759 = vadd.f32 %v950, %v1675
      %v1760 = vadd.f32 %v953, %v1678
      %v1761 = vadd.f32 %v958, %v1683
      %v1762 = vadd.f32 %v961, %v1686
      %v1763 = vadd.f32 %v966, %v1691
      %v1764 = vadd.f32 %v969, %v1694
      %v1765 = vadd.f32 %v974, %v1699
      %v1766 = vadd.f32 %v977, %v1702
      %v1767 = vadd.f32 %v982, %v1707
      %v1768 = vadd.f32 %v985, %v1710
      %v1769 = vadd.f32 %v990, %v1715
      %v1770 = vadd.f32 %v993, %v1718
      %v1771 = vadd.f32 %v998, %v1723
      %v1772 = vadd.f32 %v1001, %v1726
      %v1773 = vadd.f32 %v1006, %v1731
      %v1774 = vadd.f32 %v1009, %v1734
      %v1775 = vadd.f32 %v1014, %v1739
      %v1776 = vadd.f32 %v1017, %v1742
      %v1777 = vld [vmem:[%s301] sm:$0xf]
      %v1778 = vld [vmem:[%s301 + $0x4] sm:$0xf]
      %v1779 = vld [vmem:[%s301 + $0xc] sm:$0xf]
      %v1780 = vld [vmem:[%s301 + $0x10] sm:$0xf]
      %v1781 = vld [vmem:[%s301 + $0x18] sm:$0xf]
      %v1782 = vld [vmem:[%s301 + $0x1c] sm:$0xf]
      %v1783 = vld [vmem:[%s301 + $0x24] sm:$0xf]
      %v1784 = vld [vmem:[%s301 + $0x28] sm:$0xf]
      %v1785 = vld [vmem:[%s301 + $0x30] sm:$0xf]
      %v1786 = vld [vmem:[%s301 + $0x34] sm:$0xf]
      %v1787 = vld [vmem:[%s301 + $0x3c] sm:$0xf]
      %v1788 = vld [vmem:[%s301 + $0x40] sm:$0xf]
      %v1789 = vld [vmem:[%s301 + $0x48] sm:$0xf]
      %v1790 = vld [vmem:[%s301 + $0x4c] sm:$0xf]
      %v1791 = vld [vmem:[%s301 + $0x54] sm:$0xf]
      %v1792 = vld [vmem:[%s301 + $0x58] sm:$0xf]
      %v1793 = vld [vmem:[%s301 + $0x60] sm:$0xf]
      %v1794 = vld [vmem:[%s301 + $0x64] sm:$0xf]
      %v1795 = vld [vmem:[%s301 + $0x6c] sm:$0xf]
      %v1796 = vld [vmem:[%s301 + $0x70] sm:$0xf]
      %v1797 = vld [vmem:[%s301 + $0x78] sm:$0xf]
      %v1798 = vld [vmem:[%s301 + $0x7c] sm:$0xf]
      %v1799 = vld [vmem:[%s301 + $0x84] sm:$0xf]
      %v1800 = vld [vmem:[%s301 + $0x88] sm:$0xf]
      %v1801 = vld [vmem:[%s301 + $0x90] sm:$0xf]
      %v1802 = vld [vmem:[%s301 + $0x94] sm:$0xf]
      %v1803 = vld [vmem:[%s301 + $0x9c] sm:$0xf]
      %v1804 = vld [vmem:[%s301 + $0xa0] sm:$0xf]
      %v1805 = vld [vmem:[%s301 + $0xa8] sm:$0xf]
      %v1806 = vld [vmem:[%s301 + $0xac] sm:$0xf]
      %v1807 = vld [vmem:[%s301 + $0xb4] sm:$0xf]
      %v1808 = vld [vmem:[%s301 + $0xb8] sm:$0xf]
      %s1809 = scalar_lea.vmem %s4, 192
      %v1810 = vld [vmem:[%s1809] sm:$0xf]
      %v1811 = vld [vmem:[%s1809 + $0x4] sm:$0xf]
      %v1812 = vld [vmem:[%s1809 + $0x8] sm:$0xf]
      %v1813 = vld [vmem:[%s1809 + $0xc] sm:$0xf]
      %v1814 = vld [vmem:[%s1809 + $0x10] sm:$0xf]
      %v1815 = vld [vmem:[%s1809 + $0x14] sm:$0xf]
      %v1816 = vld [vmem:[%s1809 + $0x18] sm:$0xf]
      %v1817 = vld [vmem:[%s1809 + $0x1c] sm:$0xf]
      %v1818 = vld [vmem:[%s1809 + $0x20] sm:$0xf]
      %v1819 = vld [vmem:[%s1809 + $0x24] sm:$0xf]
      %v1820 = vld [vmem:[%s1809 + $0x28] sm:$0xf]
      %v1821 = vld [vmem:[%s1809 + $0x2c] sm:$0xf]
      %v1822 = vld [vmem:[%s1809 + $0x30] sm:$0xf]
      %v1823 = vld [vmem:[%s1809 + $0x34] sm:$0xf]
      %v1824 = vld [vmem:[%s1809 + $0x38] sm:$0xf]
      %v1825 = vld [vmem:[%s1809 + $0x3c] sm:$0xf]
      %v1858 = vunpack.c.l.b16 %v1777
      %v1859 = vunpack.c.l.b16 %v1778
      %v1860 = vunpack.c.l.b16 %v1779
      %v1861 = vunpack.c.l.b16 %v1780
      %v1862 = vunpack.c.l.b16 %v1781
      %v1863 = vunpack.c.l.b16 %v1782
      %v1864 = vunpack.c.l.b16 %v1783
      %v1865 = vunpack.c.l.b16 %v1784
      %v1866 = vunpack.c.l.b16 %v1785
      %v1867 = vunpack.c.l.b16 %v1786
      %v1868 = vunpack.c.l.b16 %v1787
      %v1869 = vunpack.c.l.b16 %v1788
      %v1870 = vunpack.c.l.b16 %v1789
      %v1871 = vunpack.c.l.b16 %v1790
      %v1872 = vunpack.c.l.b16 %v1791
      %v1873 = vunpack.c.l.b16 %v1792
      %v1874 = vunpack.c.l.b16 %v1793
      %v1875 = vunpack.c.l.b16 %v1794
      %v1876 = vunpack.c.l.b16 %v1795
      %v1877 = vunpack.c.l.b16 %v1796
      %v1878 = vunpack.c.l.b16 %v1797
      %v1879 = vunpack.c.l.b16 %v1798
      %v1880 = vunpack.c.l.b16 %v1799
      %v1881 = vunpack.c.l.b16 %v1800
      %v1882 = vunpack.c.l.b16 %v1801
      %v1883 = vunpack.c.l.b16 %v1802
      %v1884 = vunpack.c.l.b16 %v1803
      %v1885 = vunpack.c.l.b16 %v1804
      %v1886 = vunpack.c.l.b16 %v1805
      %v1887 = vunpack.c.l.b16 %v1806
      %v1888 = vunpack.c.l.b16 %v1807
      %v1889 = vunpack.c.l.b16 %v1808
      %v1890 = vpack.c.b16 %v1859, %v1858
      %v1891 = vpack.c.b16 %v1861, %v1860
      %v1892 = vpack.c.b16 %v1863, %v1862
      %v1893 = vpack.c.b16 %v1865, %v1864
      %v1894 = vpack.c.b16 %v1867, %v1866
      %v1895 = vpack.c.b16 %v1869, %v1868
      %v1896 = vpack.c.b16 %v1871, %v1870
      %v1897 = vpack.c.b16 %v1873, %v1872
      %v1898 = vpack.c.b16 %v1875, %v1874
      %v1899 = vpack.c.b16 %v1877, %v1876
      %v1900 = vpack.c.b16 %v1879, %v1878
      %v1901 = vpack.c.b16 %v1881, %v1880
      %v1902 = vpack.c.b16 %v1883, %v1882
      %v1903 = vpack.c.b16 %v1885, %v1884
      %v1904 = vpack.c.b16 %v1887, %v1886
      %v1905 = vpack.c.b16 %v1889, %v1888
      %v1938 = vunpack.c.l.b16 %v1810
      %v1939 = vunpack.c.l.b16 %v1811
      %v1940 = vunpack.c.l.b16 %v1812
      %v1941 = vunpack.c.l.b16 %v1813
      %v1942 = vunpack.c.l.b16 %v1814
      %v1943 = vunpack.c.l.b16 %v1815
      %v1944 = vunpack.c.l.b16 %v1816
      %v1945 = vunpack.c.l.b16 %v1817
      %v1946 = vunpack.c.l.b16 %v1818
      %v1947 = vunpack.c.l.b16 %v1819
      %v1948 = vunpack.c.l.b16 %v1820
      %v1949 = vunpack.c.l.b16 %v1821
      %v1950 = vunpack.c.l.b16 %v1822
      %v1951 = vunpack.c.l.b16 %v1823
      %v1952 = vunpack.c.l.b16 %v1824
      %v1953 = vunpack.c.l.b16 %v1825
      %v1954 = vpack.c.b16 %v1939, %v1938
      %v1955 = vpack.c.b16 %v1941, %v1940
      %v1956 = vpack.c.b16 %v1943, %v1942
      %v1957 = vpack.c.b16 %v1945, %v1944
      %v1958 = vpack.c.b16 %v1947, %v1946
      %v1959 = vpack.c.b16 %v1949, %v1948
      %v1960 = vpack.c.b16 %v1951, %v1950
      %v1961 = vpack.c.b16 %v1953, %v1952
      %1970 = vmatprep.subr.bf16.mxu0 0
      %1971 = vmatpush1.bf16.msra.mxu0 %v1954
      %1972 = vmatprep.subr.bf16.mxu0 0
      %1973 = vmatpush1.bf16.msra.mxu0 %v1955
      %1974 = vmatprep.subr.bf16.mxu0 0
      %1975 = vmatpush1.bf16.msra.mxu0 %v1956
      %1976 = vmatprep.subr.bf16.mxu0 0
      %1977 = vmatpush1.bf16.msra.mxu0 %v1957
      %1978 = vmatprep.subr.bf16.mxu0 0
      %1979 = vmatpush1.bf16.msra.mxu0 %v1958
      %1980 = vmatprep.subr.bf16.mxu0 0
      %1981 = vmatpush1.bf16.msra.mxu0 %v1959
      %1982 = vmatprep.subr.bf16.mxu0 0
      %1983 = vmatpush1.bf16.msra.mxu0 %v1960
      %1984 = vmatprep.subr.bf16.mxu0 0
      %1985 = vmatpush1.bf16.msra.mxu0 %v1961
      %1986 = vmatprep.subr.bf16.mxu0 0
      %1987 = vmatpush1.bf16.msra.mxu0 0
      %1988 = vmatprep.subr.bf16.mxu0 0
      %1989 = vmatpush1.bf16.msra.mxu0 0
      %1990 = vmatprep.subr.bf16.mxu0 0
      %1991 = vmatpush1.bf16.msra.mxu0 0
      %1992 = vmatprep.subr.bf16.mxu0 0
      %1993 = vmatpush1.bf16.msra.mxu0 0
      %1994 = vmatprep.subr.bf16.mxu0 0
      %1995 = vmatpush1.bf16.msra.mxu0 0
      %1996 = vmatprep.subr.bf16.mxu0 0
      %1997 = vmatpush1.bf16.msra.mxu0 0
      %1998 = vmatprep.subr.bf16.mxu0 0
      %1999 = vmatpush1.bf16.msra.mxu0 0
      %2000 = vmatprep.subr.bf16.mxu0 0
      %2001 = vmatpush1.bf16.msra.mxu0 0
      %2002 = vmatprep.mubr.bf16.mxu0 0
      %2003 = vmatmul.mubr.bf16.gmra.mrb[0].mxu0 %v1890
      %v2004 = vpop.f32.mrb[0].mxu0
      %v2005 = vadd.f32 0.0, %v2004
      %v2006 = vpop.f32.mrb[0].mxu0
      %v2007 = vpop.f32.mrb[0].mxu0
      %v2008 = vadd.f32 0.0, %v2007
      %v2009 = vpop.f32.mrb[0].mxu0
      %2010 = vmatprep.mubr.bf16.mxu0 0
      %2011 = vmatmul.mubr.bf16.gmra.mrb[0].mxu0 %v1891
      %v2012 = vpop.f32.mrb[0].mxu0
      %v2013 = vadd.f32 0.0, %v2012
      %v2014 = vpop.f32.mrb[0].mxu0
      %v2015 = vpop.f32.mrb[0].mxu0
      %v2016 = vadd.f32 0.0, %v2015
      %v2017 = vpop.f32.mrb[0].mxu0
      %2018 = vmatprep.mubr.bf16.mxu0 0
      %2019 = vmatmul.mubr.bf16.gmra.mrb[0].mxu0 %v1892
      %v2020 = vpop.f32.mrb[0].mxu0
      %v2021 = vadd.f32 0.0, %v2020
      %v2022 = vpop.f32.mrb[0].mxu0
      %v2023 = vpop.f32.mrb[0].mxu0
      %v2024 = vadd.f32 0.0, %v2023
      %v2025 = vpop.f32.mrb[0].mxu0
      %2026 = vmatprep.mubr.bf16.mxu0 0
      %2027 = vmatmul.mubr.bf16.gmra.mrb[0].mxu0 %v1893
      %v2028 = vpop.f32.mrb[0].mxu0
      %v2029 = vadd.f32 0.0, %v2028
      %v2030 = vpop.f32.mrb[0].mxu0
      %v2031 = vpop.f32.mrb[0].mxu0
      %v2032 = vadd.f32 0.0, %v2031
      %v2033 = vpop.f32.mrb[0].mxu0
      %2034 = vmatprep.mubr.bf16.mxu0 0
      %2035 = vmatmul.mubr.bf16.gmra.mrb[0].mxu0 %v1894
      %v2036 = vpop.f32.mrb[0].mxu0
      %v2037 = vadd.f32 0.0, %v2036
      %v2038 = vpop.f32.mrb[0].mxu0
      %v2039 = vpop.f32.mrb[0].mxu0
      %v2040 = vadd.f32 0.0, %v2039
      %v2041 = vpop.f32.mrb[0].mxu0
      %2042 = vmatprep.mubr.bf16.mxu0 0
      %2043 = vmatmul.mubr.bf16.gmra.mrb[0].mxu0 %v1895
      %v2044 = vpop.f32.mrb[0].mxu0
      %v2045 = vadd.f32 0.0, %v2044
      %v2046 = vpop.f32.mrb[0].mxu0
      %v2047 = vpop.f32.mrb[0].mxu0
      %v2048 = vadd.f32 0.0, %v2047
      %v2049 = vpop.f32.mrb[0].mxu0
      %2050 = vmatprep.mubr.bf16.mxu0 0
      %2051 = vmatmul.mubr.bf16.gmra.mrb[0].mxu0 %v1896
      %v2052 = vpop.f32.mrb[0].mxu0
      %v2053 = vadd.f32 0.0, %v2052
      %v2054 = vpop.f32.mrb[0].mxu0
      %v2055 = vpop.f32.mrb[0].mxu0
      %v2056 = vadd.f32 0.0, %v2055
      %v2057 = vpop.f32.mrb[0].mxu0
      %2058 = vmatprep.mubr.bf16.mxu0 0
      %2059 = vmatmul.mubr.bf16.gmra.mrb[0].mxu0 %v1897
      %v2060 = vpop.f32.mrb[0].mxu0
      %v2061 = vadd.f32 0.0, %v2060
      %v2062 = vpop.f32.mrb[0].mxu0
      %v2063 = vpop.f32.mrb[0].mxu0
      %v2064 = vadd.f32 0.0, %v2063
      %v2065 = vpop.f32.mrb[0].mxu0
      %2066 = vmatprep.mubr.bf16.mxu0 0
      %2067 = vmatmul.mubr.bf16.gmra.mrb[0].mxu0 %v1898
      %v2068 = vpop.f32.mrb[0].mxu0
      %v2069 = vadd.f32 0.0, %v2068
      %v2070 = vpop.f32.mrb[0].mxu0
      %v2071 = vpop.f32.mrb[0].mxu0
      %v2072 = vadd.f32 0.0, %v2071
      %v2073 = vpop.f32.mrb[0].mxu0
      %2074 = vmatprep.mubr.bf16.mxu0 0
      %2075 = vmatmul.mubr.bf16.gmra.mrb[0].mxu0 %v1899
      %v2076 = vpop.f32.mrb[0].mxu0
      %v2077 = vadd.f32 0.0, %v2076
      %v2078 = vpop.f32.mrb[0].mxu0
      %v2079 = vpop.f32.mrb[0].mxu0
      %v2080 = vadd.f32 0.0, %v2079
      %v2081 = vpop.f32.mrb[0].mxu0
      %2082 = vmatprep.mubr.bf16.mxu0 0
      %2083 = vmatmul.mubr.bf16.gmra.mrb[0].mxu0 %v1900
      %v2084 = vpop.f32.mrb[0].mxu0
      %v2085 = vadd.f32 0.0, %v2084
      %v2086 = vpop.f32.mrb[0].mxu0
      %v2087 = vpop.f32.mrb[0].mxu0
      %v2088 = vadd.f32 0.0, %v2087
      %v2089 = vpop.f32.mrb[0].mxu0
      %2090 = vmatprep.mubr.bf16.mxu0 0
      %2091 = vmatmul.mubr.bf16.gmra.mrb[0].mxu0 %v1901
      %v2092 = vpop.f32.mrb[0].mxu0
      %v2093 = vadd.f32 0.0, %v2092
      %v2094 = vpop.f32.mrb[0].mxu0
      %v2095 = vpop.f32.mrb[0].mxu0
      %v2096 = vadd.f32 0.0, %v2095
      %v2097 = vpop.f32.mrb[0].mxu0
      %2098 = vmatprep.mubr.bf16.mxu0 0
      %2099 = vmatmul.mubr.bf16.gmra.mrb[0].mxu0 %v1902
      %v2100 = vpop.f32.mrb[0].mxu0
      %v2101 = vadd.f32 0.0, %v2100
      %v2102 = vpop.f32.mrb[0].mxu0
      %v2103 = vpop.f32.mrb[0].mxu0
      %v2104 = vadd.f32 0.0, %v2103
      %v2105 = vpop.f32.mrb[0].mxu0
      %2106 = vmatprep.mubr.bf16.mxu0 0
      %2107 = vmatmul.mubr.bf16.gmra.mrb[0].mxu0 %v1903
      %v2108 = vpop.f32.mrb[0].mxu0
      %v2109 = vadd.f32 0.0, %v2108
      %v2110 = vpop.f32.mrb[0].mxu0
      %v2111 = vpop.f32.mrb[0].mxu0
      %v2112 = vadd.f32 0.0, %v2111
      %v2113 = vpop.f32.mrb[0].mxu0
      %2114 = vmatprep.mubr.bf16.mxu0 0
      %2115 = vmatmul.mubr.bf16.gmra.mrb[0].mxu0 %v1904
      %v2116 = vpop.f32.mrb[0].mxu0
      %v2117 = vadd.f32 0.0, %v2116
      %v2118 = vpop.f32.mrb[0].mxu0
      %v2119 = vpop.f32.mrb[0].mxu0
      %v2120 = vadd.f32 0.0, %v2119
      %v2121 = vpop.f32.mrb[0].mxu0
      %2122 = vmatprep.mubr.bf16.mxu0 0
      %2123 = vmatmul.mubr.bf16.gmra.mrb[0].mxu0 %v1905
      %v2124 = vpop.f32.mrb[0].mxu0
      %v2125 = vadd.f32 0.0, %v2124
      %v2126 = vpop.f32.mrb[0].mxu0
      %v2127 = vpop.f32.mrb[0].mxu0
      %v2128 = vadd.f32 0.0, %v2127
      %v2129 = vpop.f32.mrb[0].mxu0
      %2130 = vdwg.mxu0
      %v2131 = vadd.f32 %v1745, %v2005
      %v2132 = vadd.f32 %v1746, %v2008
      %v2133 = vadd.f32 %v1747, %v2013
      %v2134 = vadd.f32 %v1748, %v2016
      %v2135 = vadd.f32 %v1749, %v2021
      %v2136 = vadd.f32 %v1750, %v2024
      %v2137 = vadd.f32 %v1751, %v2029
      %v2138 = vadd.f32 %v1752, %v2032
      %v2139 = vadd.f32 %v1753, %v2037
      %v2140 = vadd.f32 %v1754, %v2040
      %v2141 = vadd.f32 %v1755, %v2045
      %v2142 = vadd.f32 %v1756, %v2048
      %v2143 = vadd.f32 %v1757, %v2053
      %v2144 = vadd.f32 %v1758, %v2056
      %v2145 = vadd.f32 %v1759, %v2061
      %v2146 = vadd.f32 %v1760, %v2064
      %v2147 = vadd.f32 %v1761, %v2069
      %v2148 = vadd.f32 %v1762, %v2072
      %v2149 = vadd.f32 %v1763, %v2077
      %v2150 = vadd.f32 %v1764, %v2080
      %v2151 = vadd.f32 %v1765, %v2085
      %v2152 = vadd.f32 %v1766, %v2088
      %v2153 = vadd.f32 %v1767, %v2093
      %v2154 = vadd.f32 %v1768, %v2096
      %v2155 = vadd.f32 %v1769, %v2101
      %v2156 = vadd.f32 %v1770, %v2104
      %v2157 = vadd.f32 %v1771, %v2109
      %v2158 = vadd.f32 %v1772, %v2112
      %v2159 = vadd.f32 %v1773, %v2117
      %v2160 = vadd.f32 %v1774, %v2120
      %v2161 = vadd.f32 %v1775, %v2125
      %v2162 = vadd.f32 %v1776, %v2128
      %v2163 = vld [vmem:[%s306] sm:$0xf]
      %v2164 = vld [vmem:[%s306 + $0x4] sm:$0xf]
      %v2165 = vld [vmem:[%s306 + $0xc] sm:$0xf]
      %v2166 = vld [vmem:[%s306 + $0x10] sm:$0xf]
      %v2167 = vld [vmem:[%s306 + $0x18] sm:$0xf]
      %v2168 = vld [vmem:[%s306 + $0x1c] sm:$0xf]
      %v2169 = vld [vmem:[%s306 + $0x24] sm:$0xf]
      %v2170 = vld [vmem:[%s306 + $0x28] sm:$0xf]
      %v2171 = vld [vmem:[%s306 + $0x30] sm:$0xf]
      %v2172 = vld [vmem:[%s306 + $0x34] sm:$0xf]
      %v2173 = vld [vmem:[%s306 + $0x3c] sm:$0xf]
      %v2174 = vld [vmem:[%s306 + $0x40] sm:$0xf]
      %v2175 = vld [vmem:[%s306 + $0x48] sm:$0xf]
      %v2176 = vld [vmem:[%s306 + $0x4c] sm:$0xf]
      %v2177 = vld [vmem:[%s306 + $0x54] sm:$0xf]
      %v2178 = vld [vmem:[%s306 + $0x58] sm:$0xf]
      %v2179 = vld [vmem:[%s306 + $0x60] sm:$0xf]
      %v2180 = vld [vmem:[%s306 + $0x64] sm:$0xf]
      %v2181 = vld [vmem:[%s306 + $0x6c] sm:$0xf]
      %v2182 = vld [vmem:[%s306 + $0x70] sm:$0xf]
      %v2183 = vld [vmem:[%s306 + $0x78] sm:$0xf]
      %v2184 = vld [vmem:[%s306 + $0x7c] sm:$0xf]
      %v2185 = vld [vmem:[%s306 + $0x84] sm:$0xf]
      %v2186 = vld [vmem:[%s306 + $0x88] sm:$0xf]
      %v2187 = vld [vmem:[%s306 + $0x90] sm:$0xf]
      %v2188 = vld [vmem:[%s306 + $0x94] sm:$0xf]
      %v2189 = vld [vmem:[%s306 + $0x9c] sm:$0xf]
      %v2190 = vld [vmem:[%s306 + $0xa0] sm:$0xf]
      %v2191 = vld [vmem:[%s306 + $0xa8] sm:$0xf]
      %v2192 = vld [vmem:[%s306 + $0xac] sm:$0xf]
      %v2193 = vld [vmem:[%s306 + $0xb4] sm:$0xf]
      %v2194 = vld [vmem:[%s306 + $0xb8] sm:$0xf]
      %s2195 = scalar_lea.vmem %s4, 256
      %v2196 = vld [vmem:[%s2195] sm:$0xf]
      %v2197 = vld [vmem:[%s2195 + $0x4] sm:$0xf]
      %v2198 = vld [vmem:[%s2195 + $0x8] sm:$0xf]
      %v2199 = vld [vmem:[%s2195 + $0xc] sm:$0xf]
      %v2200 = vld [vmem:[%s2195 + $0x10] sm:$0xf]
      %v2201 = vld [vmem:[%s2195 + $0x14] sm:$0xf]
      %v2202 = vld [vmem:[%s2195 + $0x18] sm:$0xf]
      %v2203 = vld [vmem:[%s2195 + $0x1c] sm:$0xf]
      %v2204 = vld [vmem:[%s2195 + $0x20] sm:$0xf]
      %v2205 = vld [vmem:[%s2195 + $0x24] sm:$0xf]
      %v2206 = vld [vmem:[%s2195 + $0x28] sm:$0xf]
      %v2207 = vld [vmem:[%s2195 + $0x2c] sm:$0xf]
      %v2208 = vld [vmem:[%s2195 + $0x30] sm:$0xf]
      %v2209 = vld [vmem:[%s2195 + $0x34] sm:$0xf]
      %v2210 = vld [vmem:[%s2195 + $0x38] sm:$0xf]
      %v2211 = vld [vmem:[%s2195 + $0x3c] sm:$0xf]
      %v2244 = vunpack.c.l.b16 %v2163
      %v2245 = vunpack.c.l.b16 %v2164
      %v2246 = vunpack.c.l.b16 %v2165
      %v2247 = vunpack.c.l.b16 %v2166
      %v2248 = vunpack.c.l.b16 %v2167
      %v2249 = vunpack.c.l.b16 %v2168
      %v2250 = vunpack.c.l.b16 %v2169
      %v2251 = vunpack.c.l.b16 %v2170
      %v2252 = vunpack.c.l.b16 %v2171
      %v2253 = vunpack.c.l.b16 %v2172
      %v2254 = vunpack.c.l.b16 %v2173
      %v2255 = vunpack.c.l.b16 %v2174
      %v2256 = vunpack.c.l.b16 %v2175
      %v2257 = vunpack.c.l.b16 %v2176
      %v2258 = vunpack.c.l.b16 %v2177
      %v2259 = vunpack.c.l.b16 %v2178
      %v2260 = vunpack.c.l.b16 %v2179
      %v2261 = vunpack.c.l.b16 %v2180
      %v2262 = vunpack.c.l.b16 %v2181
      %v2263 = vunpack.c.l.b16 %v2182
      %v2264 = vunpack.c.l.b16 %v2183
      %v2265 = vunpack.c.l.b16 %v2184
      %v2266 = vunpack.c.l.b16 %v2185
      %v2267 = vunpack.c.l.b16 %v2186
      %v2268 = vunpack.c.l.b16 %v2187
      %v2269 = vunpack.c.l.b16 %v2188
      %v2270 = vunpack.c.l.b16 %v2189
      %v2271 = vunpack.c.l.b16 %v2190
      %v2272 = vunpack.c.l.b16 %v2191
      %v2273 = vunpack.c.l.b16 %v2192
      %v2274 = vunpack.c.l.b16 %v2193
      %v2275 = vunpack.c.l.b16 %v2194
      %v2276 = vpack.c.b16 %v2245, %v2244
      %v2277 = vpack.c.b16 %v2247, %v2246
      %v2278 = vpack.c.b16 %v2249, %v2248
      %v2279 = vpack.c.b16 %v2251, %v2250
      %v2280 = vpack.c.b16 %v2253, %v2252
      %v2281 = vpack.c.b16 %v2255, %v2254
      %v2282 = vpack.c.b16 %v2257, %v2256
      %v2283 = vpack.c.b16 %v2259, %v2258
      %v2284 = vpack.c.b16 %v2261, %v2260
      %v2285 = vpack.c.b16 %v2263, %v2262
      %v2286 = vpack.c.b16 %v2265, %v2264
      %v2287 = vpack.c.b16 %v2267, %v2266
      %v2288 = vpack.c.b16 %v2269, %v2268
      %v2289 = vpack.c.b16 %v2271, %v2270
      %v2290 = vpack.c.b16 %v2273, %v2272
      %v2291 = vpack.c.b16 %v2275, %v2274
      %v2324 = vunpack.c.l.b16 %v2196
      %v2325 = vunpack.c.l.b16 %v2197
      %v2326 = vunpack.c.l.b16 %v2198
      %v2327 = vunpack.c.l.b16 %v2199
      %v2328 = vunpack.c.l.b16 %v2200
      %v2329 = vunpack.c.l.b16 %v2201
      %v2330 = vunpack.c.l.b16 %v2202
      %v2331 = vunpack.c.l.b16 %v2203
      %v2332 = vunpack.c.l.b16 %v2204
      %v2333 = vunpack.c.l.b16 %v2205
      %v2334 = vunpack.c.l.b16 %v2206
      %v2335 = vunpack.c.l.b16 %v2207
      %v2336 = vunpack.c.l.b16 %v2208
      %v2337 = vunpack.c.l.b16 %v2209
      %v2338 = vunpack.c.l.b16 %v2210
      %v2339 = vunpack.c.l.b16 %v2211
      %v2340 = vpack.c.b16 %v2325, %v2324
      %v2341 = vpack.c.b16 %v2327, %v2326
      %v2342 = vpack.c.b16 %v2329, %v2328
      %v2343 = vpack.c.b16 %v2331, %v2330
      %v2344 = vpack.c.b16 %v2333, %v2332
      %v2345 = vpack.c.b16 %v2335, %v2334
      %v2346 = vpack.c.b16 %v2337, %v2336
      %v2347 = vpack.c.b16 %v2339, %v2338
      %2356 = vmatprep.subr.bf16.mxu0 0
      %2357 = vmatpush1.bf16.msra.mxu0 %v2340
      %2358 = vmatprep.subr.bf16.mxu0 0
      %2359 = vmatpush1.bf16.msra.mxu0 %v2341
      %2360 = vmatprep.subr.bf16.mxu0 0
      %2361 = vmatpush1.bf16.msra.mxu0 %v2342
      %2362 = vmatprep.subr.bf16.mxu0 0
      %2363 = vmatpush1.bf16.msra.mxu0 %v2343
      %2364 = vmatprep.subr.bf16.mxu0 0
      %2365 = vmatpush1.bf16.msra.mxu0 %v2344
      %2366 = vmatprep.subr.bf16.mxu0 0
      %2367 = vmatpush1.bf16.msra.mxu0 %v2345
      %2368 = vmatprep.subr.bf16.mxu0 0
      %2369 = vmatpush1.bf16.msra.mxu0 %v2346
      %2370 = vmatprep.subr.bf16.mxu0 0
      %2371 = vmatpush1.bf16.msra.mxu0 %v2347
      %2372 = vmatprep.subr.bf16.mxu0 0
      %2373 = vmatpush1.bf16.msra.mxu0 0
      %2374 = vmatprep.subr.bf16.mxu0 0
      %2375 = vmatpush1.bf16.msra.mxu0 0
      %2376 = vmatprep.subr.bf16.mxu0 0
      %2377 = vmatpush1.bf16.msra.mxu0 0
      %2378 = vmatprep.subr.bf16.mxu0 0
      %2379 = vmatpush1.bf16.msra.mxu0 0
      %2380 = vmatprep.subr.bf16.mxu0 0
      %2381 = vmatpush1.bf16.msra.mxu0 0
      %2382 = vmatprep.subr.bf16.mxu0 0
      %2383 = vmatpush1.bf16.msra.mxu0 0
      %2384 = vmatprep.subr.bf16.mxu0 0
      %2385 = vmatpush1.bf16.msra.mxu0 0
      %2386 = vmatprep.subr.bf16.mxu0 0
      %2387 = vmatpush1.bf16.msra.mxu0 0
      %2388 = vmatprep.mubr.bf16.mxu0 0
      %2389 = vmatmul.mubr.bf16.gmra.mrb[0].mxu0 %v2276
      %v2390 = vpop.f32.mrb[0].mxu0
      %v2391 = vadd.f32 0.0, %v2390
      %v2392 = vpop.f32.mrb[0].mxu0
      %v2393 = vpop.f32.mrb[0].mxu0
      %v2394 = vadd.f32 0.0, %v2393
      %v2395 = vpop.f32.mrb[0].mxu0
      %2396 = vmatprep.mubr.bf16.mxu0 0
      %2397 = vmatmul.mubr.bf16.gmra.mrb[0].mxu0 %v2277
      %v2398 = vpop.f32.mrb[0].mxu0
      %v2399 = vadd.f32 0.0, %v2398
      %v2400 = vpop.f32.mrb[0].mxu0
      %v2401 = vpop.f32.mrb[0].mxu0
      %v2402 = vadd.f32 0.0, %v2401
      %v2403 = vpop.f32.mrb[0].mxu0
      %2404 = vmatprep.mubr.bf16.mxu0 0
      %2405 = vmatmul.mubr.bf16.gmra.mrb[0].mxu0 %v2278
      %v2406 = vpop.f32.mrb[0].mxu0
      %v2407 = vadd.f32 0.0, %v2406
      %v2408 = vpop.f32.mrb[0].mxu0
      %v2409 = vpop.f32.mrb[0].mxu0
      %v2410 = vadd.f32 0.0, %v2409
      %v2411 = vpop.f32.mrb[0].mxu0
      %2412 = vmatprep.mubr.bf16.mxu0 0
      %2413 = vmatmul.mubr.bf16.gmra.mrb[0].mxu0 %v2279
      %v2414 = vpop.f32.mrb[0].mxu0
      %v2415 = vadd.f32 0.0, %v2414
      %v2416 = vpop.f32.mrb[0].mxu0
      %v2417 = vpop.f32.mrb[0].mxu0
      %v2418 = vadd.f32 0.0, %v2417
      %v2419 = vpop.f32.mrb[0].mxu0
      %2420 = vmatprep.mubr.bf16.mxu0 0
      %2421 = vmatmul.mubr.bf16.gmra.mrb[0].mxu0 %v2280
      %v2422 = vpop.f32.mrb[0].mxu0
      %v2423 = vadd.f32 0.0, %v2422
      %v2424 = vpop.f32.mrb[0].mxu0
      %v2425 = vpop.f32.mrb[0].mxu0
      %v2426 = vadd.f32 0.0, %v2425
      %v2427 = vpop.f32.mrb[0].mxu0
      %2428 = vmatprep.mubr.bf16.mxu0 0
      %2429 = vmatmul.mubr.bf16.gmra.mrb[0].mxu0 %v2281
      %v2430 = vpop.f32.mrb[0].mxu0
      %v2431 = vadd.f32 0.0, %v2430
      %v2432 = vpop.f32.mrb[0].mxu0
      %v2433 = vpop.f32.mrb[0].mxu0
      %v2434 = vadd.f32 0.0, %v2433
      %v2435 = vpop.f32.mrb[0].mxu0
      %2436 = vmatprep.mubr.bf16.mxu0 0
      %2437 = vmatmul.mubr.bf16.gmra.mrb[0].mxu0 %v2282
      %v2438 = vpop.f32.mrb[0].mxu0
      %v2439 = vadd.f32 0.0, %v2438
      %v2440 = vpop.f32.mrb[0].mxu0
      %v2441 = vpop.f32.mrb[0].mxu0
      %v2442 = vadd.f32 0.0, %v2441
      %v2443 = vpop.f32.mrb[0].mxu0
      %2444 = vmatprep.mubr.bf16.mxu0 0
      %2445 = vmatmul.mubr.bf16.gmra.mrb[0].mxu0 %v2283
      %v2446 = vpop.f32.mrb[0].mxu0
      %v2447 = vadd.f32 0.0, %v2446
      %v2448 = vpop.f32.mrb[0].mxu0
      %v2449 = vpop.f32.mrb[0].mxu0
      %v2450 = vadd.f32 0.0, %v2449
      %v2451 = vpop.f32.mrb[0].mxu0
      %2452 = vmatprep.mubr.bf16.mxu0 0
      %2453 = vmatmul.mubr.bf16.gmra.mrb[0].mxu0 %v2284
      %v2454 = vpop.f32.mrb[0].mxu0
      %v2455 = vadd.f32 0.0, %v2454
      %v2456 = vpop.f32.mrb[0].mxu0
      %v2457 = vpop.f32.mrb[0].mxu0
      %v2458 = vadd.f32 0.0, %v2457
      %v2459 = vpop.f32.mrb[0].mxu0
      %2460 = vmatprep.mubr.bf16.mxu0 0
      %2461 = vmatmul.mubr.bf16.gmra.mrb[0].mxu0 %v2285
      %v2462 = vpop.f32.mrb[0].mxu0
      %v2463 = vadd.f32 0.0, %v2462
      %v2464 = vpop.f32.mrb[0].mxu0
      %v2465 = vpop.f32.mrb[0].mxu0
      %v2466 = vadd.f32 0.0, %v2465
      %v2467 = vpop.f32.mrb[0].mxu0
      %2468 = vmatprep.mubr.bf16.mxu0 0
      %2469 = vmatmul.mubr.bf16.gmra.mrb[0].mxu0 %v2286
      %v2470 = vpop.f32.mrb[0].mxu0
      %v2471 = vadd.f32 0.0, %v2470
      %v2472 = vpop.f32.mrb[0].mxu0
      %v2473 = vpop.f32.mrb[0].mxu0
      %v2474 = vadd.f32 0.0, %v2473
      %v2475 = vpop.f32.mrb[0].mxu0
      %2476 = vmatprep.mubr.bf16.mxu0 0
      %2477 = vmatmul.mubr.bf16.gmra.mrb[0].mxu0 %v2287
      %v2478 = vpop.f32.mrb[0].mxu0
      %v2479 = vadd.f32 0.0, %v2478
      %v2480 = vpop.f32.mrb[0].mxu0
      %v2481 = vpop.f32.mrb[0].mxu0
      %v2482 = vadd.f32 0.0, %v2481
      %v2483 = vpop.f32.mrb[0].mxu0
      %2484 = vmatprep.mubr.bf16.mxu0 0
      %2485 = vmatmul.mubr.bf16.gmra.mrb[0].mxu0 %v2288
      %v2486 = vpop.f32.mrb[0].mxu0
      %v2487 = vadd.f32 0.0, %v2486
      %v2488 = vpop.f32.mrb[0].mxu0
      %v2489 = vpop.f32.mrb[0].mxu0
      %v2490 = vadd.f32 0.0, %v2489
      %v2491 = vpop.f32.mrb[0].mxu0
      %2492 = vmatprep.mubr.bf16.mxu0 0
      %2493 = vmatmul.mubr.bf16.gmra.mrb[0].mxu0 %v2289
      %v2494 = vpop.f32.mrb[0].mxu0
      %v2495 = vadd.f32 0.0, %v2494
      %v2496 = vpop.f32.mrb[0].mxu0
      %v2497 = vpop.f32.mrb[0].mxu0
      %v2498 = vadd.f32 0.0, %v2497
      %v2499 = vpop.f32.mrb[0].mxu0
      %2500 = vmatprep.mubr.bf16.mxu0 0
      %2501 = vmatmul.mubr.bf16.gmra.mrb[0].mxu0 %v2290
      %v2502 = vpop.f32.mrb[0].mxu0
      %v2503 = vadd.f32 0.0, %v2502
      %v2504 = vpop.f32.mrb[0].mxu0
      %v2505 = vpop.f32.mrb[0].mxu0
      %v2506 = vadd.f32 0.0, %v2505
      %v2507 = vpop.f32.mrb[0].mxu0
      %2508 = vmatprep.mubr.bf16.mxu0 0
      %2509 = vmatmul.mubr.bf16.gmra.mrb[0].mxu0 %v2291
      %v2510 = vpop.f32.mrb[0].mxu0
      %v2511 = vadd.f32 0.0, %v2510
      %v2512 = vpop.f32.mrb[0].mxu0
      %v2513 = vpop.f32.mrb[0].mxu0
      %v2514 = vadd.f32 0.0, %v2513
      %v2515 = vpop.f32.mrb[0].mxu0
      %2516 = vdwg.mxu0
      %v2517 = vadd.f32 %v2131, %v2391
      %v2518 = vadd.f32 %v2132, %v2394
      %v2519 = vadd.f32 %v2133, %v2399
      %v2520 = vadd.f32 %v2134, %v2402
      %v2521 = vadd.f32 %v2135, %v2407
      %v2522 = vadd.f32 %v2136, %v2410
      %v2523 = vadd.f32 %v2137, %v2415
      %v2524 = vadd.f32 %v2138, %v2418
      %v2525 = vadd.f32 %v2139, %v2423
      %v2526 = vadd.f32 %v2140, %v2426
      %v2527 = vadd.f32 %v2141, %v2431
      %v2528 = vadd.f32 %v2142, %v2434
      %v2529 = vadd.f32 %v2143, %v2439
      %v2530 = vadd.f32 %v2144, %v2442
      %v2531 = vadd.f32 %v2145, %v2447
      %v2532 = vadd.f32 %v2146, %v2450
      %v2533 = vadd.f32 %v2147, %v2455
      %v2534 = vadd.f32 %v2148, %v2458
      %v2535 = vadd.f32 %v2149, %v2463
      %v2536 = vadd.f32 %v2150, %v2466
      %v2537 = vadd.f32 %v2151, %v2471
      %v2538 = vadd.f32 %v2152, %v2474
      %v2539 = vadd.f32 %v2153, %v2479
      %v2540 = vadd.f32 %v2154, %v2482
      %v2541 = vadd.f32 %v2155, %v2487
      %v2542 = vadd.f32 %v2156, %v2490
      %v2543 = vadd.f32 %v2157, %v2495
      %v2544 = vadd.f32 %v2158, %v2498
      %v2545 = vadd.f32 %v2159, %v2503
      %v2546 = vadd.f32 %v2160, %v2506
      %v2547 = vadd.f32 %v2161, %v2511
      %v2548 = vadd.f32 %v2162, %v2514
      %v2549 = vld [vmem:[%s301] sm:$0xf]
      %v2550 = vld [vmem:[%s301 + $0x4] sm:$0xf]
      %v2551 = vld [vmem:[%s301 + $0x8] sm:$0x1]
      %v2552 = vld [vmem:[%s301 + $0xc] sm:$0xf]
      %v2553 = vld [vmem:[%s301 + $0x10] sm:$0xf]
      %v2554 = vld [vmem:[%s301 + $0x14] sm:$0x1]
      %v2555 = vld [vmem:[%s301 + $0x18] sm:$0xf]
      %v2556 = vld [vmem:[%s301 + $0x1c] sm:$0xf]
      %v2557 = vld [vmem:[%s301 + $0x20] sm:$0x1]
      %v2558 = vld [vmem:[%s301 + $0x24] sm:$0xf]
      %v2559 = vld [vmem:[%s301 + $0x28] sm:$0xf]
      %v2560 = vld [vmem:[%s301 + $0x2c] sm:$0x1]
      %v2561 = vld [vmem:[%s301 + $0x30] sm:$0xf]
      %v2562 = vld [vmem:[%s301 + $0x34] sm:$0xf]
      %v2563 = vld [vmem:[%s301 + $0x38] sm:$0x1]
      %v2564 = vld [vmem:[%s301 + $0x3c] sm:$0xf]
      %v2565 = vld [vmem:[%s301 + $0x40] sm:$0xf]
      %v2566 = vld [vmem:[%s301 + $0x44] sm:$0x1]
      %v2567 = vld [vmem:[%s301 + $0x48] sm:$0xf]
      %v2568 = vld [vmem:[%s301 + $0x4c] sm:$0xf]
      %v2569 = vld [vmem:[%s301 + $0x50] sm:$0x1]
      %v2570 = vld [vmem:[%s301 + $0x54] sm:$0xf]
      %v2571 = vld [vmem:[%s301 + $0x58] sm:$0xf]
      %v2572 = vld [vmem:[%s301 + $0x5c] sm:$0x1]
      %v2573 = vld [vmem:[%s301 + $0x60] sm:$0xf]
      %v2574 = vld [vmem:[%s301 + $0x64] sm:$0xf]
      %v2575 = vld [vmem:[%s301 + $0x68] sm:$0x1]
      %v2576 = vld [vmem:[%s301 + $0x6c] sm:$0xf]
      %v2577 = vld [vmem:[%s301 + $0x70] sm:$0xf]
      %v2578 = vld [vmem:[%s301 + $0x74] sm:$0x1]
      %v2579 = vld [vmem:[%s301 + $0x78] sm:$0xf]
      %v2580 = vld [vmem:[%s301 + $0x7c] sm:$0xf]
      %v2581 = vld [vmem:[%s301 + $0x80] sm:$0x1]
      %v2582 = vld [vmem:[%s301 + $0x84] sm:$0xf]
      %v2583 = vld [vmem:[%s301 + $0x88] sm:$0xf]
      %v2584 = vld [vmem:[%s301 + $0x8c] sm:$0x1]
      %v2585 = vld [vmem:[%s301 + $0x90] sm:$0xf]
      %v2586 = vld [vmem:[%s301 + $0x94] sm:$0xf]
      %v2587 = vld [vmem:[%s301 + $0x98] sm:$0x1]
      %v2588 = vld [vmem:[%s301 + $0x9c] sm:$0xf]
      %v2589 = vld [vmem:[%s301 + $0xa0] sm:$0xf]
      %v2590 = vld [vmem:[%s301 + $0xa4] sm:$0x1]
      %v2591 = vld [vmem:[%s301 + $0xa8] sm:$0xf]
      %v2592 = vld [vmem:[%s301 + $0xac] sm:$0xf]
      %v2593 = vld [vmem:[%s301 + $0xb0] sm:$0x1]
      %v2594 = vld [vmem:[%s301 + $0xb4] sm:$0xf]
      %v2595 = vld [vmem:[%s301 + $0xb8] sm:$0xf]
      %v2596 = vld [vmem:[%s301 + $0xbc] sm:$0x1]
      %v2598 = vshrl.u32 %v2549, 16
      %v2600 = vrot.slane %v2598, 4
      %v2601 = vshll.u32 %v2549, 16
      %v2603 = vrot.slane %v2601, 5
      %v2604 = vor.u32 %v2600, %v2603
      %v2605 = vrot.slane %v2604, 4
      %v2607 = vshll.u32 %v2550, 16
      %v2609 = vrot.slane %v2607, 5
      %v2610 = vsel %vm1070, %v2605, %v2609
      %v2611 = vshrl.u32 %v2550, 16
      %v2613 = vrot.slane %v2611, 4
      %v2614 = vor.u32 %v2613, %v2609
      %v2615 = vrot.slane %v2614, 4
      %v2617 = vshll.u32 %v2551, 16
      %v2619 = vrot.slane %v2617, 5
      %v2620 = vsel %vm1070, %v2615, %v2619
      %v2622 = vshrl.u32 %v2552, 16
      %v2624 = vrot.slane %v2622, 4
      %v2625 = vshll.u32 %v2552, 16
      %v2627 = vrot.slane %v2625, 5
      %v2628 = vor.u32 %v2624, %v2627
      %v2629 = vrot.slane %v2628, 4
      %v2631 = vshll.u32 %v2553, 16
      %v2633 = vrot.slane %v2631, 5
      %v2634 = vsel %vm1070, %v2629, %v2633
      %v2635 = vshrl.u32 %v2553, 16
      %v2637 = vrot.slane %v2635, 4
      %v2638 = vor.u32 %v2637, %v2633
      %v2639 = vrot.slane %v2638, 4
      %v2641 = vshll.u32 %v2554, 16
      %v2643 = vrot.slane %v2641, 5
      %v2644 = vsel %vm1070, %v2639, %v2643
      %v2646 = vshrl.u32 %v2555, 16
      %v2648 = vrot.slane %v2646, 4
      %v2649 = vshll.u32 %v2555, 16
      %v2651 = vrot.slane %v2649, 5
      %v2652 = vor.u32 %v2648, %v2651
      %v2653 = vrot.slane %v2652, 4
      %v2655 = vshll.u32 %v2556, 16
      %v2657 = vrot.slane %v2655, 5
      %v2658 = vsel %vm1070, %v2653, %v2657
      %v2659 = vshrl.u32 %v2556, 16
      %v2661 = vrot.slane %v2659, 4
      %v2662 = vor.u32 %v2661, %v2657
      %v2663 = vrot.slane %v2662, 4
      %v2665 = vshll.u32 %v2557, 16
      %v2667 = vrot.slane %v2665, 5
      %v2668 = vsel %vm1070, %v2663, %v2667
      %v2670 = vshrl.u32 %v2558, 16
      %v2672 = vrot.slane %v2670, 4
      %v2673 = vshll.u32 %v2558, 16
      %v2675 = vrot.slane %v2673, 5
      %v2676 = vor.u32 %v2672, %v2675
      %v2677 = vrot.slane %v2676, 4
      %v2679 = vshll.u32 %v2559, 16
      %v2681 = vrot.slane %v2679, 5
      %v2682 = vsel %vm1070, %v2677, %v2681
      %v2683 = vshrl.u32 %v2559, 16
      %v2685 = vrot.slane %v2683, 4
      %v2686 = vor.u32 %v2685, %v2681
      %v2687 = vrot.slane %v2686, 4
      %v2689 = vshll.u32 %v2560, 16
      %v2691 = vrot.slane %v2689, 5
      %v2692 = vsel %vm1070, %v2687, %v2691
      %v2694 = vshrl.u32 %v2561, 16
      %v2696 = vrot.slane %v2694, 4
      %v2697 = vshll.u32 %v2561, 16
      %v2699 = vrot.slane %v2697, 5
      %v2700 = vor.u32 %v2696, %v2699
      %v2701 = vrot.slane %v2700, 4
      %v2703 = vshll.u32 %v2562, 16
      %v2705 = vrot.slane %v2703, 5
      %v2706 = vsel %vm1070, %v2701, %v2705
      %v2707 = vshrl.u32 %v2562, 16
      %v2709 = vrot.slane %v2707, 4
      %v2710 = vor.u32 %v2709, %v2705
      %v2711 = vrot.slane %v2710, 4
      %v2713 = vshll.u32 %v2563, 16
      %v2715 = vrot.slane %v2713, 5
      %v2716 = vsel %vm1070, %v2711, %v2715
      %v2718 = vshrl.u32 %v2564, 16
      %v2720 = vrot.slane %v2718, 4
      %v2721 = vshll.u32 %v2564, 16
      %v2723 = vrot.slane %v2721, 5
      %v2724 = vor.u32 %v2720, %v2723
      %v2725 = vrot.slane %v2724, 4
      %v2727 = vshll.u32 %v2565, 16
      %v2729 = vrot.slane %v2727, 5
      %v2730 = vsel %vm1070, %v2725, %v2729
      %v2731 = vshrl.u32 %v2565, 16
      %v2733 = vrot.slane %v2731, 4
      %v2734 = vor.u32 %v2733, %v2729
      %v2735 = vrot.slane %v2734, 4
      %v2737 = vshll.u32 %v2566, 16
      %v2739 = vrot.slane %v2737, 5
      %v2740 = vsel %vm1070, %v2735, %v2739
      %v2742 = vshrl.u32 %v2567, 16
      %v2744 = vrot.slane %v2742, 4
      %v2745 = vshll.u32 %v2567, 16
      %v2747 = vrot.slane %v2745, 5
      %v2748 = vor.u32 %v2744, %v2747
      %v2749 = vrot.slane %v2748, 4
      %v2751 = vshll.u32 %v2568, 16
      %v2753 = vrot.slane %v2751, 5
      %v2754 = vsel %vm1070, %v2749, %v2753
      %v2755 = vshrl.u32 %v2568, 16
      %v2757 = vrot.slane %v2755, 4
      %v2758 = vor.u32 %v2757, %v2753
      %v2759 = vrot.slane %v2758, 4
      %v2761 = vshll.u32 %v2569, 16
      %v2763 = vrot.slane %v2761, 5
      %v2764 = vsel %vm1070, %v2759, %v2763
      %v2766 = vshrl.u32 %v2570, 16
      %v2768 = vrot.slane %v2766, 4
      %v2769 = vshll.u32 %v2570, 16
      %v2771 = vrot.slane %v2769, 5
      %v2772 = vor.u32 %v2768, %v2771
      %v2773 = vrot.slane %v2772, 4
      %v2775 = vshll.u32 %v2571, 16
      %v2777 = vrot.slane %v2775, 5
      %v2778 = vsel %vm1070, %v2773, %v2777
      %v2779 = vshrl.u32 %v2571, 16
      %v2781 = vrot.slane %v2779, 4
      %v2782 = vor.u32 %v2781, %v2777
      %v2783 = vrot.slane %v2782, 4
      %v2785 = vshll.u32 %v2572, 16
      %v2787 = vrot.slane %v2785, 5
      %v2788 = vsel %vm1070, %v2783, %v2787
      %v2790 = vshrl.u32 %v2573, 16
      %v2792 = vrot.slane %v2790, 4
      %v2793 = vshll.u32 %v2573, 16
      %v2795 = vrot.slane %v2793, 5
      %v2796 = vor.u32 %v2792, %v2795
      %v2797 = vrot.slane %v2796, 4
      %v2799 = vshll.u32 %v2574, 16
      %v2801 = vrot.slane %v2799, 5
      %v2802 = vsel %vm1070, %v2797, %v2801
      %v2803 = vshrl.u32 %v2574, 16
      %v2805 = vrot.slane %v2803, 4
      %v2806 = vor.u32 %v2805, %v2801
      %v2807 = vrot.slane %v2806, 4
      %v2809 = vshll.u32 %v2575, 16
      %v2811 = vrot.slane %v2809, 5
      %v2812 = vsel %vm1070, %v2807, %v2811
      %v2814 = vshrl.u32 %v2576, 16
      %v2816 = vrot.slane %v2814, 4
      %v2817 = vshll.u32 %v2576, 16
      %v2819 = vrot.slane %v2817, 5
      %v2820 = vor.u32 %v2816, %v2819
      %v2821 = vrot.slane %v2820, 4
      %v2823 = vshll.u32 %v2577, 16
      %v2825 = vrot.slane %v2823, 5
      %v2826 = vsel %vm1070, %v2821, %v2825
      %v2827 = vshrl.u32 %v2577, 16
      %v2829 = vrot.slane %v2827, 4
      %v2830 = vor.u32 %v2829, %v2825
      %v2831 = vrot.slane %v2830, 4
      %v2833 = vshll.u32 %v2578, 16
      %v2835 = vrot.slane %v2833, 5
      %v2836 = vsel %vm1070, %v2831, %v2835
      %v2838 = vshrl.u32 %v2579, 16
      %v2840 = vrot.slane %v2838, 4
      %v2841 = vshll.u32 %v2579, 16
      %v2843 = vrot.slane %v2841, 5
      %v2844 = vor.u32 %v2840, %v2843
      %v2845 = vrot.slane %v2844, 4
      %v2847 = vshll.u32 %v2580, 16
      %v2849 = vrot.slane %v2847, 5
      %v2850 = vsel %vm1070, %v2845, %v2849
      %v2851 = vshrl.u32 %v2580, 16
      %v2853 = vrot.slane %v2851, 4
      %v2854 = vor.u32 %v2853, %v2849
      %v2855 = vrot.slane %v2854, 4
      %v2857 = vshll.u32 %v2581, 16
      %v2859 = vrot.slane %v2857, 5
      %v2860 = vsel %vm1070, %v2855, %v2859
      %v2862 = vshrl.u32 %v2582, 16
      %v2864 = vrot.slane %v2862, 4
      %v2865 = vshll.u32 %v2582, 16
      %v2867 = vrot.slane %v2865, 5
      %v2868 = vor.u32 %v2864, %v2867
      %v2869 = vrot.slane %v2868, 4
      %v2871 = vshll.u32 %v2583, 16
      %v2873 = vrot.slane %v2871, 5
      %v2874 = vsel %vm1070, %v2869, %v2873
      %v2875 = vshrl.u32 %v2583, 16
      %v2877 = vrot.slane %v2875, 4
      %v2878 = vor.u32 %v2877, %v2873
      %v2879 = vrot.slane %v2878, 4
      %v2881 = vshll.u32 %v2584, 16
      %v2883 = vrot.slane %v2881, 5
      %v2884 = vsel %vm1070, %v2879, %v2883
      %v2886 = vshrl.u32 %v2585, 16
      %v2888 = vrot.slane %v2886, 4
      %v2889 = vshll.u32 %v2585, 16
      %v2891 = vrot.slane %v2889, 5
      %v2892 = vor.u32 %v2888, %v2891
      %v2893 = vrot.slane %v2892, 4
      %v2895 = vshll.u32 %v2586, 16
      %v2897 = vrot.slane %v2895, 5
      %v2898 = vsel %vm1070, %v2893, %v2897
      %v2899 = vshrl.u32 %v2586, 16
      %v2901 = vrot.slane %v2899, 4
      %v2902 = vor.u32 %v2901, %v2897
      %v2903 = vrot.slane %v2902, 4
      %v2905 = vshll.u32 %v2587, 16
      %v2907 = vrot.slane %v2905, 5
      %v2908 = vsel %vm1070, %v2903, %v2907
      %v2910 = vshrl.u32 %v2588, 16
      %v2912 = vrot.slane %v2910, 4
      %v2913 = vshll.u32 %v2588, 16
      %v2915 = vrot.slane %v2913, 5
      %v2916 = vor.u32 %v2912, %v2915
      %v2917 = vrot.slane %v2916, 4
      %v2919 = vshll.u32 %v2589, 16
      %v2921 = vrot.slane %v2919, 5
      %v2922 = vsel %vm1070, %v2917, %v2921
      %v2923 = vshrl.u32 %v2589, 16
      %v2925 = vrot.slane %v2923, 4
      %v2926 = vor.u32 %v2925, %v2921
      %v2927 = vrot.slane %v2926, 4
      %v2929 = vshll.u32 %v2590, 16
      %v2931 = vrot.slane %v2929, 5
      %v2932 = vsel %vm1070, %v2927, %v2931
      %v2934 = vshrl.u32 %v2591, 16
      %v2936 = vrot.slane %v2934, 4
      %v2937 = vshll.u32 %v2591, 16
      %v2939 = vrot.slane %v2937, 5
      %v2940 = vor.u32 %v2936, %v2939
      %v2941 = vrot.slane %v2940, 4
      %v2943 = vshll.u32 %v2592, 16
      %v2945 = vrot.slane %v2943, 5
      %v2946 = vsel %vm1070, %v2941, %v2945
      %v2947 = vshrl.u32 %v2592, 16
      %v2949 = vrot.slane %v2947, 4
      %v2950 = vor.u32 %v2949, %v2945
      %v2951 = vrot.slane %v2950, 4
      %v2953 = vshll.u32 %v2593, 16
      %v2955 = vrot.slane %v2953, 5
      %v2956 = vsel %vm1070, %v2951, %v2955
      %v2958 = vshrl.u32 %v2594, 16
      %v2960 = vrot.slane %v2958, 4
      %v2961 = vshll.u32 %v2594, 16
      %v2963 = vrot.slane %v2961, 5
      %v2964 = vor.u32 %v2960, %v2963
      %v2965 = vrot.slane %v2964, 4
      %v2967 = vshll.u32 %v2595, 16
      %v2969 = vrot.slane %v2967, 5
      %v2970 = vsel %vm1070, %v2965, %v2969
      %v2971 = vshrl.u32 %v2595, 16
      %v2973 = vrot.slane %v2971, 4
      %v2974 = vor.u32 %v2973, %v2969
      %v2975 = vrot.slane %v2974, 4
      %v2977 = vshll.u32 %v2596, 16
      %v2979 = vrot.slane %v2977, 5
      %v2980 = vsel %vm1070, %v2975, %v2979
      %s2981 = scalar_lea.vmem %s4, 320
      %v2982 = vld [vmem:[%s2981] sm:$0xf]
      %v2983 = vld [vmem:[%s2981 + $0x4] sm:$0xf]
      %v2984 = vld [vmem:[%s2981 + $0x8] sm:$0xf]
      %v2985 = vld [vmem:[%s2981 + $0xc] sm:$0xf]
      %v2986 = vld [vmem:[%s2981 + $0x10] sm:$0xf]
      %v2987 = vld [vmem:[%s2981 + $0x14] sm:$0xf]
      %v2988 = vld [vmem:[%s2981 + $0x18] sm:$0xf]
      %v2989 = vld [vmem:[%s2981 + $0x1c] sm:$0xf]
      %v2990 = vld [vmem:[%s2981 + $0x20] sm:$0xf]
      %v2991 = vld [vmem:[%s2981 + $0x24] sm:$0xf]
      %v2992 = vld [vmem:[%s2981 + $0x28] sm:$0xf]
      %v2993 = vld [vmem:[%s2981 + $0x2c] sm:$0xf]
      %v2994 = vld [vmem:[%s2981 + $0x30] sm:$0xf]
      %v2995 = vld [vmem:[%s2981 + $0x34] sm:$0xf]
      %v2996 = vld [vmem:[%s2981 + $0x38] sm:$0xf]
      %v2997 = vld [vmem:[%s2981 + $0x3c] sm:$0xf]
      %v2998 = vunpack.c.l.b16 %v2610
      %v2999 = vunpack.c.l.b16 %v2620
      %v3000 = vunpack.c.l.b16 %v2634
      %v3001 = vunpack.c.l.b16 %v2644
      %v3002 = vunpack.c.l.b16 %v2658
      %v3003 = vunpack.c.l.b16 %v2668
      %v3004 = vunpack.c.l.b16 %v2682
      %v3005 = vunpack.c.l.b16 %v2692
      %v3006 = vunpack.c.l.b16 %v2706
      %v3007 = vunpack.c.l.b16 %v2716
      %v3008 = vunpack.c.l.b16 %v2730
      %v3009 = vunpack.c.l.b16 %v2740
      %v3010 = vunpack.c.l.b16 %v2754
      %v3011 = vunpack.c.l.b16 %v2764
      %v3012 = vunpack.c.l.b16 %v2778
      %v3013 = vunpack.c.l.b16 %v2788
      %v3014 = vunpack.c.l.b16 %v2802
      %v3015 = vunpack.c.l.b16 %v2812
      %v3016 = vunpack.c.l.b16 %v2826
      %v3017 = vunpack.c.l.b16 %v2836
      %v3018 = vunpack.c.l.b16 %v2850
      %v3019 = vunpack.c.l.b16 %v2860
      %v3020 = vunpack.c.l.b16 %v2874
      %v3021 = vunpack.c.l.b16 %v2884
      %v3022 = vunpack.c.l.b16 %v2898
      %v3023 = vunpack.c.l.b16 %v2908
      %v3024 = vunpack.c.l.b16 %v2922
      %v3025 = vunpack.c.l.b16 %v2932
      %v3026 = vunpack.c.l.b16 %v2946
      %v3027 = vunpack.c.l.b16 %v2956
      %v3028 = vunpack.c.l.b16 %v2970
      %v3029 = vunpack.c.l.b16 %v2980
      %v3030 = vpack.c.b16 %v2999, %v2998
      %v3031 = vpack.c.b16 %v3001, %v3000
      %v3032 = vpack.c.b16 %v3003, %v3002
      %v3033 = vpack.c.b16 %v3005, %v3004
      %v3034 = vpack.c.b16 %v3007, %v3006
      %v3035 = vpack.c.b16 %v3009, %v3008
      %v3036 = vpack.c.b16 %v3011, %v3010
      %v3037 = vpack.c.b16 %v3013, %v3012
      %v3038 = vpack.c.b16 %v3015, %v3014
      %v3039 = vpack.c.b16 %v3017, %v3016
      %v3040 = vpack.c.b16 %v3019, %v3018
      %v3041 = vpack.c.b16 %v3021, %v3020
      %v3042 = vpack.c.b16 %v3023, %v3022
      %v3043 = vpack.c.b16 %v3025, %v3024
      %v3044 = vpack.c.b16 %v3027, %v3026
      %v3045 = vpack.c.b16 %v3029, %v3028
      %v3078 = vunpack.c.l.b16 %v2982
      %v3079 = vunpack.c.l.b16 %v2983
      %v3080 = vunpack.c.l.b16 %v2984
      %v3081 = vunpack.c.l.b16 %v2985
      %v3082 = vunpack.c.l.b16 %v2986
      %v3083 = vunpack.c.l.b16 %v2987
      %v3084 = vunpack.c.l.b16 %v2988
      %v3085 = vunpack.c.l.b16 %v2989
      %v3086 = vunpack.c.l.b16 %v2990
      %v3087 = vunpack.c.l.b16 %v2991
      %v3088 = vunpack.c.l.b16 %v2992
      %v3089 = vunpack.c.l.b16 %v2993
      %v3090 = vunpack.c.l.b16 %v2994
      %v3091 = vunpack.c.l.b16 %v2995
      %v3092 = vunpack.c.l.b16 %v2996
      %v3093 = vunpack.c.l.b16 %v2997
      %v3094 = vpack.c.b16 %v3079, %v3078
      %v3095 = vpack.c.b16 %v3081, %v3080
      %v3096 = vpack.c.b16 %v3083, %v3082
      %v3097 = vpack.c.b16 %v3085, %v3084
      %v3098 = vpack.c.b16 %v3087, %v3086
      %v3099 = vpack.c.b16 %v3089, %v3088
      %v3100 = vpack.c.b16 %v3091, %v3090
      %v3101 = vpack.c.b16 %v3093, %v3092
      %3110 = vmatprep.subr.bf16.mxu0 0
      %3111 = vmatpush1.bf16.msra.mxu0 %v3094
      %3112 = vmatprep.subr.bf16.mxu0 0
      %3113 = vmatpush1.bf16.msra.mxu0 %v3095
      %3114 = vmatprep.subr.bf16.mxu0 0
      %3115 = vmatpush1.bf16.msra.mxu0 %v3096
      %3116 = vmatprep.subr.bf16.mxu0 0
      %3117 = vmatpush1.bf16.msra.mxu0 %v3097
      %3118 = vmatprep.subr.bf16.mxu0 0
      %3119 = vmatpush1.bf16.msra.mxu0 %v3098
      %3120 = vmatprep.subr.bf16.mxu0 0
      %3121 = vmatpush1.bf16.msra.mxu0 %v3099
      %3122 = vmatprep.subr.bf16.mxu0 0
      %3123 = vmatpush1.bf16.msra.mxu0 %v3100
      %3124 = vmatprep.subr.bf16.mxu0 0
      %3125 = vmatpush1.bf16.msra.mxu0 %v3101
      %3126 = vmatprep.subr.bf16.mxu0 0
      %3127 = vmatpush1.bf16.msra.mxu0 0
      %3128 = vmatprep.subr.bf16.mxu0 0
      %3129 = vmatpush1.bf16.msra.mxu0 0
      %3130 = vmatprep.subr.bf16.mxu0 0
      %3131 = vmatpush1.bf16.msra.mxu0 0
      %3132 = vmatprep.subr.bf16.mxu0 0
      %3133 = vmatpush1.bf16.msra.mxu0 0
      %3134 = vmatprep.subr.bf16.mxu0 0
      %3135 = vmatpush1.bf16.msra.mxu0 0
      %3136 = vmatprep.subr.bf16.mxu0 0
      %3137 = vmatpush1.bf16.msra.mxu0 0
      %3138 = vmatprep.subr.bf16.mxu0 0
      %3139 = vmatpush1.bf16.msra.mxu0 0
      %3140 = vmatprep.subr.bf16.mxu0 0
      %3141 = vmatpush1.bf16.msra.mxu0 0
      %3142 = vmatprep.mubr.bf16.mxu0 0
      %3143 = vmatmul.mubr.bf16.gmra.mrb[0].mxu0 %v3030
      %v3144 = vpop.f32.mrb[0].mxu0
      %v3145 = vadd.f32 0.0, %v3144
      %v3146 = vpop.f32.mrb[0].mxu0
      %v3147 = vpop.f32.mrb[0].mxu0
      %v3148 = vadd.f32 0.0, %v3147
      %v3149 = vpop.f32.mrb[0].mxu0
      %3150 = vmatprep.mubr.bf16.mxu0 0
      %3151 = vmatmul.mubr.bf16.gmra.mrb[0].mxu0 %v3031
      %v3152 = vpop.f32.mrb[0].mxu0
      %v3153 = vadd.f32 0.0, %v3152
      %v3154 = vpop.f32.mrb[0].mxu0
      %v3155 = vpop.f32.mrb[0].mxu0
      %v3156 = vadd.f32 0.0, %v3155
      %v3157 = vpop.f32.mrb[0].mxu0
      %3158 = vmatprep.mubr.bf16.mxu0 0
      %3159 = vmatmul.mubr.bf16.gmra.mrb[0].mxu0 %v3032
      %v3160 = vpop.f32.mrb[0].mxu0
      %v3161 = vadd.f32 0.0, %v3160
      %v3162 = vpop.f32.mrb[0].mxu0
      %v3163 = vpop.f32.mrb[0].mxu0
      %v3164 = vadd.f32 0.0, %v3163
      %v3165 = vpop.f32.mrb[0].mxu0
      %3166 = vmatprep.mubr.bf16.mxu0 0
      %3167 = vmatmul.mubr.bf16.gmra.mrb[0].mxu0 %v3033
      %v3168 = vpop.f32.mrb[0].mxu0
      %v3169 = vadd.f32 0.0, %v3168
      %v3170 = vpop.f32.mrb[0].mxu0
      %v3171 = vpop.f32.mrb[0].mxu0
      %v3172 = vadd.f32 0.0, %v3171
      %v3173 = vpop.f32.mrb[0].mxu0
      %3174 = vmatprep.mubr.bf16.mxu0 0
      %3175 = vmatmul.mubr.bf16.gmra.mrb[0].mxu0 %v3034
      %v3176 = vpop.f32.mrb[0].mxu0
      %v3177 = vadd.f32 0.0, %v3176
      %v3178 = vpop.f32.mrb[0].mxu0
      %v3179 = vpop.f32.mrb[0].mxu0
      %v3180 = vadd.f32 0.0, %v3179
      %v3181 = vpop.f32.mrb[0].mxu0
      %3182 = vmatprep.mubr.bf16.mxu0 0
      %3183 = vmatmul.mubr.bf16.gmra.mrb[0].mxu0 %v3035
      %v3184 = vpop.f32.mrb[0].mxu0
      %v3185 = vadd.f32 0.0, %v3184
      %v3186 = vpop.f32.mrb[0].mxu0
      %v3187 = vpop.f32.mrb[0].mxu0
      %v3188 = vadd.f32 0.0, %v3187
      %v3189 = vpop.f32.mrb[0].mxu0
      %3190 = vmatprep.mubr.bf16.mxu0 0
      %3191 = vmatmul.mubr.bf16.gmra.mrb[0].mxu0 %v3036
      %v3192 = vpop.f32.mrb[0].mxu0
      %v3193 = vadd.f32 0.0, %v3192
      %v3194 = vpop.f32.mrb[0].mxu0
      %v3195 = vpop.f32.mrb[0].mxu0
      %v3196 = vadd.f32 0.0, %v3195
      %v3197 = vpop.f32.mrb[0].mxu0
      %3198 = vmatprep.mubr.bf16.mxu0 0
      %3199 = vmatmul.mubr.bf16.gmra.mrb[0].mxu0 %v3037
      %v3200 = vpop.f32.mrb[0].mxu0
      %v3201 = vadd.f32 0.0, %v3200
      %v3202 = vpop.f32.mrb[0].mxu0
      %v3203 = vpop.f32.mrb[0].mxu0
      %v3204 = vadd.f32 0.0, %v3203
      %v3205 = vpop.f32.mrb[0].mxu0
      %3206 = vmatprep.mubr.bf16.mxu0 0
      %3207 = vmatmul.mubr.bf16.gmra.mrb[0].mxu0 %v3038
      %v3208 = vpop.f32.mrb[0].mxu0
      %v3209 = vadd.f32 0.0, %v3208
      %v3210 = vpop.f32.mrb[0].mxu0
      %v3211 = vpop.f32.mrb[0].mxu0
      %v3212 = vadd.f32 0.0, %v3211
      %v3213 = vpop.f32.mrb[0].mxu0
      %3214 = vmatprep.mubr.bf16.mxu0 0
      %3215 = vmatmul.mubr.bf16.gmra.mrb[0].mxu0 %v3039
      %v3216 = vpop.f32.mrb[0].mxu0
      %v3217 = vadd.f32 0.0, %v3216
      %v3218 = vpop.f32.mrb[0].mxu0
      %v3219 = vpop.f32.mrb[0].mxu0
      %v3220 = vadd.f32 0.0, %v3219
      %v3221 = vpop.f32.mrb[0].mxu0
      %3222 = vmatprep.mubr.bf16.mxu0 0
      %3223 = vmatmul.mubr.bf16.gmra.mrb[0].mxu0 %v3040
      %v3224 = vpop.f32.mrb[0].mxu0
      %v3225 = vadd.f32 0.0, %v3224
      %v3226 = vpop.f32.mrb[0].mxu0
      %v3227 = vpop.f32.mrb[0].mxu0
      %v3228 = vadd.f32 0.0, %v3227
      %v3229 = vpop.f32.mrb[0].mxu0
      %3230 = vmatprep.mubr.bf16.mxu0 0
      %3231 = vmatmul.mubr.bf16.gmra.mrb[0].mxu0 %v3041
      %v3232 = vpop.f32.mrb[0].mxu0
      %v3233 = vadd.f32 0.0, %v3232
      %v3234 = vpop.f32.mrb[0].mxu0
      %v3235 = vpop.f32.mrb[0].mxu0
      %v3236 = vadd.f32 0.0, %v3235
      %v3237 = vpop.f32.mrb[0].mxu0
      %3238 = vmatprep.mubr.bf16.mxu0 0
      %3239 = vmatmul.mubr.bf16.gmra.mrb[0].mxu0 %v3042
      %v3240 = vpop.f32.mrb[0].mxu0
      %v3241 = vadd.f32 0.0, %v3240
      %v3242 = vpop.f32.mrb[0].mxu0
      %v3243 = vpop.f32.mrb[0].mxu0
      %v3244 = vadd.f32 0.0, %v3243
      %v3245 = vpop.f32.mrb[0].mxu0
      %3246 = vmatprep.mubr.bf16.mxu0 0
      %3247 = vmatmul.mubr.bf16.gmra.mrb[0].mxu0 %v3043
      %v3248 = vpop.f32.mrb[0].mxu0
      %v3249 = vadd.f32 0.0, %v3248
      %v3250 = vpop.f32.mrb[0].mxu0
      %v3251 = vpop.f32.mrb[0].mxu0
      %v3252 = vadd.f32 0.0, %v3251
      %v3253 = vpop.f32.mrb[0].mxu0
      %3254 = vmatprep.mubr.bf16.mxu0 0
      %3255 = vmatmul.mubr.bf16.gmra.mrb[0].mxu0 %v3044
      %v3256 = vpop.f32.mrb[0].mxu0
      %v3257 = vadd.f32 0.0, %v3256
      %v3258 = vpop.f32.mrb[0].mxu0
      %v3259 = vpop.f32.mrb[0].mxu0
      %v3260 = vadd.f32 0.0, %v3259
      %v3261 = vpop.f32.mrb[0].mxu0
      %3262 = vmatprep.mubr.bf16.mxu0 0
      %3263 = vmatmul.mubr.bf16.gmra.mrb[0].mxu0 %v3045
      %v3264 = vpop.f32.mrb[0].mxu0
      %v3265 = vadd.f32 0.0, %v3264
      %v3266 = vpop.f32.mrb[0].mxu0
      %v3267 = vpop.f32.mrb[0].mxu0
      %v3268 = vadd.f32 0.0, %v3267
      %v3269 = vpop.f32.mrb[0].mxu0
      %3270 = vdwg.mxu0
      %v3271 = vadd.f32 %v2517, %v3145
      %v3272 = vadd.f32 %v2518, %v3148
      %v3273 = vadd.f32 %v2519, %v3153
      %v3274 = vadd.f32 %v2520, %v3156
      %v3275 = vadd.f32 %v2521, %v3161
      %v3276 = vadd.f32 %v2522, %v3164
      %v3277 = vadd.f32 %v2523, %v3169
      %v3278 = vadd.f32 %v2524, %v3172
      %v3279 = vadd.f32 %v2525, %v3177
      %v3280 = vadd.f32 %v2526, %v3180
      %v3281 = vadd.f32 %v2527, %v3185
      %v3282 = vadd.f32 %v2528, %v3188
      %v3283 = vadd.f32 %v2529, %v3193
      %v3284 = vadd.f32 %v2530, %v3196
      %v3285 = vadd.f32 %v2531, %v3201
      %v3286 = vadd.f32 %v2532, %v3204
      %v3287 = vadd.f32 %v2533, %v3209
      %v3288 = vadd.f32 %v2534, %v3212
      %v3289 = vadd.f32 %v2535, %v3217
      %v3290 = vadd.f32 %v2536, %v3220
      %v3291 = vadd.f32 %v2537, %v3225
      %v3292 = vadd.f32 %v2538, %v3228
      %v3293 = vadd.f32 %v2539, %v3233
      %v3294 = vadd.f32 %v2540, %v3236
      %v3295 = vadd.f32 %v2541, %v3241
      %v3296 = vadd.f32 %v2542, %v3244
      %v3297 = vadd.f32 %v2543, %v3249
      %v3298 = vadd.f32 %v2544, %v3252
      %v3299 = vadd.f32 %v2545, %v3257
      %v3300 = vadd.f32 %v2546, %v3260
      %v3301 = vadd.f32 %v2547, %v3265
      %v3302 = vadd.f32 %v2548, %v3268
      %s3303 = scalar_lea.vmem %s291, 12
      %v3304 = vld [vmem:[%s3303] sm:$0xf]
      %v3305 = vld [vmem:[%s3303 + $0x4] sm:$0xf]
      %v3306 = vld [vmem:[%s3303 + $0xc] sm:$0xf]
      %v3307 = vld [vmem:[%s3303 + $0x10] sm:$0xf]
      %v3308 = vld [vmem:[%s3303 + $0x18] sm:$0xf]
      %v3309 = vld [vmem:[%s3303 + $0x1c] sm:$0xf]
      %v3310 = vld [vmem:[%s3303 + $0x24] sm:$0xf]
      %v3311 = vld [vmem:[%s3303 + $0x28] sm:$0xf]
      %v3312 = vld [vmem:[%s3303 + $0x30] sm:$0xf]
      %v3313 = vld [vmem:[%s3303 + $0x34] sm:$0xf]
      %v3314 = vld [vmem:[%s3303 + $0x3c] sm:$0xf]
      %v3315 = vld [vmem:[%s3303 + $0x40] sm:$0xf]
      %v3316 = vld [vmem:[%s3303 + $0x48] sm:$0xf]
      %v3317 = vld [vmem:[%s3303 + $0x4c] sm:$0xf]
      %v3318 = vld [vmem:[%s3303 + $0x54] sm:$0xf]
      %v3319 = vld [vmem:[%s3303 + $0x58] sm:$0xf]
      %v3320 = vld [vmem:[%s3303 + $0x60] sm:$0xf]
      %v3321 = vld [vmem:[%s3303 + $0x64] sm:$0xf]
      %v3322 = vld [vmem:[%s3303 + $0x6c] sm:$0xf]
      %v3323 = vld [vmem:[%s3303 + $0x70] sm:$0xf]
      %v3324 = vld [vmem:[%s3303 + $0x78] sm:$0xf]
      %v3325 = vld [vmem:[%s3303 + $0x7c] sm:$0xf]
      %v3326 = vld [vmem:[%s3303 + $0x84] sm:$0xf]
      %v3327 = vld [vmem:[%s3303 + $0x88] sm:$0xf]
      %v3328 = vld [vmem:[%s3303 + $0x90] sm:$0xf]
      %v3329 = vld [vmem:[%s3303 + $0x94] sm:$0xf]
      %v3330 = vld [vmem:[%s3303 + $0x9c] sm:$0xf]
      %v3331 = vld [vmem:[%s3303 + $0xa0] sm:$0xf]
      %v3332 = vld [vmem:[%s3303 + $0xa8] sm:$0xf]
      %v3333 = vld [vmem:[%s3303 + $0xac] sm:$0xf]
      %v3334 = vld [vmem:[%s3303 + $0xb4] sm:$0xf]
      %v3335 = vld [vmem:[%s3303 + $0xb8] sm:$0xf]
      %s3336 = scalar_lea.vmem %s4, 384
      %v3337 = vld [vmem:[%s3336] sm:$0xf]
      %v3338 = vld [vmem:[%s3336 + $0x4] sm:$0xf]
      %v3339 = vld [vmem:[%s3336 + $0x8] sm:$0xf]
      %v3340 = vld [vmem:[%s3336 + $0xc] sm:$0xf]
      %v3341 = vld [vmem:[%s3336 + $0x10] sm:$0xf]
      %v3342 = vld [vmem:[%s3336 + $0x14] sm:$0xf]
      %v3343 = vld [vmem:[%s3336 + $0x18] sm:$0xf]
      %v3344 = vld [vmem:[%s3336 + $0x1c] sm:$0xf]
      %v3345 = vld [vmem:[%s3336 + $0x20] sm:$0xf]
      %v3346 = vld [vmem:[%s3336 + $0x24] sm:$0xf]
      %v3347 = vld [vmem:[%s3336 + $0x28] sm:$0xf]
      %v3348 = vld [vmem:[%s3336 + $0x2c] sm:$0xf]
      %v3349 = vld [vmem:[%s3336 + $0x30] sm:$0xf]
      %v3350 = vld [vmem:[%s3336 + $0x34] sm:$0xf]
      %v3351 = vld [vmem:[%s3336 + $0x38] sm:$0xf]
      %v3352 = vld [vmem:[%s3336 + $0x3c] sm:$0xf]
      %v3385 = vunpack.c.l.b16 %v3304
      %v3386 = vunpack.c.l.b16 %v3305
      %v3387 = vunpack.c.l.b16 %v3306
      %v3388 = vunpack.c.l.b16 %v3307
      %v3389 = vunpack.c.l.b16 %v3308
      %v3390 = vunpack.c.l.b16 %v3309
      %v3391 = vunpack.c.l.b16 %v3310
      %v3392 = vunpack.c.l.b16 %v3311
      %v3393 = vunpack.c.l.b16 %v3312
      %v3394 = vunpack.c.l.b16 %v3313
      %v3395 = vunpack.c.l.b16 %v3314
      %v3396 = vunpack.c.l.b16 %v3315
      %v3397 = vunpack.c.l.b16 %v3316
      %v3398 = vunpack.c.l.b16 %v3317
      %v3399 = vunpack.c.l.b16 %v3318
      %v3400 = vunpack.c.l.b16 %v3319
      %v3401 = vunpack.c.l.b16 %v3320
      %v3402 = vunpack.c.l.b16 %v3321
      %v3403 = vunpack.c.l.b16 %v3322
      %v3404 = vunpack.c.l.b16 %v3323
      %v3405 = vunpack.c.l.b16 %v3324
      %v3406 = vunpack.c.l.b16 %v3325
      %v3407 = vunpack.c.l.b16 %v3326
      %v3408 = vunpack.c.l.b16 %v3327
      %v3409 = vunpack.c.l.b16 %v3328
      %v3410 = vunpack.c.l.b16 %v3329
      %v3411 = vunpack.c.l.b16 %v3330
      %v3412 = vunpack.c.l.b16 %v3331
      %v3413 = vunpack.c.l.b16 %v3332
      %v3414 = vunpack.c.l.b16 %v3333
      %v3415 = vunpack.c.l.b16 %v3334
      %v3416 = vunpack.c.l.b16 %v3335
      %v3417 = vpack.c.b16 %v3386, %v3385
      %v3418 = vpack.c.b16 %v3388, %v3387
      %v3419 = vpack.c.b16 %v3390, %v3389
      %v3420 = vpack.c.b16 %v3392, %v3391
      %v3421 = vpack.c.b16 %v3394, %v3393
      %v3422 = vpack.c.b16 %v3396, %v3395
      %v3423 = vpack.c.b16 %v3398, %v3397
      %v3424 = vpack.c.b16 %v3400, %v3399
      %v3425 = vpack.c.b16 %v3402, %v3401
      %v3426 = vpack.c.b16 %v3404, %v3403
      %v3427 = vpack.c.b16 %v3406, %v3405
      %v3428 = vpack.c.b16 %v3408, %v3407
      %v3429 = vpack.c.b16 %v3410, %v3409
      %v3430 = vpack.c.b16 %v3412, %v3411
      %v3431 = vpack.c.b16 %v3414, %v3413
      %v3432 = vpack.c.b16 %v3416, %v3415
      %v3465 = vunpack.c.l.b16 %v3337
      %v3466 = vunpack.c.l.b16 %v3338
      %v3467 = vunpack.c.l.b16 %v3339
      %v3468 = vunpack.c.l.b16 %v3340
      %v3469 = vunpack.c.l.b16 %v3341
      %v3470 = vunpack.c.l.b16 %v3342
      %v3471 = vunpack.c.l.b16 %v3343
      %v3472 = vunpack.c.l.b16 %v3344
      %v3473 = vunpack.c.l.b16 %v3345
      %v3474 = vunpack.c.l.b16 %v3346
      %v3475 = vunpack.c.l.b16 %v3347
      %v3476 = vunpack.c.l.b16 %v3348
      %v3477 = vunpack.c.l.b16 %v3349
      %v3478 = vunpack.c.l.b16 %v3350
      %v3479 = vunpack.c.l.b16 %v3351
      %v3480 = vunpack.c.l.b16 %v3352
      %v3481 = vpack.c.b16 %v3466, %v3465
      %v3482 = vpack.c.b16 %v3468, %v3467
      %v3483 = vpack.c.b16 %v3470, %v3469
      %v3484 = vpack.c.b16 %v3472, %v3471
      %v3485 = vpack.c.b16 %v3474, %v3473
      %v3486 = vpack.c.b16 %v3476, %v3475
      %v3487 = vpack.c.b16 %v3478, %v3477
      %v3488 = vpack.c.b16 %v3480, %v3479
      %3497 = vmatprep.subr.bf16.mxu0 0
      %3498 = vmatpush1.bf16.msra.mxu0 %v3481
      %3499 = vmatprep.subr.bf16.mxu0 0
      %3500 = vmatpush1.bf16.msra.mxu0 %v3482
      %3501 = vmatprep.subr.bf16.mxu0 0
      %3502 = vmatpush1.bf16.msra.mxu0 %v3483
      %3503 = vmatprep.subr.bf16.mxu0 0
      %3504 = vmatpush1.bf16.msra.mxu0 %v3484
      %3505 = vmatprep.subr.bf16.mxu0 0
      %3506 = vmatpush1.bf16.msra.mxu0 %v3485
      %3507 = vmatprep.subr.bf16.mxu0 0
      %3508 = vmatpush1.bf16.msra.mxu0 %v3486
      %3509 = vmatprep.subr.bf16.mxu0 0
      %3510 = vmatpush1.bf16.msra.mxu0 %v3487
      %3511 = vmatprep.subr.bf16.mxu0 0
      %3512 = vmatpush1.bf16.msra.mxu0 %v3488
      %3513 = vmatprep.subr.bf16.mxu0 0
      %3514 = vmatpush1.bf16.msra.mxu0 0
      %3515 = vmatprep.subr.bf16.mxu0 0
      %3516 = vmatpush1.bf16.msra.mxu0 0
      %3517 = vmatprep.subr.bf16.mxu0 0
      %3518 = vmatpush1.bf16.msra.mxu0 0
      %3519 = vmatprep.subr.bf16.mxu0 0
      %3520 = vmatpush1.bf16.msra.mxu0 0
      %3521 = vmatprep.subr.bf16.mxu0 0
      %3522 = vmatpush1.bf16.msra.mxu0 0
      %3523 = vmatprep.subr.bf16.mxu0 0
      %3524 = vmatpush1.bf16.msra.mxu0 0
      %3525 = vmatprep.subr.bf16.mxu0 0
      %3526 = vmatpush1.bf16.msra.mxu0 0
      %3527 = vmatprep.subr.bf16.mxu0 0
      %3528 = vmatpush1.bf16.msra.mxu0 0
      %3529 = vmatprep.mubr.bf16.mxu0 0
      %3530 = vmatmul.mubr.bf16.gmra.mrb[0].mxu0 %v3417
      %v3531 = vpop.f32.mrb[0].mxu0
      %v3532 = vadd.f32 0.0, %v3531
      %v3533 = vpop.f32.mrb[0].mxu0
      %v3534 = vpop.f32.mrb[0].mxu0
      %v3535 = vadd.f32 0.0, %v3534
      %v3536 = vpop.f32.mrb[0].mxu0
      %3537 = vmatprep.mubr.bf16.mxu0 0
      %3538 = vmatmul.mubr.bf16.gmra.mrb[0].mxu0 %v3418
      %v3539 = vpop.f32.mrb[0].mxu0
      %v3540 = vadd.f32 0.0, %v3539
      %v3541 = vpop.f32.mrb[0].mxu0
      %v3542 = vpop.f32.mrb[0].mxu0
      %v3543 = vadd.f32 0.0, %v3542
      %v3544 = vpop.f32.mrb[0].mxu0
      %3545 = vmatprep.mubr.bf16.mxu0 0
      %3546 = vmatmul.mubr.bf16.gmra.mrb[0].mxu0 %v3419
      %v3547 = vpop.f32.mrb[0].mxu0
      %v3548 = vadd.f32 0.0, %v3547
      %v3549 = vpop.f32.mrb[0].mxu0
      %v3550 = vpop.f32.mrb[0].mxu0
      %v3551 = vadd.f32 0.0, %v3550
      %v3552 = vpop.f32.mrb[0].mxu0
      %3553 = vmatprep.mubr.bf16.mxu0 0
      %3554 = vmatmul.mubr.bf16.gmra.mrb[0].mxu0 %v3420
      %v3555 = vpop.f32.mrb[0].mxu0
      %v3556 = vadd.f32 0.0, %v3555
      %v3557 = vpop.f32.mrb[0].mxu0
      %v3558 = vpop.f32.mrb[0].mxu0
      %v3559 = vadd.f32 0.0, %v3558
      %v3560 = vpop.f32.mrb[0].mxu0
      %3561 = vmatprep.mubr.bf16.mxu0 0
      %3562 = vmatmul.mubr.bf16.gmra.mrb[0].mxu0 %v3421
      %v3563 = vpop.f32.mrb[0].mxu0
      %v3564 = vadd.f32 0.0, %v3563
      %v3565 = vpop.f32.mrb[0].mxu0
      %v3566 = vpop.f32.mrb[0].mxu0
      %v3567 = vadd.f32 0.0, %v3566
      %v3568 = vpop.f32.mrb[0].mxu0
      %3569 = vmatprep.mubr.bf16.mxu0 0
      %3570 = vmatmul.mubr.bf16.gmra.mrb[0].mxu0 %v3422
      %v3571 = vpop.f32.mrb[0].mxu0
      %v3572 = vadd.f32 0.0, %v3571
      %v3573 = vpop.f32.mrb[0].mxu0
      %v3574 = vpop.f32.mrb[0].mxu0
      %v3575 = vadd.f32 0.0, %v3574
      %v3576 = vpop.f32.mrb[0].mxu0
      %3577 = vmatprep.mubr.bf16.mxu0 0
      %3578 = vmatmul.mubr.bf16.gmra.mrb[0].mxu0 %v3423
      %v3579 = vpop.f32.mrb[0].mxu0
      %v3580 = vadd.f32 0.0, %v3579
      %v3581 = vpop.f32.mrb[0].mxu0
      %v3582 = vpop.f32.mrb[0].mxu0
      %v3583 = vadd.f32 0.0, %v3582
      %v3584 = vpop.f32.mrb[0].mxu0
      %3585 = vmatprep.mubr.bf16.mxu0 0
      %3586 = vmatmul.mubr.bf16.gmra.mrb[0].mxu0 %v3424
      %v3587 = vpop.f32.mrb[0].mxu0
      %v3588 = vadd.f32 0.0, %v3587
      %v3589 = vpop.f32.mrb[0].mxu0
      %v3590 = vpop.f32.mrb[0].mxu0
      %v3591 = vadd.f32 0.0, %v3590
      %v3592 = vpop.f32.mrb[0].mxu0
      %3593 = vmatprep.mubr.bf16.mxu0 0
      %3594 = vmatmul.mubr.bf16.gmra.mrb[0].mxu0 %v3425
      %v3595 = vpop.f32.mrb[0].mxu0
      %v3596 = vadd.f32 0.0, %v3595
      %v3597 = vpop.f32.mrb[0].mxu0
      %v3598 = vpop.f32.mrb[0].mxu0
      %v3599 = vadd.f32 0.0, %v3598
      %v3600 = vpop.f32.mrb[0].mxu0
      %3601 = vmatprep.mubr.bf16.mxu0 0
      %3602 = vmatmul.mubr.bf16.gmra.mrb[0].mxu0 %v3426
      %v3603 = vpop.f32.mrb[0].mxu0
      %v3604 = vadd.f32 0.0, %v3603
      %v3605 = vpop.f32.mrb[0].mxu0
      %v3606 = vpop.f32.mrb[0].mxu0
      %v3607 = vadd.f32 0.0, %v3606
      %v3608 = vpop.f32.mrb[0].mxu0
      %3609 = vmatprep.mubr.bf16.mxu0 0
      %3610 = vmatmul.mubr.bf16.gmra.mrb[0].mxu0 %v3427
      %v3611 = vpop.f32.mrb[0].mxu0
      %v3612 = vadd.f32 0.0, %v3611
      %v3613 = vpop.f32.mrb[0].mxu0
      %v3614 = vpop.f32.mrb[0].mxu0
      %v3615 = vadd.f32 0.0, %v3614
      %v3616 = vpop.f32.mrb[0].mxu0
      %3617 = vmatprep.mubr.bf16.mxu0 0
      %3618 = vmatmul.mubr.bf16.gmra.mrb[0].mxu0 %v3428
      %v3619 = vpop.f32.mrb[0].mxu0
      %v3620 = vadd.f32 0.0, %v3619
      %v3621 = vpop.f32.mrb[0].mxu0
      %v3622 = vpop.f32.mrb[0].mxu0
      %v3623 = vadd.f32 0.0, %v3622
      %v3624 = vpop.f32.mrb[0].mxu0
      %3625 = vmatprep.mubr.bf16.mxu0 0
      %3626 = vmatmul.mubr.bf16.gmra.mrb[0].mxu0 %v3429
      %v3627 = vpop.f32.mrb[0].mxu0
      %v3628 = vadd.f32 0.0, %v3627
      %v3629 = vpop.f32.mrb[0].mxu0
      %v3630 = vpop.f32.mrb[0].mxu0
      %v3631 = vadd.f32 0.0, %v3630
      %v3632 = vpop.f32.mrb[0].mxu0
      %3633 = vmatprep.mubr.bf16.mxu0 0
      %3634 = vmatmul.mubr.bf16.gmra.mrb[0].mxu0 %v3430
      %v3635 = vpop.f32.mrb[0].mxu0
      %v3636 = vadd.f32 0.0, %v3635
      %v3637 = vpop.f32.mrb[0].mxu0
      %v3638 = vpop.f32.mrb[0].mxu0
      %v3639 = vadd.f32 0.0, %v3638
      %v3640 = vpop.f32.mrb[0].mxu0
      %3641 = vmatprep.mubr.bf16.mxu0 0
      %3642 = vmatmul.mubr.bf16.gmra.mrb[0].mxu0 %v3431
      %v3643 = vpop.f32.mrb[0].mxu0
      %v3644 = vadd.f32 0.0, %v3643
      %v3645 = vpop.f32.mrb[0].mxu0
      %v3646 = vpop.f32.mrb[0].mxu0
      %v3647 = vadd.f32 0.0, %v3646
      %v3648 = vpop.f32.mrb[0].mxu0
      %3649 = vmatprep.mubr.bf16.mxu0 0
      %3650 = vmatmul.mubr.bf16.gmra.mrb[0].mxu0 %v3432
      %v3651 = vpop.f32.mrb[0].mxu0
      %v3652 = vadd.f32 0.0, %v3651
      %v3653 = vpop.f32.mrb[0].mxu0
      %v3654 = vpop.f32.mrb[0].mxu0
      %v3655 = vadd.f32 0.0, %v3654
      %v3656 = vpop.f32.mrb[0].mxu0
      %3657 = vdwg.mxu0
      %v3658 = vadd.f32 %v3271, %v3532
      %v3659 = vadd.f32 %v3272, %v3535
      %v3660 = vadd.f32 %v3273, %v3540
      %v3661 = vadd.f32 %v3274, %v3543
      %v3662 = vadd.f32 %v3275, %v3548
      %v3663 = vadd.f32 %v3276, %v3551
      %v3664 = vadd.f32 %v3277, %v3556
      %v3665 = vadd.f32 %v3278, %v3559
      %v3666 = vadd.f32 %v3279, %v3564
      %v3667 = vadd.f32 %v3280, %v3567
      %v3668 = vadd.f32 %v3281, %v3572
      %v3669 = vadd.f32 %v3282, %v3575
      %v3670 = vadd.f32 %v3283, %v3580
      %v3671 = vadd.f32 %v3284, %v3583
      %v3672 = vadd.f32 %v3285, %v3588
      %v3673 = vadd.f32 %v3286, %v3591
      %v3674 = vadd.f32 %v3287, %v3596
      %v3675 = vadd.f32 %v3288, %v3599
      %v3676 = vadd.f32 %v3289, %v3604
      %v3677 = vadd.f32 %v3290, %v3607
      %v3678 = vadd.f32 %v3291, %v3612
      %v3679 = vadd.f32 %v3292, %v3615
      %v3680 = vadd.f32 %v3293, %v3620
      %v3681 = vadd.f32 %v3294, %v3623
      %v3682 = vadd.f32 %v3295, %v3628
      %v3683 = vadd.f32 %v3296, %v3631
      %v3684 = vadd.f32 %v3297, %v3636
      %v3685 = vadd.f32 %v3298, %v3639
      %v3686 = vadd.f32 %v3299, %v3644
      %v3687 = vadd.f32 %v3300, %v3647
      %v3688 = vadd.f32 %v3301, %v3652
      %v3689 = vadd.f32 %v3302, %v3655
      %s3690 = scalar_lea.vmem %s296, 12
      %v3691 = vld [vmem:[%s3690] sm:$0xf]
      %v3692 = vld [vmem:[%s3690 + $0x4] sm:$0xf]
      %v3693 = vld [vmem:[%s3690 + $0xc] sm:$0xf]
      %v3694 = vld [vmem:[%s3690 + $0x10] sm:$0xf]
      %v3695 = vld [vmem:[%s3690 + $0x18] sm:$0xf]
      %v3696 = vld [vmem:[%s3690 + $0x1c] sm:$0xf]
      %v3697 = vld [vmem:[%s3690 + $0x24] sm:$0xf]
      %v3698 = vld [vmem:[%s3690 + $0x28] sm:$0xf]
      %v3699 = vld [vmem:[%s3690 + $0x30] sm:$0xf]
      %v3700 = vld [vmem:[%s3690 + $0x34] sm:$0xf]
      %v3701 = vld [vmem:[%s3690 + $0x3c] sm:$0xf]
      %v3702 = vld [vmem:[%s3690 + $0x40] sm:$0xf]
      %v3703 = vld [vmem:[%s3690 + $0x48] sm:$0xf]
      %v3704 = vld [vmem:[%s3690 + $0x4c] sm:$0xf]
      %v3705 = vld [vmem:[%s3690 + $0x54] sm:$0xf]
      %v3706 = vld [vmem:[%s3690 + $0x58] sm:$0xf]
      %v3707 = vld [vmem:[%s3690 + $0x60] sm:$0xf]
      %v3708 = vld [vmem:[%s3690 + $0x64] sm:$0xf]
      %v3709 = vld [vmem:[%s3690 + $0x6c] sm:$0xf]
      %v3710 = vld [vmem:[%s3690 + $0x70] sm:$0xf]
      %v3711 = vld [vmem:[%s3690 + $0x78] sm:$0xf]
      %v3712 = vld [vmem:[%s3690 + $0x7c] sm:$0xf]
      %v3713 = vld [vmem:[%s3690 + $0x84] sm:$0xf]
      %v3714 = vld [vmem:[%s3690 + $0x88] sm:$0xf]
      %v3715 = vld [vmem:[%s3690 + $0x90] sm:$0xf]
      %v3716 = vld [vmem:[%s3690 + $0x94] sm:$0xf]
      %v3717 = vld [vmem:[%s3690 + $0x9c] sm:$0xf]
      %v3718 = vld [vmem:[%s3690 + $0xa0] sm:$0xf]
      %v3719 = vld [vmem:[%s3690 + $0xa8] sm:$0xf]
      %v3720 = vld [vmem:[%s3690 + $0xac] sm:$0xf]
      %v3721 = vld [vmem:[%s3690 + $0xb4] sm:$0xf]
      %v3722 = vld [vmem:[%s3690 + $0xb8] sm:$0xf]
      %s3723 = scalar_lea.vmem %s4, 448
      %v3724 = vld [vmem:[%s3723] sm:$0xf]
      %v3725 = vld [vmem:[%s3723 + $0x4] sm:$0xf]
      %v3726 = vld [vmem:[%s3723 + $0x8] sm:$0xf]
      %v3727 = vld [vmem:[%s3723 + $0xc] sm:$0xf]
      %v3728 = vld [vmem:[%s3723 + $0x10] sm:$0xf]
      %v3729 = vld [vmem:[%s3723 + $0x14] sm:$0xf]
      %v3730 = vld [vmem:[%s3723 + $0x18] sm:$0xf]
      %v3731 = vld [vmem:[%s3723 + $0x1c] sm:$0xf]
      %v3732 = vld [vmem:[%s3723 + $0x20] sm:$0xf]
      %v3733 = vld [vmem:[%s3723 + $0x24] sm:$0xf]
      %v3734 = vld [vmem:[%s3723 + $0x28] sm:$0xf]
      %v3735 = vld [vmem:[%s3723 + $0x2c] sm:$0xf]
      %v3736 = vld [vmem:[%s3723 + $0x30] sm:$0xf]
      %v3737 = vld [vmem:[%s3723 + $0x34] sm:$0xf]
      %v3738 = vld [vmem:[%s3723 + $0x38] sm:$0xf]
      %v3739 = vld [vmem:[%s3723 + $0x3c] sm:$0xf]
      %v3772 = vunpack.c.l.b16 %v3691
      %v3773 = vunpack.c.l.b16 %v3692
      %v3774 = vunpack.c.l.b16 %v3693
      %v3775 = vunpack.c.l.b16 %v3694
      %v3776 = vunpack.c.l.b16 %v3695
      %v3777 = vunpack.c.l.b16 %v3696
      %v3778 = vunpack.c.l.b16 %v3697
      %v3779 = vunpack.c.l.b16 %v3698
      %v3780 = vunpack.c.l.b16 %v3699
      %v3781 = vunpack.c.l.b16 %v3700
      %v3782 = vunpack.c.l.b16 %v3701
      %v3783 = vunpack.c.l.b16 %v3702
      %v3784 = vunpack.c.l.b16 %v3703
      %v3785 = vunpack.c.l.b16 %v3704
      %v3786 = vunpack.c.l.b16 %v3705
      %v3787 = vunpack.c.l.b16 %v3706
      %v3788 = vunpack.c.l.b16 %v3707
      %v3789 = vunpack.c.l.b16 %v3708
      %v3790 = vunpack.c.l.b16 %v3709
      %v3791 = vunpack.c.l.b16 %v3710
      %v3792 = vunpack.c.l.b16 %v3711
      %v3793 = vunpack.c.l.b16 %v3712
      %v3794 = vunpack.c.l.b16 %v3713
      %v3795 = vunpack.c.l.b16 %v3714
      %v3796 = vunpack.c.l.b16 %v3715
      %v3797 = vunpack.c.l.b16 %v3716
      %v3798 = vunpack.c.l.b16 %v3717
      %v3799 = vunpack.c.l.b16 %v3718
      %v3800 = vunpack.c.l.b16 %v3719
      %v3801 = vunpack.c.l.b16 %v3720
      %v3802 = vunpack.c.l.b16 %v3721
      %v3803 = vunpack.c.l.b16 %v3722
      %v3804 = vpack.c.b16 %v3773, %v3772
      %v3805 = vpack.c.b16 %v3775, %v3774
      %v3806 = vpack.c.b16 %v3777, %v3776
      %v3807 = vpack.c.b16 %v3779, %v3778
      %v3808 = vpack.c.b16 %v3781, %v3780
      %v3809 = vpack.c.b16 %v3783, %v3782
      %v3810 = vpack.c.b16 %v3785, %v3784
      %v3811 = vpack.c.b16 %v3787, %v3786
      %v3812 = vpack.c.b16 %v3789, %v3788
      %v3813 = vpack.c.b16 %v3791, %v3790
      %v3814 = vpack.c.b16 %v3793, %v3792
      %v3815 = vpack.c.b16 %v3795, %v3794
      %v3816 = vpack.c.b16 %v3797, %v3796
      %v3817 = vpack.c.b16 %v3799, %v3798
      %v3818 = vpack.c.b16 %v3801, %v3800
      %v3819 = vpack.c.b16 %v3803, %v3802
      %v3852 = vunpack.c.l.b16 %v3724
      %v3853 = vunpack.c.l.b16 %v3725
      %v3854 = vunpack.c.l.b16 %v3726
      %v3855 = vunpack.c.l.b16 %v3727
      %v3856 = vunpack.c.l.b16 %v3728
      %v3857 = vunpack.c.l.b16 %v3729
      %v3858 = vunpack.c.l.b16 %v3730
      %v3859 = vunpack.c.l.b16 %v3731
      %v3860 = vunpack.c.l.b16 %v3732
      %v3861 = vunpack.c.l.b16 %v3733
      %v3862 = vunpack.c.l.b16 %v3734
      %v3863 = vunpack.c.l.b16 %v3735
      %v3864 = vunpack.c.l.b16 %v3736
      %v3865 = vunpack.c.l.b16 %v3737
      %v3866 = vunpack.c.l.b16 %v3738
      %v3867 = vunpack.c.l.b16 %v3739
      %v3868 = vpack.c.b16 %v3853, %v3852
      %v3869 = vpack.c.b16 %v3855, %v3854
      %v3870 = vpack.c.b16 %v3857, %v3856
      %v3871 = vpack.c.b16 %v3859, %v3858
      %v3872 = vpack.c.b16 %v3861, %v3860
      %v3873 = vpack.c.b16 %v3863, %v3862
      %v3874 = vpack.c.b16 %v3865, %v3864
      %v3875 = vpack.c.b16 %v3867, %v3866
      %3884 = vmatprep.subr.bf16.mxu0 0
      %3885 = vmatpush1.bf16.msra.mxu0 %v3868
      %3886 = vmatprep.subr.bf16.mxu0 0
      %3887 = vmatpush1.bf16.msra.mxu0 %v3869
      %3888 = vmatprep.subr.bf16.mxu0 0
      %3889 = vmatpush1.bf16.msra.mxu0 %v3870
      %3890 = vmatprep.subr.bf16.mxu0 0
      %3891 = vmatpush1.bf16.msra.mxu0 %v3871
      %3892 = vmatprep.subr.bf16.mxu0 0
      %3893 = vmatpush1.bf16.msra.mxu0 %v3872
      %3894 = vmatprep.subr.bf16.mxu0 0
      %3895 = vmatpush1.bf16.msra.mxu0 %v3873
      %3896 = vmatprep.subr.bf16.mxu0 0
      %3897 = vmatpush1.bf16.msra.mxu0 %v3874
      %3898 = vmatprep.subr.bf16.mxu0 0
      %3899 = vmatpush1.bf16.msra.mxu0 %v3875
      %3900 = vmatprep.subr.bf16.mxu0 0
      %3901 = vmatpush1.bf16.msra.mxu0 0
      %3902 = vmatprep.subr.bf16.mxu0 0
      %3903 = vmatpush1.bf16.msra.mxu0 0
      %3904 = vmatprep.subr.bf16.mxu0 0
      %3905 = vmatpush1.bf16.msra.mxu0 0
      %3906 = vmatprep.subr.bf16.mxu0 0
      %3907 = vmatpush1.bf16.msra.mxu0 0
      %3908 = vmatprep.subr.bf16.mxu0 0
      %3909 = vmatpush1.bf16.msra.mxu0 0
      %3910 = vmatprep.subr.bf16.mxu0 0
      %3911 = vmatpush1.bf16.msra.mxu0 0
      %3912 = vmatprep.subr.bf16.mxu0 0
      %3913 = vmatpush1.bf16.msra.mxu0 0
      %3914 = vmatprep.subr.bf16.mxu0 0
      %3915 = vmatpush1.bf16.msra.mxu0 0
      %3916 = vmatprep.mubr.bf16.mxu0 0
      %3917 = vmatmul.mubr.bf16.gmra.mrb[0].mxu0 %v3804
      %v3918 = vpop.f32.mrb[0].mxu0
      %v3919 = vadd.f32 0.0, %v3918
      %v3920 = vpop.f32.mrb[0].mxu0
      %v3921 = vpop.f32.mrb[0].mxu0
      %v3922 = vadd.f32 0.0, %v3921
      %v3923 = vpop.f32.mrb[0].mxu0
      %3924 = vmatprep.mubr.bf16.mxu0 0
      %3925 = vmatmul.mubr.bf16.gmra.mrb[0].mxu0 %v3805
      %v3926 = vpop.f32.mrb[0].mxu0
      %v3927 = vadd.f32 0.0, %v3926
      %v3928 = vpop.f32.mrb[0].mxu0
      %v3929 = vpop.f32.mrb[0].mxu0
      %v3930 = vadd.f32 0.0, %v3929
      %v3931 = vpop.f32.mrb[0].mxu0
      %3932 = vmatprep.mubr.bf16.mxu0 0
      %3933 = vmatmul.mubr.bf16.gmra.mrb[0].mxu0 %v3806
      %v3934 = vpop.f32.mrb[0].mxu0
      %v3935 = vadd.f32 0.0, %v3934
      %v3936 = vpop.f32.mrb[0].mxu0
      %v3937 = vpop.f32.mrb[0].mxu0
      %v3938 = vadd.f32 0.0, %v3937
      %v3939 = vpop.f32.mrb[0].mxu0
      %3940 = vmatprep.mubr.bf16.mxu0 0
      %3941 = vmatmul.mubr.bf16.gmra.mrb[0].mxu0 %v3807
      %v3942 = vpop.f32.mrb[0].mxu0
      %v3943 = vadd.f32 0.0, %v3942
      %v3944 = vpop.f32.mrb[0].mxu0
      %v3945 = vpop.f32.mrb[0].mxu0
      %v3946 = vadd.f32 0.0, %v3945
      %v3947 = vpop.f32.mrb[0].mxu0
      %3948 = vmatprep.mubr.bf16.mxu0 0
      %3949 = vmatmul.mubr.bf16.gmra.mrb[0].mxu0 %v3808
      %v3950 = vpop.f32.mrb[0].mxu0
      %v3951 = vadd.f32 0.0, %v3950
      %v3952 = vpop.f32.mrb[0].mxu0
      %v3953 = vpop.f32.mrb[0].mxu0
      %v3954 = vadd.f32 0.0, %v3953
      %v3955 = vpop.f32.mrb[0].mxu0
      %3956 = vmatprep.mubr.bf16.mxu0 0
      %3957 = vmatmul.mubr.bf16.gmra.mrb[0].mxu0 %v3809
      %v3958 = vpop.f32.mrb[0].mxu0
      %v3959 = vadd.f32 0.0, %v3958
      %v3960 = vpop.f32.mrb[0].mxu0
      %v3961 = vpop.f32.mrb[0].mxu0
      %v3962 = vadd.f32 0.0, %v3961
      %v3963 = vpop.f32.mrb[0].mxu0
      %3964 = vmatprep.mubr.bf16.mxu0 0
      %3965 = vmatmul.mubr.bf16.gmra.mrb[0].mxu0 %v3810
      %v3966 = vpop.f32.mrb[0].mxu0
      %v3967 = vadd.f32 0.0, %v3966
      %v3968 = vpop.f32.mrb[0].mxu0
      %v3969 = vpop.f32.mrb[0].mxu0
      %v3970 = vadd.f32 0.0, %v3969
      %v3971 = vpop.f32.mrb[0].mxu0
      %3972 = vmatprep.mubr.bf16.mxu0 0
      %3973 = vmatmul.mubr.bf16.gmra.mrb[0].mxu0 %v3811
      %v3974 = vpop.f32.mrb[0].mxu0
      %v3975 = vadd.f32 0.0, %v3974
      %v3976 = vpop.f32.mrb[0].mxu0
      %v3977 = vpop.f32.mrb[0].mxu0
      %v3978 = vadd.f32 0.0, %v3977
      %v3979 = vpop.f32.mrb[0].mxu0
      %3980 = vmatprep.mubr.bf16.mxu0 0
      %3981 = vmatmul.mubr.bf16.gmra.mrb[0].mxu0 %v3812
      %v3982 = vpop.f32.mrb[0].mxu0
      %v3983 = vadd.f32 0.0, %v3982
      %v3984 = vpop.f32.mrb[0].mxu0
      %v3985 = vpop.f32.mrb[0].mxu0
      %v3986 = vadd.f32 0.0, %v3985
      %v3987 = vpop.f32.mrb[0].mxu0
      %3988 = vmatprep.mubr.bf16.mxu0 0
      %3989 = vmatmul.mubr.bf16.gmra.mrb[0].mxu0 %v3813
      %v3990 = vpop.f32.mrb[0].mxu0
      %v3991 = vadd.f32 0.0, %v3990
      %v3992 = vpop.f32.mrb[0].mxu0
      %v3993 = vpop.f32.mrb[0].mxu0
      %v3994 = vadd.f32 0.0, %v3993
      %v3995 = vpop.f32.mrb[0].mxu0
      %3996 = vmatprep.mubr.bf16.mxu0 0
      %3997 = vmatmul.mubr.bf16.gmra.mrb[0].mxu0 %v3814
      %v3998 = vpop.f32.mrb[0].mxu0
      %v3999 = vadd.f32 0.0, %v3998
      %v4000 = vpop.f32.mrb[0].mxu0
      %v4001 = vpop.f32.mrb[0].mxu0
      %v4002 = vadd.f32 0.0, %v4001
      %v4003 = vpop.f32.mrb[0].mxu0
      %4004 = vmatprep.mubr.bf16.mxu0 0
      %4005 = vmatmul.mubr.bf16.gmra.mrb[0].mxu0 %v3815
      %v4006 = vpop.f32.mrb[0].mxu0
      %v4007 = vadd.f32 0.0, %v4006
      %v4008 = vpop.f32.mrb[0].mxu0
      %v4009 = vpop.f32.mrb[0].mxu0
      %v4010 = vadd.f32 0.0, %v4009
      %v4011 = vpop.f32.mrb[0].mxu0
      %4012 = vmatprep.mubr.bf16.mxu0 0
      %4013 = vmatmul.mubr.bf16.gmra.mrb[0].mxu0 %v3816
      %v4014 = vpop.f32.mrb[0].mxu0
      %v4015 = vadd.f32 0.0, %v4014
      %v4016 = vpop.f32.mrb[0].mxu0
      %v4017 = vpop.f32.mrb[0].mxu0
      %v4018 = vadd.f32 0.0, %v4017
      %v4019 = vpop.f32.mrb[0].mxu0
      %4020 = vmatprep.mubr.bf16.mxu0 0
      %4021 = vmatmul.mubr.bf16.gmra.mrb[0].mxu0 %v3817
      %v4022 = vpop.f32.mrb[0].mxu0
      %v4023 = vadd.f32 0.0, %v4022
      %v4024 = vpop.f32.mrb[0].mxu0
      %v4025 = vpop.f32.mrb[0].mxu0
      %v4026 = vadd.f32 0.0, %v4025
      %v4027 = vpop.f32.mrb[0].mxu0
      %4028 = vmatprep.mubr.bf16.mxu0 0
      %4029 = vmatmul.mubr.bf16.gmra.mrb[0].mxu0 %v3818
      %v4030 = vpop.f32.mrb[0].mxu0
      %v4031 = vadd.f32 0.0, %v4030
      %v4032 = vpop.f32.mrb[0].mxu0
      %v4033 = vpop.f32.mrb[0].mxu0
      %v4034 = vadd.f32 0.0, %v4033
      %v4035 = vpop.f32.mrb[0].mxu0
      %4036 = vmatprep.mubr.bf16.mxu0 0
      %4037 = vmatmul.mubr.bf16.gmra.mrb[0].mxu0 %v3819
      %v4038 = vpop.f32.mrb[0].mxu0
      %v4039 = vadd.f32 0.0, %v4038
      %v4040 = vpop.f32.mrb[0].mxu0
      %v4041 = vpop.f32.mrb[0].mxu0
      %v4042 = vadd.f32 0.0, %v4041
      %v4043 = vpop.f32.mrb[0].mxu0
      %4044 = vdwg.mxu0
      %v4045 = vadd.f32 %v3658, %v3919
      %v4046 = vadd.f32 %v3659, %v3922
      %v4047 = vadd.f32 %v3660, %v3927
      %v4048 = vadd.f32 %v3661, %v3930
      %v4049 = vadd.f32 %v3662, %v3935
      %v4050 = vadd.f32 %v3663, %v3938
      %v4051 = vadd.f32 %v3664, %v3943
      %v4052 = vadd.f32 %v3665, %v3946
      %v4053 = vadd.f32 %v3666, %v3951
      %v4054 = vadd.f32 %v3667, %v3954
      %v4055 = vadd.f32 %v3668, %v3959
      %v4056 = vadd.f32 %v3669, %v3962
      %v4057 = vadd.f32 %v3670, %v3967
      %v4058 = vadd.f32 %v3671, %v3970
      %v4059 = vadd.f32 %v3672, %v3975
      %v4060 = vadd.f32 %v3673, %v3978
      %v4061 = vadd.f32 %v3674, %v3983
      %v4062 = vadd.f32 %v3675, %v3986
      %v4063 = vadd.f32 %v3676, %v3991
      %v4064 = vadd.f32 %v3677, %v3994
      %v4065 = vadd.f32 %v3678, %v3999
      %v4066 = vadd.f32 %v3679, %v4002
      %v4067 = vadd.f32 %v3680, %v4007
      %v4068 = vadd.f32 %v3681, %v4010
      %v4069 = vadd.f32 %v3682, %v4015
      %v4070 = vadd.f32 %v3683, %v4018
      %v4071 = vadd.f32 %v3684, %v4023
      %v4072 = vadd.f32 %v3685, %v4026
      %v4073 = vadd.f32 %v3686, %v4031
      %v4074 = vadd.f32 %v3687, %v4034
      %v4075 = vadd.f32 %v3688, %v4039
      %v4076 = vadd.f32 %v3689, %v4042
      %v4077 = vld [vmem:[%s3303] sm:$0xf]
      %v4078 = vld [vmem:[%s3303 + $0x4] sm:$0xf]
      %v4079 = vld [vmem:[%s3303 + $0x8] sm:$0x1]
      %v4080 = vld [vmem:[%s3303 + $0xc] sm:$0xf]
      %v4081 = vld [vmem:[%s3303 + $0x10] sm:$0xf]
      %v4082 = vld [vmem:[%s3303 + $0x14] sm:$0x1]
      %v4083 = vld [vmem:[%s3303 + $0x18] sm:$0xf]
      %v4084 = vld [vmem:[%s3303 + $0x1c] sm:$0xf]
      %v4085 = vld [vmem:[%s3303 + $0x20] sm:$0x1]
      %v4086 = vld [vmem:[%s3303 + $0x24] sm:$0xf]
      %v4087 = vld [vmem:[%s3303 + $0x28] sm:$0xf]
      %v4088 = vld [vmem:[%s3303 + $0x2c] sm:$0x1]
      %v4089 = vld [vmem:[%s3303 + $0x30] sm:$0xf]
      %v4090 = vld [vmem:[%s3303 + $0x34] sm:$0xf]
      %v4091 = vld [vmem:[%s3303 + $0x38] sm:$0x1]
      %v4092 = vld [vmem:[%s3303 + $0x3c] sm:$0xf]
      %v4093 = vld [vmem:[%s3303 + $0x40] sm:$0xf]
      %v4094 = vld [vmem:[%s3303 + $0x44] sm:$0x1]
      %v4095 = vld [vmem:[%s3303 + $0x48] sm:$0xf]
      %v4096 = vld [vmem:[%s3303 + $0x4c] sm:$0xf]
      %v4097 = vld [vmem:[%s3303 + $0x50] sm:$0x1]
      %v4098 = vld [vmem:[%s3303 + $0x54] sm:$0xf]
      %v4099 = vld [vmem:[%s3303 + $0x58] sm:$0xf]
      %v4100 = vld [vmem:[%s3303 + $0x5c] sm:$0x1]
      %v4101 = vld [vmem:[%s3303 + $0x60] sm:$0xf]
      %v4102 = vld [vmem:[%s3303 + $0x64] sm:$0xf]
      %v4103 = vld [vmem:[%s3303 + $0x68] sm:$0x1]
      %v4104 = vld [vmem:[%s3303 + $0x6c] sm:$0xf]
      %v4105 = vld [vmem:[%s3303 + $0x70] sm:$0xf]
      %v4106 = vld [vmem:[%s3303 + $0x74] sm:$0x1]
      %v4107 = vld [vmem:[%s3303 + $0x78] sm:$0xf]
      %v4108 = vld [vmem:[%s3303 + $0x7c] sm:$0xf]
      %v4109 = vld [vmem:[%s3303 + $0x80] sm:$0x1]
      %v4110 = vld [vmem:[%s3303 + $0x84] sm:$0xf]
      %v4111 = vld [vmem:[%s3303 + $0x88] sm:$0xf]
      %v4112 = vld [vmem:[%s3303 + $0x8c] sm:$0x1]
      %v4113 = vld [vmem:[%s3303 + $0x90] sm:$0xf]
      %v4114 = vld [vmem:[%s3303 + $0x94] sm:$0xf]
      %v4115 = vld [vmem:[%s3303 + $0x98] sm:$0x1]
      %v4116 = vld [vmem:[%s3303 + $0x9c] sm:$0xf]
      %v4117 = vld [vmem:[%s3303 + $0xa0] sm:$0xf]
      %v4118 = vld [vmem:[%s3303 + $0xa4] sm:$0x1]
      %v4119 = vld [vmem:[%s3303 + $0xa8] sm:$0xf]
      %v4120 = vld [vmem:[%s3303 + $0xac] sm:$0xf]
      %v4121 = vld [vmem:[%s3303 + $0xb0] sm:$0x1]
      %v4122 = vld [vmem:[%s3303 + $0xb4] sm:$0xf]
      %v4123 = vld [vmem:[%s3303 + $0xb8] sm:$0xf]
      %v4124 = vld [vmem:[%s3303 + $0xbc] sm:$0x1]
      %v4126 = vshrl.u32 %v4077, 16
      %v4128 = vrot.slane %v4126, 4
      %v4129 = vshll.u32 %v4077, 16
      %v4131 = vrot.slane %v4129, 5
      %v4132 = vor.u32 %v4128, %v4131
      %v4133 = vrot.slane %v4132, 4
      %v4135 = vshll.u32 %v4078, 16
      %v4137 = vrot.slane %v4135, 5
      %v4138 = vsel %vm1070, %v4133, %v4137
      %v4139 = vshrl.u32 %v4078, 16
      %v4141 = vrot.slane %v4139, 4
      %v4142 = vor.u32 %v4141, %v4137
      %v4143 = vrot.slane %v4142, 4
      %v4145 = vshll.u32 %v4079, 16
      %v4147 = vrot.slane %v4145, 5
      %v4148 = vsel %vm1070, %v4143, %v4147
      %v4150 = vshrl.u32 %v4080, 16
      %v4152 = vrot.slane %v4150, 4
      %v4153 = vshll.u32 %v4080, 16
      %v4155 = vrot.slane %v4153, 5
      %v4156 = vor.u32 %v4152, %v4155
      %v4157 = vrot.slane %v4156, 4
      %v4159 = vshll.u32 %v4081, 16
      %v4161 = vrot.slane %v4159, 5
      %v4162 = vsel %vm1070, %v4157, %v4161
      %v4163 = vshrl.u32 %v4081, 16
      %v4165 = vrot.slane %v4163, 4
      %v4166 = vor.u32 %v4165, %v4161
      %v4167 = vrot.slane %v4166, 4
      %v4169 = vshll.u32 %v4082, 16
      %v4171 = vrot.slane %v4169, 5
      %v4172 = vsel %vm1070, %v4167, %v4171
      %v4174 = vshrl.u32 %v4083, 16
      %v4176 = vrot.slane %v4174, 4
      %v4177 = vshll.u32 %v4083, 16
      %v4179 = vrot.slane %v4177, 5
      %v4180 = vor.u32 %v4176, %v4179
      %v4181 = vrot.slane %v4180, 4
      %v4183 = vshll.u32 %v4084, 16
      %v4185 = vrot.slane %v4183, 5
      %v4186 = vsel %vm1070, %v4181, %v4185
      %v4187 = vshrl.u32 %v4084, 16
      %v4189 = vrot.slane %v4187, 4
      %v4190 = vor.u32 %v4189, %v4185
      %v4191 = vrot.slane %v4190, 4
      %v4193 = vshll.u32 %v4085, 16
      %v4195 = vrot.slane %v4193, 5
      %v4196 = vsel %vm1070, %v4191, %v4195
      %v4198 = vshrl.u32 %v4086, 16
      %v4200 = vrot.slane %v4198, 4
      %v4201 = vshll.u32 %v4086, 16
      %v4203 = vrot.slane %v4201, 5
      %v4204 = vor.u32 %v4200, %v4203
      %v4205 = vrot.slane %v4204, 4
      %v4207 = vshll.u32 %v4087, 16
      %v4209 = vrot.slane %v4207, 5
      %v4210 = vsel %vm1070, %v4205, %v4209
      %v4211 = vshrl.u32 %v4087, 16
      %v4213 = vrot.slane %v4211, 4
      %v4214 = vor.u32 %v4213, %v4209
      %v4215 = vrot.slane %v4214, 4
      %v4217 = vshll.u32 %v4088, 16
      %v4219 = vrot.slane %v4217, 5
      %v4220 = vsel %vm1070, %v4215, %v4219
      %v4222 = vshrl.u32 %v4089, 16
      %v4224 = vrot.slane %v4222, 4
      %v4225 = vshll.u32 %v4089, 16
      %v4227 = vrot.slane %v4225, 5
      %v4228 = vor.u32 %v4224, %v4227
      %v4229 = vrot.slane %v4228, 4
      %v4231 = vshll.u32 %v4090, 16
      %v4233 = vrot.slane %v4231, 5
      %v4234 = vsel %vm1070, %v4229, %v4233
      %v4235 = vshrl.u32 %v4090, 16
      %v4237 = vrot.slane %v4235, 4
      %v4238 = vor.u32 %v4237, %v4233
      %v4239 = vrot.slane %v4238, 4
      %v4241 = vshll.u32 %v4091, 16
      %v4243 = vrot.slane %v4241, 5
      %v4244 = vsel %vm1070, %v4239, %v4243
      %v4246 = vshrl.u32 %v4092, 16
      %v4248 = vrot.slane %v4246, 4
      %v4249 = vshll.u32 %v4092, 16
      %v4251 = vrot.slane %v4249, 5
      %v4252 = vor.u32 %v4248, %v4251
      %v4253 = vrot.slane %v4252, 4
      %v4255 = vshll.u32 %v4093, 16
      %v4257 = vrot.slane %v4255, 5
      %v4258 = vsel %vm1070, %v4253, %v4257
      %v4259 = vshrl.u32 %v4093, 16
      %v4261 = vrot.slane %v4259, 4
      %v4262 = vor.u32 %v4261, %v4257
      %v4263 = vrot.slane %v4262, 4
      %v4265 = vshll.u32 %v4094, 16
      %v4267 = vrot.slane %v4265, 5
      %v4268 = vsel %vm1070, %v4263, %v4267
      %v4270 = vshrl.u32 %v4095, 16
      %v4272 = vrot.slane %v4270, 4
      %v4273 = vshll.u32 %v4095, 16
      %v4275 = vrot.slane %v4273, 5
      %v4276 = vor.u32 %v4272, %v4275
      %v4277 = vrot.slane %v4276, 4
      %v4279 = vshll.u32 %v4096, 16
      %v4281 = vrot.slane %v4279, 5
      %v4282 = vsel %vm1070, %v4277, %v4281
      %v4283 = vshrl.u32 %v4096, 16
      %v4285 = vrot.slane %v4283, 4
      %v4286 = vor.u32 %v4285, %v4281
      %v4287 = vrot.slane %v4286, 4
      %v4289 = vshll.u32 %v4097, 16
      %v4291 = vrot.slane %v4289, 5
      %v4292 = vsel %vm1070, %v4287, %v4291
      %v4294 = vshrl.u32 %v4098, 16
      %v4296 = vrot.slane %v4294, 4
      %v4297 = vshll.u32 %v4098, 16
      %v4299 = vrot.slane %v4297, 5
      %v4300 = vor.u32 %v4296, %v4299
      %v4301 = vrot.slane %v4300, 4
      %v4303 = vshll.u32 %v4099, 16
      %v4305 = vrot.slane %v4303, 5
      %v4306 = vsel %vm1070, %v4301, %v4305
      %v4307 = vshrl.u32 %v4099, 16
      %v4309 = vrot.slane %v4307, 4
      %v4310 = vor.u32 %v4309, %v4305
      %v4311 = vrot.slane %v4310, 4
      %v4313 = vshll.u32 %v4100, 16
      %v4315 = vrot.slane %v4313, 5
      %v4316 = vsel %vm1070, %v4311, %v4315
      %v4318 = vshrl.u32 %v4101, 16
      %v4320 = vrot.slane %v4318, 4
      %v4321 = vshll.u32 %v4101, 16
      %v4323 = vrot.slane %v4321, 5
      %v4324 = vor.u32 %v4320, %v4323
      %v4325 = vrot.slane %v4324, 4
      %v4327 = vshll.u32 %v4102, 16
      %v4329 = vrot.slane %v4327, 5
      %v4330 = vsel %vm1070, %v4325, %v4329
      %v4331 = vshrl.u32 %v4102, 16
      %v4333 = vrot.slane %v4331, 4
      %v4334 = vor.u32 %v4333, %v4329
      %v4335 = vrot.slane %v4334, 4
      %v4337 = vshll.u32 %v4103, 16
      %v4339 = vrot.slane %v4337, 5
      %v4340 = vsel %vm1070, %v4335, %v4339
      %v4342 = vshrl.u32 %v4104, 16
      %v4344 = vrot.slane %v4342, 4
      %v4345 = vshll.u32 %v4104, 16
      %v4347 = vrot.slane %v4345, 5
      %v4348 = vor.u32 %v4344, %v4347
      %v4349 = vrot.slane %v4348, 4
      %v4351 = vshll.u32 %v4105, 16
      %v4353 = vrot.slane %v4351, 5
      %v4354 = vsel %vm1070, %v4349, %v4353
      %v4355 = vshrl.u32 %v4105, 16
      %v4357 = vrot.slane %v4355, 4
      %v4358 = vor.u32 %v4357, %v4353
      %v4359 = vrot.slane %v4358, 4
      %v4361 = vshll.u32 %v4106, 16
      %v4363 = vrot.slane %v4361, 5
      %v4364 = vsel %vm1070, %v4359, %v4363
      %v4366 = vshrl.u32 %v4107, 16
      %v4368 = vrot.slane %v4366, 4
      %v4369 = vshll.u32 %v4107, 16
      %v4371 = vrot.slane %v4369, 5
      %v4372 = vor.u32 %v4368, %v4371
      %v4373 = vrot.slane %v4372, 4
      %v4375 = vshll.u32 %v4108, 16
      %v4377 = vrot.slane %v4375, 5
      %v4378 = vsel %vm1070, %v4373, %v4377
      %v4379 = vshrl.u32 %v4108, 16
      %v4381 = vrot.slane %v4379, 4
      %v4382 = vor.u32 %v4381, %v4377
      %v4383 = vrot.slane %v4382, 4
      %v4385 = vshll.u32 %v4109, 16
      %v4387 = vrot.slane %v4385, 5
      %v4388 = vsel %vm1070, %v4383, %v4387
      %v4390 = vshrl.u32 %v4110, 16
      %v4392 = vrot.slane %v4390, 4
      %v4393 = vshll.u32 %v4110, 16
      %v4395 = vrot.slane %v4393, 5
      %v4396 = vor.u32 %v4392, %v4395
      %v4397 = vrot.slane %v4396, 4
      %v4399 = vshll.u32 %v4111, 16
      %v4401 = vrot.slane %v4399, 5
      %v4402 = vsel %vm1070, %v4397, %v4401
      %v4403 = vshrl.u32 %v4111, 16
      %v4405 = vrot.slane %v4403, 4
      %v4406 = vor.u32 %v4405, %v4401
      %v4407 = vrot.slane %v4406, 4
      %v4409 = vshll.u32 %v4112, 16
      %v4411 = vrot.slane %v4409, 5
      %v4412 = vsel %vm1070, %v4407, %v4411
      %v4414 = vshrl.u32 %v4113, 16
      %v4416 = vrot.slane %v4414, 4
      %v4417 = vshll.u32 %v4113, 16
      %v4419 = vrot.slane %v4417, 5
      %v4420 = vor.u32 %v4416, %v4419
      %v4421 = vrot.slane %v4420, 4
      %v4423 = vshll.u32 %v4114, 16
      %v4425 = vrot.slane %v4423, 5
      %v4426 = vsel %vm1070, %v4421, %v4425
      %v4427 = vshrl.u32 %v4114, 16
      %v4429 = vrot.slane %v4427, 4
      %v4430 = vor.u32 %v4429, %v4425
      %v4431 = vrot.slane %v4430, 4
      %v4433 = vshll.u32 %v4115, 16
      %v4435 = vrot.slane %v4433, 5
      %v4436 = vsel %vm1070, %v4431, %v4435
      %v4438 = vshrl.u32 %v4116, 16
      %v4440 = vrot.slane %v4438, 4
      %v4441 = vshll.u32 %v4116, 16
      %v4443 = vrot.slane %v4441, 5
      %v4444 = vor.u32 %v4440, %v4443
      %v4445 = vrot.slane %v4444, 4
      %v4447 = vshll.u32 %v4117, 16
      %v4449 = vrot.slane %v4447, 5
      %v4450 = vsel %vm1070, %v4445, %v4449
      %v4451 = vshrl.u32 %v4117, 16
      %v4453 = vrot.slane %v4451, 4
      %v4454 = vor.u32 %v4453, %v4449
      %v4455 = vrot.slane %v4454, 4
      %v4457 = vshll.u32 %v4118, 16
      %v4459 = vrot.slane %v4457, 5
      %v4460 = vsel %vm1070, %v4455, %v4459
      %v4462 = vshrl.u32 %v4119, 16
      %v4464 = vrot.slane %v4462, 4
      %v4465 = vshll.u32 %v4119, 16
      %v4467 = vrot.slane %v4465, 5
      %v4468 = vor.u32 %v4464, %v4467
      %v4469 = vrot.slane %v4468, 4
      %v4471 = vshll.u32 %v4120, 16
      %v4473 = vrot.slane %v4471, 5
      %v4474 = vsel %vm1070, %v4469, %v4473
      %v4475 = vshrl.u32 %v4120, 16
      %v4477 = vrot.slane %v4475, 4
      %v4478 = vor.u32 %v4477, %v4473
      %v4479 = vrot.slane %v4478, 4
      %v4481 = vshll.u32 %v4121, 16
      %v4483 = vrot.slane %v4481, 5
      %v4484 = vsel %vm1070, %v4479, %v4483
      %v4486 = vshrl.u32 %v4122, 16
      %v4488 = vrot.slane %v4486, 4
      %v4489 = vshll.u32 %v4122, 16
      %v4491 = vrot.slane %v4489, 5
      %v4492 = vor.u32 %v4488, %v4491
      %v4493 = vrot.slane %v4492, 4
      %v4495 = vshll.u32 %v4123, 16
      %v4497 = vrot.slane %v4495, 5
      %v4498 = vsel %vm1070, %v4493, %v4497
      %v4499 = vshrl.u32 %v4123, 16
      %v4501 = vrot.slane %v4499, 4
      %v4502 = vor.u32 %v4501, %v4497
      %v4503 = vrot.slane %v4502, 4
      %v4505 = vshll.u32 %v4124, 16
      %v4507 = vrot.slane %v4505, 5
      %v4508 = vsel %vm1070, %v4503, %v4507
      %s4509 = scalar_lea.vmem %s4, 512
      %v4510 = vld [vmem:[%s4509] sm:$0xf]
      %v4511 = vld [vmem:[%s4509 + $0x4] sm:$0xf]
      %v4512 = vld [vmem:[%s4509 + $0x8] sm:$0xf]
      %v4513 = vld [vmem:[%s4509 + $0xc] sm:$0xf]
      %v4514 = vld [vmem:[%s4509 + $0x10] sm:$0xf]
      %v4515 = vld [vmem:[%s4509 + $0x14] sm:$0xf]
      %v4516 = vld [vmem:[%s4509 + $0x18] sm:$0xf]
      %v4517 = vld [vmem:[%s4509 + $0x1c] sm:$0xf]
      %v4518 = vld [vmem:[%s4509 + $0x20] sm:$0xf]
      %v4519 = vld [vmem:[%s4509 + $0x24] sm:$0xf]
      %v4520 = vld [vmem:[%s4509 + $0x28] sm:$0xf]
      %v4521 = vld [vmem:[%s4509 + $0x2c] sm:$0xf]
      %v4522 = vld [vmem:[%s4509 + $0x30] sm:$0xf]
      %v4523 = vld [vmem:[%s4509 + $0x34] sm:$0xf]
      %v4524 = vld [vmem:[%s4509 + $0x38] sm:$0xf]
      %v4525 = vld [vmem:[%s4509 + $0x3c] sm:$0xf]
      %v4526 = vunpack.c.l.b16 %v4138
      %v4527 = vunpack.c.l.b16 %v4148
      %v4528 = vunpack.c.l.b16 %v4162
      %v4529 = vunpack.c.l.b16 %v4172
      %v4530 = vunpack.c.l.b16 %v4186
      %v4531 = vunpack.c.l.b16 %v4196
      %v4532 = vunpack.c.l.b16 %v4210
      %v4533 = vunpack.c.l.b16 %v4220
      %v4534 = vunpack.c.l.b16 %v4234
      %v4535 = vunpack.c.l.b16 %v4244
      %v4536 = vunpack.c.l.b16 %v4258
      %v4537 = vunpack.c.l.b16 %v4268
      %v4538 = vunpack.c.l.b16 %v4282
      %v4539 = vunpack.c.l.b16 %v4292
      %v4540 = vunpack.c.l.b16 %v4306
      %v4541 = vunpack.c.l.b16 %v4316
      %v4542 = vunpack.c.l.b16 %v4330
      %v4543 = vunpack.c.l.b16 %v4340
      %v4544 = vunpack.c.l.b16 %v4354
      %v4545 = vunpack.c.l.b16 %v4364
      %v4546 = vunpack.c.l.b16 %v4378
      %v4547 = vunpack.c.l.b16 %v4388
      %v4548 = vunpack.c.l.b16 %v4402
      %v4549 = vunpack.c.l.b16 %v4412
      %v4550 = vunpack.c.l.b16 %v4426
      %v4551 = vunpack.c.l.b16 %v4436
      %v4552 = vunpack.c.l.b16 %v4450
      %v4553 = vunpack.c.l.b16 %v4460
      %v4554 = vunpack.c.l.b16 %v4474
      %v4555 = vunpack.c.l.b16 %v4484
      %v4556 = vunpack.c.l.b16 %v4498
      %v4557 = vunpack.c.l.b16 %v4508
      %v4558 = vpack.c.b16 %v4527, %v4526
      %v4559 = vpack.c.b16 %v4529, %v4528
      %v4560 = vpack.c.b16 %v4531, %v4530
      %v4561 = vpack.c.b16 %v4533, %v4532
      %v4562 = vpack.c.b16 %v4535, %v4534
      %v4563 = vpack.c.b16 %v4537, %v4536
      %v4564 = vpack.c.b16 %v4539, %v4538
      %v4565 = vpack.c.b16 %v4541, %v4540
      %v4566 = vpack.c.b16 %v4543, %v4542
      %v4567 = vpack.c.b16 %v4545, %v4544
      %v4568 = vpack.c.b16 %v4547, %v4546
      %v4569 = vpack.c.b16 %v4549, %v4548
      %v4570 = vpack.c.b16 %v4551, %v4550
      %v4571 = vpack.c.b16 %v4553, %v4552
      %v4572 = vpack.c.b16 %v4555, %v4554
      %v4573 = vpack.c.b16 %v4557, %v4556
      %v4606 = vunpack.c.l.b16 %v4510
      %v4607 = vunpack.c.l.b16 %v4511
      %v4608 = vunpack.c.l.b16 %v4512
      %v4609 = vunpack.c.l.b16 %v4513
      %v4610 = vunpack.c.l.b16 %v4514
      %v4611 = vunpack.c.l.b16 %v4515
      %v4612 = vunpack.c.l.b16 %v4516
      %v4613 = vunpack.c.l.b16 %v4517
      %v4614 = vunpack.c.l.b16 %v4518
      %v4615 = vunpack.c.l.b16 %v4519
      %v4616 = vunpack.c.l.b16 %v4520
      %v4617 = vunpack.c.l.b16 %v4521
      %v4618 = vunpack.c.l.b16 %v4522
      %v4619 = vunpack.c.l.b16 %v4523
      %v4620 = vunpack.c.l.b16 %v4524
      %v4621 = vunpack.c.l.b16 %v4525
      %v4622 = vpack.c.b16 %v4607, %v4606
      %v4623 = vpack.c.b16 %v4609, %v4608
      %v4624 = vpack.c.b16 %v4611, %v4610
      %v4625 = vpack.c.b16 %v4613, %v4612
      %v4626 = vpack.c.b16 %v4615, %v4614
      %v4627 = vpack.c.b16 %v4617, %v4616
      %v4628 = vpack.c.b16 %v4619, %v4618
      %v4629 = vpack.c.b16 %v4621, %v4620
      %4638 = vmatprep.subr.bf16.mxu0 0
      %4639 = vmatpush1.bf16.msra.mxu0 %v4622
      %4640 = vmatprep.subr.bf16.mxu0 0
      %4641 = vmatpush1.bf16.msra.mxu0 %v4623
      %4642 = vmatprep.subr.bf16.mxu0 0
      %4643 = vmatpush1.bf16.msra.mxu0 %v4624
      %4644 = vmatprep.subr.bf16.mxu0 0
      %4645 = vmatpush1.bf16.msra.mxu0 %v4625
      %4646 = vmatprep.subr.bf16.mxu0 0
      %4647 = vmatpush1.bf16.msra.mxu0 %v4626
      %4648 = vmatprep.subr.bf16.mxu0 0
      %4649 = vmatpush1.bf16.msra.mxu0 %v4627
      %4650 = vmatprep.subr.bf16.mxu0 0
      %4651 = vmatpush1.bf16.msra.mxu0 %v4628
      %4652 = vmatprep.subr.bf16.mxu0 0
      %4653 = vmatpush1.bf16.msra.mxu0 %v4629
      %4654 = vmatprep.subr.bf16.mxu0 0
      %4655 = vmatpush1.bf16.msra.mxu0 0
      %4656 = vmatprep.subr.bf16.mxu0 0
      %4657 = vmatpush1.bf16.msra.mxu0 0
      %4658 = vmatprep.subr.bf16.mxu0 0
      %4659 = vmatpush1.bf16.msra.mxu0 0
      %4660 = vmatprep.subr.bf16.mxu0 0
      %4661 = vmatpush1.bf16.msra.mxu0 0
      %4662 = vmatprep.subr.bf16.mxu0 0
      %4663 = vmatpush1.bf16.msra.mxu0 0
      %4664 = vmatprep.subr.bf16.mxu0 0
      %4665 = vmatpush1.bf16.msra.mxu0 0
      %4666 = vmatprep.subr.bf16.mxu0 0
      %4667 = vmatpush1.bf16.msra.mxu0 0
      %4668 = vmatprep.subr.bf16.mxu0 0
      %4669 = vmatpush1.bf16.msra.mxu0 0
      %4670 = vmatprep.mubr.bf16.mxu0 0
      %4671 = vmatmul.mubr.bf16.gmra.mrb[0].mxu0 %v4558
      %v4672 = vpop.f32.mrb[0].mxu0
      %v4673 = vadd.f32 0.0, %v4672
      %v4674 = vpop.f32.mrb[0].mxu0
      %v4675 = vpop.f32.mrb[0].mxu0
      %v4676 = vadd.f32 0.0, %v4675
      %v4677 = vpop.f32.mrb[0].mxu0
      %4678 = vmatprep.mubr.bf16.mxu0 0
      %4679 = vmatmul.mubr.bf16.gmra.mrb[0].mxu0 %v4559
      %v4680 = vpop.f32.mrb[0].mxu0
      %v4681 = vadd.f32 0.0, %v4680
      %v4682 = vpop.f32.mrb[0].mxu0
      %v4683 = vpop.f32.mrb[0].mxu0
      %v4684 = vadd.f32 0.0, %v4683
      %v4685 = vpop.f32.mrb[0].mxu0
      %4686 = vmatprep.mubr.bf16.mxu0 0
      %4687 = vmatmul.mubr.bf16.gmra.mrb[0].mxu0 %v4560
      %v4688 = vpop.f32.mrb[0].mxu0
      %v4689 = vadd.f32 0.0, %v4688
      %v4690 = vpop.f32.mrb[0].mxu0
      %v4691 = vpop.f32.mrb[0].mxu0
      %v4692 = vadd.f32 0.0, %v4691
      %v4693 = vpop.f32.mrb[0].mxu0
      %4694 = vmatprep.mubr.bf16.mxu0 0
      %4695 = vmatmul.mubr.bf16.gmra.mrb[0].mxu0 %v4561
      %v4696 = vpop.f32.mrb[0].mxu0
      %v4697 = vadd.f32 0.0, %v4696
      %v4698 = vpop.f32.mrb[0].mxu0
      %v4699 = vpop.f32.mrb[0].mxu0
      %v4700 = vadd.f32 0.0, %v4699
      %v4701 = vpop.f32.mrb[0].mxu0
      %4702 = vmatprep.mubr.bf16.mxu0 0
      %4703 = vmatmul.mubr.bf16.gmra.mrb[0].mxu0 %v4562
      %v4704 = vpop.f32.mrb[0].mxu0
      %v4705 = vadd.f32 0.0, %v4704
      %v4706 = vpop.f32.mrb[0].mxu0
      %v4707 = vpop.f32.mrb[0].mxu0
      %v4708 = vadd.f32 0.0, %v4707
      %v4709 = vpop.f32.mrb[0].mxu0
      %4710 = vmatprep.mubr.bf16.mxu0 0
      %4711 = vmatmul.mubr.bf16.gmra.mrb[0].mxu0 %v4563
      %v4712 = vpop.f32.mrb[0].mxu0
      %v4713 = vadd.f32 0.0, %v4712
      %v4714 = vpop.f32.mrb[0].mxu0
      %v4715 = vpop.f32.mrb[0].mxu0
      %v4716 = vadd.f32 0.0, %v4715
      %v4717 = vpop.f32.mrb[0].mxu0
      %4718 = vmatprep.mubr.bf16.mxu0 0
      %4719 = vmatmul.mubr.bf16.gmra.mrb[0].mxu0 %v4564
      %v4720 = vpop.f32.mrb[0].mxu0
      %v4721 = vadd.f32 0.0, %v4720
      %v4722 = vpop.f32.mrb[0].mxu0
      %v4723 = vpop.f32.mrb[0].mxu0
      %v4724 = vadd.f32 0.0, %v4723
      %v4725 = vpop.f32.mrb[0].mxu0
      %4726 = vmatprep.mubr.bf16.mxu0 0
      %4727 = vmatmul.mubr.bf16.gmra.mrb[0].mxu0 %v4565
      %v4728 = vpop.f32.mrb[0].mxu0
      %v4729 = vadd.f32 0.0, %v4728
      %v4730 = vpop.f32.mrb[0].mxu0
      %v4731 = vpop.f32.mrb[0].mxu0
      %v4732 = vadd.f32 0.0, %v4731
      %v4733 = vpop.f32.mrb[0].mxu0
      %4734 = vmatprep.mubr.bf16.mxu0 0
      %4735 = vmatmul.mubr.bf16.gmra.mrb[0].mxu0 %v4566
      %v4736 = vpop.f32.mrb[0].mxu0
      %v4737 = vadd.f32 0.0, %v4736
      %v4738 = vpop.f32.mrb[0].mxu0
      %v4739 = vpop.f32.mrb[0].mxu0
      %v4740 = vadd.f32 0.0, %v4739
      %v4741 = vpop.f32.mrb[0].mxu0
      %4742 = vmatprep.mubr.bf16.mxu0 0
      %4743 = vmatmul.mubr.bf16.gmra.mrb[0].mxu0 %v4567
      %v4744 = vpop.f32.mrb[0].mxu0
      %v4745 = vadd.f32 0.0, %v4744
      %v4746 = vpop.f32.mrb[0].mxu0
      %v4747 = vpop.f32.mrb[0].mxu0
      %v4748 = vadd.f32 0.0, %v4747
      %v4749 = vpop.f32.mrb[0].mxu0
      %4750 = vmatprep.mubr.bf16.mxu0 0
      %4751 = vmatmul.mubr.bf16.gmra.mrb[0].mxu0 %v4568
      %v4752 = vpop.f32.mrb[0].mxu0
      %v4753 = vadd.f32 0.0, %v4752
      %v4754 = vpop.f32.mrb[0].mxu0
      %v4755 = vpop.f32.mrb[0].mxu0
      %v4756 = vadd.f32 0.0, %v4755
      %v4757 = vpop.f32.mrb[0].mxu0
      %4758 = vmatprep.mubr.bf16.mxu0 0
      %4759 = vmatmul.mubr.bf16.gmra.mrb[0].mxu0 %v4569
      %v4760 = vpop.f32.mrb[0].mxu0
      %v4761 = vadd.f32 0.0, %v4760
      %v4762 = vpop.f32.mrb[0].mxu0
      %v4763 = vpop.f32.mrb[0].mxu0
      %v4764 = vadd.f32 0.0, %v4763
      %v4765 = vpop.f32.mrb[0].mxu0
      %4766 = vmatprep.mubr.bf16.mxu0 0
      %4767 = vmatmul.mubr.bf16.gmra.mrb[0].mxu0 %v4570
      %v4768 = vpop.f32.mrb[0].mxu0
      %v4769 = vadd.f32 0.0, %v4768
      %v4770 = vpop.f32.mrb[0].mxu0
      %v4771 = vpop.f32.mrb[0].mxu0
      %v4772 = vadd.f32 0.0, %v4771
      %v4773 = vpop.f32.mrb[0].mxu0
      %4774 = vmatprep.mubr.bf16.mxu0 0
      %4775 = vmatmul.mubr.bf16.gmra.mrb[0].mxu0 %v4571
      %v4776 = vpop.f32.mrb[0].mxu0
      %v4777 = vadd.f32 0.0, %v4776
      %v4778 = vpop.f32.mrb[0].mxu0
      %v4779 = vpop.f32.mrb[0].mxu0
      %v4780 = vadd.f32 0.0, %v4779
      %v4781 = vpop.f32.mrb[0].mxu0
      %4782 = vmatprep.mubr.bf16.mxu0 0
      %4783 = vmatmul.mubr.bf16.gmra.mrb[0].mxu0 %v4572
      %v4784 = vpop.f32.mrb[0].mxu0
      %v4785 = vadd.f32 0.0, %v4784
      %v4786 = vpop.f32.mrb[0].mxu0
      %v4787 = vpop.f32.mrb[0].mxu0
      %v4788 = vadd.f32 0.0, %v4787
      %v4789 = vpop.f32.mrb[0].mxu0
      %4790 = vmatprep.mubr.bf16.mxu0 0
      %4791 = vmatmul.mubr.bf16.gmra.mrb[0].mxu0 %v4573
      %v4792 = vpop.f32.mrb[0].mxu0
      %v4793 = vadd.f32 0.0, %v4792
      %v4794 = vpop.f32.mrb[0].mxu0
      %v4795 = vpop.f32.mrb[0].mxu0
      %v4796 = vadd.f32 0.0, %v4795
      %v4797 = vpop.f32.mrb[0].mxu0
      %4798 = vdwg.mxu0
      %v4799 = vadd.f32 %v4045, %v4673
      %v4800 = vadd.f32 %v4046, %v4676
      %v4801 = vadd.f32 %v4047, %v4681
      %v4802 = vadd.f32 %v4048, %v4684
      %v4803 = vadd.f32 %v4049, %v4689
      %v4804 = vadd.f32 %v4050, %v4692
      %v4805 = vadd.f32 %v4051, %v4697
      %v4806 = vadd.f32 %v4052, %v4700
      %v4807 = vadd.f32 %v4053, %v4705
      %v4808 = vadd.f32 %v4054, %v4708
      %v4809 = vadd.f32 %v4055, %v4713
      %v4810 = vadd.f32 %v4056, %v4716
      %v4811 = vadd.f32 %v4057, %v4721
      %v4812 = vadd.f32 %v4058, %v4724
      %v4813 = vadd.f32 %v4059, %v4729
      %v4814 = vadd.f32 %v4060, %v4732
      %v4815 = vadd.f32 %v4061, %v4737
      %v4816 = vadd.f32 %v4062, %v4740
      %v4817 = vadd.f32 %v4063, %v4745
      %v4818 = vadd.f32 %v4064, %v4748
      %v4819 = vadd.f32 %v4065, %v4753
      %v4820 = vadd.f32 %v4066, %v4756
      %v4821 = vadd.f32 %v4067, %v4761
      %v4822 = vadd.f32 %v4068, %v4764
      %v4823 = vadd.f32 %v4069, %v4769
      %v4824 = vadd.f32 %v4070, %v4772
      %v4825 = vadd.f32 %v4071, %v4777
      %v4826 = vadd.f32 %v4072, %v4780
      %v4827 = vadd.f32 %v4073, %v4785
      %v4828 = vadd.f32 %v4074, %v4788
      %v4829 = vadd.f32 %v4075, %v4793
      %v4830 = vadd.f32 %v4076, %v4796
      %v4831 = vld [vmem:[%s5] sm:$0x1]
      %v4833 = vlaneseq
      %v4834 = vshrl.u32 %v4833, 7
      %v4835 = vsub.s32 0, %v4834
      %v4836 = vrot.slane %v4831, %v4835
      %v4838 = vadd.f32 %v4799, %v4836
      %v4839 = vadd.f32 %v4800, %v4836
      %v4840 = vadd.f32 %v4801, %v4836
      %v4841 = vadd.f32 %v4802, %v4836
      %v4842 = vadd.f32 %v4803, %v4836
      %v4843 = vadd.f32 %v4804, %v4836
      %v4844 = vadd.f32 %v4805, %v4836
      %v4845 = vadd.f32 %v4806, %v4836
      %v4846 = vadd.f32 %v4807, %v4836
      %v4847 = vadd.f32 %v4808, %v4836
      %v4848 = vadd.f32 %v4809, %v4836
      %v4849 = vadd.f32 %v4810, %v4836
      %v4850 = vadd.f32 %v4811, %v4836
      %v4851 = vadd.f32 %v4812, %v4836
      %v4852 = vadd.f32 %v4813, %v4836
      %v4853 = vadd.f32 %v4814, %v4836
      %v4854 = vadd.f32 %v4815, %v4836
      %v4855 = vadd.f32 %v4816, %v4836
      %v4856 = vadd.f32 %v4817, %v4836
      %v4857 = vadd.f32 %v4818, %v4836
      %v4858 = vadd.f32 %v4819, %v4836
      %v4859 = vadd.f32 %v4820, %v4836
      %v4860 = vadd.f32 %v4821, %v4836
      %v4861 = vadd.f32 %v4822, %v4836
      %v4862 = vadd.f32 %v4823, %v4836
      %v4863 = vadd.f32 %v4824, %v4836
      %v4864 = vadd.f32 %v4825, %v4836
      %v4865 = vadd.f32 %v4826, %v4836
      %v4866 = vadd.f32 %v4827, %v4836
      %v4867 = vadd.f32 %v4828, %v4836
      %v4868 = vadd.f32 %v4829, %v4836
      %v4869 = vadd.f32 %v4830, %v4836
      %v4870 = vmax.f32 %v4838, 0.0
      %v4871 = vmax.f32 %v4839, 0.0
      %v4872 = vmax.f32 %v4840, 0.0
      %v4873 = vmax.f32 %v4841, 0.0
      %v4874 = vmax.f32 %v4842, 0.0
      %v4875 = vmax.f32 %v4843, 0.0
      %v4876 = vmax.f32 %v4844, 0.0
      %v4877 = vmax.f32 %v4845, 0.0
      %v4878 = vmax.f32 %v4846, 0.0
      %v4879 = vmax.f32 %v4847, 0.0
      %v4880 = vmax.f32 %v4848, 0.0
      %v4881 = vmax.f32 %v4849, 0.0
      %v4882 = vmax.f32 %v4850, 0.0
      %v4883 = vmax.f32 %v4851, 0.0
      %v4884 = vmax.f32 %v4852, 0.0
      %v4885 = vmax.f32 %v4853, 0.0
      %v4886 = vmax.f32 %v4854, 0.0
      %v4887 = vmax.f32 %v4855, 0.0
      %v4888 = vmax.f32 %v4856, 0.0
      %v4889 = vmax.f32 %v4857, 0.0
      %v4890 = vmax.f32 %v4858, 0.0
      %v4891 = vmax.f32 %v4859, 0.0
      %v4892 = vmax.f32 %v4860, 0.0
      %v4893 = vmax.f32 %v4861, 0.0
      %v4894 = vmax.f32 %v4862, 0.0
      %v4895 = vmax.f32 %v4863, 0.0
      %v4896 = vmax.f32 %v4864, 0.0
      %v4897 = vmax.f32 %v4865, 0.0
      %v4898 = vmax.f32 %v4866, 0.0
      %v4899 = vmax.f32 %v4867, 0.0
      %v4900 = vmax.f32 %v4868, 0.0
      %v4901 = vmax.f32 %v4869, 0.0
      %v4902 = vpack.c.bf16 %v4871, %v4870
      %v4903 = vpack.c.bf16 %v4873, %v4872
      %v4904 = vpack.c.bf16 %v4875, %v4874
      %v4905 = vpack.c.bf16 %v4877, %v4876
      %v4906 = vpack.c.bf16 %v4879, %v4878
      %v4907 = vpack.c.bf16 %v4881, %v4880
      %v4908 = vpack.c.bf16 %v4883, %v4882
      %v4909 = vpack.c.bf16 %v4885, %v4884
      %v4910 = vpack.c.bf16 %v4887, %v4886
      %v4911 = vpack.c.bf16 %v4889, %v4888
      %v4912 = vpack.c.bf16 %v4891, %v4890
      %v4913 = vpack.c.bf16 %v4893, %v4892
      %v4914 = vpack.c.bf16 %v4895, %v4894
      %v4915 = vpack.c.bf16 %v4897, %v4896
      %v4916 = vpack.c.bf16 %v4899, %v4898
      %v4917 = vpack.c.bf16 %v4901, %v4900
      %v4934 = vunpack.c.l.b16 %v4902
      %v4935 = vunpack.c.h.b16 %v4902
      %v4936 = vunpack.c.l.b16 %v4903
      %v4937 = vunpack.c.h.b16 %v4903
      %v4938 = vunpack.c.l.b16 %v4904
      %v4939 = vunpack.c.h.b16 %v4904
      %v4940 = vunpack.c.l.b16 %v4905
      %v4941 = vunpack.c.h.b16 %v4905
      %v4942 = vunpack.c.l.b16 %v4906
      %v4943 = vunpack.c.h.b16 %v4906
      %v4944 = vunpack.c.l.b16 %v4907
      %v4945 = vunpack.c.h.b16 %v4907
      %v4946 = vunpack.c.l.b16 %v4908
      %v4947 = vunpack.c.h.b16 %v4908
      %v4948 = vunpack.c.l.b16 %v4909
      %v4949 = vunpack.c.h.b16 %v4909
      %v4950 = vunpack.c.l.b16 %v4910
      %v4951 = vunpack.c.h.b16 %v4910
      %v4952 = vunpack.c.l.b16 %v4911
      %v4953 = vunpack.c.h.b16 %v4911
      %v4954 = vunpack.c.l.b16 %v4912
      %v4955 = vunpack.c.h.b16 %v4912
      %v4956 = vunpack.c.l.b16 %v4913
      %v4957 = vunpack.c.h.b16 %v4913
      %v4958 = vunpack.c.l.b16 %v4914
      %v4959 = vunpack.c.h.b16 %v4914
      %v4960 = vunpack.c.l.b16 %v4915
      %v4961 = vunpack.c.h.b16 %v4915
      %v4962 = vunpack.c.l.b16 %v4916
      %v4963 = vunpack.c.h.b16 %v4916
      %v4964 = vunpack.c.l.b16 %v4917
      %v4965 = vunpack.c.h.b16 %v4917
      %v4966 = vpack.c.b16 %v4934, %v4934
      %v4967 = vpack.c.b16 %v4935, %v4935
      %v4968 = vpack.c.b16 %v4936, %v4936
      %v4969 = vpack.c.b16 %v4937, %v4937
      %v4970 = vpack.c.b16 %v4938, %v4938
      %v4971 = vpack.c.b16 %v4939, %v4939
      %v4972 = vpack.c.b16 %v4940, %v4940
      %v4973 = vpack.c.b16 %v4941, %v4941
      %v4974 = vpack.c.b16 %v4942, %v4942
      %v4975 = vpack.c.b16 %v4943, %v4943
      %v4976 = vpack.c.b16 %v4944, %v4944
      %v4977 = vpack.c.b16 %v4945, %v4945
      %v4978 = vpack.c.b16 %v4946, %v4946
      %v4979 = vpack.c.b16 %v4947, %v4947
      %v4980 = vpack.c.b16 %v4948, %v4948
      %v4981 = vpack.c.b16 %v4949, %v4949
      %v4982 = vpack.c.b16 %v4950, %v4950
      %v4983 = vpack.c.b16 %v4951, %v4951
      %v4984 = vpack.c.b16 %v4952, %v4952
      %v4985 = vpack.c.b16 %v4953, %v4953
      %v4986 = vpack.c.b16 %v4954, %v4954
      %v4987 = vpack.c.b16 %v4955, %v4955
      %v4988 = vpack.c.b16 %v4956, %v4956
      %v4989 = vpack.c.b16 %v4957, %v4957
      %v4990 = vpack.c.b16 %v4958, %v4958
      %v4991 = vpack.c.b16 %v4959, %v4959
      %v4992 = vpack.c.b16 %v4960, %v4960
      %v4993 = vpack.c.b16 %v4961, %v4961
      %v4994 = vpack.c.b16 %v4962, %v4962
      %v4995 = vpack.c.b16 %v4963, %v4963
      %v4996 = vpack.c.b16 %v4964, %v4964
      %v4997 = vpack.c.b16 %v4965, %v4965
      %5030 = vst [vmem:[%s311] sm:$0xf] %v4966
      %5031 = vst [vmem:[%s311 + $0x4] sm:$0xf] %v4967
      %5032 = vst [vmem:[%s311 + $0x8] sm:$0xf] %v4968
      %5033 = vst [vmem:[%s311 + $0xc] sm:$0xf] %v4969
      %5034 = vst [vmem:[%s311 + $0x10] sm:$0xf] %v4970
      %5035 = vst [vmem:[%s311 + $0x14] sm:$0xf] %v4971
      %5036 = vst [vmem:[%s311 + $0x18] sm:$0xf] %v4972
      %5037 = vst [vmem:[%s311 + $0x1c] sm:$0xf] %v4973
      %5038 = vst [vmem:[%s311 + $0x20] sm:$0xf] %v4974
      %5039 = vst [vmem:[%s311 + $0x24] sm:$0xf] %v4975
      %5040 = vst [vmem:[%s311 + $0x28] sm:$0xf] %v4976
      %5041 = vst [vmem:[%s311 + $0x2c] sm:$0xf] %v4977
      %5042 = vst [vmem:[%s311 + $0x30] sm:$0xf] %v4978
      %5043 = vst [vmem:[%s311 + $0x34] sm:$0xf] %v4979
      %5044 = vst [vmem:[%s311 + $0x38] sm:$0xf] %v4980
      %5045 = vst [vmem:[%s311 + $0x3c] sm:$0xf] %v4981
      %5046 = vst [vmem:[%s311 + $0x40] sm:$0xf] %v4982
      %5047 = vst [vmem:[%s311 + $0x44] sm:$0xf] %v4983
      %5048 = vst [vmem:[%s311 + $0x48] sm:$0xf] %v4984
      %5049 = vst [vmem:[%s311 + $0x4c] sm:$0xf] %v4985
      %5050 = vst [vmem:[%s311 + $0x50] sm:$0xf] %v4986
      %5051 = vst [vmem:[%s311 + $0x54] sm:$0xf] %v4987
      %5052 = vst [vmem:[%s311 + $0x58] sm:$0xf] %v4988
      %5053 = vst [vmem:[%s311 + $0x5c] sm:$0xf] %v4989
      %5054 = vst [vmem:[%s311 + $0x60] sm:$0xf] %v4990
      %5055 = vst [vmem:[%s311 + $0x64] sm:$0xf] %v4991
      %5056 = vst [vmem:[%s311 + $0x68] sm:$0xf] %v4992
      %5057 = vst [vmem:[%s311 + $0x6c] sm:$0xf] %v4993
      %5058 = vst [vmem:[%s311 + $0x70] sm:$0xf] %v4994
      %5059 = vst [vmem:[%s311 + $0x74] sm:$0xf] %v4995
      %5060 = vst [vmem:[%s311 + $0x78] sm:$0xf] %v4996
      %5061 = vst [vmem:[%s311 + $0x7c] sm:$0xf] %v4997
      %p5062 = scmp.lt.s32.totalorder %s17, 1
      %s5063 = scalar_select %p5062, %s17, 1
      %s5064 = smul.addr %s5063, 32
      %s5065 = smul.addr %s5064, 4
      %s5066 = scalar_lea.vmem %s6, %s5065
      // Predicated region
      $region45: #{_lambda_.3} parent=43 // pred_check
        %p5067 = pneg %p181
      $region46: #{_lambda_.3} parent=43 // pred_check_branch
        %5069 = sbr.rel (%p5067) target = $region48
      $region47: #{_lambda_.3} parent=43 // pred_region
        _
      $region48: #{_lambda_.3} parent=43 // pred_fallthru
        _
    $region44: #{_lambda_.3} parent=5 // pred_fallthru
      _
    %p5070 = scmp.le.s32.totalorder 2, %s12
    // Predicated region
    $region49: #{_lambda_.3} parent=5 // pred_check
      %p5071 = pneg %p5070
    $region50: #{_lambda_.3} parent=5 // pred_check_branch
      %5073 = sbr.rel (%p5071) target = $region52
    $region51: #{_lambda_.3} parent=5 // pred_region
      %s5074 = ssub.s32 %s12, 2
      // Predicated region
      $region53: #{_lambda_.3} parent=51 // pred_check
        %p5075 = pneg %p187
      $region54: #{_lambda_.3} parent=51 // pred_check_branch
        %5077 = sbr.rel (%p5075) target = $region56
      $region55: #{_lambda_.3} parent=51 // pred_region
        %p5078 = scmp.lt.s32.totalorder %s18, 1
        %s5079 = scalar_select %p5078, %s18, 1
        %s5080 = smul.addr %s5079, 32
        %s5081 = smul.addr %s5080, 4
        %s5082 = scalar_lea.vmem %s6, %s5081
      $region56: #{_lambda_.3} parent=51 // pred_fallthru
        _
    $region52: #{_lambda_.3} parent=5 // pred_fallthru
      _
  $region6: #{_lambda_.3} parent=0 // loop_footer
    %s16 = sadd.s32 1, %s12
  $region7: #{_lambda_.3} parent=0 // loop_footer_branch
    %11 = sbr.rel target = $region3
  $region8: #{_lambda_.3} parent=0 // loop_exit
    _

</llo_original>
